<compile_context>
chip_gen: v6e
topology: v6e:2x2x1
jax: 0.10.0
libtpu: 0.0.40
codegen_flags: <defaults>
</compile_context>

<pallas_src>
import functools

import numpy as np
import jax
import jax.numpy as jnp
from jax.experimental import pallas as pl
from jax.experimental.pallas import tpu as pltpu

# ----------------------- scaled-down model config -----------------------
B = 2            # batch
D = 32           # embed_dim
NUM_HEADS = 4
MLP_RATIO = 4
PATCH = 8        # patch_size
IMG = 16         # video spatial size (in_chans = 3)
MEL = 16         # audio "mel" bins (conv in_chans = 1)
T_AUD = 16       # audio time steps
DEPTH_A = 1      # blocks_a
DEPTH_V = 1      # blocks_v
DEPTH_U = 1      # blocks_u (12 - modality_specific_depth in the reference)

_EPS = 1e-5      # PyTorch LayerNorm default

# row indices into the packed (6, D) LayerNorm tables:
#   [norm1, norm1_a, norm1_v, norm2, norm2_a, norm2_v]
_LN_IDX = {'': (0, 3), '_a': (1, 4), '_v': (2, 5)}


# ----------------------------- kernel helpers -----------------------------
def _ln(x, w, b):
    # x: (M, D) f32; w, b: (1, D) f32
    mu = jnp.mean(x, axis=-1, keepdims=True)
    var = jnp.mean((x - mu) ** 2, axis=-1, keepdims=True)
    return (x - mu) * jax.lax.rsqrt(var + _EPS) * w + b


def _block(x2, bp, modality, num_heads, mask):
    """One transformer Block on a (B*N, D) token matrix.

    Per-batch attention isolation comes from the additive block-diagonal
    `mask` ((B*N, B*N), 0 within batch / -1e30 across), so all matmuls are
    single 2D MXU contractions over every batch element at once.
    """
    dim = x2.shape[-1]
    dh = dim // num_heads
    scale = dh ** -0.5
    i1, i2 = _LN_IDX[modality]
    ln_w, ln_b = bp['ln_w'], bp['ln_b']          # (6, D) each

    # --- attention branch (pre-LN) ---
    h = _ln(x2, ln_w[i1:i1 + 1, :], ln_b[i1:i1 + 1, :])
    hb = h.astype(jnp.bfloat16)

    attn = jnp.zeros_like(x2)
    for hd in range(num_heads):                  # static unroll, H = 4
        # per-head weights indexed on the leading (major) dim -> no lane slices
        q = jnp.dot(hb, bp['wq'][hd],
                    preferred_element_type=jnp.float32) + bp['bq'][hd:hd + 1, :]
        k = jnp.dot(hb, bp['wk'][hd],
                    preferred_element_type=jnp.float32) + bp['bk'][hd:hd + 1, :]
        v = jnp.dot(hb, bp['wv'][hd],
                    preferred_element_type=jnp.float32) + bp['bv'][hd:hd + 1, :]

        # scores over all batches at once; cross-batch entries masked out
        s = jax.lax.dot_general(
            q.astype(jnp.bfloat16), k.astype(jnp.bfloat16),
            (((1,), (1,)), ((), ())),
            preferred_element_type=jnp.float32) * scale + mask
        s = s - jnp.max(s, axis=-1, keepdims=True)
        e = jnp.exp(s)
        p_attn = e * pl.reciprocal(jnp.sum(e, axis=-1, keepdims=True),
                                   approx=True)

        o = jnp.dot(p_attn.astype(jnp.bfloat16), v.astype(jnp.bfloat16),
                    preferred_element_type=jnp.float32)
        # output projection accumulated per head -> no lane-axis concat
        attn = attn + jnp.dot(o.astype(jnp.bfloat16), bp['wproj'][hd],
                              preferred_element_type=jnp.float32)

    x2 = x2 + attn + bp['bproj']                 # drop_path = Identity

    # --- MLP branch (pre-LN) ---
    h2 = _ln(x2, ln_w[i2:i2 + 1, :], ln_b[i2:i2 + 1, :])
    m = jnp.dot(h2.astype(jnp.bfloat16), bp['fc1_w'],
                preferred_element_type=jnp.float32) + bp['fc1_b']
    # exact GELU (matches nn.GELU default), kept in f32
    m = 0.5 * m * (1.0 + jax.lax.erf(m * (1.0 / np.sqrt(2.0))))
    m = jnp.dot(m.astype(jnp.bfloat16), bp['fc2_w'],
                preferred_element_type=jnp.float32) + bp['fc2_b']
    return x2 + m


# ----------------------------- fused kernel -------------------------------
def fused_encoder_kernel(*refs, treedef, num_heads, batch, n_a, n_v):
    n_out = 3
    a_ref, v_ref = refs[0], refs[1]
    param_refs = refs[2:-n_out]
    x_out, ca_out, cv_out = refs[-n_out:]

    # All parameters live in VMEM; read once and rebuild the pytree.
    p = jax.tree_util.tree_unflatten(treedef, [r[...] for r in param_refs])

    def embed(patch_ref, w, b, posmod):
        t = jnp.dot(patch_ref[...].astype(jnp.bfloat16), w,
                    preferred_element_type=jnp.float32) + b
        # tile (N, D) pos+modality table over batch inside the kernel
        return t + jnp.concatenate([posmod] * batch, axis=0)

    a_tok = embed(a_ref, p['pe_a_w'], p['pe_a_b'], p['posmod_a'])   # (B*Na, D)
    v_tok = embed(v_ref, p['pe_v_w'], p['pe_v_b'], p['posmod_v'])   # (B*Nv, D)

    for bp in p['blocks_a']:
        a_tok = _block(a_tok, bp, '', num_heads, p['mask_a'])
    for bp in p['blocks_v']:
        v_tok = _block(v_tok, bp, '', num_heads, p['mask_v'])

    # concat along the token dim per batch element: rows ordered as
    # [b0: a-tokens, v-tokens, b1: a-tokens, v-tokens]  ==  (B, Na+Nv, D)
    parts = []
    for b in range(batch):
        parts.append(a_tok[b * n_a:(b + 1) * n_a, :])
        parts.append(v_tok[b * n_v:(b + 1) * n_v, :])
    x2 = jnp.concatenate(parts, axis=0)

    for bp in p['blocks_u']:
        x2 = _block(x2, bp, '', num_heads, p['mask_u'])
    x2 = _ln(x2, p['fn_w'][0:1, :], p['fn_b'][0:1, :])
    x_out[...] = x2.astype(x_out.dtype)

    # NB: the reference re-applies each u-block to the ORIGINAL a/v tokens
    # (it does not chain ca/cv).  Kept as-is to preserve semantics.
    ca = a_tok   # fallback if DEPTH_U == 0 (reference would NameError)
    for bp in p['blocks_u']:
        ca = _block(a_tok, bp, '_a', num_heads, p['mask_a'])
    ca = _ln(ca, p['fn_w'][1:2, :], p['fn_b'][1:2, :])
    ca_out[...] = ca.astype(ca_out.dtype)

    cv = v_tok
    for bp in p['blocks_u']:
        cv = _block(v_tok, bp, '_v', num_heads, p['mask_v'])
    cv = _ln(cv, p['fn_w'][2:3, :], p['fn_b'][2:3, :])
    cv_out[...] = cv.astype(cv_out.dtype)


# ------------------------------ glue --------------------------------------
def patchify_nchw(x, p):
    # NCHW -> (B, num_patches, C*p*p), matching Conv2d(kernel=stride=p)
    Bb, C, H, W = x.shape
    gh, gw = H // p, W // p
    x = x.reshape(Bb, C, gh, p, gw, p)
    x = x.transpose(0, 2, 4, 1, 3, 5)
    return x.reshape(Bb, gh * gw, C * p * p)


def _get_1d_sincos(embed_dim, pos):
    omega = np.arange(embed_dim // 2, dtype=np.float64) / (embed_dim / 2.0)
    omega = 1.0 / 10000 ** omega
    out = np.einsum('m,d->md', pos.reshape(-1), omega)
    return np.concatenate([np.sin(out), np.cos(out)], axis=1)


def get_2d_sincos_pos_embed(embed_dim, grid_h, grid_w):
    gh = np.arange(grid_h, dtype=np.float64)
    gw = np.arange(grid_w, dtype=np.float64)
    grid = np.meshgrid(gw, gh)               # w first (MAE convention)
    grid = np.stack(grid, axis=0).reshape(2, -1)
    emb_h = _get_1d_sincos(embed_dim // 2, grid[0])
    emb_w = _get_1d_sincos(embed_dim // 2, grid[1])
    return np.concatenate([emb_h, emb_w], axis=1).astype(np.float32)


def make_attn_mask(batch, n_tok):
    # block-diagonal additive mask: 0 within a batch element, -1e30 across
    ids = np.repeat(np.arange(batch), n_tok)
    same = ids[:, None] == ids[None, :]
    return jnp.asarray(np.where(same, 0.0, -1e30).astype(np.float32))


# ------------------------------ params -------------------------------------
def make_block_params(key):
    h_mlp = D * MLP_RATIO
    dh = D // NUM_HEADS
    ks = jax.random.split(key, 6)
    bp = {}
    # packed LayerNorm tables: rows [n1, n1_a, n1_v, n2, n2_a, n2_v]
    bp['ln_w'] = jnp.ones((6, D), jnp.float32)
    bp['ln_b'] = jnp.zeros((6, D), jnp.float32)
    # per-head q/k/v weights (H, D, dh), biases (H, dh); proj split per head
    bp['wq'] = (jax.random.normal(ks[0], (NUM_HEADS, D, dh)) * 0.02).astype(jnp.bfloat16)
    bp['wk'] = (jax.random.normal(ks[1], (NUM_HEADS, D, dh)) * 0.02).astype(jnp.bfloat16)
    bp['wv'] = (jax.random.normal(ks[2], (NUM_HEADS, D, dh)) * 0.02).astype(jnp.bfloat16)
    bp['bq'] = jnp.zeros((NUM_HEADS, dh), jnp.float32)   # qkv_bias=True
    bp['bk'] = jnp.zeros((NUM_HEADS, dh), jnp.float32)
    bp['bv'] = jnp.zeros((NUM_HEADS, dh), jnp.float32)
    bp['wproj'] = (jax.random.normal(ks[3], (NUM_HEADS, dh, D)) * 0.02).astype(jnp.bfloat16)
    bp['bproj'] = jnp.zeros((1, D), jnp.float32)
    bp['fc1_w'] = (jax.random.normal(ks[4], (D, h_mlp)) * 0.02).astype(jnp.bfloat16)
    bp['fc1_b'] = jnp.zeros((1, h_mlp), jnp.float32)
    bp['fc2_w'] = (jax.random.normal(ks[5], (h_mlp, D)) * 0.02).astype(jnp.bfloat16)
    bp['fc2_b'] = jnp.zeros((1, D), jnp.float32)
    return bp


def make_params(key):
    ks = jax.random.split(key, 8)
    p = {}
    p['pe_a_w'] = (jax.random.normal(ks[0], (1 * PATCH * PATCH, D)) * 0.02).astype(jnp.bfloat16)
    p['pe_a_b'] = jnp.zeros((1, D), jnp.float32)
    p['pe_v_w'] = (jax.random.normal(ks[1], (3 * PATCH * PATCH, D)) * 0.02).astype(jnp.bfloat16)
    p['pe_v_b'] = jnp.zeros((1, D), jnp.float32)
    pos_a = jnp.asarray(get_2d_sincos_pos_embed(D, MEL // PATCH, T_AUD // PATCH))
    pos_v = jnp.asarray(get_2d_sincos_pos_embed(D, IMG // PATCH, IMG // PATCH))
    mod_a = jax.random.normal(ks[2], (1, D)) * 0.02
    mod_v = jax.random.normal(ks[3], (1, D)) * 0.02
    p['posmod_a'] = (pos_a + mod_a).astype(jnp.float32)      # (Na, D)
    p['posmod_v'] = (pos_v + mod_v).astype(jnp.float32)      # (Nv, D)
    p['blocks_a'] = [make_block_params(k) for k in jax.random.split(ks[4], DEPTH_A)]
    p['blocks_v'] = [make_block_params(k) for k in jax.random.split(ks[5], DEPTH_V)]
    p['blocks_u'] = [make_block_params(k) for k in jax.random.split(ks[6], DEPTH_U)]
    # packed final norms: rows [norm, norm_a, norm_v]
    p['fn_w'] = jnp.ones((3, D), jnp.float32)
    p['fn_b'] = jnp.zeros((3, D), jnp.float32)
    return p


# ------------------------------ wrapper ------------------------------------
def _full_spec(arr):
    nd = arr.ndim
    return pl.BlockSpec(arr.shape, lambda i, nd=nd: (0,) * nd)


def forward_encoder(a, v, params):
    """PJE.forward_encoder: a (B, T, M), v (B, 3, IMG, IMG) -- one fused kernel."""
    Bb = a.shape[0]
    # audio: unsqueeze(1) then transpose(2,3) -> (B, 1, M, T) NCHW
    a4 = jnp.transpose(a[:, None, :, :], (0, 1, 3, 2))
    pa = patchify_nchw(a4, PATCH)                      # (B, Na, p*p)
    pv = patchify_nchw(v, PATCH)                       # (B, Nv, 3*p*p)
    _, n_a, p_a = pa.shape
    _, n_v, p_v = pv.shape
    a2 = pa.reshape(Bb * n_a, p_a)
    v2 = pv.reshape(Bb * n_v, p_v)

    kparams = dict(params)                             # shallow copy
    kparams['mask_a'] = make_attn_mask(Bb, n_a)
    kparams['mask_v'] = make_attn_mask(Bb, n_v)
    kparams['mask_u'] = make_attn_mask(Bb, n_a + n_v)

    leaves, treedef = jax.tree_util.tree_flatten(kparams)
    inputs = [a2, v2] + leaves

    out_shape = (
        jax.ShapeDtypeStruct((Bb * (n_a + n_v), D), jnp.float32),   # x
        jax.ShapeDtypeStruct((Bb * n_a, D), jnp.float32),           # ca
        jax.ShapeDtypeStruct((Bb * n_v, D), jnp.float32),           # cv
    )
    in_specs = [_full_spec(x) for x in inputs]
    out_specs = tuple(
        pl.BlockSpec(s.shape, lambda i: (0, 0)) for s in out_shape)

    kern = functools.partial(
        fused_encoder_kernel, treedef=treedef, num_heads=NUM_HEADS,
        batch=Bb, n_a=n_a, n_v=n_v)

    x, ca, cv = pl.pallas_call(
        kern,
        out_shape=out_shape,
        grid=(1,),
        in_specs=in_specs,
        out_specs=out_specs,
        compiler_params=pltpu.CompilerParams(
            dimension_semantics=("arbitrary",)),
    )(*inputs)

    # TODO(synk): reference ends with `x = bank(x)` which builds a stateful
    # randn memory bank (and is constructed with a tensor size); skipped here.
    return (x.reshape(Bb, n_a + n_v, D),
            ca.reshape(Bb, n_a, D),
            cv.reshape(Bb, n_v, D))


def multimodal_classifier_forward(a, v, params):
    # MultimodalClassifier.forward depends on an undefined global `mode` and on
    # torch.load()'d checkpoints; we implement the train path:
    #   train_forward -> PJE.forward_encoder(a, v)
    # TODO(synk): 'finetune' / 'pretrain' branches require checkpoint weights and
    # undefined attributes (self.fc, ids_restore_*); not implemented.
    return forward_encoder(a, v, params)


# ------------------------------- main --------------------------------------
if __name__ == "__main__":
    root = jax.random.PRNGKey(0)
    k_param, k_a, k_v = jax.random.split(root, 3)
    params = make_params(k_param)

    a = jax.random.normal(k_a, (B, T_AUD, MEL), dtype=jnp.float32)       # audio
    v = jax.random.normal(k_v, (B, 3, IMG, IMG), dtype=jnp.float32)      # video NCHW

    x, ca, cv = multimodal_classifier_forward(a, v, params)
    jax.block_until_ready((x, ca, cv))
    assert bool(jnp.isfinite(x).all() & jnp.isfinite(ca).all() & jnp.isfinite(cv).all())
    print("KERNEL_OK")
</pallas_src>

<mosaic_0001>
module attributes {stable_mosaic.version = 11 : i64} {
  func.func @fused_encoder_kernel(%arg0: i32, %arg1: memref<8x64xf32, #tpu.memory_space<vmem>>, %arg2: memref<8x192xf32, #tpu.memory_space<vmem>>, %arg3: memref<4x8xf32, #tpu.memory_space<vmem>>, %arg4: memref<1x32xf32, #tpu.memory_space<vmem>>, %arg5: memref<4x8xf32, #tpu.memory_space<vmem>>, %arg6: memref<4x8xf32, #tpu.memory_space<vmem>>, %arg7: memref<1x128xf32, #tpu.memory_space<vmem>>, %arg8: memref<32x128xbf16, #tpu.memory_space<vmem>>, %arg9: memref<1x32xf32, #tpu.memory_space<vmem>>, %arg10: memref<128x32xbf16, #tpu.memory_space<vmem>>, %arg11: memref<6x32xf32, #tpu.memory_space<vmem>>, %arg12: memref<6x32xf32, #tpu.memory_space<vmem>>, %arg13: memref<4x32x8xbf16, #tpu.memory_space<vmem>>, %arg14: memref<4x8x32xbf16, #tpu.memory_space<vmem>>, %arg15: memref<4x32x8xbf16, #tpu.memory_space<vmem>>, %arg16: memref<4x32x8xbf16, #tpu.memory_space<vmem>>, %arg17: memref<4x8xf32, #tpu.memory_space<vmem>>, %arg18: memref<1x32xf32, #tpu.memory_space<vmem>>, %arg19: memref<4x8xf32, #tpu.memory_space<vmem>>, %arg20: memref<4x8xf32, #tpu.memory_space<vmem>>, %arg21: memref<1x128xf32, #tpu.memory_space<vmem>>, %arg22: memref<32x128xbf16, #tpu.memory_space<vmem>>, %arg23: memref<1x32xf32, #tpu.memory_space<vmem>>, %arg24: memref<128x32xbf16, #tpu.memory_space<vmem>>, %arg25: memref<6x32xf32, #tpu.memory_space<vmem>>, %arg26: memref<6x32xf32, #tpu.memory_space<vmem>>, %arg27: memref<4x32x8xbf16, #tpu.memory_space<vmem>>, %arg28: memref<4x8x32xbf16, #tpu.memory_space<vmem>>, %arg29: memref<4x32x8xbf16, #tpu.memory_space<vmem>>, %arg30: memref<4x32x8xbf16, #tpu.memory_space<vmem>>, %arg31: memref<4x8xf32, #tpu.memory_space<vmem>>, %arg32: memref<1x32xf32, #tpu.memory_space<vmem>>, %arg33: memref<4x8xf32, #tpu.memory_space<vmem>>, %arg34: memref<4x8xf32, #tpu.memory_space<vmem>>, %arg35: memref<1x128xf32, #tpu.memory_space<vmem>>, %arg36: memref<32x128xbf16, #tpu.memory_space<vmem>>, %arg37: memref<1x32xf32, #tpu.memory_space<vmem>>, %arg38: memref<128x32xbf16, #tpu.memory_space<vmem>>, %arg39: memref<6x32xf32, #tpu.memory_space<vmem>>, %arg40: memref<6x32xf32, #tpu.memory_space<vmem>>, %arg41: memref<4x32x8xbf16, #tpu.memory_space<vmem>>, %arg42: memref<4x8x32xbf16, #tpu.memory_space<vmem>>, %arg43: memref<4x32x8xbf16, #tpu.memory_space<vmem>>, %arg44: memref<4x32x8xbf16, #tpu.memory_space<vmem>>, %arg45: memref<3x32xf32, #tpu.memory_space<vmem>>, %arg46: memref<3x32xf32, #tpu.memory_space<vmem>>, %arg47: memref<8x8xf32, #tpu.memory_space<vmem>>, %arg48: memref<16x16xf32, #tpu.memory_space<vmem>>, %arg49: memref<8x8xf32, #tpu.memory_space<vmem>>, %arg50: memref<1x32xf32, #tpu.memory_space<vmem>>, %arg51: memref<64x32xbf16, #tpu.memory_space<vmem>>, %arg52: memref<1x32xf32, #tpu.memory_space<vmem>>, %arg53: memref<192x32xbf16, #tpu.memory_space<vmem>>, %arg54: memref<4x32xf32, #tpu.memory_space<vmem>>, %arg55: memref<4x32xf32, #tpu.memory_space<vmem>>, %arg56: memref<16x32xf32, #tpu.memory_space<vmem>>, %arg57: memref<8x32xf32, #tpu.memory_space<vmem>>, %arg58: memref<8x32xf32, #tpu.memory_space<vmem>>) attributes {dimension_semantics = [#tpu.dimension_semantics<arbitrary>], iteration_bounds = array<i64: 1>, scalar_prefetch = 0 : i64, scratch_operands = 0 : i64, tpu.core_type = #tpu.core_type<tc>, window_params = [{pipeline_mode = #tpu.pipeline_mode<synchronous>, transform_indices = @transform_0, window_bounds = array<i64: 8, 64>}, {pipeline_mode = #tpu.pipeline_mode<synchronous>, transform_indices = @transform_1, window_bounds = array<i64: 8, 192>}, {pipeline_mode = #tpu.pipeline_mode<synchronous>, transform_indices = @transform_2, window_bounds = array<i64: 4, 8>}, {pipeline_mode = #tpu.pipeline_mode<synchronous>, transform_indices = @transform_3, window_bounds = array<i64: 1, 32>}, {pipeline_mode = #tpu.pipeline_mode<synchronous>, transform_indices = @transform_4, window_bounds = array<i64: 4, 8>}, {pipeline_mode = #tpu.pipeline_mode<synchronous>, transform_indices = @transform_5, window_bounds = array<i64: 4, 8>}, {pipeline_mode = #tpu.pipeline_mode<synchronous>, transform_indices = @transform_6, window_bounds = array<i64: 1, 128>}, {pipeline_mode = #tpu.pipeline_mode<synchronous>, transform_indices = @transform_7, window_bounds = array<i64: 32, 128>}, {pipeline_mode = #tpu.pipeline_mode<synchronous>, transform_indices = @transform_8, window_bounds = array<i64: 1, 32>}, {pipeline_mode = #tpu.pipeline_mode<synchronous>, transform_indices = @transform_9, window_bounds = array<i64: 128, 32>}, {pipeline_mode = #tpu.pipeline_mode<synchronous>, transform_indices = @transform_10, window_bounds = array<i64: 6, 32>}, {pipeline_mode = #tpu.pipeline_mode<synchronous>, transform_indices = @transform_11, window_bounds = array<i64: 6, 32>}, {pipeline_mode = #tpu.pipeline_mode<synchronous>, transform_indices = @transform_12, window_bounds = array<i64: 4, 32, 8>}, {pipeline_mode = #tpu.pipeline_mode<synchronous>, transform_indices = @transform_13, window_bounds = array<i64: 4, 8, 32>}, {pipeline_mode = #tpu.pipeline_mode<synchronous>, transform_indices = @transform_14, window_bounds = array<i64: 4, 32, 8>}, {pipeline_mode = #tpu.pipeline_mode<synchronous>, transform_indices = @transform_15, window_bounds = array<i64: 4, 32, 8>}, {pipeline_mode = #tpu.pipeline_mode<synchronous>, transform_indices = @transform_16, window_bounds = array<i64: 4, 8>}, {pipeline_mode = #tpu.pipeline_mode<synchronous>, transform_indices = @transform_17, window_bounds = array<i64: 1, 32>}, {pipeline_mode = #tpu.pipeline_mode<synchronous>, transform_indices = @transform_18, window_bounds = array<i64: 4, 8>}, {pipeline_mode = #tpu.pipeline_mode<synchronous>, transform_indices = @transform_19, window_bounds = array<i64: 4, 8>}, {pipeline_mode = #tpu.pipeline_mode<synchronous>, transform_indices = @transform_20, window_bounds = array<i64: 1, 128>}, {pipeline_mode = #tpu.pipeline_mode<synchronous>, transform_indices = @transform_21, window_bounds = array<i64: 32, 128>}, {pipeline_mode = #tpu.pipeline_mode<synchronous>, transform_indices = @transform_22, window_bounds = array<i64: 1, 32>}, {pipeline_mode = #tpu.pipeline_mode<synchronous>, transform_indices = @transform_23, window_bounds = array<i64: 128, 32>}, {pipeline_mode = #tpu.pipeline_mode<synchronous>, transform_indices = @transform_24, window_bounds = array<i64: 6, 32>}, {pipeline_mode = #tpu.pipeline_mode<synchronous>, transform_indices = @transform_25, window_bounds = array<i64: 6, 32>}, {pipeline_mode = #tpu.pipeline_mode<synchronous>, transform_indices = @transform_26, window_bounds = array<i64: 4, 32, 8>}, {pipeline_mode = #tpu.pipeline_mode<synchronous>, transform_indices = @transform_27, window_bounds = array<i64: 4, 8, 32>}, {pipeline_mode = #tpu.pipeline_mode<synchronous>, transform_indices = @transform_28, window_bounds = array<i64: 4, 32, 8>}, {pipeline_mode = #tpu.pipeline_mode<synchronous>, transform_indices = @transform_29, window_bounds = array<i64: 4, 32, 8>}, {pipeline_mode = #tpu.pipeline_mode<synchronous>, transform_indices = @transform_30, window_bounds = array<i64: 4, 8>}, {pipeline_mode = #tpu.pipeline_mode<synchronous>, transform_indices = @transform_31, window_bounds = array<i64: 1, 32>}, {pipeline_mode = #tpu.pipeline_mode<synchronous>, transform_indices = @transform_32, window_bounds = array<i64: 4, 8>}, {pipeline_mode = #tpu.pipeline_mode<synchronous>, transform_indices = @transform_33, window_bounds = array<i64: 4, 8>}, {pipeline_mode = #tpu.pipeline_mode<synchronous>, transform_indices = @transform_34, window_bounds = array<i64: 1, 128>}, {pipeline_mode = #tpu.pipeline_mode<synchronous>, transform_indices = @transform_35, window_bounds = array<i64: 32, 128>}, {pipeline_mode = #tpu.pipeline_mode<synchronous>, transform_indices = @transform_36, window_bounds = array<i64: 1, 32>}, {pipeline_mode = #tpu.pipeline_mode<synchronous>, transform_indices = @transform_37, window_bounds = array<i64: 128, 32>}, {pipeline_mode = #tpu.pipeline_mode<synchronous>, transform_indices = @transform_38, window_bounds = array<i64: 6, 32>}, {pipeline_mode = #tpu.pipeline_mode<synchronous>, transform_indices = @transform_39, window_bounds = array<i64: 6, 32>}, {pipeline_mode = #tpu.pipeline_mode<synchronous>, transform_indices = @transform_40, window_bounds = array<i64: 4, 32, 8>}, {pipeline_mode = #tpu.pipeline_mode<synchronous>, transform_indices = @transform_41, window_bounds = array<i64: 4, 8, 32>}, {pipeline_mode = #tpu.pipeline_mode<synchronous>, transform_indices = @transform_42, window_bounds = array<i64: 4, 32, 8>}, {pipeline_mode = #tpu.pipeline_mode<synchronous>, transform_indices = @transform_43, window_bounds = array<i64: 4, 32, 8>}, {pipeline_mode = #tpu.pipeline_mode<synchronous>, transform_indices = @transform_44, window_bounds = array<i64: 3, 32>}, {pipeline_mode = #tpu.pipeline_mode<synchronous>, transform_indices = @transform_45, window_bounds = array<i64: 3, 32>}, {pipeline_mode = #tpu.pipeline_mode<synchronous>, transform_indices = @transform_46, window_bounds = array<i64: 8, 8>}, {pipeline_mode = #tpu.pipeline_mode<synchronous>, transform_indices = @transform_47, window_bounds = array<i64: 16, 16>}, {pipeline_mode = #tpu.pipeline_mode<synchronous>, transform_indices = @transform_48, window_bounds = array<i64: 8, 8>}, {pipeline_mode = #tpu.pipeline_mode<synchronous>, transform_indices = @transform_49, window_bounds = array<i64: 1, 32>}, {pipeline_mode = #tpu.pipeline_mode<synchronous>, transform_indices = @transform_50, window_bounds = array<i64: 64, 32>}, {pipeline_mode = #tpu.pipeline_mode<synchronous>, transform_indices = @transform_51, window_bounds = array<i64: 1, 32>}, {pipeline_mode = #tpu.pipeline_mode<synchronous>, transform_indices = @transform_52, window_bounds = array<i64: 192, 32>}, {pipeline_mode = #tpu.pipeline_mode<synchronous>, transform_indices = @transform_53, window_bounds = array<i64: 4, 32>}, {pipeline_mode = #tpu.pipeline_mode<synchronous>, transform_indices = @transform_54, window_bounds = array<i64: 4, 32>}, {pipeline_mode = #tpu.pipeline_mode<synchronous>, transform_indices = @transform_55, window_bounds = array<i64: 16, 32>}, {pipeline_mode = #tpu.pipeline_mode<synchronous>, transform_indices = @transform_56, window_bounds = array<i64: 8, 32>}, {pipeline_mode = #tpu.pipeline_mode<synchronous>, transform_indices = @transform_57, window_bounds = array<i64: 8, 32>}]} {
    %c0 = arith.constant 0 : index
    %c0_0 = arith.constant 0 : index
    %0 = vector.load %arg3[%c0, %c0_0] : memref<4x8xf32, #tpu.memory_space<vmem>>, vector<4x8xf32>
    %c0_1 = arith.constant 0 : index
    %c0_2 = arith.constant 0 : index
    %1 = vector.load %arg4[%c0_1, %c0_2] : memref<1x32xf32, #tpu.memory_space<vmem>>, vector<1x32xf32>
    %c0_3 = arith.constant 0 : index
    %c0_4 = arith.constant 0 : index
    %2 = vector.load %arg5[%c0_3, %c0_4] : memref<4x8xf32, #tpu.memory_space<vmem>>, vector<4x8xf32>
    %c0_5 = arith.constant 0 : index
    %c0_6 = arith.constant 0 : index
    %3 = vector.load %arg6[%c0_5, %c0_6] : memref<4x8xf32, #tpu.memory_space<vmem>>, vector<4x8xf32>
    %c0_7 = arith.constant 0 : index
    %c0_8 = arith.constant 0 : index
    %4 = vector.load %arg7[%c0_7, %c0_8] : memref<1x128xf32, #tpu.memory_space<vmem>>, vector<1x128xf32>
    %c0_9 = arith.constant 0 : index
    %c0_10 = arith.constant 0 : index
    %5 = vector.load %arg8[%c0_9, %c0_10] : memref<32x128xbf16, #tpu.memory_space<vmem>>, vector<32x128xbf16>
    %c0_11 = arith.constant 0 : index
    %c0_12 = arith.constant 0 : index
    %6 = vector.load %arg9[%c0_11, %c0_12] : memref<1x32xf32, #tpu.memory_space<vmem>>, vector<1x32xf32>
    %c0_13 = arith.constant 0 : index
    %c0_14 = arith.constant 0 : index
    %7 = vector.load %arg10[%c0_13, %c0_14] : memref<128x32xbf16, #tpu.memory_space<vmem>>, vector<128x32xbf16>
    %c0_15 = arith.constant 0 : index
    %c0_16 = arith.constant 0 : index
    %8 = vector.load %arg11[%c0_15, %c0_16] : memref<6x32xf32, #tpu.memory_space<vmem>>, vector<6x32xf32>
    %c0_17 = arith.constant 0 : index
    %c0_18 = arith.constant 0 : index
    %9 = vector.load %arg12[%c0_17, %c0_18] : memref<6x32xf32, #tpu.memory_space<vmem>>, vector<6x32xf32>
    %c0_19 = arith.constant 0 : index
    %c0_20 = arith.constant 0 : index
    %c0_21 = arith.constant 0 : index
    %10 = vector.load %arg13[%c0_19, %c0_20, %c0_21] : memref<4x32x8xbf16, #tpu.memory_space<vmem>>, vector<4x32x8xbf16>
    %c0_22 = arith.constant 0 : index
    %c0_23 = arith.constant 0 : index
    %c0_24 = arith.constant 0 : index
    %11 = vector.load %arg14[%c0_22, %c0_23, %c0_24] : memref<4x8x32xbf16, #tpu.memory_space<vmem>>, vector<4x8x32xbf16>
    %c0_25 = arith.constant 0 : index
    %c0_26 = arith.constant 0 : index
    %c0_27 = arith.constant 0 : index
    %12 = vector.load %arg15[%c0_25, %c0_26, %c0_27] : memref<4x32x8xbf16, #tpu.memory_space<vmem>>, vector<4x32x8xbf16>
    %c0_28 = arith.constant 0 : index
    %c0_29 = arith.constant 0 : index
    %c0_30 = arith.constant 0 : index
    %13 = vector.load %arg16[%c0_28, %c0_29, %c0_30] : memref<4x32x8xbf16, #tpu.memory_space<vmem>>, vector<4x32x8xbf16>
    %c0_31 = arith.constant 0 : index
    %c0_32 = arith.constant 0 : index
    %14 = vector.load %arg17[%c0_31, %c0_32] : memref<4x8xf32, #tpu.memory_space<vmem>>, vector<4x8xf32>
    %c0_33 = arith.constant 0 : index
    %c0_34 = arith.constant 0 : index
    %15 = vector.load %arg18[%c0_33, %c0_34] : memref<1x32xf32, #tpu.memory_space<vmem>>, vector<1x32xf32>
    %c0_35 = arith.constant 0 : index
    %c0_36 = arith.constant 0 : index
    %16 = vector.load %arg19[%c0_35, %c0_36] : memref<4x8xf32, #tpu.memory_space<vmem>>, vector<4x8xf32>
    %c0_37 = arith.constant 0 : index
    %c0_38 = arith.constant 0 : index
    %17 = vector.load %arg20[%c0_37, %c0_38] : memref<4x8xf32, #tpu.memory_space<vmem>>, vector<4x8xf32>
    %c0_39 = arith.constant 0 : index
    %c0_40 = arith.constant 0 : index
    %18 = vector.load %arg21[%c0_39, %c0_40] : memref<1x128xf32, #tpu.memory_space<vmem>>, vector<1x128xf32>
    %c0_41 = arith.constant 0 : index
    %c0_42 = arith.constant 0 : index
    %19 = vector.load %arg22[%c0_41, %c0_42] : memref<32x128xbf16, #tpu.memory_space<vmem>>, vector<32x128xbf16>
    %c0_43 = arith.constant 0 : index
    %c0_44 = arith.constant 0 : index
    %20 = vector.load %arg23[%c0_43, %c0_44] : memref<1x32xf32, #tpu.memory_space<vmem>>, vector<1x32xf32>
    %c0_45 = arith.constant 0 : index
    %c0_46 = arith.constant 0 : index
    %21 = vector.load %arg24[%c0_45, %c0_46] : memref<128x32xbf16, #tpu.memory_space<vmem>>, vector<128x32xbf16>
    %c0_47 = arith.constant 0 : index
    %c0_48 = arith.constant 0 : index
    %22 = vector.load %arg25[%c0_47, %c0_48] : memref<6x32xf32, #tpu.memory_space<vmem>>, vector<6x32xf32>
    %c0_49 = arith.constant 0 : index
    %c0_50 = arith.constant 0 : index
    %23 = vector.load %arg26[%c0_49, %c0_50] : memref<6x32xf32, #tpu.memory_space<vmem>>, vector<6x32xf32>
    %c0_51 = arith.constant 0 : index
    %c0_52 = arith.constant 0 : index
    %c0_53 = arith.constant 0 : index
    %24 = vector.load %arg27[%c0_51, %c0_52, %c0_53] : memref<4x32x8xbf16, #tpu.memory_space<vmem>>, vector<4x32x8xbf16>
    %c0_54 = arith.constant 0 : index
    %c0_55 = arith.constant 0 : index
    %c0_56 = arith.constant 0 : index
    %25 = vector.load %arg28[%c0_54, %c0_55, %c0_56] : memref<4x8x32xbf16, #tpu.memory_space<vmem>>, vector<4x8x32xbf16>
    %c0_57 = arith.constant 0 : index
    %c0_58 = arith.constant 0 : index
    %c0_59 = arith.constant 0 : index
    %26 = vector.load %arg29[%c0_57, %c0_58, %c0_59] : memref<4x32x8xbf16, #tpu.memory_space<vmem>>, vector<4x32x8xbf16>
    %c0_60 = arith.constant 0 : index
    %c0_61 = arith.constant 0 : index
    %c0_62 = arith.constant 0 : index
    %27 = vector.load %arg30[%c0_60, %c0_61, %c0_62] : memref<4x32x8xbf16, #tpu.memory_space<vmem>>, vector<4x32x8xbf16>
    %c0_63 = arith.constant 0 : index
    %c0_64 = arith.constant 0 : index
    %28 = vector.load %arg31[%c0_63, %c0_64] : memref<4x8xf32, #tpu.memory_space<vmem>>, vector<4x8xf32>
    %c0_65 = arith.constant 0 : index
    %c0_66 = arith.constant 0 : index
    %29 = vector.load %arg32[%c0_65, %c0_66] : memref<1x32xf32, #tpu.memory_space<vmem>>, vector<1x32xf32>
    %c0_67 = arith.constant 0 : index
    %c0_68 = arith.constant 0 : index
    %30 = vector.load %arg33[%c0_67, %c0_68] : memref<4x8xf32, #tpu.memory_space<vmem>>, vector<4x8xf32>
    %c0_69 = arith.constant 0 : index
    %c0_70 = arith.constant 0 : index
    %31 = vector.load %arg34[%c0_69, %c0_70] : memref<4x8xf32, #tpu.memory_space<vmem>>, vector<4x8xf32>
    %c0_71 = arith.constant 0 : index
    %c0_72 = arith.constant 0 : index
    %32 = vector.load %arg35[%c0_71, %c0_72] : memref<1x128xf32, #tpu.memory_space<vmem>>, vector<1x128xf32>
    %c0_73 = arith.constant 0 : index
    %c0_74 = arith.constant 0 : index
    %33 = vector.load %arg36[%c0_73, %c0_74] : memref<32x128xbf16, #tpu.memory_space<vmem>>, vector<32x128xbf16>
    %c0_75 = arith.constant 0 : index
    %c0_76 = arith.constant 0 : index
    %34 = vector.load %arg37[%c0_75, %c0_76] : memref<1x32xf32, #tpu.memory_space<vmem>>, vector<1x32xf32>
    %c0_77 = arith.constant 0 : index
    %c0_78 = arith.constant 0 : index
    %35 = vector.load %arg38[%c0_77, %c0_78] : memref<128x32xbf16, #tpu.memory_space<vmem>>, vector<128x32xbf16>
    %c0_79 = arith.constant 0 : index
    %c0_80 = arith.constant 0 : index
    %36 = vector.load %arg39[%c0_79, %c0_80] : memref<6x32xf32, #tpu.memory_space<vmem>>, vector<6x32xf32>
    %c0_81 = arith.constant 0 : index
    %c0_82 = arith.constant 0 : index
    %37 = vector.load %arg40[%c0_81, %c0_82] : memref<6x32xf32, #tpu.memory_space<vmem>>, vector<6x32xf32>
    %c0_83 = arith.constant 0 : index
    %c0_84 = arith.constant 0 : index
    %c0_85 = arith.constant 0 : index
    %38 = vector.load %arg41[%c0_83, %c0_84, %c0_85] : memref<4x32x8xbf16, #tpu.memory_space<vmem>>, vector<4x32x8xbf16>
    %c0_86 = arith.constant 0 : index
    %c0_87 = arith.constant 0 : index
    %c0_88 = arith.constant 0 : index
    %39 = vector.load %arg42[%c0_86, %c0_87, %c0_88] : memref<4x8x32xbf16, #tpu.memory_space<vmem>>, vector<4x8x32xbf16>
    %c0_89 = arith.constant 0 : index
    %c0_90 = arith.constant 0 : index
    %c0_91 = arith.constant 0 : index
    %40 = vector.load %arg43[%c0_89, %c0_90, %c0_91] : memref<4x32x8xbf16, #tpu.memory_space<vmem>>, vector<4x32x8xbf16>
    %c0_92 = arith.constant 0 : index
    %c0_93 = arith.constant 0 : index
    %c0_94 = arith.constant 0 : index
    %41 = vector.load %arg44[%c0_92, %c0_93, %c0_94] : memref<4x32x8xbf16, #tpu.memory_space<vmem>>, vector<4x32x8xbf16>
    %c0_95 = arith.constant 0 : index
    %c0_96 = arith.constant 0 : index
    %42 = vector.load %arg45[%c0_95, %c0_96] : memref<3x32xf32, #tpu.memory_space<vmem>>, vector<3x32xf32>
    %c0_97 = arith.constant 0 : index
    %c0_98 = arith.constant 0 : index
    %43 = vector.load %arg46[%c0_97, %c0_98] : memref<3x32xf32, #tpu.memory_space<vmem>>, vector<3x32xf32>
    %c0_99 = arith.constant 0 : index
    %c0_100 = arith.constant 0 : index
    %44 = vector.load %arg47[%c0_99, %c0_100] : memref<8x8xf32, #tpu.memory_space<vmem>>, vector<8x8xf32>
    %c0_101 = arith.constant 0 : index
    %c0_102 = arith.constant 0 : index
    %45 = vector.load %arg48[%c0_101, %c0_102] : memref<16x16xf32, #tpu.memory_space<vmem>>, vector<16x16xf32>
    %c0_103 = arith.constant 0 : index
    %c0_104 = arith.constant 0 : index
    %46 = vector.load %arg49[%c0_103, %c0_104] : memref<8x8xf32, #tpu.memory_space<vmem>>, vector<8x8xf32>
    %c0_105 = arith.constant 0 : index
    %c0_106 = arith.constant 0 : index
    %47 = vector.load %arg50[%c0_105, %c0_106] : memref<1x32xf32, #tpu.memory_space<vmem>>, vector<1x32xf32>
    %c0_107 = arith.constant 0 : index
    %c0_108 = arith.constant 0 : index
    %48 = vector.load %arg51[%c0_107, %c0_108] : memref<64x32xbf16, #tpu.memory_space<vmem>>, vector<64x32xbf16>
    %c0_109 = arith.constant 0 : index
    %c0_110 = arith.constant 0 : index
    %49 = vector.load %arg52[%c0_109, %c0_110] : memref<1x32xf32, #tpu.memory_space<vmem>>, vector<1x32xf32>
    %c0_111 = arith.constant 0 : index
    %c0_112 = arith.constant 0 : index
    %50 = vector.load %arg53[%c0_111, %c0_112] : memref<192x32xbf16, #tpu.memory_space<vmem>>, vector<192x32xbf16>
    %c0_113 = arith.constant 0 : index
    %c0_114 = arith.constant 0 : index
    %51 = vector.load %arg54[%c0_113, %c0_114] : memref<4x32xf32, #tpu.memory_space<vmem>>, vector<4x32xf32>
    %c0_115 = arith.constant 0 : index
    %c0_116 = arith.constant 0 : index
    %52 = vector.load %arg55[%c0_115, %c0_116] : memref<4x32xf32, #tpu.memory_space<vmem>>, vector<4x32xf32>
    %c0_117 = arith.constant 0 : index
    %c0_118 = arith.constant 0 : index
    %53 = vector.load %arg1[%c0_117, %c0_118] : memref<8x64xf32, #tpu.memory_space<vmem>>, vector<8x64xf32>
    %54 = arith.truncf %53 : vector<8x64xf32> to vector<8x64xbf16>
    %cst = arith.constant dense<0.000000e+00> : vector<8x32xf32>
    %55 = tpu.matmul %54, %48, %cst {dimension_numbers = #tpu.dot_dimension_numbers<[1], [0], [0], [1], [0, 0, 1, 1], [], []>} : vector<8x64xbf16>, vector<64x32xbf16>, vector<8x32xf32> -> vector<8x32xf32>
    %56 = vector.broadcast %47 : vector<1x32xf32> to vector<8x32xf32>
    %57 = arith.addf %55, %56 : vector<8x32xf32>
    %58 = tpu.concatenate %51, %51 in 0 : vector<4x32xf32>, vector<4x32xf32> -> vector<8x32xf32>
    %59 = arith.addf %57, %58 : vector<8x32xf32>
    %c0_119 = arith.constant 0 : index
    %c0_120 = arith.constant 0 : index
    %60 = vector.load %arg2[%c0_119, %c0_120] : memref<8x192xf32, #tpu.memory_space<vmem>>, vector<8x192xf32>
    %61 = arith.truncf %60 : vector<8x192xf32> to vector<8x192xbf16>
    %cst_121 = arith.constant dense<0.000000e+00> : vector<8x32xf32>
    %62 = tpu.matmul %61, %50, %cst_121 {dimension_numbers = #tpu.dot_dimension_numbers<[1], [0], [0], [1], [0, 0, 1, 1], [], []>} : vector<8x192xbf16>, vector<192x32xbf16>, vector<8x32xf32> -> vector<8x32xf32>
    %63 = vector.broadcast %49 : vector<1x32xf32> to vector<8x32xf32>
    %64 = arith.addf %62, %63 : vector<8x32xf32>
    %65 = tpu.concatenate %52, %52 in 0 : vector<4x32xf32>, vector<4x32xf32> -> vector<8x32xf32>
    %66 = arith.addf %64, %65 : vector<8x32xf32>
    %67 = vector.extract_strided_slice %9 {offsets = [0, 0], sizes = [1, 32], strides = [1, 1]} : vector<6x32xf32> to vector<1x32xf32>
    %68 = vector.extract_strided_slice %8 {offsets = [0, 0], sizes = [1, 32], strides = [1, 1]} : vector<6x32xf32> to vector<1x32xf32>
    %cst_122 = arith.constant dense<0.000000e+00> : vector<8xf32>
    %69 = vector.multi_reduction <add>, %59, %cst_122 [1] : vector<8x32xf32> to vector<8xf32>
    %70 = vector.shape_cast %69 : vector<8xf32> to vector<8x1xf32>
    %cst_123 = arith.constant 3.200000e+01 : f32
    %71 = vector.broadcast %cst_123 : f32 to vector<8x1xf32>
    %72 = arith.divf %70, %71 : vector<8x1xf32>
    %73 = vector.broadcast %72 : vector<8x1xf32> to vector<8x32xf32>
    %74 = arith.subf %59, %73 : vector<8x32xf32>
    %75 = arith.mulf %74, %74 : vector<8x32xf32>
    %cst_124 = arith.constant dense<0.000000e+00> : vector<8xf32>
    %76 = vector.multi_reduction <add>, %75, %cst_124 [1] : vector<8x32xf32> to vector<8xf32>
    %77 = vector.shape_cast %76 : vector<8xf32> to vector<8x1xf32>
    %cst_125 = arith.constant 3.200000e+01 : f32
    %78 = vector.broadcast %cst_125 : f32 to vector<8x1xf32>
    %79 = arith.divf %77, %78 : vector<8x1xf32>
    %80 = vector.broadcast %72 : vector<8x1xf32> to vector<8x32xf32>
    %81 = arith.subf %59, %80 : vector<8x32xf32>
    %cst_126 = arith.constant 9.99999974E-6 : f32
    %82 = vector.broadcast %cst_126 : f32 to vector<8x1xf32>
    %83 = arith.addf %79, %82 : vector<8x1xf32>
    %84 = math.rsqrt %83 : vector<8x1xf32>
    %85 = vector.broadcast %84 : vector<8x1xf32> to vector<8x32xf32>
    %86 = arith.mulf %81, %85 : vector<8x32xf32>
    %87 = vector.broadcast %67 : vector<1x32xf32> to vector<8x32xf32>
    %88 = arith.mulf %86, %87 : vector<8x32xf32>
    %89 = vector.broadcast %68 : vector<1x32xf32> to vector<8x32xf32>
    %90 = arith.addf %88, %89 : vector<8x32xf32>
    %91 = arith.truncf %90 : vector<8x32xf32> to vector<8x32xbf16>
    %cst_127 = arith.constant 0.000000e+00 : f32
    %92 = vector.broadcast %cst_127 : f32 to vector<8x32xf32>
    %93 = vector.extract_strided_slice %12 {offsets = [0, 0, 0], sizes = [1, 32, 8], strides = [1, 1, 1]} : vector<4x32x8xbf16> to vector<1x32x8xbf16>
    %94 = vector.shape_cast %93 : vector<1x32x8xbf16> to vector<32x8xbf16>
    %cst_128 = arith.constant dense<0.000000e+00> : vector<8x8xf32>
    %95 = tpu.matmul %91, %94, %cst_128 {dimension_numbers = #tpu.dot_dimension_numbers<[1], [0], [0], [1], [0, 0, 1, 1], [], []>} : vector<8x32xbf16>, vector<32x8xbf16>, vector<8x8xf32> -> vector<8x8xf32>
    %96 = vector.extract_strided_slice %2 {offsets = [0, 0], sizes = [1, 8], strides = [1, 1]} : vector<4x8xf32> to vector<1x8xf32>
    %97 = vector.broadcast %96 : vector<1x8xf32> to vector<8x8xf32>
    %98 = arith.addf %95, %97 : vector<8x8xf32>
    %99 = vector.extract_strided_slice %10 {offsets = [0, 0, 0], sizes = [1, 32, 8], strides = [1, 1, 1]} : vector<4x32x8xbf16> to vector<1x32x8xbf16>
    %100 = vector.shape_cast %99 : vector<1x32x8xbf16> to vector<32x8xbf16>
    %cst_129 = arith.constant dense<0.000000e+00> : vector<8x8xf32>
    %101 = tpu.matmul %91, %100, %cst_129 {dimension_numbers = #tpu.dot_dimension_numbers<[1], [0], [0], [1], [0, 0, 1, 1], [], []>} : vector<8x32xbf16>, vector<32x8xbf16>, vector<8x8xf32> -> vector<8x8xf32>
    %102 = vector.extract_strided_slice %0 {offsets = [0, 0], sizes = [1, 8], strides = [1, 1]} : vector<4x8xf32> to vector<1x8xf32>
    %103 = vector.broadcast %102 : vector<1x8xf32> to vector<8x8xf32>
    %104 = arith.addf %101, %103 : vector<8x8xf32>
    %105 = vector.extract_strided_slice %13 {offsets = [0, 0, 0], sizes = [1, 32, 8], strides = [1, 1, 1]} : vector<4x32x8xbf16> to vector<1x32x8xbf16>
    %106 = vector.shape_cast %105 : vector<1x32x8xbf16> to vector<32x8xbf16>
    %cst_130 = arith.constant dense<0.000000e+00> : vector<8x8xf32>
    %107 = tpu.matmul %91, %106, %cst_130 {dimension_numbers = #tpu.dot_dimension_numbers<[1], [0], [0], [1], [0, 0, 1, 1], [], []>} : vector<8x32xbf16>, vector<32x8xbf16>, vector<8x8xf32> -> vector<8x8xf32>
    %108 = vector.extract_strided_slice %3 {offsets = [0, 0], sizes = [1, 8], strides = [1, 1]} : vector<4x8xf32> to vector<1x8xf32>
    %109 = vector.broadcast %108 : vector<1x8xf32> to vector<8x8xf32>
    %110 = arith.addf %107, %109 : vector<8x8xf32>
    %111 = arith.truncf %98 : vector<8x8xf32> to vector<8x8xbf16>
    %112 = arith.truncf %104 : vector<8x8xf32> to vector<8x8xbf16>
    %cst_131 = arith.constant dense<0.000000e+00> : vector<8x8xf32>
    %113 = tpu.matmul %111, %112, %cst_131 {dimension_numbers = #tpu.dot_dimension_numbers<[1], [1], [0], [0], [0, 0, 1, 0], [], []>} : vector<8x8xbf16>, vector<8x8xbf16>, vector<8x8xf32> -> vector<8x8xf32>
    %cst_132 = arith.constant 0.353553385 : f32
    %114 = vector.broadcast %cst_132 : f32 to vector<8x8xf32>
    %115 = arith.mulf %113, %114 : vector<8x8xf32>
    %116 = arith.addf %115, %44 : vector<8x8xf32>
    %cst_133 = arith.constant dense<0xFF800000> : vector<8xf32>
    %117 = vector.multi_reduction <maximumf>, %116, %cst_133 [1] : vector<8x8xf32> to vector<8xf32>
    %118 = vector.shape_cast %117 : vector<8xf32> to vector<8x1xf32>
    %119 = vector.broadcast %118 : vector<8x1xf32> to vector<8x8xf32>
    %120 = arith.subf %116, %119 : vector<8x8xf32>
    %121 = math.exp %120 : vector<8x8xf32>
    %cst_134 = arith.constant dense<0.000000e+00> : vector<8xf32>
    %122 = vector.multi_reduction <add>, %121, %cst_134 [1] : vector<8x8xf32> to vector<8xf32>
    %123 = vector.shape_cast %122 : vector<8xf32> to vector<8x1xf32>
    %124 = tpu.reciprocal %123 {approx = true} : vector<8x1xf32> -> vector<8x1xf32>
    %125 = vector.broadcast %124 : vector<8x1xf32> to vector<8x8xf32>
    %126 = arith.mulf %121, %125 : vector<8x8xf32>
    %127 = arith.truncf %126 : vector<8x8xf32> to vector<8x8xbf16>
    %128 = arith.truncf %110 : vector<8x8xf32> to vector<8x8xbf16>
    %cst_135 = arith.constant dense<0.000000e+00> : vector<8x8xf32>
    %129 = tpu.matmul %127, %128, %cst_135 {dimension_numbers = #tpu.dot_dimension_numbers<[1], [0], [0], [1], [0, 0, 1, 1], [], []>} : vector<8x8xbf16>, vector<8x8xbf16>, vector<8x8xf32> -> vector<8x8xf32>
    %130 = arith.truncf %129 : vector<8x8xf32> to vector<8x8xbf16>
    %131 = vector.extract_strided_slice %11 {offsets = [0, 0, 0], sizes = [1, 8, 32], strides = [1, 1, 1]} : vector<4x8x32xbf16> to vector<1x8x32xbf16>
    %132 = vector.shape_cast %131 : vector<1x8x32xbf16> to vector<8x32xbf16>
    %cst_136 = arith.constant dense<0.000000e+00> : vector<8x32xf32>
    %133 = tpu.matmul %130, %132, %cst_136 {dimension_numbers = #tpu.dot_dimension_numbers<[1], [0], [0], [1], [0, 0, 1, 1], [], []>} : vector<8x8xbf16>, vector<8x32xbf16>, vector<8x32xf32> -> vector<8x32xf32>
    %134 = arith.addf %92, %133 : vector<8x32xf32>
    %135 = vector.extract_strided_slice %12 {offsets = [1, 0, 0], sizes = [1, 32, 8], strides = [1, 1, 1]} : vector<4x32x8xbf16> to vector<1x32x8xbf16>
    %136 = vector.shape_cast %135 : vector<1x32x8xbf16> to vector<32x8xbf16>
    %cst_137 = arith.constant dense<0.000000e+00> : vector<8x8xf32>
    %137 = tpu.matmul %91, %136, %cst_137 {dimension_numbers = #tpu.dot_dimension_numbers<[1], [0], [0], [1], [0, 0, 1, 1], [], []>} : vector<8x32xbf16>, vector<32x8xbf16>, vector<8x8xf32> -> vector<8x8xf32>
    %138 = vector.extract_strided_slice %2 {offsets = [1, 0], sizes = [1, 8], strides = [1, 1]} : vector<4x8xf32> to vector<1x8xf32>
    %139 = vector.broadcast %138 : vector<1x8xf32> to vector<8x8xf32>
    %140 = arith.addf %137, %139 : vector<8x8xf32>
    %141 = vector.extract_strided_slice %10 {offsets = [1, 0, 0], sizes = [1, 32, 8], strides = [1, 1, 1]} : vector<4x32x8xbf16> to vector<1x32x8xbf16>
    %142 = vector.shape_cast %141 : vector<1x32x8xbf16> to vector<32x8xbf16>
    %cst_138 = arith.constant dense<0.000000e+00> : vector<8x8xf32>
    %143 = tpu.matmul %91, %142, %cst_138 {dimension_numbers = #tpu.dot_dimension_numbers<[1], [0], [0], [1], [0, 0, 1, 1], [], []>} : vector<8x32xbf16>, vector<32x8xbf16>, vector<8x8xf32> -> vector<8x8xf32>
    %144 = vector.extract_strided_slice %0 {offsets = [1, 0], sizes = [1, 8], strides = [1, 1]} : vector<4x8xf32> to vector<1x8xf32>
    %145 = vector.broadcast %144 : vector<1x8xf32> to vector<8x8xf32>
    %146 = arith.addf %143, %145 : vector<8x8xf32>
    %147 = vector.extract_strided_slice %13 {offsets = [1, 0, 0], sizes = [1, 32, 8], strides = [1, 1, 1]} : vector<4x32x8xbf16> to vector<1x32x8xbf16>
    %148 = vector.shape_cast %147 : vector<1x32x8xbf16> to vector<32x8xbf16>
    %cst_139 = arith.constant dense<0.000000e+00> : vector<8x8xf32>
    %149 = tpu.matmul %91, %148, %cst_139 {dimension_numbers = #tpu.dot_dimension_numbers<[1], [0], [0], [1], [0, 0, 1, 1], [], []>} : vector<8x32xbf16>, vector<32x8xbf16>, vector<8x8xf32> -> vector<8x8xf32>
    %150 = vector.extract_strided_slice %3 {offsets = [1, 0], sizes = [1, 8], strides = [1, 1]} : vector<4x8xf32> to vector<1x8xf32>
    %151 = vector.broadcast %150 : vector<1x8xf32> to vector<8x8xf32>
    %152 = arith.addf %149, %151 : vector<8x8xf32>
    %153 = arith.truncf %140 : vector<8x8xf32> to vector<8x8xbf16>
    %154 = arith.truncf %146 : vector<8x8xf32> to vector<8x8xbf16>
    %cst_140 = arith.constant dense<0.000000e+00> : vector<8x8xf32>
    %155 = tpu.matmul %153, %154, %cst_140 {dimension_numbers = #tpu.dot_dimension_numbers<[1], [1], [0], [0], [0, 0, 1, 0], [], []>} : vector<8x8xbf16>, vector<8x8xbf16>, vector<8x8xf32> -> vector<8x8xf32>
    %cst_141 = arith.constant 0.353553385 : f32
    %156 = vector.broadcast %cst_141 : f32 to vector<8x8xf32>
    %157 = arith.mulf %155, %156 : vector<8x8xf32>
    %158 = arith.addf %157, %44 : vector<8x8xf32>
    %cst_142 = arith.constant dense<0xFF800000> : vector<8xf32>
    %159 = vector.multi_reduction <maximumf>, %158, %cst_142 [1] : vector<8x8xf32> to vector<8xf32>
    %160 = vector.shape_cast %159 : vector<8xf32> to vector<8x1xf32>
    %161 = vector.broadcast %160 : vector<8x1xf32> to vector<8x8xf32>
    %162 = arith.subf %158, %161 : vector<8x8xf32>
    %163 = math.exp %162 : vector<8x8xf32>
    %cst_143 = arith.constant dense<0.000000e+00> : vector<8xf32>
    %164 = vector.multi_reduction <add>, %163, %cst_143 [1] : vector<8x8xf32> to vector<8xf32>
    %165 = vector.shape_cast %164 : vector<8xf32> to vector<8x1xf32>
    %166 = tpu.reciprocal %165 {approx = true} : vector<8x1xf32> -> vector<8x1xf32>
    %167 = vector.broadcast %166 : vector<8x1xf32> to vector<8x8xf32>
    %168 = arith.mulf %163, %167 : vector<8x8xf32>
    %169 = arith.truncf %168 : vector<8x8xf32> to vector<8x8xbf16>
    %170 = arith.truncf %152 : vector<8x8xf32> to vector<8x8xbf16>
    %cst_144 = arith.constant dense<0.000000e+00> : vector<8x8xf32>
    %171 = tpu.matmul %169, %170, %cst_144 {dimension_numbers = #tpu.dot_dimension_numbers<[1], [0], [0], [1], [0, 0, 1, 1], [], []>} : vector<8x8xbf16>, vector<8x8xbf16>, vector<8x8xf32> -> vector<8x8xf32>
    %172 = arith.truncf %171 : vector<8x8xf32> to vector<8x8xbf16>
    %173 = vector.extract_strided_slice %11 {offsets = [1, 0, 0], sizes = [1, 8, 32], strides = [1, 1, 1]} : vector<4x8x32xbf16> to vector<1x8x32xbf16>
    %174 = vector.shape_cast %173 : vector<1x8x32xbf16> to vector<8x32xbf16>
    %cst_145 = arith.constant dense<0.000000e+00> : vector<8x32xf32>
    %175 = tpu.matmul %172, %174, %cst_145 {dimension_numbers = #tpu.dot_dimension_numbers<[1], [0], [0], [1], [0, 0, 1, 1], [], []>} : vector<8x8xbf16>, vector<8x32xbf16>, vector<8x32xf32> -> vector<8x32xf32>
    %176 = arith.addf %134, %175 : vector<8x32xf32>
    %177 = vector.extract_strided_slice %12 {offsets = [2, 0, 0], sizes = [1, 32, 8], strides = [1, 1, 1]} : vector<4x32x8xbf16> to vector<1x32x8xbf16>
    %178 = vector.shape_cast %177 : vector<1x32x8xbf16> to vector<32x8xbf16>
    %cst_146 = arith.constant dense<0.000000e+00> : vector<8x8xf32>
    %179 = tpu.matmul %91, %178, %cst_146 {dimension_numbers = #tpu.dot_dimension_numbers<[1], [0], [0], [1], [0, 0, 1, 1], [], []>} : vector<8x32xbf16>, vector<32x8xbf16>, vector<8x8xf32> -> vector<8x8xf32>
    %180 = vector.extract_strided_slice %2 {offsets = [2, 0], sizes = [1, 8], strides = [1, 1]} : vector<4x8xf32> to vector<1x8xf32>
    %181 = vector.broadcast %180 : vector<1x8xf32> to vector<8x8xf32>
    %182 = arith.addf %179, %181 : vector<8x8xf32>
    %183 = vector.extract_strided_slice %10 {offsets = [2, 0, 0], sizes = [1, 32, 8], strides = [1, 1, 1]} : vector<4x32x8xbf16> to vector<1x32x8xbf16>
    %184 = vector.shape_cast %183 : vector<1x32x8xbf16> to vector<32x8xbf16>
    %cst_147 = arith.constant dense<0.000000e+00> : vector<8x8xf32>
    %185 = tpu.matmul %91, %184, %cst_147 {dimension_numbers = #tpu.dot_dimension_numbers<[1], [0], [0], [1], [0, 0, 1, 1], [], []>} : vector<8x32xbf16>, vector<32x8xbf16>, vector<8x8xf32> -> vector<8x8xf32>
    %186 = vector.extract_strided_slice %0 {offsets = [2, 0], sizes = [1, 8], strides = [1, 1]} : vector<4x8xf32> to vector<1x8xf32>
    %187 = vector.broadcast %186 : vector<1x8xf32> to vector<8x8xf32>
    %188 = arith.addf %185, %187 : vector<8x8xf32>
    %189 = vector.extract_strided_slice %13 {offsets = [2, 0, 0], sizes = [1, 32, 8], strides = [1, 1, 1]} : vector<4x32x8xbf16> to vector<1x32x8xbf16>
    %190 = vector.shape_cast %189 : vector<1x32x8xbf16> to vector<32x8xbf16>
    %cst_148 = arith.constant dense<0.000000e+00> : vector<8x8xf32>
    %191 = tpu.matmul %91, %190, %cst_148 {dimension_numbers = #tpu.dot_dimension_numbers<[1], [0], [0], [1], [0, 0, 1, 1], [], []>} : vector<8x32xbf16>, vector<32x8xbf16>, vector<8x8xf32> -> vector<8x8xf32>
    %192 = vector.extract_strided_slice %3 {offsets = [2, 0], sizes = [1, 8], strides = [1, 1]} : vector<4x8xf32> to vector<1x8xf32>
    %193 = vector.broadcast %192 : vector<1x8xf32> to vector<8x8xf32>
    %194 = arith.addf %191, %193 : vector<8x8xf32>
    %195 = arith.truncf %182 : vector<8x8xf32> to vector<8x8xbf16>
    %196 = arith.truncf %188 : vector<8x8xf32> to vector<8x8xbf16>
    %cst_149 = arith.constant dense<0.000000e+00> : vector<8x8xf32>
    %197 = tpu.matmul %195, %196, %cst_149 {dimension_numbers = #tpu.dot_dimension_numbers<[1], [1], [0], [0], [0, 0, 1, 0], [], []>} : vector<8x8xbf16>, vector<8x8xbf16>, vector<8x8xf32> -> vector<8x8xf32>
    %cst_150 = arith.constant 0.353553385 : f32
    %198 = vector.broadcast %cst_150 : f32 to vector<8x8xf32>
    %199 = arith.mulf %197, %198 : vector<8x8xf32>
    %200 = arith.addf %199, %44 : vector<8x8xf32>
    %cst_151 = arith.constant dense<0xFF800000> : vector<8xf32>
    %201 = vector.multi_reduction <maximumf>, %200, %cst_151 [1] : vector<8x8xf32> to vector<8xf32>
    %202 = vector.shape_cast %201 : vector<8xf32> to vector<8x1xf32>
    %203 = vector.broadcast %202 : vector<8x1xf32> to vector<8x8xf32>
    %204 = arith.subf %200, %203 : vector<8x8xf32>
    %205 = math.exp %204 : vector<8x8xf32>
    %cst_152 = arith.constant dense<0.000000e+00> : vector<8xf32>
    %206 = vector.multi_reduction <add>, %205, %cst_152 [1] : vector<8x8xf32> to vector<8xf32>
    %207 = vector.shape_cast %206 : vector<8xf32> to vector<8x1xf32>
    %208 = tpu.reciprocal %207 {approx = true} : vector<8x1xf32> -> vector<8x1xf32>
    %209 = vector.broadcast %208 : vector<8x1xf32> to vector<8x8xf32>
    %210 = arith.mulf %205, %209 : vector<8x8xf32>
    %211 = arith.truncf %210 : vector<8x8xf32> to vector<8x8xbf16>
    %212 = arith.truncf %194 : vector<8x8xf32> to vector<8x8xbf16>
    %cst_153 = arith.constant dense<0.000000e+00> : vector<8x8xf32>
    %213 = tpu.matmul %211, %212, %cst_153 {dimension_numbers = #tpu.dot_dimension_numbers<[1], [0], [0], [1], [0, 0, 1, 1], [], []>} : vector<8x8xbf16>, vector<8x8xbf16>, vector<8x8xf32> -> vector<8x8xf32>
    %214 = arith.truncf %213 : vector<8x8xf32> to vector<8x8xbf16>
    %215 = vector.extract_strided_slice %11 {offsets = [2, 0, 0], sizes = [1, 8, 32], strides = [1, 1, 1]} : vector<4x8x32xbf16> to vector<1x8x32xbf16>
    %216 = vector.shape_cast %215 : vector<1x8x32xbf16> to vector<8x32xbf16>
    %cst_154 = arith.constant dense<0.000000e+00> : vector<8x32xf32>
    %217 = tpu.matmul %214, %216, %cst_154 {dimension_numbers = #tpu.dot_dimension_numbers<[1], [0], [0], [1], [0, 0, 1, 1], [], []>} : vector<8x8xbf16>, vector<8x32xbf16>, vector<8x32xf32> -> vector<8x32xf32>
    %218 = arith.addf %176, %217 : vector<8x32xf32>
    %219 = vector.extract_strided_slice %12 {offsets = [3, 0, 0], sizes = [1, 32, 8], strides = [1, 1, 1]} : vector<4x32x8xbf16> to vector<1x32x8xbf16>
    %220 = vector.shape_cast %219 : vector<1x32x8xbf16> to vector<32x8xbf16>
    %cst_155 = arith.constant dense<0.000000e+00> : vector<8x8xf32>
    %221 = tpu.matmul %91, %220, %cst_155 {dimension_numbers = #tpu.dot_dimension_numbers<[1], [0], [0], [1], [0, 0, 1, 1], [], []>} : vector<8x32xbf16>, vector<32x8xbf16>, vector<8x8xf32> -> vector<8x8xf32>
    %222 = vector.extract_strided_slice %2 {offsets = [3, 0], sizes = [1, 8], strides = [1, 1]} : vector<4x8xf32> to vector<1x8xf32>
    %223 = vector.broadcast %222 : vector<1x8xf32> to vector<8x8xf32>
    %224 = arith.addf %221, %223 : vector<8x8xf32>
    %225 = vector.extract_strided_slice %10 {offsets = [3, 0, 0], sizes = [1, 32, 8], strides = [1, 1, 1]} : vector<4x32x8xbf16> to vector<1x32x8xbf16>
    %226 = vector.shape_cast %225 : vector<1x32x8xbf16> to vector<32x8xbf16>
    %cst_156 = arith.constant dense<0.000000e+00> : vector<8x8xf32>
    %227 = tpu.matmul %91, %226, %cst_156 {dimension_numbers = #tpu.dot_dimension_numbers<[1], [0], [0], [1], [0, 0, 1, 1], [], []>} : vector<8x32xbf16>, vector<32x8xbf16>, vector<8x8xf32> -> vector<8x8xf32>
    %228 = vector.extract_strided_slice %0 {offsets = [3, 0], sizes = [1, 8], strides = [1, 1]} : vector<4x8xf32> to vector<1x8xf32>
    %229 = vector.broadcast %228 : vector<1x8xf32> to vector<8x8xf32>
    %230 = arith.addf %227, %229 : vector<8x8xf32>
    %231 = vector.extract_strided_slice %13 {offsets = [3, 0, 0], sizes = [1, 32, 8], strides = [1, 1, 1]} : vector<4x32x8xbf16> to vector<1x32x8xbf16>
    %232 = vector.shape_cast %231 : vector<1x32x8xbf16> to vector<32x8xbf16>
    %cst_157 = arith.constant dense<0.000000e+00> : vector<8x8xf32>
    %233 = tpu.matmul %91, %232, %cst_157 {dimension_numbers = #tpu.dot_dimension_numbers<[1], [0], [0], [1], [0, 0, 1, 1], [], []>} : vector<8x32xbf16>, vector<32x8xbf16>, vector<8x8xf32> -> vector<8x8xf32>
    %234 = vector.extract_strided_slice %3 {offsets = [3, 0], sizes = [1, 8], strides = [1, 1]} : vector<4x8xf32> to vector<1x8xf32>
    %235 = vector.broadcast %234 : vector<1x8xf32> to vector<8x8xf32>
    %236 = arith.addf %233, %235 : vector<8x8xf32>
    %237 = arith.truncf %224 : vector<8x8xf32> to vector<8x8xbf16>
    %238 = arith.truncf %230 : vector<8x8xf32> to vector<8x8xbf16>
    %cst_158 = arith.constant dense<0.000000e+00> : vector<8x8xf32>
    %239 = tpu.matmul %237, %238, %cst_158 {dimension_numbers = #tpu.dot_dimension_numbers<[1], [1], [0], [0], [0, 0, 1, 0], [], []>} : vector<8x8xbf16>, vector<8x8xbf16>, vector<8x8xf32> -> vector<8x8xf32>
    %cst_159 = arith.constant 0.353553385 : f32
    %240 = vector.broadcast %cst_159 : f32 to vector<8x8xf32>
    %241 = arith.mulf %239, %240 : vector<8x8xf32>
    %242 = arith.addf %241, %44 : vector<8x8xf32>
    %cst_160 = arith.constant dense<0xFF800000> : vector<8xf32>
    %243 = vector.multi_reduction <maximumf>, %242, %cst_160 [1] : vector<8x8xf32> to vector<8xf32>
    %244 = vector.shape_cast %243 : vector<8xf32> to vector<8x1xf32>
    %245 = vector.broadcast %244 : vector<8x1xf32> to vector<8x8xf32>
    %246 = arith.subf %242, %245 : vector<8x8xf32>
    %247 = math.exp %246 : vector<8x8xf32>
    %cst_161 = arith.constant dense<0.000000e+00> : vector<8xf32>
    %248 = vector.multi_reduction <add>, %247, %cst_161 [1] : vector<8x8xf32> to vector<8xf32>
    %249 = vector.shape_cast %248 : vector<8xf32> to vector<8x1xf32>
    %250 = tpu.reciprocal %249 {approx = true} : vector<8x1xf32> -> vector<8x1xf32>
    %251 = vector.broadcast %250 : vector<8x1xf32> to vector<8x8xf32>
    %252 = arith.mulf %247, %251 : vector<8x8xf32>
    %253 = arith.truncf %252 : vector<8x8xf32> to vector<8x8xbf16>
    %254 = arith.truncf %236 : vector<8x8xf32> to vector<8x8xbf16>
    %cst_162 = arith.constant dense<0.000000e+00> : vector<8x8xf32>
    %255 = tpu.matmul %253, %254, %cst_162 {dimension_numbers = #tpu.dot_dimension_numbers<[1], [0], [0], [1], [0, 0, 1, 1], [], []>} : vector<8x8xbf16>, vector<8x8xbf16>, vector<8x8xf32> -> vector<8x8xf32>
    %256 = arith.truncf %255 : vector<8x8xf32> to vector<8x8xbf16>
    %257 = vector.extract_strided_slice %11 {offsets = [3, 0, 0], sizes = [1, 8, 32], strides = [1, 1, 1]} : vector<4x8x32xbf16> to vector<1x8x32xbf16>
    %258 = vector.shape_cast %257 : vector<1x8x32xbf16> to vector<8x32xbf16>
    %cst_163 = arith.constant dense<0.000000e+00> : vector<8x32xf32>
    %259 = tpu.matmul %256, %258, %cst_163 {dimension_numbers = #tpu.dot_dimension_numbers<[1], [0], [0], [1], [0, 0, 1, 1], [], []>} : vector<8x8xbf16>, vector<8x32xbf16>, vector<8x32xf32> -> vector<8x32xf32>
    %260 = arith.addf %218, %259 : vector<8x32xf32>
    %261 = arith.addf %59, %260 : vector<8x32xf32>
    %262 = vector.broadcast %1 : vector<1x32xf32> to vector<8x32xf32>
    %263 = arith.addf %261, %262 : vector<8x32xf32>
    %264 = vector.extract_strided_slice %9 {offsets = [3, 0], sizes = [1, 32], strides = [1, 1]} : vector<6x32xf32> to vector<1x32xf32>
    %265 = vector.extract_strided_slice %8 {offsets = [3, 0], sizes = [1, 32], strides = [1, 1]} : vector<6x32xf32> to vector<1x32xf32>
    %cst_164 = arith.constant dense<0.000000e+00> : vector<8xf32>
    %266 = vector.multi_reduction <add>, %263, %cst_164 [1] : vector<8x32xf32> to vector<8xf32>
    %267 = vector.shape_cast %266 : vector<8xf32> to vector<8x1xf32>
    %cst_165 = arith.constant 3.200000e+01 : f32
    %268 = vector.broadcast %cst_165 : f32 to vector<8x1xf32>
    %269 = arith.divf %267, %268 : vector<8x1xf32>
    %270 = vector.broadcast %269 : vector<8x1xf32> to vector<8x32xf32>
    %271 = arith.subf %263, %270 : vector<8x32xf32>
    %272 = arith.mulf %271, %271 : vector<8x32xf32>
    %cst_166 = arith.constant dense<0.000000e+00> : vector<8xf32>
    %273 = vector.multi_reduction <add>, %272, %cst_166 [1] : vector<8x32xf32> to vector<8xf32>
    %274 = vector.shape_cast %273 : vector<8xf32> to vector<8x1xf32>
    %cst_167 = arith.constant 3.200000e+01 : f32
    %275 = vector.broadcast %cst_167 : f32 to vector<8x1xf32>
    %276 = arith.divf %274, %275 : vector<8x1xf32>
    %277 = vector.broadcast %269 : vector<8x1xf32> to vector<8x32xf32>
    %278 = arith.subf %263, %277 : vector<8x32xf32>
    %cst_168 = arith.constant 9.99999974E-6 : f32
    %279 = vector.broadcast %cst_168 : f32 to vector<8x1xf32>
    %280 = arith.addf %276, %279 : vector<8x1xf32>
    %281 = math.rsqrt %280 : vector<8x1xf32>
    %282 = vector.broadcast %281 : vector<8x1xf32> to vector<8x32xf32>
    %283 = arith.mulf %278, %282 : vector<8x32xf32>
    %284 = vector.broadcast %264 : vector<1x32xf32> to vector<8x32xf32>
    %285 = arith.mulf %283, %284 : vector<8x32xf32>
    %286 = vector.broadcast %265 : vector<1x32xf32> to vector<8x32xf32>
    %287 = arith.addf %285, %286 : vector<8x32xf32>
    %288 = arith.truncf %287 : vector<8x32xf32> to vector<8x32xbf16>
    %cst_169 = arith.constant dense<0.000000e+00> : vector<8x128xf32>
    %289 = tpu.matmul %288, %5, %cst_169 {dimension_numbers = #tpu.dot_dimension_numbers<[1], [0], [0], [1], [0, 0, 1, 1], [], []>} : vector<8x32xbf16>, vector<32x128xbf16>, vector<8x128xf32> -> vector<8x128xf32>
    %290 = vector.broadcast %4 : vector<1x128xf32> to vector<8x128xf32>
    %291 = arith.addf %289, %290 : vector<8x128xf32>
    %cst_170 = arith.constant 5.000000e-01 : f32
    %292 = vector.broadcast %cst_170 : f32 to vector<8x128xf32>
    %293 = arith.mulf %292, %291 : vector<8x128xf32>
    %cst_171 = arith.constant 0.707106769 : f32
    %294 = vector.broadcast %cst_171 : f32 to vector<8x128xf32>
    %295 = arith.mulf %291, %294 : vector<8x128xf32>
    %296 = math.erf %295 : vector<8x128xf32>
    %cst_172 = arith.constant 1.000000e+00 : f32
    %297 = vector.broadcast %cst_172 : f32 to vector<8x128xf32>
    %298 = arith.addf %297, %296 : vector<8x128xf32>
    %299 = arith.mulf %293, %298 : vector<8x128xf32>
    %300 = arith.truncf %299 : vector<8x128xf32> to vector<8x128xbf16>
    %cst_173 = arith.constant dense<0.000000e+00> : vector<8x32xf32>
    %301 = tpu.matmul %300, %7, %cst_173 {dimension_numbers = #tpu.dot_dimension_numbers<[1], [0], [0], [1], [0, 0, 1, 1], [], []>} : vector<8x128xbf16>, vector<128x32xbf16>, vector<8x32xf32> -> vector<8x32xf32>
    %302 = vector.broadcast %6 : vector<1x32xf32> to vector<8x32xf32>
    %303 = arith.addf %301, %302 : vector<8x32xf32>
    %304 = arith.addf %263, %303 : vector<8x32xf32>
    %305 = vector.extract_strided_slice %37 {offsets = [0, 0], sizes = [1, 32], strides = [1, 1]} : vector<6x32xf32> to vector<1x32xf32>
    %306 = vector.extract_strided_slice %36 {offsets = [0, 0], sizes = [1, 32], strides = [1, 1]} : vector<6x32xf32> to vector<1x32xf32>
    %cst_174 = arith.constant dense<0.000000e+00> : vector<8xf32>
    %307 = vector.multi_reduction <add>, %66, %cst_174 [1] : vector<8x32xf32> to vector<8xf32>
    %308 = vector.shape_cast %307 : vector<8xf32> to vector<8x1xf32>
    %cst_175 = arith.constant 3.200000e+01 : f32
    %309 = vector.broadcast %cst_175 : f32 to vector<8x1xf32>
    %310 = arith.divf %308, %309 : vector<8x1xf32>
    %311 = vector.broadcast %310 : vector<8x1xf32> to vector<8x32xf32>
    %312 = arith.subf %66, %311 : vector<8x32xf32>
    %313 = arith.mulf %312, %312 : vector<8x32xf32>
    %cst_176 = arith.constant dense<0.000000e+00> : vector<8xf32>
    %314 = vector.multi_reduction <add>, %313, %cst_176 [1] : vector<8x32xf32> to vector<8xf32>
    %315 = vector.shape_cast %314 : vector<8xf32> to vector<8x1xf32>
    %cst_177 = arith.constant 3.200000e+01 : f32
    %316 = vector.broadcast %cst_177 : f32 to vector<8x1xf32>
    %317 = arith.divf %315, %316 : vector<8x1xf32>
    %318 = vector.broadcast %310 : vector<8x1xf32> to vector<8x32xf32>
    %319 = arith.subf %66, %318 : vector<8x32xf32>
    %cst_178 = arith.constant 9.99999974E-6 : f32
    %320 = vector.broadcast %cst_178 : f32 to vector<8x1xf32>
    %321 = arith.addf %317, %320 : vector<8x1xf32>
    %322 = math.rsqrt %321 : vector<8x1xf32>
    %323 = vector.broadcast %322 : vector<8x1xf32> to vector<8x32xf32>
    %324 = arith.mulf %319, %323 : vector<8x32xf32>
    %325 = vector.broadcast %305 : vector<1x32xf32> to vector<8x32xf32>
    %326 = arith.mulf %324, %325 : vector<8x32xf32>
    %327 = vector.broadcast %306 : vector<1x32xf32> to vector<8x32xf32>
    %328 = arith.addf %326, %327 : vector<8x32xf32>
    %329 = arith.truncf %328 : vector<8x32xf32> to vector<8x32xbf16>
    %cst_179 = arith.constant 0.000000e+00 : f32
    %330 = vector.broadcast %cst_179 : f32 to vector<8x32xf32>
    %331 = vector.extract_strided_slice %40 {offsets = [0, 0, 0], sizes = [1, 32, 8], strides = [1, 1, 1]} : vector<4x32x8xbf16> to vector<1x32x8xbf16>
    %332 = vector.shape_cast %331 : vector<1x32x8xbf16> to vector<32x8xbf16>
    %cst_180 = arith.constant dense<0.000000e+00> : vector<8x8xf32>
    %333 = tpu.matmul %329, %332, %cst_180 {dimension_numbers = #tpu.dot_dimension_numbers<[1], [0], [0], [1], [0, 0, 1, 1], [], []>} : vector<8x32xbf16>, vector<32x8xbf16>, vector<8x8xf32> -> vector<8x8xf32>
    %334 = vector.extract_strided_slice %30 {offsets = [0, 0], sizes = [1, 8], strides = [1, 1]} : vector<4x8xf32> to vector<1x8xf32>
    %335 = vector.broadcast %334 : vector<1x8xf32> to vector<8x8xf32>
    %336 = arith.addf %333, %335 : vector<8x8xf32>
    %337 = vector.extract_strided_slice %38 {offsets = [0, 0, 0], sizes = [1, 32, 8], strides = [1, 1, 1]} : vector<4x32x8xbf16> to vector<1x32x8xbf16>
    %338 = vector.shape_cast %337 : vector<1x32x8xbf16> to vector<32x8xbf16>
    %cst_181 = arith.constant dense<0.000000e+00> : vector<8x8xf32>
    %339 = tpu.matmul %329, %338, %cst_181 {dimension_numbers = #tpu.dot_dimension_numbers<[1], [0], [0], [1], [0, 0, 1, 1], [], []>} : vector<8x32xbf16>, vector<32x8xbf16>, vector<8x8xf32> -> vector<8x8xf32>
    %340 = vector.extract_strided_slice %28 {offsets = [0, 0], sizes = [1, 8], strides = [1, 1]} : vector<4x8xf32> to vector<1x8xf32>
    %341 = vector.broadcast %340 : vector<1x8xf32> to vector<8x8xf32>
    %342 = arith.addf %339, %341 : vector<8x8xf32>
    %343 = vector.extract_strided_slice %41 {offsets = [0, 0, 0], sizes = [1, 32, 8], strides = [1, 1, 1]} : vector<4x32x8xbf16> to vector<1x32x8xbf16>
    %344 = vector.shape_cast %343 : vector<1x32x8xbf16> to vector<32x8xbf16>
    %cst_182 = arith.constant dense<0.000000e+00> : vector<8x8xf32>
    %345 = tpu.matmul %329, %344, %cst_182 {dimension_numbers = #tpu.dot_dimension_numbers<[1], [0], [0], [1], [0, 0, 1, 1], [], []>} : vector<8x32xbf16>, vector<32x8xbf16>, vector<8x8xf32> -> vector<8x8xf32>
    %346 = vector.extract_strided_slice %31 {offsets = [0, 0], sizes = [1, 8], strides = [1, 1]} : vector<4x8xf32> to vector<1x8xf32>
    %347 = vector.broadcast %346 : vector<1x8xf32> to vector<8x8xf32>
    %348 = arith.addf %345, %347 : vector<8x8xf32>
    %349 = arith.truncf %336 : vector<8x8xf32> to vector<8x8xbf16>
    %350 = arith.truncf %342 : vector<8x8xf32> to vector<8x8xbf16>
    %cst_183 = arith.constant dense<0.000000e+00> : vector<8x8xf32>
    %351 = tpu.matmul %349, %350, %cst_183 {dimension_numbers = #tpu.dot_dimension_numbers<[1], [1], [0], [0], [0, 0, 1, 0], [], []>} : vector<8x8xbf16>, vector<8x8xbf16>, vector<8x8xf32> -> vector<8x8xf32>
    %cst_184 = arith.constant 0.353553385 : f32
    %352 = vector.broadcast %cst_184 : f32 to vector<8x8xf32>
    %353 = arith.mulf %351, %352 : vector<8x8xf32>
    %354 = arith.addf %353, %46 : vector<8x8xf32>
    %cst_185 = arith.constant dense<0xFF800000> : vector<8xf32>
    %355 = vector.multi_reduction <maximumf>, %354, %cst_185 [1] : vector<8x8xf32> to vector<8xf32>
    %356 = vector.shape_cast %355 : vector<8xf32> to vector<8x1xf32>
    %357 = vector.broadcast %356 : vector<8x1xf32> to vector<8x8xf32>
    %358 = arith.subf %354, %357 : vector<8x8xf32>
    %359 = math.exp %358 : vector<8x8xf32>
    %cst_186 = arith.constant dense<0.000000e+00> : vector<8xf32>
    %360 = vector.multi_reduction <add>, %359, %cst_186 [1] : vector<8x8xf32> to vector<8xf32>
    %361 = vector.shape_cast %360 : vector<8xf32> to vector<8x1xf32>
    %362 = tpu.reciprocal %361 {approx = true} : vector<8x1xf32> -> vector<8x1xf32>
    %363 = vector.broadcast %362 : vector<8x1xf32> to vector<8x8xf32>
    %364 = arith.mulf %359, %363 : vector<8x8xf32>
    %365 = arith.truncf %364 : vector<8x8xf32> to vector<8x8xbf16>
    %366 = arith.truncf %348 : vector<8x8xf32> to vector<8x8xbf16>
    %cst_187 = arith.constant dense<0.000000e+00> : vector<8x8xf32>
    %367 = tpu.matmul %365, %366, %cst_187 {dimension_numbers = #tpu.dot_dimension_numbers<[1], [0], [0], [1], [0, 0, 1, 1], [], []>} : vector<8x8xbf16>, vector<8x8xbf16>, vector<8x8xf32> -> vector<8x8xf32>
    %368 = arith.truncf %367 : vector<8x8xf32> to vector<8x8xbf16>
    %369 = vector.extract_strided_slice %39 {offsets = [0, 0, 0], sizes = [1, 8, 32], strides = [1, 1, 1]} : vector<4x8x32xbf16> to vector<1x8x32xbf16>
    %370 = vector.shape_cast %369 : vector<1x8x32xbf16> to vector<8x32xbf16>
    %cst_188 = arith.constant dense<0.000000e+00> : vector<8x32xf32>
    %371 = tpu.matmul %368, %370, %cst_188 {dimension_numbers = #tpu.dot_dimension_numbers<[1], [0], [0], [1], [0, 0, 1, 1], [], []>} : vector<8x8xbf16>, vector<8x32xbf16>, vector<8x32xf32> -> vector<8x32xf32>
    %372 = arith.addf %330, %371 : vector<8x32xf32>
    %373 = vector.extract_strided_slice %40 {offsets = [1, 0, 0], sizes = [1, 32, 8], strides = [1, 1, 1]} : vector<4x32x8xbf16> to vector<1x32x8xbf16>
    %374 = vector.shape_cast %373 : vector<1x32x8xbf16> to vector<32x8xbf16>
    %cst_189 = arith.constant dense<0.000000e+00> : vector<8x8xf32>
    %375 = tpu.matmul %329, %374, %cst_189 {dimension_numbers = #tpu.dot_dimension_numbers<[1], [0], [0], [1], [0, 0, 1, 1], [], []>} : vector<8x32xbf16>, vector<32x8xbf16>, vector<8x8xf32> -> vector<8x8xf32>
    %376 = vector.extract_strided_slice %30 {offsets = [1, 0], sizes = [1, 8], strides = [1, 1]} : vector<4x8xf32> to vector<1x8xf32>
    %377 = vector.broadcast %376 : vector<1x8xf32> to vector<8x8xf32>
    %378 = arith.addf %375, %377 : vector<8x8xf32>
    %379 = vector.extract_strided_slice %38 {offsets = [1, 0, 0], sizes = [1, 32, 8], strides = [1, 1, 1]} : vector<4x32x8xbf16> to vector<1x32x8xbf16>
    %380 = vector.shape_cast %379 : vector<1x32x8xbf16> to vector<32x8xbf16>
    %cst_190 = arith.constant dense<0.000000e+00> : vector<8x8xf32>
    %381 = tpu.matmul %329, %380, %cst_190 {dimension_numbers = #tpu.dot_dimension_numbers<[1], [0], [0], [1], [0, 0, 1, 1], [], []>} : vector<8x32xbf16>, vector<32x8xbf16>, vector<8x8xf32> -> vector<8x8xf32>
    %382 = vector.extract_strided_slice %28 {offsets = [1, 0], sizes = [1, 8], strides = [1, 1]} : vector<4x8xf32> to vector<1x8xf32>
    %383 = vector.broadcast %382 : vector<1x8xf32> to vector<8x8xf32>
    %384 = arith.addf %381, %383 : vector<8x8xf32>
    %385 = vector.extract_strided_slice %41 {offsets = [1, 0, 0], sizes = [1, 32, 8], strides = [1, 1, 1]} : vector<4x32x8xbf16> to vector<1x32x8xbf16>
    %386 = vector.shape_cast %385 : vector<1x32x8xbf16> to vector<32x8xbf16>
    %cst_191 = arith.constant dense<0.000000e+00> : vector<8x8xf32>
    %387 = tpu.matmul %329, %386, %cst_191 {dimension_numbers = #tpu.dot_dimension_numbers<[1], [0], [0], [1], [0, 0, 1, 1], [], []>} : vector<8x32xbf16>, vector<32x8xbf16>, vector<8x8xf32> -> vector<8x8xf32>
    %388 = vector.extract_strided_slice %31 {offsets = [1, 0], sizes = [1, 8], strides = [1, 1]} : vector<4x8xf32> to vector<1x8xf32>
    %389 = vector.broadcast %388 : vector<1x8xf32> to vector<8x8xf32>
    %390 = arith.addf %387, %389 : vector<8x8xf32>
    %391 = arith.truncf %378 : vector<8x8xf32> to vector<8x8xbf16>
    %392 = arith.truncf %384 : vector<8x8xf32> to vector<8x8xbf16>
    %cst_192 = arith.constant dense<0.000000e+00> : vector<8x8xf32>
    %393 = tpu.matmul %391, %392, %cst_192 {dimension_numbers = #tpu.dot_dimension_numbers<[1], [1], [0], [0], [0, 0, 1, 0], [], []>} : vector<8x8xbf16>, vector<8x8xbf16>, vector<8x8xf32> -> vector<8x8xf32>
    %cst_193 = arith.constant 0.353553385 : f32
    %394 = vector.broadcast %cst_193 : f32 to vector<8x8xf32>
    %395 = arith.mulf %393, %394 : vector<8x8xf32>
    %396 = arith.addf %395, %46 : vector<8x8xf32>
    %cst_194 = arith.constant dense<0xFF800000> : vector<8xf32>
    %397 = vector.multi_reduction <maximumf>, %396, %cst_194 [1] : vector<8x8xf32> to vector<8xf32>
    %398 = vector.shape_cast %397 : vector<8xf32> to vector<8x1xf32>
    %399 = vector.broadcast %398 : vector<8x1xf32> to vector<8x8xf32>
    %400 = arith.subf %396, %399 : vector<8x8xf32>
    %401 = math.exp %400 : vector<8x8xf32>
    %cst_195 = arith.constant dense<0.000000e+00> : vector<8xf32>
    %402 = vector.multi_reduction <add>, %401, %cst_195 [1] : vector<8x8xf32> to vector<8xf32>
    %403 = vector.shape_cast %402 : vector<8xf32> to vector<8x1xf32>
    %404 = tpu.reciprocal %403 {approx = true} : vector<8x1xf32> -> vector<8x1xf32>
    %405 = vector.broadcast %404 : vector<8x1xf32> to vector<8x8xf32>
    %406 = arith.mulf %401, %405 : vector<8x8xf32>
    %407 = arith.truncf %406 : vector<8x8xf32> to vector<8x8xbf16>
    %408 = arith.truncf %390 : vector<8x8xf32> to vector<8x8xbf16>
    %cst_196 = arith.constant dense<0.000000e+00> : vector<8x8xf32>
    %409 = tpu.matmul %407, %408, %cst_196 {dimension_numbers = #tpu.dot_dimension_numbers<[1], [0], [0], [1], [0, 0, 1, 1], [], []>} : vector<8x8xbf16>, vector<8x8xbf16>, vector<8x8xf32> -> vector<8x8xf32>
    %410 = arith.truncf %409 : vector<8x8xf32> to vector<8x8xbf16>
    %411 = vector.extract_strided_slice %39 {offsets = [1, 0, 0], sizes = [1, 8, 32], strides = [1, 1, 1]} : vector<4x8x32xbf16> to vector<1x8x32xbf16>
    %412 = vector.shape_cast %411 : vector<1x8x32xbf16> to vector<8x32xbf16>
    %cst_197 = arith.constant dense<0.000000e+00> : vector<8x32xf32>
    %413 = tpu.matmul %410, %412, %cst_197 {dimension_numbers = #tpu.dot_dimension_numbers<[1], [0], [0], [1], [0, 0, 1, 1], [], []>} : vector<8x8xbf16>, vector<8x32xbf16>, vector<8x32xf32> -> vector<8x32xf32>
    %414 = arith.addf %372, %413 : vector<8x32xf32>
    %415 = vector.extract_strided_slice %40 {offsets = [2, 0, 0], sizes = [1, 32, 8], strides = [1, 1, 1]} : vector<4x32x8xbf16> to vector<1x32x8xbf16>
    %416 = vector.shape_cast %415 : vector<1x32x8xbf16> to vector<32x8xbf16>
    %cst_198 = arith.constant dense<0.000000e+00> : vector<8x8xf32>
    %417 = tpu.matmul %329, %416, %cst_198 {dimension_numbers = #tpu.dot_dimension_numbers<[1], [0], [0], [1], [0, 0, 1, 1], [], []>} : vector<8x32xbf16>, vector<32x8xbf16>, vector<8x8xf32> -> vector<8x8xf32>
    %418 = vector.extract_strided_slice %30 {offsets = [2, 0], sizes = [1, 8], strides = [1, 1]} : vector<4x8xf32> to vector<1x8xf32>
    %419 = vector.broadcast %418 : vector<1x8xf32> to vector<8x8xf32>
    %420 = arith.addf %417, %419 : vector<8x8xf32>
    %421 = vector.extract_strided_slice %38 {offsets = [2, 0, 0], sizes = [1, 32, 8], strides = [1, 1, 1]} : vector<4x32x8xbf16> to vector<1x32x8xbf16>
    %422 = vector.shape_cast %421 : vector<1x32x8xbf16> to vector<32x8xbf16>
    %cst_199 = arith.constant dense<0.000000e+00> : vector<8x8xf32>
    %423 = tpu.matmul %329, %422, %cst_199 {dimension_numbers = #tpu.dot_dimension_numbers<[1], [0], [0], [1], [0, 0, 1, 1], [], []>} : vector<8x32xbf16>, vector<32x8xbf16>, vector<8x8xf32> -> vector<8x8xf32>
    %424 = vector.extract_strided_slice %28 {offsets = [2, 0], sizes = [1, 8], strides = [1, 1]} : vector<4x8xf32> to vector<1x8xf32>
    %425 = vector.broadcast %424 : vector<1x8xf32> to vector<8x8xf32>
    %426 = arith.addf %423, %425 : vector<8x8xf32>
    %427 = vector.extract_strided_slice %41 {offsets = [2, 0, 0], sizes = [1, 32, 8], strides = [1, 1, 1]} : vector<4x32x8xbf16> to vector<1x32x8xbf16>
    %428 = vector.shape_cast %427 : vector<1x32x8xbf16> to vector<32x8xbf16>
    %cst_200 = arith.constant dense<0.000000e+00> : vector<8x8xf32>
    %429 = tpu.matmul %329, %428, %cst_200 {dimension_numbers = #tpu.dot_dimension_numbers<[1], [0], [0], [1], [0, 0, 1, 1], [], []>} : vector<8x32xbf16>, vector<32x8xbf16>, vector<8x8xf32> -> vector<8x8xf32>
    %430 = vector.extract_strided_slice %31 {offsets = [2, 0], sizes = [1, 8], strides = [1, 1]} : vector<4x8xf32> to vector<1x8xf32>
    %431 = vector.broadcast %430 : vector<1x8xf32> to vector<8x8xf32>
    %432 = arith.addf %429, %431 : vector<8x8xf32>
    %433 = arith.truncf %420 : vector<8x8xf32> to vector<8x8xbf16>
    %434 = arith.truncf %426 : vector<8x8xf32> to vector<8x8xbf16>
    %cst_201 = arith.constant dense<0.000000e+00> : vector<8x8xf32>
    %435 = tpu.matmul %433, %434, %cst_201 {dimension_numbers = #tpu.dot_dimension_numbers<[1], [1], [0], [0], [0, 0, 1, 0], [], []>} : vector<8x8xbf16>, vector<8x8xbf16>, vector<8x8xf32> -> vector<8x8xf32>
    %cst_202 = arith.constant 0.353553385 : f32
    %436 = vector.broadcast %cst_202 : f32 to vector<8x8xf32>
    %437 = arith.mulf %435, %436 : vector<8x8xf32>
    %438 = arith.addf %437, %46 : vector<8x8xf32>
    %cst_203 = arith.constant dense<0xFF800000> : vector<8xf32>
    %439 = vector.multi_reduction <maximumf>, %438, %cst_203 [1] : vector<8x8xf32> to vector<8xf32>
    %440 = vector.shape_cast %439 : vector<8xf32> to vector<8x1xf32>
    %441 = vector.broadcast %440 : vector<8x1xf32> to vector<8x8xf32>
    %442 = arith.subf %438, %441 : vector<8x8xf32>
    %443 = math.exp %442 : vector<8x8xf32>
    %cst_204 = arith.constant dense<0.000000e+00> : vector<8xf32>
    %444 = vector.multi_reduction <add>, %443, %cst_204 [1] : vector<8x8xf32> to vector<8xf32>
    %445 = vector.shape_cast %444 : vector<8xf32> to vector<8x1xf32>
    %446 = tpu.reciprocal %445 {approx = true} : vector<8x1xf32> -> vector<8x1xf32>
    %447 = vector.broadcast %446 : vector<8x1xf32> to vector<8x8xf32>
    %448 = arith.mulf %443, %447 : vector<8x8xf32>
    %449 = arith.truncf %448 : vector<8x8xf32> to vector<8x8xbf16>
    %450 = arith.truncf %432 : vector<8x8xf32> to vector<8x8xbf16>
    %cst_205 = arith.constant dense<0.000000e+00> : vector<8x8xf32>
    %451 = tpu.matmul %449, %450, %cst_205 {dimension_numbers = #tpu.dot_dimension_numbers<[1], [0], [0], [1], [0, 0, 1, 1], [], []>} : vector<8x8xbf16>, vector<8x8xbf16>, vector<8x8xf32> -> vector<8x8xf32>
    %452 = arith.truncf %451 : vector<8x8xf32> to vector<8x8xbf16>
    %453 = vector.extract_strided_slice %39 {offsets = [2, 0, 0], sizes = [1, 8, 32], strides = [1, 1, 1]} : vector<4x8x32xbf16> to vector<1x8x32xbf16>
    %454 = vector.shape_cast %453 : vector<1x8x32xbf16> to vector<8x32xbf16>
    %cst_206 = arith.constant dense<0.000000e+00> : vector<8x32xf32>
    %455 = tpu.matmul %452, %454, %cst_206 {dimension_numbers = #tpu.dot_dimension_numbers<[1], [0], [0], [1], [0, 0, 1, 1], [], []>} : vector<8x8xbf16>, vector<8x32xbf16>, vector<8x32xf32> -> vector<8x32xf32>
    %456 = arith.addf %414, %455 : vector<8x32xf32>
    %457 = vector.extract_strided_slice %40 {offsets = [3, 0, 0], sizes = [1, 32, 8], strides = [1, 1, 1]} : vector<4x32x8xbf16> to vector<1x32x8xbf16>
    %458 = vector.shape_cast %457 : vector<1x32x8xbf16> to vector<32x8xbf16>
    %cst_207 = arith.constant dense<0.000000e+00> : vector<8x8xf32>
    %459 = tpu.matmul %329, %458, %cst_207 {dimension_numbers = #tpu.dot_dimension_numbers<[1], [0], [0], [1], [0, 0, 1, 1], [], []>} : vector<8x32xbf16>, vector<32x8xbf16>, vector<8x8xf32> -> vector<8x8xf32>
    %460 = vector.extract_strided_slice %30 {offsets = [3, 0], sizes = [1, 8], strides = [1, 1]} : vector<4x8xf32> to vector<1x8xf32>
    %461 = vector.broadcast %460 : vector<1x8xf32> to vector<8x8xf32>
    %462 = arith.addf %459, %461 : vector<8x8xf32>
    %463 = vector.extract_strided_slice %38 {offsets = [3, 0, 0], sizes = [1, 32, 8], strides = [1, 1, 1]} : vector<4x32x8xbf16> to vector<1x32x8xbf16>
    %464 = vector.shape_cast %463 : vector<1x32x8xbf16> to vector<32x8xbf16>
    %cst_208 = arith.constant dense<0.000000e+00> : vector<8x8xf32>
    %465 = tpu.matmul %329, %464, %cst_208 {dimension_numbers = #tpu.dot_dimension_numbers<[1], [0], [0], [1], [0, 0, 1, 1], [], []>} : vector<8x32xbf16>, vector<32x8xbf16>, vector<8x8xf32> -> vector<8x8xf32>
    %466 = vector.extract_strided_slice %28 {offsets = [3, 0], sizes = [1, 8], strides = [1, 1]} : vector<4x8xf32> to vector<1x8xf32>
    %467 = vector.broadcast %466 : vector<1x8xf32> to vector<8x8xf32>
    %468 = arith.addf %465, %467 : vector<8x8xf32>
    %469 = vector.extract_strided_slice %41 {offsets = [3, 0, 0], sizes = [1, 32, 8], strides = [1, 1, 1]} : vector<4x32x8xbf16> to vector<1x32x8xbf16>
    %470 = vector.shape_cast %469 : vector<1x32x8xbf16> to vector<32x8xbf16>
    %cst_209 = arith.constant dense<0.000000e+00> : vector<8x8xf32>
    %471 = tpu.matmul %329, %470, %cst_209 {dimension_numbers = #tpu.dot_dimension_numbers<[1], [0], [0], [1], [0, 0, 1, 1], [], []>} : vector<8x32xbf16>, vector<32x8xbf16>, vector<8x8xf32> -> vector<8x8xf32>
    %472 = vector.extract_strided_slice %31 {offsets = [3, 0], sizes = [1, 8], strides = [1, 1]} : vector<4x8xf32> to vector<1x8xf32>
    %473 = vector.broadcast %472 : vector<1x8xf32> to vector<8x8xf32>
    %474 = arith.addf %471, %473 : vector<8x8xf32>
    %475 = arith.truncf %462 : vector<8x8xf32> to vector<8x8xbf16>
    %476 = arith.truncf %468 : vector<8x8xf32> to vector<8x8xbf16>
    %cst_210 = arith.constant dense<0.000000e+00> : vector<8x8xf32>
    %477 = tpu.matmul %475, %476, %cst_210 {dimension_numbers = #tpu.dot_dimension_numbers<[1], [1], [0], [0], [0, 0, 1, 0], [], []>} : vector<8x8xbf16>, vector<8x8xbf16>, vector<8x8xf32> -> vector<8x8xf32>
    %cst_211 = arith.constant 0.353553385 : f32
    %478 = vector.broadcast %cst_211 : f32 to vector<8x8xf32>
    %479 = arith.mulf %477, %478 : vector<8x8xf32>
    %480 = arith.addf %479, %46 : vector<8x8xf32>
    %cst_212 = arith.constant dense<0xFF800000> : vector<8xf32>
    %481 = vector.multi_reduction <maximumf>, %480, %cst_212 [1] : vector<8x8xf32> to vector<8xf32>
    %482 = vector.shape_cast %481 : vector<8xf32> to vector<8x1xf32>
    %483 = vector.broadcast %482 : vector<8x1xf32> to vector<8x8xf32>
    %484 = arith.subf %480, %483 : vector<8x8xf32>
    %485 = math.exp %484 : vector<8x8xf32>
    %cst_213 = arith.constant dense<0.000000e+00> : vector<8xf32>
    %486 = vector.multi_reduction <add>, %485, %cst_213 [1] : vector<8x8xf32> to vector<8xf32>
    %487 = vector.shape_cast %486 : vector<8xf32> to vector<8x1xf32>
    %488 = tpu.reciprocal %487 {approx = true} : vector<8x1xf32> -> vector<8x1xf32>
    %489 = vector.broadcast %488 : vector<8x1xf32> to vector<8x8xf32>
    %490 = arith.mulf %485, %489 : vector<8x8xf32>
    %491 = arith.truncf %490 : vector<8x8xf32> to vector<8x8xbf16>
    %492 = arith.truncf %474 : vector<8x8xf32> to vector<8x8xbf16>
    %cst_214 = arith.constant dense<0.000000e+00> : vector<8x8xf32>
    %493 = tpu.matmul %491, %492, %cst_214 {dimension_numbers = #tpu.dot_dimension_numbers<[1], [0], [0], [1], [0, 0, 1, 1], [], []>} : vector<8x8xbf16>, vector<8x8xbf16>, vector<8x8xf32> -> vector<8x8xf32>
    %494 = arith.truncf %493 : vector<8x8xf32> to vector<8x8xbf16>
    %495 = vector.extract_strided_slice %39 {offsets = [3, 0, 0], sizes = [1, 8, 32], strides = [1, 1, 1]} : vector<4x8x32xbf16> to vector<1x8x32xbf16>
    %496 = vector.shape_cast %495 : vector<1x8x32xbf16> to vector<8x32xbf16>
    %cst_215 = arith.constant dense<0.000000e+00> : vector<8x32xf32>
    %497 = tpu.matmul %494, %496, %cst_215 {dimension_numbers = #tpu.dot_dimension_numbers<[1], [0], [0], [1], [0, 0, 1, 1], [], []>} : vector<8x8xbf16>, vector<8x32xbf16>, vector<8x32xf32> -> vector<8x32xf32>
    %498 = arith.addf %456, %497 : vector<8x32xf32>
    %499 = arith.addf %66, %498 : vector<8x32xf32>
    %500 = vector.broadcast %29 : vector<1x32xf32> to vector<8x32xf32>
    %501 = arith.addf %499, %500 : vector<8x32xf32>
    %502 = vector.extract_strided_slice %37 {offsets = [3, 0], sizes = [1, 32], strides = [1, 1]} : vector<6x32xf32> to vector<1x32xf32>
    %503 = vector.extract_strided_slice %36 {offsets = [3, 0], sizes = [1, 32], strides = [1, 1]} : vector<6x32xf32> to vector<1x32xf32>
    %cst_216 = arith.constant dense<0.000000e+00> : vector<8xf32>
    %504 = vector.multi_reduction <add>, %501, %cst_216 [1] : vector<8x32xf32> to vector<8xf32>
    %505 = vector.shape_cast %504 : vector<8xf32> to vector<8x1xf32>
    %cst_217 = arith.constant 3.200000e+01 : f32
    %506 = vector.broadcast %cst_217 : f32 to vector<8x1xf32>
    %507 = arith.divf %505, %506 : vector<8x1xf32>
    %508 = vector.broadcast %507 : vector<8x1xf32> to vector<8x32xf32>
    %509 = arith.subf %501, %508 : vector<8x32xf32>
    %510 = arith.mulf %509, %509 : vector<8x32xf32>
    %cst_218 = arith.constant dense<0.000000e+00> : vector<8xf32>
    %511 = vector.multi_reduction <add>, %510, %cst_218 [1] : vector<8x32xf32> to vector<8xf32>
    %512 = vector.shape_cast %511 : vector<8xf32> to vector<8x1xf32>
    %cst_219 = arith.constant 3.200000e+01 : f32
    %513 = vector.broadcast %cst_219 : f32 to vector<8x1xf32>
    %514 = arith.divf %512, %513 : vector<8x1xf32>
    %515 = vector.broadcast %507 : vector<8x1xf32> to vector<8x32xf32>
    %516 = arith.subf %501, %515 : vector<8x32xf32>
    %cst_220 = arith.constant 9.99999974E-6 : f32
    %517 = vector.broadcast %cst_220 : f32 to vector<8x1xf32>
    %518 = arith.addf %514, %517 : vector<8x1xf32>
    %519 = math.rsqrt %518 : vector<8x1xf32>
    %520 = vector.broadcast %519 : vector<8x1xf32> to vector<8x32xf32>
    %521 = arith.mulf %516, %520 : vector<8x32xf32>
    %522 = vector.broadcast %502 : vector<1x32xf32> to vector<8x32xf32>
    %523 = arith.mulf %521, %522 : vector<8x32xf32>
    %524 = vector.broadcast %503 : vector<1x32xf32> to vector<8x32xf32>
    %525 = arith.addf %523, %524 : vector<8x32xf32>
    %526 = arith.truncf %525 : vector<8x32xf32> to vector<8x32xbf16>
    %cst_221 = arith.constant dense<0.000000e+00> : vector<8x128xf32>
    %527 = tpu.matmul %526, %33, %cst_221 {dimension_numbers = #tpu.dot_dimension_numbers<[1], [0], [0], [1], [0, 0, 1, 1], [], []>} : vector<8x32xbf16>, vector<32x128xbf16>, vector<8x128xf32> -> vector<8x128xf32>
    %528 = vector.broadcast %32 : vector<1x128xf32> to vector<8x128xf32>
    %529 = arith.addf %527, %528 : vector<8x128xf32>
    %cst_222 = arith.constant 5.000000e-01 : f32
    %530 = vector.broadcast %cst_222 : f32 to vector<8x128xf32>
    %531 = arith.mulf %530, %529 : vector<8x128xf32>
    %cst_223 = arith.constant 0.707106769 : f32
    %532 = vector.broadcast %cst_223 : f32 to vector<8x128xf32>
    %533 = arith.mulf %529, %532 : vector<8x128xf32>
    %534 = math.erf %533 : vector<8x128xf32>
    %cst_224 = arith.constant 1.000000e+00 : f32
    %535 = vector.broadcast %cst_224 : f32 to vector<8x128xf32>
    %536 = arith.addf %535, %534 : vector<8x128xf32>
    %537 = arith.mulf %531, %536 : vector<8x128xf32>
    %538 = arith.truncf %537 : vector<8x128xf32> to vector<8x128xbf16>
    %cst_225 = arith.constant dense<0.000000e+00> : vector<8x32xf32>
    %539 = tpu.matmul %538, %35, %cst_225 {dimension_numbers = #tpu.dot_dimension_numbers<[1], [0], [0], [1], [0, 0, 1, 1], [], []>} : vector<8x128xbf16>, vector<128x32xbf16>, vector<8x32xf32> -> vector<8x32xf32>
    %540 = vector.broadcast %34 : vector<1x32xf32> to vector<8x32xf32>
    %541 = arith.addf %539, %540 : vector<8x32xf32>
    %542 = arith.addf %501, %541 : vector<8x32xf32>
    %543 = vector.extract_strided_slice %304 {offsets = [0, 0], sizes = [4, 32], strides = [1, 1]} : vector<8x32xf32> to vector<4x32xf32>
    %544 = vector.extract_strided_slice %542 {offsets = [0, 0], sizes = [4, 32], strides = [1, 1]} : vector<8x32xf32> to vector<4x32xf32>
    %545 = vector.extract_strided_slice %304 {offsets = [4, 0], sizes = [4, 32], strides = [1, 1]} : vector<8x32xf32> to vector<4x32xf32>
    %546 = vector.extract_strided_slice %542 {offsets = [4, 0], sizes = [4, 32], strides = [1, 1]} : vector<8x32xf32> to vector<4x32xf32>
    %547 = tpu.concatenate %543, %544, %545, %546 in 0 : vector<4x32xf32>, vector<4x32xf32>, vector<4x32xf32>, vector<4x32xf32> -> vector<16x32xf32>
    %548 = vector.extract_strided_slice %23 {offsets = [0, 0], sizes = [1, 32], strides = [1, 1]} : vector<6x32xf32> to vector<1x32xf32>
    %549 = vector.extract_strided_slice %22 {offsets = [0, 0], sizes = [1, 32], strides = [1, 1]} : vector<6x32xf32> to vector<1x32xf32>
    %cst_226 = arith.constant dense<0.000000e+00> : vector<16xf32>
    %550 = vector.multi_reduction <add>, %547, %cst_226 [1] : vector<16x32xf32> to vector<16xf32>
    %551 = vector.shape_cast %550 : vector<16xf32> to vector<16x1xf32>
    %cst_227 = arith.constant 3.200000e+01 : f32
    %552 = vector.broadcast %cst_227 : f32 to vector<16x1xf32>
    %553 = arith.divf %551, %552 : vector<16x1xf32>
    %554 = vector.broadcast %553 : vector<16x1xf32> to vector<16x32xf32>
    %555 = arith.subf %547, %554 : vector<16x32xf32>
    %556 = arith.mulf %555, %555 : vector<16x32xf32>
    %cst_228 = arith.constant dense<0.000000e+00> : vector<16xf32>
    %557 = vector.multi_reduction <add>, %556, %cst_228 [1] : vector<16x32xf32> to vector<16xf32>
    %558 = vector.shape_cast %557 : vector<16xf32> to vector<16x1xf32>
    %cst_229 = arith.constant 3.200000e+01 : f32
    %559 = vector.broadcast %cst_229 : f32 to vector<16x1xf32>
    %560 = arith.divf %558, %559 : vector<16x1xf32>
    %561 = vector.broadcast %553 : vector<16x1xf32> to vector<16x32xf32>
    %562 = arith.subf %547, %561 : vector<16x32xf32>
    %cst_230 = arith.constant 9.99999974E-6 : f32
    %563 = vector.broadcast %cst_230 : f32 to vector<16x1xf32>
    %564 = arith.addf %560, %563 : vector<16x1xf32>
    %565 = math.rsqrt %564 : vector<16x1xf32>
    %566 = vector.broadcast %565 : vector<16x1xf32> to vector<16x32xf32>
    %567 = arith.mulf %562, %566 : vector<16x32xf32>
    %568 = vector.broadcast %548 : vector<1x32xf32> to vector<16x32xf32>
    %569 = arith.mulf %567, %568 : vector<16x32xf32>
    %570 = vector.broadcast %549 : vector<1x32xf32> to vector<16x32xf32>
    %571 = arith.addf %569, %570 : vector<16x32xf32>
    %572 = arith.truncf %571 : vector<16x32xf32> to vector<16x32xbf16>
    %cst_231 = arith.constant 0.000000e+00 : f32
    %573 = vector.broadcast %cst_231 : f32 to vector<16x32xf32>
    %574 = vector.extract_strided_slice %26 {offsets = [0, 0, 0], sizes = [1, 32, 8], strides = [1, 1, 1]} : vector<4x32x8xbf16> to vector<1x32x8xbf16>
    %575 = vector.shape_cast %574 : vector<1x32x8xbf16> to vector<32x8xbf16>
    %cst_232 = arith.constant dense<0.000000e+00> : vector<16x8xf32>
    %576 = tpu.matmul %572, %575, %cst_232 {dimension_numbers = #tpu.dot_dimension_numbers<[1], [0], [0], [1], [0, 0, 1, 1], [], []>} : vector<16x32xbf16>, vector<32x8xbf16>, vector<16x8xf32> -> vector<16x8xf32>
    %577 = vector.extract_strided_slice %16 {offsets = [0, 0], sizes = [1, 8], strides = [1, 1]} : vector<4x8xf32> to vector<1x8xf32>
    %578 = vector.broadcast %577 : vector<1x8xf32> to vector<16x8xf32>
    %579 = arith.addf %576, %578 : vector<16x8xf32>
    %580 = vector.extract_strided_slice %24 {offsets = [0, 0, 0], sizes = [1, 32, 8], strides = [1, 1, 1]} : vector<4x32x8xbf16> to vector<1x32x8xbf16>
    %581 = vector.shape_cast %580 : vector<1x32x8xbf16> to vector<32x8xbf16>
    %cst_233 = arith.constant dense<0.000000e+00> : vector<16x8xf32>
    %582 = tpu.matmul %572, %581, %cst_233 {dimension_numbers = #tpu.dot_dimension_numbers<[1], [0], [0], [1], [0, 0, 1, 1], [], []>} : vector<16x32xbf16>, vector<32x8xbf16>, vector<16x8xf32> -> vector<16x8xf32>
    %583 = vector.extract_strided_slice %14 {offsets = [0, 0], sizes = [1, 8], strides = [1, 1]} : vector<4x8xf32> to vector<1x8xf32>
    %584 = vector.broadcast %583 : vector<1x8xf32> to vector<16x8xf32>
    %585 = arith.addf %582, %584 : vector<16x8xf32>
    %586 = vector.extract_strided_slice %27 {offsets = [0, 0, 0], sizes = [1, 32, 8], strides = [1, 1, 1]} : vector<4x32x8xbf16> to vector<1x32x8xbf16>
    %587 = vector.shape_cast %586 : vector<1x32x8xbf16> to vector<32x8xbf16>
    %cst_234 = arith.constant dense<0.000000e+00> : vector<16x8xf32>
    %588 = tpu.matmul %572, %587, %cst_234 {dimension_numbers = #tpu.dot_dimension_numbers<[1], [0], [0], [1], [0, 0, 1, 1], [], []>} : vector<16x32xbf16>, vector<32x8xbf16>, vector<16x8xf32> -> vector<16x8xf32>
    %589 = vector.extract_strided_slice %17 {offsets = [0, 0], sizes = [1, 8], strides = [1, 1]} : vector<4x8xf32> to vector<1x8xf32>
    %590 = vector.broadcast %589 : vector<1x8xf32> to vector<16x8xf32>
    %591 = arith.addf %588, %590 : vector<16x8xf32>
    %592 = arith.truncf %579 : vector<16x8xf32> to vector<16x8xbf16>
    %593 = arith.truncf %585 : vector<16x8xf32> to vector<16x8xbf16>
    %cst_235 = arith.constant dense<0.000000e+00> : vector<16x16xf32>
    %594 = tpu.matmul %592, %593, %cst_235 {dimension_numbers = #tpu.dot_dimension_numbers<[1], [1], [0], [0], [0, 0, 1, 0], [], []>} : vector<16x8xbf16>, vector<16x8xbf16>, vector<16x16xf32> -> vector<16x16xf32>
    %cst_236 = arith.constant 0.353553385 : f32
    %595 = vector.broadcast %cst_236 : f32 to vector<16x16xf32>
    %596 = arith.mulf %594, %595 : vector<16x16xf32>
    %597 = arith.addf %596, %45 : vector<16x16xf32>
    %cst_237 = arith.constant dense<0xFF800000> : vector<16xf32>
    %598 = vector.multi_reduction <maximumf>, %597, %cst_237 [1] : vector<16x16xf32> to vector<16xf32>
    %599 = vector.shape_cast %598 : vector<16xf32> to vector<16x1xf32>
    %600 = vector.broadcast %599 : vector<16x1xf32> to vector<16x16xf32>
    %601 = arith.subf %597, %600 : vector<16x16xf32>
    %602 = math.exp %601 : vector<16x16xf32>
    %cst_238 = arith.constant dense<0.000000e+00> : vector<16xf32>
    %603 = vector.multi_reduction <add>, %602, %cst_238 [1] : vector<16x16xf32> to vector<16xf32>
    %604 = vector.shape_cast %603 : vector<16xf32> to vector<16x1xf32>
    %605 = tpu.reciprocal %604 {approx = true} : vector<16x1xf32> -> vector<16x1xf32>
    %606 = vector.broadcast %605 : vector<16x1xf32> to vector<16x16xf32>
    %607 = arith.mulf %602, %606 : vector<16x16xf32>
    %608 = arith.truncf %607 : vector<16x16xf32> to vector<16x16xbf16>
    %609 = arith.truncf %591 : vector<16x8xf32> to vector<16x8xbf16>
    %cst_239 = arith.constant dense<0.000000e+00> : vector<16x8xf32>
    %610 = tpu.matmul %608, %609, %cst_239 {dimension_numbers = #tpu.dot_dimension_numbers<[1], [0], [0], [1], [0, 0, 1, 1], [], []>} : vector<16x16xbf16>, vector<16x8xbf16>, vector<16x8xf32> -> vector<16x8xf32>
    %611 = arith.truncf %610 : vector<16x8xf32> to vector<16x8xbf16>
    %612 = vector.extract_strided_slice %25 {offsets = [0, 0, 0], sizes = [1, 8, 32], strides = [1, 1, 1]} : vector<4x8x32xbf16> to vector<1x8x32xbf16>
    %613 = vector.shape_cast %612 : vector<1x8x32xbf16> to vector<8x32xbf16>
    %cst_240 = arith.constant dense<0.000000e+00> : vector<16x32xf32>
    %614 = tpu.matmul %611, %613, %cst_240 {dimension_numbers = #tpu.dot_dimension_numbers<[1], [0], [0], [1], [0, 0, 1, 1], [], []>} : vector<16x8xbf16>, vector<8x32xbf16>, vector<16x32xf32> -> vector<16x32xf32>
    %615 = arith.addf %573, %614 : vector<16x32xf32>
    %616 = vector.extract_strided_slice %26 {offsets = [1, 0, 0], sizes = [1, 32, 8], strides = [1, 1, 1]} : vector<4x32x8xbf16> to vector<1x32x8xbf16>
    %617 = vector.shape_cast %616 : vector<1x32x8xbf16> to vector<32x8xbf16>
    %cst_241 = arith.constant dense<0.000000e+00> : vector<16x8xf32>
    %618 = tpu.matmul %572, %617, %cst_241 {dimension_numbers = #tpu.dot_dimension_numbers<[1], [0], [0], [1], [0, 0, 1, 1], [], []>} : vector<16x32xbf16>, vector<32x8xbf16>, vector<16x8xf32> -> vector<16x8xf32>
    %619 = vector.extract_strided_slice %16 {offsets = [1, 0], sizes = [1, 8], strides = [1, 1]} : vector<4x8xf32> to vector<1x8xf32>
    %620 = vector.broadcast %619 : vector<1x8xf32> to vector<16x8xf32>
    %621 = arith.addf %618, %620 : vector<16x8xf32>
    %622 = vector.extract_strided_slice %24 {offsets = [1, 0, 0], sizes = [1, 32, 8], strides = [1, 1, 1]} : vector<4x32x8xbf16> to vector<1x32x8xbf16>
    %623 = vector.shape_cast %622 : vector<1x32x8xbf16> to vector<32x8xbf16>
    %cst_242 = arith.constant dense<0.000000e+00> : vector<16x8xf32>
    %624 = tpu.matmul %572, %623, %cst_242 {dimension_numbers = #tpu.dot_dimension_numbers<[1], [0], [0], [1], [0, 0, 1, 1], [], []>} : vector<16x32xbf16>, vector<32x8xbf16>, vector<16x8xf32> -> vector<16x8xf32>
    %625 = vector.extract_strided_slice %14 {offsets = [1, 0], sizes = [1, 8], strides = [1, 1]} : vector<4x8xf32> to vector<1x8xf32>
    %626 = vector.broadcast %625 : vector<1x8xf32> to vector<16x8xf32>
    %627 = arith.addf %624, %626 : vector<16x8xf32>
    %628 = vector.extract_strided_slice %27 {offsets = [1, 0, 0], sizes = [1, 32, 8], strides = [1, 1, 1]} : vector<4x32x8xbf16> to vector<1x32x8xbf16>
    %629 = vector.shape_cast %628 : vector<1x32x8xbf16> to vector<32x8xbf16>
    %cst_243 = arith.constant dense<0.000000e+00> : vector<16x8xf32>
    %630 = tpu.matmul %572, %629, %cst_243 {dimension_numbers = #tpu.dot_dimension_numbers<[1], [0], [0], [1], [0, 0, 1, 1], [], []>} : vector<16x32xbf16>, vector<32x8xbf16>, vector<16x8xf32> -> vector<16x8xf32>
    %631 = vector.extract_strided_slice %17 {offsets = [1, 0], sizes = [1, 8], strides = [1, 1]} : vector<4x8xf32> to vector<1x8xf32>
    %632 = vector.broadcast %631 : vector<1x8xf32> to vector<16x8xf32>
    %633 = arith.addf %630, %632 : vector<16x8xf32>
    %634 = arith.truncf %621 : vector<16x8xf32> to vector<16x8xbf16>
    %635 = arith.truncf %627 : vector<16x8xf32> to vector<16x8xbf16>
    %cst_244 = arith.constant dense<0.000000e+00> : vector<16x16xf32>
    %636 = tpu.matmul %634, %635, %cst_244 {dimension_numbers = #tpu.dot_dimension_numbers<[1], [1], [0], [0], [0, 0, 1, 0], [], []>} : vector<16x8xbf16>, vector<16x8xbf16>, vector<16x16xf32> -> vector<16x16xf32>
    %cst_245 = arith.constant 0.353553385 : f32
    %637 = vector.broadcast %cst_245 : f32 to vector<16x16xf32>
    %638 = arith.mulf %636, %637 : vector<16x16xf32>
    %639 = arith.addf %638, %45 : vector<16x16xf32>
    %cst_246 = arith.constant dense<0xFF800000> : vector<16xf32>
    %640 = vector.multi_reduction <maximumf>, %639, %cst_246 [1] : vector<16x16xf32> to vector<16xf32>
    %641 = vector.shape_cast %640 : vector<16xf32> to vector<16x1xf32>
    %642 = vector.broadcast %641 : vector<16x1xf32> to vector<16x16xf32>
    %643 = arith.subf %639, %642 : vector<16x16xf32>
    %644 = math.exp %643 : vector<16x16xf32>
    %cst_247 = arith.constant dense<0.000000e+00> : vector<16xf32>
    %645 = vector.multi_reduction <add>, %644, %cst_247 [1] : vector<16x16xf32> to vector<16xf32>
    %646 = vector.shape_cast %645 : vector<16xf32> to vector<16x1xf32>
    %647 = tpu.reciprocal %646 {approx = true} : vector<16x1xf32> -> vector<16x1xf32>
    %648 = vector.broadcast %647 : vector<16x1xf32> to vector<16x16xf32>
    %649 = arith.mulf %644, %648 : vector<16x16xf32>
    %650 = arith.truncf %649 : vector<16x16xf32> to vector<16x16xbf16>
    %651 = arith.truncf %633 : vector<16x8xf32> to vector<16x8xbf16>
    %cst_248 = arith.constant dense<0.000000e+00> : vector<16x8xf32>
    %652 = tpu.matmul %650, %651, %cst_248 {dimension_numbers = #tpu.dot_dimension_numbers<[1], [0], [0], [1], [0, 0, 1, 1], [], []>} : vector<16x16xbf16>, vector<16x8xbf16>, vector<16x8xf32> -> vector<16x8xf32>
    %653 = arith.truncf %652 : vector<16x8xf32> to vector<16x8xbf16>
    %654 = vector.extract_strided_slice %25 {offsets = [1, 0, 0], sizes = [1, 8, 32], strides = [1, 1, 1]} : vector<4x8x32xbf16> to vector<1x8x32xbf16>
    %655 = vector.shape_cast %654 : vector<1x8x32xbf16> to vector<8x32xbf16>
    %cst_249 = arith.constant dense<0.000000e+00> : vector<16x32xf32>
    %656 = tpu.matmul %653, %655, %cst_249 {dimension_numbers = #tpu.dot_dimension_numbers<[1], [0], [0], [1], [0, 0, 1, 1], [], []>} : vector<16x8xbf16>, vector<8x32xbf16>, vector<16x32xf32> -> vector<16x32xf32>
    %657 = arith.addf %615, %656 : vector<16x32xf32>
    %658 = vector.extract_strided_slice %26 {offsets = [2, 0, 0], sizes = [1, 32, 8], strides = [1, 1, 1]} : vector<4x32x8xbf16> to vector<1x32x8xbf16>
    %659 = vector.shape_cast %658 : vector<1x32x8xbf16> to vector<32x8xbf16>
    %cst_250 = arith.constant dense<0.000000e+00> : vector<16x8xf32>
    %660 = tpu.matmul %572, %659, %cst_250 {dimension_numbers = #tpu.dot_dimension_numbers<[1], [0], [0], [1], [0, 0, 1, 1], [], []>} : vector<16x32xbf16>, vector<32x8xbf16>, vector<16x8xf32> -> vector<16x8xf32>
    %661 = vector.extract_strided_slice %16 {offsets = [2, 0], sizes = [1, 8], strides = [1, 1]} : vector<4x8xf32> to vector<1x8xf32>
    %662 = vector.broadcast %661 : vector<1x8xf32> to vector<16x8xf32>
    %663 = arith.addf %660, %662 : vector<16x8xf32>
    %664 = vector.extract_strided_slice %24 {offsets = [2, 0, 0], sizes = [1, 32, 8], strides = [1, 1, 1]} : vector<4x32x8xbf16> to vector<1x32x8xbf16>
    %665 = vector.shape_cast %664 : vector<1x32x8xbf16> to vector<32x8xbf16>
    %cst_251 = arith.constant dense<0.000000e+00> : vector<16x8xf32>
    %666 = tpu.matmul %572, %665, %cst_251 {dimension_numbers = #tpu.dot_dimension_numbers<[1], [0], [0], [1], [0, 0, 1, 1], [], []>} : vector<16x32xbf16>, vector<32x8xbf16>, vector<16x8xf32> -> vector<16x8xf32>
    %667 = vector.extract_strided_slice %14 {offsets = [2, 0], sizes = [1, 8], strides = [1, 1]} : vector<4x8xf32> to vector<1x8xf32>
    %668 = vector.broadcast %667 : vector<1x8xf32> to vector<16x8xf32>
    %669 = arith.addf %666, %668 : vector<16x8xf32>
    %670 = vector.extract_strided_slice %27 {offsets = [2, 0, 0], sizes = [1, 32, 8], strides = [1, 1, 1]} : vector<4x32x8xbf16> to vector<1x32x8xbf16>
    %671 = vector.shape_cast %670 : vector<1x32x8xbf16> to vector<32x8xbf16>
    %cst_252 = arith.constant dense<0.000000e+00> : vector<16x8xf32>
    %672 = tpu.matmul %572, %671, %cst_252 {dimension_numbers = #tpu.dot_dimension_numbers<[1], [0], [0], [1], [0, 0, 1, 1], [], []>} : vector<16x32xbf16>, vector<32x8xbf16>, vector<16x8xf32> -> vector<16x8xf32>
    %673 = vector.extract_strided_slice %17 {offsets = [2, 0], sizes = [1, 8], strides = [1, 1]} : vector<4x8xf32> to vector<1x8xf32>
    %674 = vector.broadcast %673 : vector<1x8xf32> to vector<16x8xf32>
    %675 = arith.addf %672, %674 : vector<16x8xf32>
    %676 = arith.truncf %663 : vector<16x8xf32> to vector<16x8xbf16>
    %677 = arith.truncf %669 : vector<16x8xf32> to vector<16x8xbf16>
    %cst_253 = arith.constant dense<0.000000e+00> : vector<16x16xf32>
    %678 = tpu.matmul %676, %677, %cst_253 {dimension_numbers = #tpu.dot_dimension_numbers<[1], [1], [0], [0], [0, 0, 1, 0], [], []>} : vector<16x8xbf16>, vector<16x8xbf16>, vector<16x16xf32> -> vector<16x16xf32>
    %cst_254 = arith.constant 0.353553385 : f32
    %679 = vector.broadcast %cst_254 : f32 to vector<16x16xf32>
    %680 = arith.mulf %678, %679 : vector<16x16xf32>
    %681 = arith.addf %680, %45 : vector<16x16xf32>
    %cst_255 = arith.constant dense<0xFF800000> : vector<16xf32>
    %682 = vector.multi_reduction <maximumf>, %681, %cst_255 [1] : vector<16x16xf32> to vector<16xf32>
    %683 = vector.shape_cast %682 : vector<16xf32> to vector<16x1xf32>
    %684 = vector.broadcast %683 : vector<16x1xf32> to vector<16x16xf32>
    %685 = arith.subf %681, %684 : vector<16x16xf32>
    %686 = math.exp %685 : vector<16x16xf32>
    %cst_256 = arith.constant dense<0.000000e+00> : vector<16xf32>
    %687 = vector.multi_reduction <add>, %686, %cst_256 [1] : vector<16x16xf32> to vector<16xf32>
    %688 = vector.shape_cast %687 : vector<16xf32> to vector<16x1xf32>
    %689 = tpu.reciprocal %688 {approx = true} : vector<16x1xf32> -> vector<16x1xf32>
    %690 = vector.broadcast %689 : vector<16x1xf32> to vector<16x16xf32>
    %691 = arith.mulf %686, %690 : vector<16x16xf32>
    %692 = arith.truncf %691 : vector<16x16xf32> to vector<16x16xbf16>
    %693 = arith.truncf %675 : vector<16x8xf32> to vector<16x8xbf16>
    %cst_257 = arith.constant dense<0.000000e+00> : vector<16x8xf32>
    %694 = tpu.matmul %692, %693, %cst_257 {dimension_numbers = #tpu.dot_dimension_numbers<[1], [0], [0], [1], [0, 0, 1, 1], [], []>} : vector<16x16xbf16>, vector<16x8xbf16>, vector<16x8xf32> -> vector<16x8xf32>
    %695 = arith.truncf %694 : vector<16x8xf32> to vector<16x8xbf16>
    %696 = vector.extract_strided_slice %25 {offsets = [2, 0, 0], sizes = [1, 8, 32], strides = [1, 1, 1]} : vector<4x8x32xbf16> to vector<1x8x32xbf16>
    %697 = vector.shape_cast %696 : vector<1x8x32xbf16> to vector<8x32xbf16>
    %cst_258 = arith.constant dense<0.000000e+00> : vector<16x32xf32>
    %698 = tpu.matmul %695, %697, %cst_258 {dimension_numbers = #tpu.dot_dimension_numbers<[1], [0], [0], [1], [0, 0, 1, 1], [], []>} : vector<16x8xbf16>, vector<8x32xbf16>, vector<16x32xf32> -> vector<16x32xf32>
    %699 = arith.addf %657, %698 : vector<16x32xf32>
    %700 = vector.extract_strided_slice %26 {offsets = [3, 0, 0], sizes = [1, 32, 8], strides = [1, 1, 1]} : vector<4x32x8xbf16> to vector<1x32x8xbf16>
    %701 = vector.shape_cast %700 : vector<1x32x8xbf16> to vector<32x8xbf16>
    %cst_259 = arith.constant dense<0.000000e+00> : vector<16x8xf32>
    %702 = tpu.matmul %572, %701, %cst_259 {dimension_numbers = #tpu.dot_dimension_numbers<[1], [0], [0], [1], [0, 0, 1, 1], [], []>} : vector<16x32xbf16>, vector<32x8xbf16>, vector<16x8xf32> -> vector<16x8xf32>
    %703 = vector.extract_strided_slice %16 {offsets = [3, 0], sizes = [1, 8], strides = [1, 1]} : vector<4x8xf32> to vector<1x8xf32>
    %704 = vector.broadcast %703 : vector<1x8xf32> to vector<16x8xf32>
    %705 = arith.addf %702, %704 : vector<16x8xf32>
    %706 = vector.extract_strided_slice %24 {offsets = [3, 0, 0], sizes = [1, 32, 8], strides = [1, 1, 1]} : vector<4x32x8xbf16> to vector<1x32x8xbf16>
    %707 = vector.shape_cast %706 : vector<1x32x8xbf16> to vector<32x8xbf16>
    %cst_260 = arith.constant dense<0.000000e+00> : vector<16x8xf32>
    %708 = tpu.matmul %572, %707, %cst_260 {dimension_numbers = #tpu.dot_dimension_numbers<[1], [0], [0], [1], [0, 0, 1, 1], [], []>} : vector<16x32xbf16>, vector<32x8xbf16>, vector<16x8xf32> -> vector<16x8xf32>
    %709 = vector.extract_strided_slice %14 {offsets = [3, 0], sizes = [1, 8], strides = [1, 1]} : vector<4x8xf32> to vector<1x8xf32>
    %710 = vector.broadcast %709 : vector<1x8xf32> to vector<16x8xf32>
    %711 = arith.addf %708, %710 : vector<16x8xf32>
    %712 = vector.extract_strided_slice %27 {offsets = [3, 0, 0], sizes = [1, 32, 8], strides = [1, 1, 1]} : vector<4x32x8xbf16> to vector<1x32x8xbf16>
    %713 = vector.shape_cast %712 : vector<1x32x8xbf16> to vector<32x8xbf16>
    %cst_261 = arith.constant dense<0.000000e+00> : vector<16x8xf32>
    %714 = tpu.matmul %572, %713, %cst_261 {dimension_numbers = #tpu.dot_dimension_numbers<[1], [0], [0], [1], [0, 0, 1, 1], [], []>} : vector<16x32xbf16>, vector<32x8xbf16>, vector<16x8xf32> -> vector<16x8xf32>
    %715 = vector.extract_strided_slice %17 {offsets = [3, 0], sizes = [1, 8], strides = [1, 1]} : vector<4x8xf32> to vector<1x8xf32>
    %716 = vector.broadcast %715 : vector<1x8xf32> to vector<16x8xf32>
    %717 = arith.addf %714, %716 : vector<16x8xf32>
    %718 = arith.truncf %705 : vector<16x8xf32> to vector<16x8xbf16>
    %719 = arith.truncf %711 : vector<16x8xf32> to vector<16x8xbf16>
    %cst_262 = arith.constant dense<0.000000e+00> : vector<16x16xf32>
    %720 = tpu.matmul %718, %719, %cst_262 {dimension_numbers = #tpu.dot_dimension_numbers<[1], [1], [0], [0], [0, 0, 1, 0], [], []>} : vector<16x8xbf16>, vector<16x8xbf16>, vector<16x16xf32> -> vector<16x16xf32>
    %cst_263 = arith.constant 0.353553385 : f32
    %721 = vector.broadcast %cst_263 : f32 to vector<16x16xf32>
    %722 = arith.mulf %720, %721 : vector<16x16xf32>
    %723 = arith.addf %722, %45 : vector<16x16xf32>
    %cst_264 = arith.constant dense<0xFF800000> : vector<16xf32>
    %724 = vector.multi_reduction <maximumf>, %723, %cst_264 [1] : vector<16x16xf32> to vector<16xf32>
    %725 = vector.shape_cast %724 : vector<16xf32> to vector<16x1xf32>
    %726 = vector.broadcast %725 : vector<16x1xf32> to vector<16x16xf32>
    %727 = arith.subf %723, %726 : vector<16x16xf32>
    %728 = math.exp %727 : vector<16x16xf32>
    %cst_265 = arith.constant dense<0.000000e+00> : vector<16xf32>
    %729 = vector.multi_reduction <add>, %728, %cst_265 [1] : vector<16x16xf32> to vector<16xf32>
    %730 = vector.shape_cast %729 : vector<16xf32> to vector<16x1xf32>
    %731 = tpu.reciprocal %730 {approx = true} : vector<16x1xf32> -> vector<16x1xf32>
    %732 = vector.broadcast %731 : vector<16x1xf32> to vector<16x16xf32>
    %733 = arith.mulf %728, %732 : vector<16x16xf32>
    %734 = arith.truncf %733 : vector<16x16xf32> to vector<16x16xbf16>
    %735 = arith.truncf %717 : vector<16x8xf32> to vector<16x8xbf16>
    %cst_266 = arith.constant dense<0.000000e+00> : vector<16x8xf32>
    %736 = tpu.matmul %734, %735, %cst_266 {dimension_numbers = #tpu.dot_dimension_numbers<[1], [0], [0], [1], [0, 0, 1, 1], [], []>} : vector<16x16xbf16>, vector<16x8xbf16>, vector<16x8xf32> -> vector<16x8xf32>
    %737 = arith.truncf %736 : vector<16x8xf32> to vector<16x8xbf16>
    %738 = vector.extract_strided_slice %25 {offsets = [3, 0, 0], sizes = [1, 8, 32], strides = [1, 1, 1]} : vector<4x8x32xbf16> to vector<1x8x32xbf16>
    %739 = vector.shape_cast %738 : vector<1x8x32xbf16> to vector<8x32xbf16>
    %cst_267 = arith.constant dense<0.000000e+00> : vector<16x32xf32>
    %740 = tpu.matmul %737, %739, %cst_267 {dimension_numbers = #tpu.dot_dimension_numbers<[1], [0], [0], [1], [0, 0, 1, 1], [], []>} : vector<16x8xbf16>, vector<8x32xbf16>, vector<16x32xf32> -> vector<16x32xf32>
    %741 = arith.addf %699, %740 : vector<16x32xf32>
    %742 = arith.addf %547, %741 : vector<16x32xf32>
    %743 = vector.broadcast %15 : vector<1x32xf32> to vector<16x32xf32>
    %744 = arith.addf %742, %743 : vector<16x32xf32>
    %745 = vector.extract_strided_slice %23 {offsets = [3, 0], sizes = [1, 32], strides = [1, 1]} : vector<6x32xf32> to vector<1x32xf32>
    %746 = vector.extract_strided_slice %22 {offsets = [3, 0], sizes = [1, 32], strides = [1, 1]} : vector<6x32xf32> to vector<1x32xf32>
    %cst_268 = arith.constant dense<0.000000e+00> : vector<16xf32>
    %747 = vector.multi_reduction <add>, %744, %cst_268 [1] : vector<16x32xf32> to vector<16xf32>
    %748 = vector.shape_cast %747 : vector<16xf32> to vector<16x1xf32>
    %cst_269 = arith.constant 3.200000e+01 : f32
    %749 = vector.broadcast %cst_269 : f32 to vector<16x1xf32>
    %750 = arith.divf %748, %749 : vector<16x1xf32>
    %751 = vector.broadcast %750 : vector<16x1xf32> to vector<16x32xf32>
    %752 = arith.subf %744, %751 : vector<16x32xf32>
    %753 = arith.mulf %752, %752 : vector<16x32xf32>
    %cst_270 = arith.constant dense<0.000000e+00> : vector<16xf32>
    %754 = vector.multi_reduction <add>, %753, %cst_270 [1] : vector<16x32xf32> to vector<16xf32>
    %755 = vector.shape_cast %754 : vector<16xf32> to vector<16x1xf32>
    %cst_271 = arith.constant 3.200000e+01 : f32
    %756 = vector.broadcast %cst_271 : f32 to vector<16x1xf32>
    %757 = arith.divf %755, %756 : vector<16x1xf32>
    %758 = vector.broadcast %750 : vector<16x1xf32> to vector<16x32xf32>
    %759 = arith.subf %744, %758 : vector<16x32xf32>
    %cst_272 = arith.constant 9.99999974E-6 : f32
    %760 = vector.broadcast %cst_272 : f32 to vector<16x1xf32>
    %761 = arith.addf %757, %760 : vector<16x1xf32>
    %762 = math.rsqrt %761 : vector<16x1xf32>
    %763 = vector.broadcast %762 : vector<16x1xf32> to vector<16x32xf32>
    %764 = arith.mulf %759, %763 : vector<16x32xf32>
    %765 = vector.broadcast %745 : vector<1x32xf32> to vector<16x32xf32>
    %766 = arith.mulf %764, %765 : vector<16x32xf32>
    %767 = vector.broadcast %746 : vector<1x32xf32> to vector<16x32xf32>
    %768 = arith.addf %766, %767 : vector<16x32xf32>
    %769 = arith.truncf %768 : vector<16x32xf32> to vector<16x32xbf16>
    %cst_273 = arith.constant dense<0.000000e+00> : vector<16x128xf32>
    %770 = tpu.matmul %769, %19, %cst_273 {dimension_numbers = #tpu.dot_dimension_numbers<[1], [0], [0], [1], [0, 0, 1, 1], [], []>} : vector<16x32xbf16>, vector<32x128xbf16>, vector<16x128xf32> -> vector<16x128xf32>
    %771 = vector.broadcast %18 : vector<1x128xf32> to vector<16x128xf32>
    %772 = arith.addf %770, %771 : vector<16x128xf32>
    %cst_274 = arith.constant 5.000000e-01 : f32
    %773 = vector.broadcast %cst_274 : f32 to vector<16x128xf32>
    %774 = arith.mulf %773, %772 : vector<16x128xf32>
    %cst_275 = arith.constant 0.707106769 : f32
    %775 = vector.broadcast %cst_275 : f32 to vector<16x128xf32>
    %776 = arith.mulf %772, %775 : vector<16x128xf32>
    %777 = math.erf %776 : vector<16x128xf32>
    %cst_276 = arith.constant 1.000000e+00 : f32
    %778 = vector.broadcast %cst_276 : f32 to vector<16x128xf32>
    %779 = arith.addf %778, %777 : vector<16x128xf32>
    %780 = arith.mulf %774, %779 : vector<16x128xf32>
    %781 = arith.truncf %780 : vector<16x128xf32> to vector<16x128xbf16>
    %cst_277 = arith.constant dense<0.000000e+00> : vector<16x32xf32>
    %782 = tpu.matmul %781, %21, %cst_277 {dimension_numbers = #tpu.dot_dimension_numbers<[1], [0], [0], [1], [0, 0, 1, 1], [], []>} : vector<16x128xbf16>, vector<128x32xbf16>, vector<16x32xf32> -> vector<16x32xf32>
    %783 = vector.broadcast %20 : vector<1x32xf32> to vector<16x32xf32>
    %784 = arith.addf %782, %783 : vector<16x32xf32>
    %785 = arith.addf %744, %784 : vector<16x32xf32>
    %786 = vector.extract_strided_slice %43 {offsets = [0, 0], sizes = [1, 32], strides = [1, 1]} : vector<3x32xf32> to vector<1x32xf32>
    %787 = vector.extract_strided_slice %42 {offsets = [0, 0], sizes = [1, 32], strides = [1, 1]} : vector<3x32xf32> to vector<1x32xf32>
    %cst_278 = arith.constant dense<0.000000e+00> : vector<16xf32>
    %788 = vector.multi_reduction <add>, %785, %cst_278 [1] : vector<16x32xf32> to vector<16xf32>
    %789 = vector.shape_cast %788 : vector<16xf32> to vector<16x1xf32>
    %cst_279 = arith.constant 3.200000e+01 : f32
    %790 = vector.broadcast %cst_279 : f32 to vector<16x1xf32>
    %791 = arith.divf %789, %790 : vector<16x1xf32>
    %792 = vector.broadcast %791 : vector<16x1xf32> to vector<16x32xf32>
    %793 = arith.subf %785, %792 : vector<16x32xf32>
    %794 = arith.mulf %793, %793 : vector<16x32xf32>
    %cst_280 = arith.constant dense<0.000000e+00> : vector<16xf32>
    %795 = vector.multi_reduction <add>, %794, %cst_280 [1] : vector<16x32xf32> to vector<16xf32>
    %796 = vector.shape_cast %795 : vector<16xf32> to vector<16x1xf32>
    %cst_281 = arith.constant 3.200000e+01 : f32
    %797 = vector.broadcast %cst_281 : f32 to vector<16x1xf32>
    %798 = arith.divf %796, %797 : vector<16x1xf32>
    %799 = vector.broadcast %791 : vector<16x1xf32> to vector<16x32xf32>
    %800 = arith.subf %785, %799 : vector<16x32xf32>
    %cst_282 = arith.constant 9.99999974E-6 : f32
    %801 = vector.broadcast %cst_282 : f32 to vector<16x1xf32>
    %802 = arith.addf %798, %801 : vector<16x1xf32>
    %803 = math.rsqrt %802 : vector<16x1xf32>
    %804 = vector.broadcast %803 : vector<16x1xf32> to vector<16x32xf32>
    %805 = arith.mulf %800, %804 : vector<16x32xf32>
    %806 = vector.broadcast %786 : vector<1x32xf32> to vector<16x32xf32>
    %807 = arith.mulf %805, %806 : vector<16x32xf32>
    %808 = vector.broadcast %787 : vector<1x32xf32> to vector<16x32xf32>
    %809 = arith.addf %807, %808 : vector<16x32xf32>
    %c0_283 = arith.constant 0 : index
    %c0_284 = arith.constant 0 : index
    %810 = vector.load %arg56[%c0_283, %c0_284] : memref<16x32xf32, #tpu.memory_space<vmem>>, vector<16x32xf32>
    tpu.vector_store %arg56[%c0_283, %c0_284], %809 {strides = array<i32>} : memref<16x32xf32, #tpu.memory_space<vmem>>, vector<16x32xf32>,
    %811 = vector.extract_strided_slice %23 {offsets = [1, 0], sizes = [1, 32], strides = [1, 1]} : vector<6x32xf32> to vector<1x32xf32>
    %812 = vector.extract_strided_slice %22 {offsets = [1, 0], sizes = [1, 32], strides = [1, 1]} : vector<6x32xf32> to vector<1x32xf32>
    %cst_285 = arith.constant dense<0.000000e+00> : vector<8xf32>
    %813 = vector.multi_reduction <add>, %304, %cst_285 [1] : vector<8x32xf32> to vector<8xf32>
    %814 = vector.shape_cast %813 : vector<8xf32> to vector<8x1xf32>
    %cst_286 = arith.constant 3.200000e+01 : f32
    %815 = vector.broadcast %cst_286 : f32 to vector<8x1xf32>
    %816 = arith.divf %814, %815 : vector<8x1xf32>
    %817 = vector.broadcast %816 : vector<8x1xf32> to vector<8x32xf32>
    %818 = arith.subf %304, %817 : vector<8x32xf32>
    %819 = arith.mulf %818, %818 : vector<8x32xf32>
    %cst_287 = arith.constant dense<0.000000e+00> : vector<8xf32>
    %820 = vector.multi_reduction <add>, %819, %cst_287 [1] : vector<8x32xf32> to vector<8xf32>
    %821 = vector.shape_cast %820 : vector<8xf32> to vector<8x1xf32>
    %cst_288 = arith.constant 3.200000e+01 : f32
    %822 = vector.broadcast %cst_288 : f32 to vector<8x1xf32>
    %823 = arith.divf %821, %822 : vector<8x1xf32>
    %824 = vector.broadcast %816 : vector<8x1xf32> to vector<8x32xf32>
    %825 = arith.subf %304, %824 : vector<8x32xf32>
    %cst_289 = arith.constant 9.99999974E-6 : f32
    %826 = vector.broadcast %cst_289 : f32 to vector<8x1xf32>
    %827 = arith.addf %823, %826 : vector<8x1xf32>
    %828 = math.rsqrt %827 : vector<8x1xf32>
    %829 = vector.broadcast %828 : vector<8x1xf32> to vector<8x32xf32>
    %830 = arith.mulf %825, %829 : vector<8x32xf32>
    %831 = vector.broadcast %811 : vector<1x32xf32> to vector<8x32xf32>
    %832 = arith.mulf %830, %831 : vector<8x32xf32>
    %833 = vector.broadcast %812 : vector<1x32xf32> to vector<8x32xf32>
    %834 = arith.addf %832, %833 : vector<8x32xf32>
    %835 = arith.truncf %834 : vector<8x32xf32> to vector<8x32xbf16>
    %cst_290 = arith.constant 0.000000e+00 : f32
    %836 = vector.broadcast %cst_290 : f32 to vector<8x32xf32>
    %837 = vector.extract_strided_slice %26 {offsets = [0, 0, 0], sizes = [1, 32, 8], strides = [1, 1, 1]} : vector<4x32x8xbf16> to vector<1x32x8xbf16>
    %838 = vector.shape_cast %837 : vector<1x32x8xbf16> to vector<32x8xbf16>
    %cst_291 = arith.constant dense<0.000000e+00> : vector<8x8xf32>
    %839 = tpu.matmul %835, %838, %cst_291 {dimension_numbers = #tpu.dot_dimension_numbers<[1], [0], [0], [1], [0, 0, 1, 1], [], []>} : vector<8x32xbf16>, vector<32x8xbf16>, vector<8x8xf32> -> vector<8x8xf32>
    %840 = vector.extract_strided_slice %16 {offsets = [0, 0], sizes = [1, 8], strides = [1, 1]} : vector<4x8xf32> to vector<1x8xf32>
    %841 = vector.broadcast %840 : vector<1x8xf32> to vector<8x8xf32>
    %842 = arith.addf %839, %841 : vector<8x8xf32>
    %843 = vector.extract_strided_slice %24 {offsets = [0, 0, 0], sizes = [1, 32, 8], strides = [1, 1, 1]} : vector<4x32x8xbf16> to vector<1x32x8xbf16>
    %844 = vector.shape_cast %843 : vector<1x32x8xbf16> to vector<32x8xbf16>
    %cst_292 = arith.constant dense<0.000000e+00> : vector<8x8xf32>
    %845 = tpu.matmul %835, %844, %cst_292 {dimension_numbers = #tpu.dot_dimension_numbers<[1], [0], [0], [1], [0, 0, 1, 1], [], []>} : vector<8x32xbf16>, vector<32x8xbf16>, vector<8x8xf32> -> vector<8x8xf32>
    %846 = vector.extract_strided_slice %14 {offsets = [0, 0], sizes = [1, 8], strides = [1, 1]} : vector<4x8xf32> to vector<1x8xf32>
    %847 = vector.broadcast %846 : vector<1x8xf32> to vector<8x8xf32>
    %848 = arith.addf %845, %847 : vector<8x8xf32>
    %849 = vector.extract_strided_slice %27 {offsets = [0, 0, 0], sizes = [1, 32, 8], strides = [1, 1, 1]} : vector<4x32x8xbf16> to vector<1x32x8xbf16>
    %850 = vector.shape_cast %849 : vector<1x32x8xbf16> to vector<32x8xbf16>
    %cst_293 = arith.constant dense<0.000000e+00> : vector<8x8xf32>
    %851 = tpu.matmul %835, %850, %cst_293 {dimension_numbers = #tpu.dot_dimension_numbers<[1], [0], [0], [1], [0, 0, 1, 1], [], []>} : vector<8x32xbf16>, vector<32x8xbf16>, vector<8x8xf32> -> vector<8x8xf32>
    %852 = vector.extract_strided_slice %17 {offsets = [0, 0], sizes = [1, 8], strides = [1, 1]} : vector<4x8xf32> to vector<1x8xf32>
    %853 = vector.broadcast %852 : vector<1x8xf32> to vector<8x8xf32>
    %854 = arith.addf %851, %853 : vector<8x8xf32>
    %855 = arith.truncf %842 : vector<8x8xf32> to vector<8x8xbf16>
    %856 = arith.truncf %848 : vector<8x8xf32> to vector<8x8xbf16>
    %cst_294 = arith.constant dense<0.000000e+00> : vector<8x8xf32>
    %857 = tpu.matmul %855, %856, %cst_294 {dimension_numbers = #tpu.dot_dimension_numbers<[1], [1], [0], [0], [0, 0, 1, 0], [], []>} : vector<8x8xbf16>, vector<8x8xbf16>, vector<8x8xf32> -> vector<8x8xf32>
    %cst_295 = arith.constant 0.353553385 : f32
    %858 = vector.broadcast %cst_295 : f32 to vector<8x8xf32>
    %859 = arith.mulf %857, %858 : vector<8x8xf32>
    %860 = arith.addf %859, %44 : vector<8x8xf32>
    %cst_296 = arith.constant dense<0xFF800000> : vector<8xf32>
    %861 = vector.multi_reduction <maximumf>, %860, %cst_296 [1] : vector<8x8xf32> to vector<8xf32>
    %862 = vector.shape_cast %861 : vector<8xf32> to vector<8x1xf32>
    %863 = vector.broadcast %862 : vector<8x1xf32> to vector<8x8xf32>
    %864 = arith.subf %860, %863 : vector<8x8xf32>
    %865 = math.exp %864 : vector<8x8xf32>
    %cst_297 = arith.constant dense<0.000000e+00> : vector<8xf32>
    %866 = vector.multi_reduction <add>, %865, %cst_297 [1] : vector<8x8xf32> to vector<8xf32>
    %867 = vector.shape_cast %866 : vector<8xf32> to vector<8x1xf32>
    %868 = tpu.reciprocal %867 {approx = true} : vector<8x1xf32> -> vector<8x1xf32>
    %869 = vector.broadcast %868 : vector<8x1xf32> to vector<8x8xf32>
    %870 = arith.mulf %865, %869 : vector<8x8xf32>
    %871 = arith.truncf %870 : vector<8x8xf32> to vector<8x8xbf16>
    %872 = arith.truncf %854 : vector<8x8xf32> to vector<8x8xbf16>
    %cst_298 = arith.constant dense<0.000000e+00> : vector<8x8xf32>
    %873 = tpu.matmul %871, %872, %cst_298 {dimension_numbers = #tpu.dot_dimension_numbers<[1], [0], [0], [1], [0, 0, 1, 1], [], []>} : vector<8x8xbf16>, vector<8x8xbf16>, vector<8x8xf32> -> vector<8x8xf32>
    %874 = arith.truncf %873 : vector<8x8xf32> to vector<8x8xbf16>
    %875 = vector.extract_strided_slice %25 {offsets = [0, 0, 0], sizes = [1, 8, 32], strides = [1, 1, 1]} : vector<4x8x32xbf16> to vector<1x8x32xbf16>
    %876 = vector.shape_cast %875 : vector<1x8x32xbf16> to vector<8x32xbf16>
    %cst_299 = arith.constant dense<0.000000e+00> : vector<8x32xf32>
    %877 = tpu.matmul %874, %876, %cst_299 {dimension_numbers = #tpu.dot_dimension_numbers<[1], [0], [0], [1], [0, 0, 1, 1], [], []>} : vector<8x8xbf16>, vector<8x32xbf16>, vector<8x32xf32> -> vector<8x32xf32>
    %878 = arith.addf %836, %877 : vector<8x32xf32>
    %879 = vector.extract_strided_slice %26 {offsets = [1, 0, 0], sizes = [1, 32, 8], strides = [1, 1, 1]} : vector<4x32x8xbf16> to vector<1x32x8xbf16>
    %880 = vector.shape_cast %879 : vector<1x32x8xbf16> to vector<32x8xbf16>
    %cst_300 = arith.constant dense<0.000000e+00> : vector<8x8xf32>
    %881 = tpu.matmul %835, %880, %cst_300 {dimension_numbers = #tpu.dot_dimension_numbers<[1], [0], [0], [1], [0, 0, 1, 1], [], []>} : vector<8x32xbf16>, vector<32x8xbf16>, vector<8x8xf32> -> vector<8x8xf32>
    %882 = vector.extract_strided_slice %16 {offsets = [1, 0], sizes = [1, 8], strides = [1, 1]} : vector<4x8xf32> to vector<1x8xf32>
    %883 = vector.broadcast %882 : vector<1x8xf32> to vector<8x8xf32>
    %884 = arith.addf %881, %883 : vector<8x8xf32>
    %885 = vector.extract_strided_slice %24 {offsets = [1, 0, 0], sizes = [1, 32, 8], strides = [1, 1, 1]} : vector<4x32x8xbf16> to vector<1x32x8xbf16>
    %886 = vector.shape_cast %885 : vector<1x32x8xbf16> to vector<32x8xbf16>
    %cst_301 = arith.constant dense<0.000000e+00> : vector<8x8xf32>
    %887 = tpu.matmul %835, %886, %cst_301 {dimension_numbers = #tpu.dot_dimension_numbers<[1], [0], [0], [1], [0, 0, 1, 1], [], []>} : vector<8x32xbf16>, vector<32x8xbf16>, vector<8x8xf32> -> vector<8x8xf32>
    %888 = vector.extract_strided_slice %14 {offsets = [1, 0], sizes = [1, 8], strides = [1, 1]} : vector<4x8xf32> to vector<1x8xf32>
    %889 = vector.broadcast %888 : vector<1x8xf32> to vector<8x8xf32>
    %890 = arith.addf %887, %889 : vector<8x8xf32>
    %891 = vector.extract_strided_slice %27 {offsets = [1, 0, 0], sizes = [1, 32, 8], strides = [1, 1, 1]} : vector<4x32x8xbf16> to vector<1x32x8xbf16>
    %892 = vector.shape_cast %891 : vector<1x32x8xbf16> to vector<32x8xbf16>
    %cst_302 = arith.constant dense<0.000000e+00> : vector<8x8xf32>
    %893 = tpu.matmul %835, %892, %cst_302 {dimension_numbers = #tpu.dot_dimension_numbers<[1], [0], [0], [1], [0, 0, 1, 1], [], []>} : vector<8x32xbf16>, vector<32x8xbf16>, vector<8x8xf32> -> vector<8x8xf32>
    %894 = vector.extract_strided_slice %17 {offsets = [1, 0], sizes = [1, 8], strides = [1, 1]} : vector<4x8xf32> to vector<1x8xf32>
    %895 = vector.broadcast %894 : vector<1x8xf32> to vector<8x8xf32>
    %896 = arith.addf %893, %895 : vector<8x8xf32>
    %897 = arith.truncf %884 : vector<8x8xf32> to vector<8x8xbf16>
    %898 = arith.truncf %890 : vector<8x8xf32> to vector<8x8xbf16>
    %cst_303 = arith.constant dense<0.000000e+00> : vector<8x8xf32>
    %899 = tpu.matmul %897, %898, %cst_303 {dimension_numbers = #tpu.dot_dimension_numbers<[1], [1], [0], [0], [0, 0, 1, 0], [], []>} : vector<8x8xbf16>, vector<8x8xbf16>, vector<8x8xf32> -> vector<8x8xf32>
    %cst_304 = arith.constant 0.353553385 : f32
    %900 = vector.broadcast %cst_304 : f32 to vector<8x8xf32>
    %901 = arith.mulf %899, %900 : vector<8x8xf32>
    %902 = arith.addf %901, %44 : vector<8x8xf32>
    %cst_305 = arith.constant dense<0xFF800000> : vector<8xf32>
    %903 = vector.multi_reduction <maximumf>, %902, %cst_305 [1] : vector<8x8xf32> to vector<8xf32>
    %904 = vector.shape_cast %903 : vector<8xf32> to vector<8x1xf32>
    %905 = vector.broadcast %904 : vector<8x1xf32> to vector<8x8xf32>
    %906 = arith.subf %902, %905 : vector<8x8xf32>
    %907 = math.exp %906 : vector<8x8xf32>
    %cst_306 = arith.constant dense<0.000000e+00> : vector<8xf32>
    %908 = vector.multi_reduction <add>, %907, %cst_306 [1] : vector<8x8xf32> to vector<8xf32>
    %909 = vector.shape_cast %908 : vector<8xf32> to vector<8x1xf32>
    %910 = tpu.reciprocal %909 {approx = true} : vector<8x1xf32> -> vector<8x1xf32>
    %911 = vector.broadcast %910 : vector<8x1xf32> to vector<8x8xf32>
    %912 = arith.mulf %907, %911 : vector<8x8xf32>
    %913 = arith.truncf %912 : vector<8x8xf32> to vector<8x8xbf16>
    %914 = arith.truncf %896 : vector<8x8xf32> to vector<8x8xbf16>
    %cst_307 = arith.constant dense<0.000000e+00> : vector<8x8xf32>
    %915 = tpu.matmul %913, %914, %cst_307 {dimension_numbers = #tpu.dot_dimension_numbers<[1], [0], [0], [1], [0, 0, 1, 1], [], []>} : vector<8x8xbf16>, vector<8x8xbf16>, vector<8x8xf32> -> vector<8x8xf32>
    %916 = arith.truncf %915 : vector<8x8xf32> to vector<8x8xbf16>
    %917 = vector.extract_strided_slice %25 {offsets = [1, 0, 0], sizes = [1, 8, 32], strides = [1, 1, 1]} : vector<4x8x32xbf16> to vector<1x8x32xbf16>
    %918 = vector.shape_cast %917 : vector<1x8x32xbf16> to vector<8x32xbf16>
    %cst_308 = arith.constant dense<0.000000e+00> : vector<8x32xf32>
    %919 = tpu.matmul %916, %918, %cst_308 {dimension_numbers = #tpu.dot_dimension_numbers<[1], [0], [0], [1], [0, 0, 1, 1], [], []>} : vector<8x8xbf16>, vector<8x32xbf16>, vector<8x32xf32> -> vector<8x32xf32>
    %920 = arith.addf %878, %919 : vector<8x32xf32>
    %921 = vector.extract_strided_slice %26 {offsets = [2, 0, 0], sizes = [1, 32, 8], strides = [1, 1, 1]} : vector<4x32x8xbf16> to vector<1x32x8xbf16>
    %922 = vector.shape_cast %921 : vector<1x32x8xbf16> to vector<32x8xbf16>
    %cst_309 = arith.constant dense<0.000000e+00> : vector<8x8xf32>
    %923 = tpu.matmul %835, %922, %cst_309 {dimension_numbers = #tpu.dot_dimension_numbers<[1], [0], [0], [1], [0, 0, 1, 1], [], []>} : vector<8x32xbf16>, vector<32x8xbf16>, vector<8x8xf32> -> vector<8x8xf32>
    %924 = vector.extract_strided_slice %16 {offsets = [2, 0], sizes = [1, 8], strides = [1, 1]} : vector<4x8xf32> to vector<1x8xf32>
    %925 = vector.broadcast %924 : vector<1x8xf32> to vector<8x8xf32>
    %926 = arith.addf %923, %925 : vector<8x8xf32>
    %927 = vector.extract_strided_slice %24 {offsets = [2, 0, 0], sizes = [1, 32, 8], strides = [1, 1, 1]} : vector<4x32x8xbf16> to vector<1x32x8xbf16>
    %928 = vector.shape_cast %927 : vector<1x32x8xbf16> to vector<32x8xbf16>
    %cst_310 = arith.constant dense<0.000000e+00> : vector<8x8xf32>
    %929 = tpu.matmul %835, %928, %cst_310 {dimension_numbers = #tpu.dot_dimension_numbers<[1], [0], [0], [1], [0, 0, 1, 1], [], []>} : vector<8x32xbf16>, vector<32x8xbf16>, vector<8x8xf32> -> vector<8x8xf32>
    %930 = vector.extract_strided_slice %14 {offsets = [2, 0], sizes = [1, 8], strides = [1, 1]} : vector<4x8xf32> to vector<1x8xf32>
    %931 = vector.broadcast %930 : vector<1x8xf32> to vector<8x8xf32>
    %932 = arith.addf %929, %931 : vector<8x8xf32>
    %933 = vector.extract_strided_slice %27 {offsets = [2, 0, 0], sizes = [1, 32, 8], strides = [1, 1, 1]} : vector<4x32x8xbf16> to vector<1x32x8xbf16>
    %934 = vector.shape_cast %933 : vector<1x32x8xbf16> to vector<32x8xbf16>
    %cst_311 = arith.constant dense<0.000000e+00> : vector<8x8xf32>
    %935 = tpu.matmul %835, %934, %cst_311 {dimension_numbers = #tpu.dot_dimension_numbers<[1], [0], [0], [1], [0, 0, 1, 1], [], []>} : vector<8x32xbf16>, vector<32x8xbf16>, vector<8x8xf32> -> vector<8x8xf32>
    %936 = vector.extract_strided_slice %17 {offsets = [2, 0], sizes = [1, 8], strides = [1, 1]} : vector<4x8xf32> to vector<1x8xf32>
    %937 = vector.broadcast %936 : vector<1x8xf32> to vector<8x8xf32>
    %938 = arith.addf %935, %937 : vector<8x8xf32>
    %939 = arith.truncf %926 : vector<8x8xf32> to vector<8x8xbf16>
    %940 = arith.truncf %932 : vector<8x8xf32> to vector<8x8xbf16>
    %cst_312 = arith.constant dense<0.000000e+00> : vector<8x8xf32>
    %941 = tpu.matmul %939, %940, %cst_312 {dimension_numbers = #tpu.dot_dimension_numbers<[1], [1], [0], [0], [0, 0, 1, 0], [], []>} : vector<8x8xbf16>, vector<8x8xbf16>, vector<8x8xf32> -> vector<8x8xf32>
    %cst_313 = arith.constant 0.353553385 : f32
    %942 = vector.broadcast %cst_313 : f32 to vector<8x8xf32>
    %943 = arith.mulf %941, %942 : vector<8x8xf32>
    %944 = arith.addf %943, %44 : vector<8x8xf32>
    %cst_314 = arith.constant dense<0xFF800000> : vector<8xf32>
    %945 = vector.multi_reduction <maximumf>, %944, %cst_314 [1] : vector<8x8xf32> to vector<8xf32>
    %946 = vector.shape_cast %945 : vector<8xf32> to vector<8x1xf32>
    %947 = vector.broadcast %946 : vector<8x1xf32> to vector<8x8xf32>
    %948 = arith.subf %944, %947 : vector<8x8xf32>
    %949 = math.exp %948 : vector<8x8xf32>
    %cst_315 = arith.constant dense<0.000000e+00> : vector<8xf32>
    %950 = vector.multi_reduction <add>, %949, %cst_315 [1] : vector<8x8xf32> to vector<8xf32>
    %951 = vector.shape_cast %950 : vector<8xf32> to vector<8x1xf32>
    %952 = tpu.reciprocal %951 {approx = true} : vector<8x1xf32> -> vector<8x1xf32>
    %953 = vector.broadcast %952 : vector<8x1xf32> to vector<8x8xf32>
    %954 = arith.mulf %949, %953 : vector<8x8xf32>
    %955 = arith.truncf %954 : vector<8x8xf32> to vector<8x8xbf16>
    %956 = arith.truncf %938 : vector<8x8xf32> to vector<8x8xbf16>
    %cst_316 = arith.constant dense<0.000000e+00> : vector<8x8xf32>
    %957 = tpu.matmul %955, %956, %cst_316 {dimension_numbers = #tpu.dot_dimension_numbers<[1], [0], [0], [1], [0, 0, 1, 1], [], []>} : vector<8x8xbf16>, vector<8x8xbf16>, vector<8x8xf32> -> vector<8x8xf32>
    %958 = arith.truncf %957 : vector<8x8xf32> to vector<8x8xbf16>
    %959 = vector.extract_strided_slice %25 {offsets = [2, 0, 0], sizes = [1, 8, 32], strides = [1, 1, 1]} : vector<4x8x32xbf16> to vector<1x8x32xbf16>
    %960 = vector.shape_cast %959 : vector<1x8x32xbf16> to vector<8x32xbf16>
    %cst_317 = arith.constant dense<0.000000e+00> : vector<8x32xf32>
    %961 = tpu.matmul %958, %960, %cst_317 {dimension_numbers = #tpu.dot_dimension_numbers<[1], [0], [0], [1], [0, 0, 1, 1], [], []>} : vector<8x8xbf16>, vector<8x32xbf16>, vector<8x32xf32> -> vector<8x32xf32>
    %962 = arith.addf %920, %961 : vector<8x32xf32>
    %963 = vector.extract_strided_slice %26 {offsets = [3, 0, 0], sizes = [1, 32, 8], strides = [1, 1, 1]} : vector<4x32x8xbf16> to vector<1x32x8xbf16>
    %964 = vector.shape_cast %963 : vector<1x32x8xbf16> to vector<32x8xbf16>
    %cst_318 = arith.constant dense<0.000000e+00> : vector<8x8xf32>
    %965 = tpu.matmul %835, %964, %cst_318 {dimension_numbers = #tpu.dot_dimension_numbers<[1], [0], [0], [1], [0, 0, 1, 1], [], []>} : vector<8x32xbf16>, vector<32x8xbf16>, vector<8x8xf32> -> vector<8x8xf32>
    %966 = vector.extract_strided_slice %16 {offsets = [3, 0], sizes = [1, 8], strides = [1, 1]} : vector<4x8xf32> to vector<1x8xf32>
    %967 = vector.broadcast %966 : vector<1x8xf32> to vector<8x8xf32>
    %968 = arith.addf %965, %967 : vector<8x8xf32>
    %969 = vector.extract_strided_slice %24 {offsets = [3, 0, 0], sizes = [1, 32, 8], strides = [1, 1, 1]} : vector<4x32x8xbf16> to vector<1x32x8xbf16>
    %970 = vector.shape_cast %969 : vector<1x32x8xbf16> to vector<32x8xbf16>
    %cst_319 = arith.constant dense<0.000000e+00> : vector<8x8xf32>
    %971 = tpu.matmul %835, %970, %cst_319 {dimension_numbers = #tpu.dot_dimension_numbers<[1], [0], [0], [1], [0, 0, 1, 1], [], []>} : vector<8x32xbf16>, vector<32x8xbf16>, vector<8x8xf32> -> vector<8x8xf32>
    %972 = vector.extract_strided_slice %14 {offsets = [3, 0], sizes = [1, 8], strides = [1, 1]} : vector<4x8xf32> to vector<1x8xf32>
    %973 = vector.broadcast %972 : vector<1x8xf32> to vector<8x8xf32>
    %974 = arith.addf %971, %973 : vector<8x8xf32>
    %975 = vector.extract_strided_slice %27 {offsets = [3, 0, 0], sizes = [1, 32, 8], strides = [1, 1, 1]} : vector<4x32x8xbf16> to vector<1x32x8xbf16>
    %976 = vector.shape_cast %975 : vector<1x32x8xbf16> to vector<32x8xbf16>
    %cst_320 = arith.constant dense<0.000000e+00> : vector<8x8xf32>
    %977 = tpu.matmul %835, %976, %cst_320 {dimension_numbers = #tpu.dot_dimension_numbers<[1], [0], [0], [1], [0, 0, 1, 1], [], []>} : vector<8x32xbf16>, vector<32x8xbf16>, vector<8x8xf32> -> vector<8x8xf32>
    %978 = vector.extract_strided_slice %17 {offsets = [3, 0], sizes = [1, 8], strides = [1, 1]} : vector<4x8xf32> to vector<1x8xf32>
    %979 = vector.broadcast %978 : vector<1x8xf32> to vector<8x8xf32>
    %980 = arith.addf %977, %979 : vector<8x8xf32>
    %981 = arith.truncf %968 : vector<8x8xf32> to vector<8x8xbf16>
    %982 = arith.truncf %974 : vector<8x8xf32> to vector<8x8xbf16>
    %cst_321 = arith.constant dense<0.000000e+00> : vector<8x8xf32>
    %983 = tpu.matmul %981, %982, %cst_321 {dimension_numbers = #tpu.dot_dimension_numbers<[1], [1], [0], [0], [0, 0, 1, 0], [], []>} : vector<8x8xbf16>, vector<8x8xbf16>, vector<8x8xf32> -> vector<8x8xf32>
    %cst_322 = arith.constant 0.353553385 : f32
    %984 = vector.broadcast %cst_322 : f32 to vector<8x8xf32>
    %985 = arith.mulf %983, %984 : vector<8x8xf32>
    %986 = arith.addf %985, %44 : vector<8x8xf32>
    %cst_323 = arith.constant dense<0xFF800000> : vector<8xf32>
    %987 = vector.multi_reduction <maximumf>, %986, %cst_323 [1] : vector<8x8xf32> to vector<8xf32>
    %988 = vector.shape_cast %987 : vector<8xf32> to vector<8x1xf32>
    %989 = vector.broadcast %988 : vector<8x1xf32> to vector<8x8xf32>
    %990 = arith.subf %986, %989 : vector<8x8xf32>
    %991 = math.exp %990 : vector<8x8xf32>
    %cst_324 = arith.constant dense<0.000000e+00> : vector<8xf32>
    %992 = vector.multi_reduction <add>, %991, %cst_324 [1] : vector<8x8xf32> to vector<8xf32>
    %993 = vector.shape_cast %992 : vector<8xf32> to vector<8x1xf32>
    %994 = tpu.reciprocal %993 {approx = true} : vector<8x1xf32> -> vector<8x1xf32>
    %995 = vector.broadcast %994 : vector<8x1xf32> to vector<8x8xf32>
    %996 = arith.mulf %991, %995 : vector<8x8xf32>
    %997 = arith.truncf %996 : vector<8x8xf32> to vector<8x8xbf16>
    %998 = arith.truncf %980 : vector<8x8xf32> to vector<8x8xbf16>
    %cst_325 = arith.constant dense<0.000000e+00> : vector<8x8xf32>
    %999 = tpu.matmul %997, %998, %cst_325 {dimension_numbers = #tpu.dot_dimension_numbers<[1], [0], [0], [1], [0, 0, 1, 1], [], []>} : vector<8x8xbf16>, vector<8x8xbf16>, vector<8x8xf32> -> vector<8x8xf32>
    %1000 = arith.truncf %999 : vector<8x8xf32> to vector<8x8xbf16>
    %1001 = vector.extract_strided_slice %25 {offsets = [3, 0, 0], sizes = [1, 8, 32], strides = [1, 1, 1]} : vector<4x8x32xbf16> to vector<1x8x32xbf16>
    %1002 = vector.shape_cast %1001 : vector<1x8x32xbf16> to vector<8x32xbf16>
    %cst_326 = arith.constant dense<0.000000e+00> : vector<8x32xf32>
    %1003 = tpu.matmul %1000, %1002, %cst_326 {dimension_numbers = #tpu.dot_dimension_numbers<[1], [0], [0], [1], [0, 0, 1, 1], [], []>} : vector<8x8xbf16>, vector<8x32xbf16>, vector<8x32xf32> -> vector<8x32xf32>
    %1004 = arith.addf %962, %1003 : vector<8x32xf32>
    %1005 = arith.addf %304, %1004 : vector<8x32xf32>
    %1006 = vector.broadcast %15 : vector<1x32xf32> to vector<8x32xf32>
    %1007 = arith.addf %1005, %1006 : vector<8x32xf32>
    %1008 = vector.extract_strided_slice %23 {offsets = [4, 0], sizes = [1, 32], strides = [1, 1]} : vector<6x32xf32> to vector<1x32xf32>
    %1009 = vector.extract_strided_slice %22 {offsets = [4, 0], sizes = [1, 32], strides = [1, 1]} : vector<6x32xf32> to vector<1x32xf32>
    %cst_327 = arith.constant dense<0.000000e+00> : vector<8xf32>
    %1010 = vector.multi_reduction <add>, %1007, %cst_327 [1] : vector<8x32xf32> to vector<8xf32>
    %1011 = vector.shape_cast %1010 : vector<8xf32> to vector<8x1xf32>
    %cst_328 = arith.constant 3.200000e+01 : f32
    %1012 = vector.broadcast %cst_328 : f32 to vector<8x1xf32>
    %1013 = arith.divf %1011, %1012 : vector<8x1xf32>
    %1014 = vector.broadcast %1013 : vector<8x1xf32> to vector<8x32xf32>
    %1015 = arith.subf %1007, %1014 : vector<8x32xf32>
    %1016 = arith.mulf %1015, %1015 : vector<8x32xf32>
    %cst_329 = arith.constant dense<0.000000e+00> : vector<8xf32>
    %1017 = vector.multi_reduction <add>, %1016, %cst_329 [1] : vector<8x32xf32> to vector<8xf32>
    %1018 = vector.shape_cast %1017 : vector<8xf32> to vector<8x1xf32>
    %cst_330 = arith.constant 3.200000e+01 : f32
    %1019 = vector.broadcast %cst_330 : f32 to vector<8x1xf32>
    %1020 = arith.divf %1018, %1019 : vector<8x1xf32>
    %1021 = vector.broadcast %1013 : vector<8x1xf32> to vector<8x32xf32>
    %1022 = arith.subf %1007, %1021 : vector<8x32xf32>
    %cst_331 = arith.constant 9.99999974E-6 : f32
    %1023 = vector.broadcast %cst_331 : f32 to vector<8x1xf32>
    %1024 = arith.addf %1020, %1023 : vector<8x1xf32>
    %1025 = math.rsqrt %1024 : vector<8x1xf32>
    %1026 = vector.broadcast %1025 : vector<8x1xf32> to vector<8x32xf32>
    %1027 = arith.mulf %1022, %1026 : vector<8x32xf32>
    %1028 = vector.broadcast %1008 : vector<1x32xf32> to vector<8x32xf32>
    %1029 = arith.mulf %1027, %1028 : vector<8x32xf32>
    %1030 = vector.broadcast %1009 : vector<1x32xf32> to vector<8x32xf32>
    %1031 = arith.addf %1029, %1030 : vector<8x32xf32>
    %1032 = arith.truncf %1031 : vector<8x32xf32> to vector<8x32xbf16>
    %cst_332 = arith.constant dense<0.000000e+00> : vector<8x128xf32>
    %1033 = tpu.matmul %1032, %19, %cst_332 {dimension_numbers = #tpu.dot_dimension_numbers<[1], [0], [0], [1], [0, 0, 1, 1], [], []>} : vector<8x32xbf16>, vector<32x128xbf16>, vector<8x128xf32> -> vector<8x128xf32>
    %1034 = vector.broadcast %18 : vector<1x128xf32> to vector<8x128xf32>
    %1035 = arith.addf %1033, %1034 : vector<8x128xf32>
    %cst_333 = arith.constant 5.000000e-01 : f32
    %1036 = vector.broadcast %cst_333 : f32 to vector<8x128xf32>
    %1037 = arith.mulf %1036, %1035 : vector<8x128xf32>
    %cst_334 = arith.constant 0.707106769 : f32
    %1038 = vector.broadcast %cst_334 : f32 to vector<8x128xf32>
    %1039 = arith.mulf %1035, %1038 : vector<8x128xf32>
    %1040 = math.erf %1039 : vector<8x128xf32>
    %cst_335 = arith.constant 1.000000e+00 : f32
    %1041 = vector.broadcast %cst_335 : f32 to vector<8x128xf32>
    %1042 = arith.addf %1041, %1040 : vector<8x128xf32>
    %1043 = arith.mulf %1037, %1042 : vector<8x128xf32>
    %1044 = arith.truncf %1043 : vector<8x128xf32> to vector<8x128xbf16>
    %cst_336 = arith.constant dense<0.000000e+00> : vector<8x32xf32>
    %1045 = tpu.matmul %1044, %21, %cst_336 {dimension_numbers = #tpu.dot_dimension_numbers<[1], [0], [0], [1], [0, 0, 1, 1], [], []>} : vector<8x128xbf16>, vector<128x32xbf16>, vector<8x32xf32> -> vector<8x32xf32>
    %1046 = vector.broadcast %20 : vector<1x32xf32> to vector<8x32xf32>
    %1047 = arith.addf %1045, %1046 : vector<8x32xf32>
    %1048 = arith.addf %1007, %1047 : vector<8x32xf32>
    %1049 = vector.extract_strided_slice %43 {offsets = [1, 0], sizes = [1, 32], strides = [1, 1]} : vector<3x32xf32> to vector<1x32xf32>
    %1050 = vector.extract_strided_slice %42 {offsets = [1, 0], sizes = [1, 32], strides = [1, 1]} : vector<3x32xf32> to vector<1x32xf32>
    %cst_337 = arith.constant dense<0.000000e+00> : vector<8xf32>
    %1051 = vector.multi_reduction <add>, %1048, %cst_337 [1] : vector<8x32xf32> to vector<8xf32>
    %1052 = vector.shape_cast %1051 : vector<8xf32> to vector<8x1xf32>
    %cst_338 = arith.constant 3.200000e+01 : f32
    %1053 = vector.broadcast %cst_338 : f32 to vector<8x1xf32>
    %1054 = arith.divf %1052, %1053 : vector<8x1xf32>
    %1055 = vector.broadcast %1054 : vector<8x1xf32> to vector<8x32xf32>
    %1056 = arith.subf %1048, %1055 : vector<8x32xf32>
    %1057 = arith.mulf %1056, %1056 : vector<8x32xf32>
    %cst_339 = arith.constant dense<0.000000e+00> : vector<8xf32>
    %1058 = vector.multi_reduction <add>, %1057, %cst_339 [1] : vector<8x32xf32> to vector<8xf32>
    %1059 = vector.shape_cast %1058 : vector<8xf32> to vector<8x1xf32>
    %cst_340 = arith.constant 3.200000e+01 : f32
    %1060 = vector.broadcast %cst_340 : f32 to vector<8x1xf32>
    %1061 = arith.divf %1059, %1060 : vector<8x1xf32>
    %1062 = vector.broadcast %1054 : vector<8x1xf32> to vector<8x32xf32>
    %1063 = arith.subf %1048, %1062 : vector<8x32xf32>
    %cst_341 = arith.constant 9.99999974E-6 : f32
    %1064 = vector.broadcast %cst_341 : f32 to vector<8x1xf32>
    %1065 = arith.addf %1061, %1064 : vector<8x1xf32>
    %1066 = math.rsqrt %1065 : vector<8x1xf32>
    %1067 = vector.broadcast %1066 : vector<8x1xf32> to vector<8x32xf32>
    %1068 = arith.mulf %1063, %1067 : vector<8x32xf32>
    %1069 = vector.broadcast %1049 : vector<1x32xf32> to vector<8x32xf32>
    %1070 = arith.mulf %1068, %1069 : vector<8x32xf32>
    %1071 = vector.broadcast %1050 : vector<1x32xf32> to vector<8x32xf32>
    %1072 = arith.addf %1070, %1071 : vector<8x32xf32>
    %c0_342 = arith.constant 0 : index
    %c0_343 = arith.constant 0 : index
    %1073 = vector.load %arg57[%c0_342, %c0_343] : memref<8x32xf32, #tpu.memory_space<vmem>>, vector<8x32xf32>
    tpu.vector_store %arg57[%c0_342, %c0_343], %1072 {strides = array<i32>} : memref<8x32xf32, #tpu.memory_space<vmem>>, vector<8x32xf32>,
    %1074 = vector.extract_strided_slice %23 {offsets = [2, 0], sizes = [1, 32], strides = [1, 1]} : vector<6x32xf32> to vector<1x32xf32>
    %1075 = vector.extract_strided_slice %22 {offsets = [2, 0], sizes = [1, 32], strides = [1, 1]} : vector<6x32xf32> to vector<1x32xf32>
    %cst_344 = arith.constant dense<0.000000e+00> : vector<8xf32>
    %1076 = vector.multi_reduction <add>, %542, %cst_344 [1] : vector<8x32xf32> to vector<8xf32>
    %1077 = vector.shape_cast %1076 : vector<8xf32> to vector<8x1xf32>
    %cst_345 = arith.constant 3.200000e+01 : f32
    %1078 = vector.broadcast %cst_345 : f32 to vector<8x1xf32>
    %1079 = arith.divf %1077, %1078 : vector<8x1xf32>
    %1080 = vector.broadcast %1079 : vector<8x1xf32> to vector<8x32xf32>
    %1081 = arith.subf %542, %1080 : vector<8x32xf32>
    %1082 = arith.mulf %1081, %1081 : vector<8x32xf32>
    %cst_346 = arith.constant dense<0.000000e+00> : vector<8xf32>
    %1083 = vector.multi_reduction <add>, %1082, %cst_346 [1] : vector<8x32xf32> to vector<8xf32>
    %1084 = vector.shape_cast %1083 : vector<8xf32> to vector<8x1xf32>
    %cst_347 = arith.constant 3.200000e+01 : f32
    %1085 = vector.broadcast %cst_347 : f32 to vector<8x1xf32>
    %1086 = arith.divf %1084, %1085 : vector<8x1xf32>
    %1087 = vector.broadcast %1079 : vector<8x1xf32> to vector<8x32xf32>
    %1088 = arith.subf %542, %1087 : vector<8x32xf32>
    %cst_348 = arith.constant 9.99999974E-6 : f32
    %1089 = vector.broadcast %cst_348 : f32 to vector<8x1xf32>
    %1090 = arith.addf %1086, %1089 : vector<8x1xf32>
    %1091 = math.rsqrt %1090 : vector<8x1xf32>
    %1092 = vector.broadcast %1091 : vector<8x1xf32> to vector<8x32xf32>
    %1093 = arith.mulf %1088, %1092 : vector<8x32xf32>
    %1094 = vector.broadcast %1074 : vector<1x32xf32> to vector<8x32xf32>
    %1095 = arith.mulf %1093, %1094 : vector<8x32xf32>
    %1096 = vector.broadcast %1075 : vector<1x32xf32> to vector<8x32xf32>
    %1097 = arith.addf %1095, %1096 : vector<8x32xf32>
    %1098 = arith.truncf %1097 : vector<8x32xf32> to vector<8x32xbf16>
    %cst_349 = arith.constant 0.000000e+00 : f32
    %1099 = vector.broadcast %cst_349 : f32 to vector<8x32xf32>
    %1100 = vector.extract_strided_slice %26 {offsets = [0, 0, 0], sizes = [1, 32, 8], strides = [1, 1, 1]} : vector<4x32x8xbf16> to vector<1x32x8xbf16>
    %1101 = vector.shape_cast %1100 : vector<1x32x8xbf16> to vector<32x8xbf16>
    %cst_350 = arith.constant dense<0.000000e+00> : vector<8x8xf32>
    %1102 = tpu.matmul %1098, %1101, %cst_350 {dimension_numbers = #tpu.dot_dimension_numbers<[1], [0], [0], [1], [0, 0, 1, 1], [], []>} : vector<8x32xbf16>, vector<32x8xbf16>, vector<8x8xf32> -> vector<8x8xf32>
    %1103 = vector.extract_strided_slice %16 {offsets = [0, 0], sizes = [1, 8], strides = [1, 1]} : vector<4x8xf32> to vector<1x8xf32>
    %1104 = vector.broadcast %1103 : vector<1x8xf32> to vector<8x8xf32>
    %1105 = arith.addf %1102, %1104 : vector<8x8xf32>
    %1106 = vector.extract_strided_slice %24 {offsets = [0, 0, 0], sizes = [1, 32, 8], strides = [1, 1, 1]} : vector<4x32x8xbf16> to vector<1x32x8xbf16>
    %1107 = vector.shape_cast %1106 : vector<1x32x8xbf16> to vector<32x8xbf16>
    %cst_351 = arith.constant dense<0.000000e+00> : vector<8x8xf32>
    %1108 = tpu.matmul %1098, %1107, %cst_351 {dimension_numbers = #tpu.dot_dimension_numbers<[1], [0], [0], [1], [0, 0, 1, 1], [], []>} : vector<8x32xbf16>, vector<32x8xbf16>, vector<8x8xf32> -> vector<8x8xf32>
    %1109 = vector.extract_strided_slice %14 {offsets = [0, 0], sizes = [1, 8], strides = [1, 1]} : vector<4x8xf32> to vector<1x8xf32>
    %1110 = vector.broadcast %1109 : vector<1x8xf32> to vector<8x8xf32>
    %1111 = arith.addf %1108, %1110 : vector<8x8xf32>
    %1112 = vector.extract_strided_slice %27 {offsets = [0, 0, 0], sizes = [1, 32, 8], strides = [1, 1, 1]} : vector<4x32x8xbf16> to vector<1x32x8xbf16>
    %1113 = vector.shape_cast %1112 : vector<1x32x8xbf16> to vector<32x8xbf16>
    %cst_352 = arith.constant dense<0.000000e+00> : vector<8x8xf32>
    %1114 = tpu.matmul %1098, %1113, %cst_352 {dimension_numbers = #tpu.dot_dimension_numbers<[1], [0], [0], [1], [0, 0, 1, 1], [], []>} : vector<8x32xbf16>, vector<32x8xbf16>, vector<8x8xf32> -> vector<8x8xf32>
    %1115 = vector.extract_strided_slice %17 {offsets = [0, 0], sizes = [1, 8], strides = [1, 1]} : vector<4x8xf32> to vector<1x8xf32>
    %1116 = vector.broadcast %1115 : vector<1x8xf32> to vector<8x8xf32>
    %1117 = arith.addf %1114, %1116 : vector<8x8xf32>
    %1118 = arith.truncf %1105 : vector<8x8xf32> to vector<8x8xbf16>
    %1119 = arith.truncf %1111 : vector<8x8xf32> to vector<8x8xbf16>
    %cst_353 = arith.constant dense<0.000000e+00> : vector<8x8xf32>
    %1120 = tpu.matmul %1118, %1119, %cst_353 {dimension_numbers = #tpu.dot_dimension_numbers<[1], [1], [0], [0], [0, 0, 1, 0], [], []>} : vector<8x8xbf16>, vector<8x8xbf16>, vector<8x8xf32> -> vector<8x8xf32>
    %cst_354 = arith.constant 0.353553385 : f32
    %1121 = vector.broadcast %cst_354 : f32 to vector<8x8xf32>
    %1122 = arith.mulf %1120, %1121 : vector<8x8xf32>
    %1123 = arith.addf %1122, %46 : vector<8x8xf32>
    %cst_355 = arith.constant dense<0xFF800000> : vector<8xf32>
    %1124 = vector.multi_reduction <maximumf>, %1123, %cst_355 [1] : vector<8x8xf32> to vector<8xf32>
    %1125 = vector.shape_cast %1124 : vector<8xf32> to vector<8x1xf32>
    %1126 = vector.broadcast %1125 : vector<8x1xf32> to vector<8x8xf32>
    %1127 = arith.subf %1123, %1126 : vector<8x8xf32>
    %1128 = math.exp %1127 : vector<8x8xf32>
    %cst_356 = arith.constant dense<0.000000e+00> : vector<8xf32>
    %1129 = vector.multi_reduction <add>, %1128, %cst_356 [1] : vector<8x8xf32> to vector<8xf32>
    %1130 = vector.shape_cast %1129 : vector<8xf32> to vector<8x1xf32>
    %1131 = tpu.reciprocal %1130 {approx = true} : vector<8x1xf32> -> vector<8x1xf32>
    %1132 = vector.broadcast %1131 : vector<8x1xf32> to vector<8x8xf32>
    %1133 = arith.mulf %1128, %1132 : vector<8x8xf32>
    %1134 = arith.truncf %1133 : vector<8x8xf32> to vector<8x8xbf16>
    %1135 = arith.truncf %1117 : vector<8x8xf32> to vector<8x8xbf16>
    %cst_357 = arith.constant dense<0.000000e+00> : vector<8x8xf32>
    %1136 = tpu.matmul %1134, %1135, %cst_357 {dimension_numbers = #tpu.dot_dimension_numbers<[1], [0], [0], [1], [0, 0, 1, 1], [], []>} : vector<8x8xbf16>, vector<8x8xbf16>, vector<8x8xf32> -> vector<8x8xf32>
    %1137 = arith.truncf %1136 : vector<8x8xf32> to vector<8x8xbf16>
    %1138 = vector.extract_strided_slice %25 {offsets = [0, 0, 0], sizes = [1, 8, 32], strides = [1, 1, 1]} : vector<4x8x32xbf16> to vector<1x8x32xbf16>
    %1139 = vector.shape_cast %1138 : vector<1x8x32xbf16> to vector<8x32xbf16>
    %cst_358 = arith.constant dense<0.000000e+00> : vector<8x32xf32>
    %1140 = tpu.matmul %1137, %1139, %cst_358 {dimension_numbers = #tpu.dot_dimension_numbers<[1], [0], [0], [1], [0, 0, 1, 1], [], []>} : vector<8x8xbf16>, vector<8x32xbf16>, vector<8x32xf32> -> vector<8x32xf32>
    %1141 = arith.addf %1099, %1140 : vector<8x32xf32>
    %1142 = vector.extract_strided_slice %26 {offsets = [1, 0, 0], sizes = [1, 32, 8], strides = [1, 1, 1]} : vector<4x32x8xbf16> to vector<1x32x8xbf16>
    %1143 = vector.shape_cast %1142 : vector<1x32x8xbf16> to vector<32x8xbf16>
    %cst_359 = arith.constant dense<0.000000e+00> : vector<8x8xf32>
    %1144 = tpu.matmul %1098, %1143, %cst_359 {dimension_numbers = #tpu.dot_dimension_numbers<[1], [0], [0], [1], [0, 0, 1, 1], [], []>} : vector<8x32xbf16>, vector<32x8xbf16>, vector<8x8xf32> -> vector<8x8xf32>
    %1145 = vector.extract_strided_slice %16 {offsets = [1, 0], sizes = [1, 8], strides = [1, 1]} : vector<4x8xf32> to vector<1x8xf32>
    %1146 = vector.broadcast %1145 : vector<1x8xf32> to vector<8x8xf32>
    %1147 = arith.addf %1144, %1146 : vector<8x8xf32>
    %1148 = vector.extract_strided_slice %24 {offsets = [1, 0, 0], sizes = [1, 32, 8], strides = [1, 1, 1]} : vector<4x32x8xbf16> to vector<1x32x8xbf16>
    %1149 = vector.shape_cast %1148 : vector<1x32x8xbf16> to vector<32x8xbf16>
    %cst_360 = arith.constant dense<0.000000e+00> : vector<8x8xf32>
    %1150 = tpu.matmul %1098, %1149, %cst_360 {dimension_numbers = #tpu.dot_dimension_numbers<[1], [0], [0], [1], [0, 0, 1, 1], [], []>} : vector<8x32xbf16>, vector<32x8xbf16>, vector<8x8xf32> -> vector<8x8xf32>
    %1151 = vector.extract_strided_slice %14 {offsets = [1, 0], sizes = [1, 8], strides = [1, 1]} : vector<4x8xf32> to vector<1x8xf32>
    %1152 = vector.broadcast %1151 : vector<1x8xf32> to vector<8x8xf32>
    %1153 = arith.addf %1150, %1152 : vector<8x8xf32>
    %1154 = vector.extract_strided_slice %27 {offsets = [1, 0, 0], sizes = [1, 32, 8], strides = [1, 1, 1]} : vector<4x32x8xbf16> to vector<1x32x8xbf16>
    %1155 = vector.shape_cast %1154 : vector<1x32x8xbf16> to vector<32x8xbf16>
    %cst_361 = arith.constant dense<0.000000e+00> : vector<8x8xf32>
    %1156 = tpu.matmul %1098, %1155, %cst_361 {dimension_numbers = #tpu.dot_dimension_numbers<[1], [0], [0], [1], [0, 0, 1, 1], [], []>} : vector<8x32xbf16>, vector<32x8xbf16>, vector<8x8xf32> -> vector<8x8xf32>
    %1157 = vector.extract_strided_slice %17 {offsets = [1, 0], sizes = [1, 8], strides = [1, 1]} : vector<4x8xf32> to vector<1x8xf32>
    %1158 = vector.broadcast %1157 : vector<1x8xf32> to vector<8x8xf32>
    %1159 = arith.addf %1156, %1158 : vector<8x8xf32>
    %1160 = arith.truncf %1147 : vector<8x8xf32> to vector<8x8xbf16>
    %1161 = arith.truncf %1153 : vector<8x8xf32> to vector<8x8xbf16>
    %cst_362 = arith.constant dense<0.000000e+00> : vector<8x8xf32>
    %1162 = tpu.matmul %1160, %1161, %cst_362 {dimension_numbers = #tpu.dot_dimension_numbers<[1], [1], [0], [0], [0, 0, 1, 0], [], []>} : vector<8x8xbf16>, vector<8x8xbf16>, vector<8x8xf32> -> vector<8x8xf32>
    %cst_363 = arith.constant 0.353553385 : f32
    %1163 = vector.broadcast %cst_363 : f32 to vector<8x8xf32>
    %1164 = arith.mulf %1162, %1163 : vector<8x8xf32>
    %1165 = arith.addf %1164, %46 : vector<8x8xf32>
    %cst_364 = arith.constant dense<0xFF800000> : vector<8xf32>
    %1166 = vector.multi_reduction <maximumf>, %1165, %cst_364 [1] : vector<8x8xf32> to vector<8xf32>
    %1167 = vector.shape_cast %1166 : vector<8xf32> to vector<8x1xf32>
    %1168 = vector.broadcast %1167 : vector<8x1xf32> to vector<8x8xf32>
    %1169 = arith.subf %1165, %1168 : vector<8x8xf32>
    %1170 = math.exp %1169 : vector<8x8xf32>
    %cst_365 = arith.constant dense<0.000000e+00> : vector<8xf32>
    %1171 = vector.multi_reduction <add>, %1170, %cst_365 [1] : vector<8x8xf32> to vector<8xf32>
    %1172 = vector.shape_cast %1171 : vector<8xf32> to vector<8x1xf32>
    %1173 = tpu.reciprocal %1172 {approx = true} : vector<8x1xf32> -> vector<8x1xf32>
    %1174 = vector.broadcast %1173 : vector<8x1xf32> to vector<8x8xf32>
    %1175 = arith.mulf %1170, %1174 : vector<8x8xf32>
    %1176 = arith.truncf %1175 : vector<8x8xf32> to vector<8x8xbf16>
    %1177 = arith.truncf %1159 : vector<8x8xf32> to vector<8x8xbf16>
    %cst_366 = arith.constant dense<0.000000e+00> : vector<8x8xf32>
    %1178 = tpu.matmul %1176, %1177, %cst_366 {dimension_numbers = #tpu.dot_dimension_numbers<[1], [0], [0], [1], [0, 0, 1, 1], [], []>} : vector<8x8xbf16>, vector<8x8xbf16>, vector<8x8xf32> -> vector<8x8xf32>
    %1179 = arith.truncf %1178 : vector<8x8xf32> to vector<8x8xbf16>
    %1180 = vector.extract_strided_slice %25 {offsets = [1, 0, 0], sizes = [1, 8, 32], strides = [1, 1, 1]} : vector<4x8x32xbf16> to vector<1x8x32xbf16>
    %1181 = vector.shape_cast %1180 : vector<1x8x32xbf16> to vector<8x32xbf16>
    %cst_367 = arith.constant dense<0.000000e+00> : vector<8x32xf32>
    %1182 = tpu.matmul %1179, %1181, %cst_367 {dimension_numbers = #tpu.dot_dimension_numbers<[1], [0], [0], [1], [0, 0, 1, 1], [], []>} : vector<8x8xbf16>, vector<8x32xbf16>, vector<8x32xf32> -> vector<8x32xf32>
    %1183 = arith.addf %1141, %1182 : vector<8x32xf32>
    %1184 = vector.extract_strided_slice %26 {offsets = [2, 0, 0], sizes = [1, 32, 8], strides = [1, 1, 1]} : vector<4x32x8xbf16> to vector<1x32x8xbf16>
    %1185 = vector.shape_cast %1184 : vector<1x32x8xbf16> to vector<32x8xbf16>
    %cst_368 = arith.constant dense<0.000000e+00> : vector<8x8xf32>
    %1186 = tpu.matmul %1098, %1185, %cst_368 {dimension_numbers = #tpu.dot_dimension_numbers<[1], [0], [0], [1], [0, 0, 1, 1], [], []>} : vector<8x32xbf16>, vector<32x8xbf16>, vector<8x8xf32> -> vector<8x8xf32>
    %1187 = vector.extract_strided_slice %16 {offsets = [2, 0], sizes = [1, 8], strides = [1, 1]} : vector<4x8xf32> to vector<1x8xf32>
    %1188 = vector.broadcast %1187 : vector<1x8xf32> to vector<8x8xf32>
    %1189 = arith.addf %1186, %1188 : vector<8x8xf32>
    %1190 = vector.extract_strided_slice %24 {offsets = [2, 0, 0], sizes = [1, 32, 8], strides = [1, 1, 1]} : vector<4x32x8xbf16> to vector<1x32x8xbf16>
    %1191 = vector.shape_cast %1190 : vector<1x32x8xbf16> to vector<32x8xbf16>
    %cst_369 = arith.constant dense<0.000000e+00> : vector<8x8xf32>
    %1192 = tpu.matmul %1098, %1191, %cst_369 {dimension_numbers = #tpu.dot_dimension_numbers<[1], [0], [0], [1], [0, 0, 1, 1], [], []>} : vector<8x32xbf16>, vector<32x8xbf16>, vector<8x8xf32> -> vector<8x8xf32>
    %1193 = vector.extract_strided_slice %14 {offsets = [2, 0], sizes = [1, 8], strides = [1, 1]} : vector<4x8xf32> to vector<1x8xf32>
    %1194 = vector.broadcast %1193 : vector<1x8xf32> to vector<8x8xf32>
    %1195 = arith.addf %1192, %1194 : vector<8x8xf32>
    %1196 = vector.extract_strided_slice %27 {offsets = [2, 0, 0], sizes = [1, 32, 8], strides = [1, 1, 1]} : vector<4x32x8xbf16> to vector<1x32x8xbf16>
    %1197 = vector.shape_cast %1196 : vector<1x32x8xbf16> to vector<32x8xbf16>
    %cst_370 = arith.constant dense<0.000000e+00> : vector<8x8xf32>
    %1198 = tpu.matmul %1098, %1197, %cst_370 {dimension_numbers = #tpu.dot_dimension_numbers<[1], [0], [0], [1], [0, 0, 1, 1], [], []>} : vector<8x32xbf16>, vector<32x8xbf16>, vector<8x8xf32> -> vector<8x8xf32>
    %1199 = vector.extract_strided_slice %17 {offsets = [2, 0], sizes = [1, 8], strides = [1, 1]} : vector<4x8xf32> to vector<1x8xf32>
    %1200 = vector.broadcast %1199 : vector<1x8xf32> to vector<8x8xf32>
    %1201 = arith.addf %1198, %1200 : vector<8x8xf32>
    %1202 = arith.truncf %1189 : vector<8x8xf32> to vector<8x8xbf16>
    %1203 = arith.truncf %1195 : vector<8x8xf32> to vector<8x8xbf16>
    %cst_371 = arith.constant dense<0.000000e+00> : vector<8x8xf32>
    %1204 = tpu.matmul %1202, %1203, %cst_371 {dimension_numbers = #tpu.dot_dimension_numbers<[1], [1], [0], [0], [0, 0, 1, 0], [], []>} : vector<8x8xbf16>, vector<8x8xbf16>, vector<8x8xf32> -> vector<8x8xf32>
    %cst_372 = arith.constant 0.353553385 : f32
    %1205 = vector.broadcast %cst_372 : f32 to vector<8x8xf32>
    %1206 = arith.mulf %1204, %1205 : vector<8x8xf32>
    %1207 = arith.addf %1206, %46 : vector<8x8xf32>
    %cst_373 = arith.constant dense<0xFF800000> : vector<8xf32>
    %1208 = vector.multi_reduction <maximumf>, %1207, %cst_373 [1] : vector<8x8xf32> to vector<8xf32>
    %1209 = vector.shape_cast %1208 : vector<8xf32> to vector<8x1xf32>
    %1210 = vector.broadcast %1209 : vector<8x1xf32> to vector<8x8xf32>
    %1211 = arith.subf %1207, %1210 : vector<8x8xf32>
    %1212 = math.exp %1211 : vector<8x8xf32>
    %cst_374 = arith.constant dense<0.000000e+00> : vector<8xf32>
    %1213 = vector.multi_reduction <add>, %1212, %cst_374 [1] : vector<8x8xf32> to vector<8xf32>
    %1214 = vector.shape_cast %1213 : vector<8xf32> to vector<8x1xf32>
    %1215 = tpu.reciprocal %1214 {approx = true} : vector<8x1xf32> -> vector<8x1xf32>
    %1216 = vector.broadcast %1215 : vector<8x1xf32> to vector<8x8xf32>
    %1217 = arith.mulf %1212, %1216 : vector<8x8xf32>
    %1218 = arith.truncf %1217 : vector<8x8xf32> to vector<8x8xbf16>
    %1219 = arith.truncf %1201 : vector<8x8xf32> to vector<8x8xbf16>
    %cst_375 = arith.constant dense<0.000000e+00> : vector<8x8xf32>
    %1220 = tpu.matmul %1218, %1219, %cst_375 {dimension_numbers = #tpu.dot_dimension_numbers<[1], [0], [0], [1], [0, 0, 1, 1], [], []>} : vector<8x8xbf16>, vector<8x8xbf16>, vector<8x8xf32> -> vector<8x8xf32>
    %1221 = arith.truncf %1220 : vector<8x8xf32> to vector<8x8xbf16>
    %1222 = vector.extract_strided_slice %25 {offsets = [2, 0, 0], sizes = [1, 8, 32], strides = [1, 1, 1]} : vector<4x8x32xbf16> to vector<1x8x32xbf16>
    %1223 = vector.shape_cast %1222 : vector<1x8x32xbf16> to vector<8x32xbf16>
    %cst_376 = arith.constant dense<0.000000e+00> : vector<8x32xf32>
    %1224 = tpu.matmul %1221, %1223, %cst_376 {dimension_numbers = #tpu.dot_dimension_numbers<[1], [0], [0], [1], [0, 0, 1, 1], [], []>} : vector<8x8xbf16>, vector<8x32xbf16>, vector<8x32xf32> -> vector<8x32xf32>
    %1225 = arith.addf %1183, %1224 : vector<8x32xf32>
    %1226 = vector.extract_strided_slice %26 {offsets = [3, 0, 0], sizes = [1, 32, 8], strides = [1, 1, 1]} : vector<4x32x8xbf16> to vector<1x32x8xbf16>
    %1227 = vector.shape_cast %1226 : vector<1x32x8xbf16> to vector<32x8xbf16>
    %cst_377 = arith.constant dense<0.000000e+00> : vector<8x8xf32>
    %1228 = tpu.matmul %1098, %1227, %cst_377 {dimension_numbers = #tpu.dot_dimension_numbers<[1], [0], [0], [1], [0, 0, 1, 1], [], []>} : vector<8x32xbf16>, vector<32x8xbf16>, vector<8x8xf32> -> vector<8x8xf32>
    %1229 = vector.extract_strided_slice %16 {offsets = [3, 0], sizes = [1, 8], strides = [1, 1]} : vector<4x8xf32> to vector<1x8xf32>
    %1230 = vector.broadcast %1229 : vector<1x8xf32> to vector<8x8xf32>
    %1231 = arith.addf %1228, %1230 : vector<8x8xf32>
    %1232 = vector.extract_strided_slice %24 {offsets = [3, 0, 0], sizes = [1, 32, 8], strides = [1, 1, 1]} : vector<4x32x8xbf16> to vector<1x32x8xbf16>
    %1233 = vector.shape_cast %1232 : vector<1x32x8xbf16> to vector<32x8xbf16>
    %cst_378 = arith.constant dense<0.000000e+00> : vector<8x8xf32>
    %1234 = tpu.matmul %1098, %1233, %cst_378 {dimension_numbers = #tpu.dot_dimension_numbers<[1], [0], [0], [1], [0, 0, 1, 1], [], []>} : vector<8x32xbf16>, vector<32x8xbf16>, vector<8x8xf32> -> vector<8x8xf32>
    %1235 = vector.extract_strided_slice %14 {offsets = [3, 0], sizes = [1, 8], strides = [1, 1]} : vector<4x8xf32> to vector<1x8xf32>
    %1236 = vector.broadcast %1235 : vector<1x8xf32> to vector<8x8xf32>
    %1237 = arith.addf %1234, %1236 : vector<8x8xf32>
    %1238 = vector.extract_strided_slice %27 {offsets = [3, 0, 0], sizes = [1, 32, 8], strides = [1, 1, 1]} : vector<4x32x8xbf16> to vector<1x32x8xbf16>
    %1239 = vector.shape_cast %1238 : vector<1x32x8xbf16> to vector<32x8xbf16>
    %cst_379 = arith.constant dense<0.000000e+00> : vector<8x8xf32>
    %1240 = tpu.matmul %1098, %1239, %cst_379 {dimension_numbers = #tpu.dot_dimension_numbers<[1], [0], [0], [1], [0, 0, 1, 1], [], []>} : vector<8x32xbf16>, vector<32x8xbf16>, vector<8x8xf32> -> vector<8x8xf32>
    %1241 = vector.extract_strided_slice %17 {offsets = [3, 0], sizes = [1, 8], strides = [1, 1]} : vector<4x8xf32> to vector<1x8xf32>
    %1242 = vector.broadcast %1241 : vector<1x8xf32> to vector<8x8xf32>
    %1243 = arith.addf %1240, %1242 : vector<8x8xf32>
    %1244 = arith.truncf %1231 : vector<8x8xf32> to vector<8x8xbf16>
    %1245 = arith.truncf %1237 : vector<8x8xf32> to vector<8x8xbf16>
    %cst_380 = arith.constant dense<0.000000e+00> : vector<8x8xf32>
    %1246 = tpu.matmul %1244, %1245, %cst_380 {dimension_numbers = #tpu.dot_dimension_numbers<[1], [1], [0], [0], [0, 0, 1, 0], [], []>} : vector<8x8xbf16>, vector<8x8xbf16>, vector<8x8xf32> -> vector<8x8xf32>
    %cst_381 = arith.constant 0.353553385 : f32
    %1247 = vector.broadcast %cst_381 : f32 to vector<8x8xf32>
    %1248 = arith.mulf %1246, %1247 : vector<8x8xf32>
    %1249 = arith.addf %1248, %46 : vector<8x8xf32>
    %cst_382 = arith.constant dense<0xFF800000> : vector<8xf32>
    %1250 = vector.multi_reduction <maximumf>, %1249, %cst_382 [1] : vector<8x8xf32> to vector<8xf32>
    %1251 = vector.shape_cast %1250 : vector<8xf32> to vector<8x1xf32>
    %1252 = vector.broadcast %1251 : vector<8x1xf32> to vector<8x8xf32>
    %1253 = arith.subf %1249, %1252 : vector<8x8xf32>
    %1254 = math.exp %1253 : vector<8x8xf32>
    %cst_383 = arith.constant dense<0.000000e+00> : vector<8xf32>
    %1255 = vector.multi_reduction <add>, %1254, %cst_383 [1] : vector<8x8xf32> to vector<8xf32>
    %1256 = vector.shape_cast %1255 : vector<8xf32> to vector<8x1xf32>
    %1257 = tpu.reciprocal %1256 {approx = true} : vector<8x1xf32> -> vector<8x1xf32>
    %1258 = vector.broadcast %1257 : vector<8x1xf32> to vector<8x8xf32>
    %1259 = arith.mulf %1254, %1258 : vector<8x8xf32>
    %1260 = arith.truncf %1259 : vector<8x8xf32> to vector<8x8xbf16>
    %1261 = arith.truncf %1243 : vector<8x8xf32> to vector<8x8xbf16>
    %cst_384 = arith.constant dense<0.000000e+00> : vector<8x8xf32>
    %1262 = tpu.matmul %1260, %1261, %cst_384 {dimension_numbers = #tpu.dot_dimension_numbers<[1], [0], [0], [1], [0, 0, 1, 1], [], []>} : vector<8x8xbf16>, vector<8x8xbf16>, vector<8x8xf32> -> vector<8x8xf32>
    %1263 = arith.truncf %1262 : vector<8x8xf32> to vector<8x8xbf16>
    %1264 = vector.extract_strided_slice %25 {offsets = [3, 0, 0], sizes = [1, 8, 32], strides = [1, 1, 1]} : vector<4x8x32xbf16> to vector<1x8x32xbf16>
    %1265 = vector.shape_cast %1264 : vector<1x8x32xbf16> to vector<8x32xbf16>
    %cst_385 = arith.constant dense<0.000000e+00> : vector<8x32xf32>
    %1266 = tpu.matmul %1263, %1265, %cst_385 {dimension_numbers = #tpu.dot_dimension_numbers<[1], [0], [0], [1], [0, 0, 1, 1], [], []>} : vector<8x8xbf16>, vector<8x32xbf16>, vector<8x32xf32> -> vector<8x32xf32>
    %1267 = arith.addf %1225, %1266 : vector<8x32xf32>
    %1268 = arith.addf %542, %1267 : vector<8x32xf32>
    %1269 = vector.broadcast %15 : vector<1x32xf32> to vector<8x32xf32>
    %1270 = arith.addf %1268, %1269 : vector<8x32xf32>
    %1271 = vector.extract_strided_slice %23 {offsets = [5, 0], sizes = [1, 32], strides = [1, 1]} : vector<6x32xf32> to vector<1x32xf32>
    %1272 = vector.extract_strided_slice %22 {offsets = [5, 0], sizes = [1, 32], strides = [1, 1]} : vector<6x32xf32> to vector<1x32xf32>
    %cst_386 = arith.constant dense<0.000000e+00> : vector<8xf32>
    %1273 = vector.multi_reduction <add>, %1270, %cst_386 [1] : vector<8x32xf32> to vector<8xf32>
    %1274 = vector.shape_cast %1273 : vector<8xf32> to vector<8x1xf32>
    %cst_387 = arith.constant 3.200000e+01 : f32
    %1275 = vector.broadcast %cst_387 : f32 to vector<8x1xf32>
    %1276 = arith.divf %1274, %1275 : vector<8x1xf32>
    %1277 = vector.broadcast %1276 : vector<8x1xf32> to vector<8x32xf32>
    %1278 = arith.subf %1270, %1277 : vector<8x32xf32>
    %1279 = arith.mulf %1278, %1278 : vector<8x32xf32>
    %cst_388 = arith.constant dense<0.000000e+00> : vector<8xf32>
    %1280 = vector.multi_reduction <add>, %1279, %cst_388 [1] : vector<8x32xf32> to vector<8xf32>
    %1281 = vector.shape_cast %1280 : vector<8xf32> to vector<8x1xf32>
    %cst_389 = arith.constant 3.200000e+01 : f32
    %1282 = vector.broadcast %cst_389 : f32 to vector<8x1xf32>
    %1283 = arith.divf %1281, %1282 : vector<8x1xf32>
    %1284 = vector.broadcast %1276 : vector<8x1xf32> to vector<8x32xf32>
    %1285 = arith.subf %1270, %1284 : vector<8x32xf32>
    %cst_390 = arith.constant 9.99999974E-6 : f32
    %1286 = vector.broadcast %cst_390 : f32 to vector<8x1xf32>
    %1287 = arith.addf %1283, %1286 : vector<8x1xf32>
    %1288 = math.rsqrt %1287 : vector<8x1xf32>
    %1289 = vector.broadcast %1288 : vector<8x1xf32> to vector<8x32xf32>
    %1290 = arith.mulf %1285, %1289 : vector<8x32xf32>
    %1291 = vector.broadcast %1271 : vector<1x32xf32> to vector<8x32xf32>
    %1292 = arith.mulf %1290, %1291 : vector<8x32xf32>
    %1293 = vector.broadcast %1272 : vector<1x32xf32> to vector<8x32xf32>
    %1294 = arith.addf %1292, %1293 : vector<8x32xf32>
    %1295 = arith.truncf %1294 : vector<8x32xf32> to vector<8x32xbf16>
    %cst_391 = arith.constant dense<0.000000e+00> : vector<8x128xf32>
    %1296 = tpu.matmul %1295, %19, %cst_391 {dimension_numbers = #tpu.dot_dimension_numbers<[1], [0], [0], [1], [0, 0, 1, 1], [], []>} : vector<8x32xbf16>, vector<32x128xbf16>, vector<8x128xf32> -> vector<8x128xf32>
    %1297 = vector.broadcast %18 : vector<1x128xf32> to vector<8x128xf32>
    %1298 = arith.addf %1296, %1297 : vector<8x128xf32>
    %cst_392 = arith.constant 5.000000e-01 : f32
    %1299 = vector.broadcast %cst_392 : f32 to vector<8x128xf32>
    %1300 = arith.mulf %1299, %1298 : vector<8x128xf32>
    %cst_393 = arith.constant 0.707106769 : f32
    %1301 = vector.broadcast %cst_393 : f32 to vector<8x128xf32>
    %1302 = arith.mulf %1298, %1301 : vector<8x128xf32>
    %1303 = math.erf %1302 : vector<8x128xf32>
    %cst_394 = arith.constant 1.000000e+00 : f32
    %1304 = vector.broadcast %cst_394 : f32 to vector<8x128xf32>
    %1305 = arith.addf %1304, %1303 : vector<8x128xf32>
    %1306 = arith.mulf %1300, %1305 : vector<8x128xf32>
    %1307 = arith.truncf %1306 : vector<8x128xf32> to vector<8x128xbf16>
    %cst_395 = arith.constant dense<0.000000e+00> : vector<8x32xf32>
    %1308 = tpu.matmul %1307, %21, %cst_395 {dimension_numbers = #tpu.dot_dimension_numbers<[1], [0], [0], [1], [0, 0, 1, 1], [], []>} : vector<8x128xbf16>, vector<128x32xbf16>, vector<8x32xf32> -> vector<8x32xf32>
    %1309 = vector.broadcast %20 : vector<1x32xf32> to vector<8x32xf32>
    %1310 = arith.addf %1308, %1309 : vector<8x32xf32>
    %1311 = arith.addf %1270, %1310 : vector<8x32xf32>
    %1312 = vector.extract_strided_slice %43 {offsets = [2, 0], sizes = [1, 32], strides = [1, 1]} : vector<3x32xf32> to vector<1x32xf32>
    %1313 = vector.extract_strided_slice %42 {offsets = [2, 0], sizes = [1, 32], strides = [1, 1]} : vector<3x32xf32> to vector<1x32xf32>
    %cst_396 = arith.constant dense<0.000000e+00> : vector<8xf32>
    %1314 = vector.multi_reduction <add>, %1311, %cst_396 [1] : vector<8x32xf32> to vector<8xf32>
    %1315 = vector.shape_cast %1314 : vector<8xf32> to vector<8x1xf32>
    %cst_397 = arith.constant 3.200000e+01 : f32
    %1316 = vector.broadcast %cst_397 : f32 to vector<8x1xf32>
    %1317 = arith.divf %1315, %1316 : vector<8x1xf32>
    %1318 = vector.broadcast %1317 : vector<8x1xf32> to vector<8x32xf32>
    %1319 = arith.subf %1311, %1318 : vector<8x32xf32>
    %1320 = arith.mulf %1319, %1319 : vector<8x32xf32>
    %cst_398 = arith.constant dense<0.000000e+00> : vector<8xf32>
    %1321 = vector.multi_reduction <add>, %1320, %cst_398 [1] : vector<8x32xf32> to vector<8xf32>
    %1322 = vector.shape_cast %1321 : vector<8xf32> to vector<8x1xf32>
    %cst_399 = arith.constant 3.200000e+01 : f32
    %1323 = vector.broadcast %cst_399 : f32 to vector<8x1xf32>
    %1324 = arith.divf %1322, %1323 : vector<8x1xf32>
    %1325 = vector.broadcast %1317 : vector<8x1xf32> to vector<8x32xf32>
    %1326 = arith.subf %1311, %1325 : vector<8x32xf32>
    %cst_400 = arith.constant 9.99999974E-6 : f32
    %1327 = vector.broadcast %cst_400 : f32 to vector<8x1xf32>
    %1328 = arith.addf %1324, %1327 : vector<8x1xf32>
    %1329 = math.rsqrt %1328 : vector<8x1xf32>
    %1330 = vector.broadcast %1329 : vector<8x1xf32> to vector<8x32xf32>
    %1331 = arith.mulf %1326, %1330 : vector<8x32xf32>
    %1332 = vector.broadcast %1312 : vector<1x32xf32> to vector<8x32xf32>
    %1333 = arith.mulf %1331, %1332 : vector<8x32xf32>
    %1334 = vector.broadcast %1313 : vector<1x32xf32> to vector<8x32xf32>
    %1335 = arith.addf %1333, %1334 : vector<8x32xf32>
    %c0_401 = arith.constant 0 : index
    %c0_402 = arith.constant 0 : index
    %1336 = vector.load %arg58[%c0_401, %c0_402] : memref<8x32xf32, #tpu.memory_space<vmem>>, vector<8x32xf32>
    tpu.vector_store %arg58[%c0_401, %c0_402], %1335 {strides = array<i32>} : memref<8x32xf32, #tpu.memory_space<vmem>>, vector<8x32xf32>,
    return
  }
  func.func @transform_0(%arg0: i32) -> (i32, i32) {
    %c0_i32 = arith.constant 0 : i32
    %c0_i32_0 = arith.constant 0 : i32
    %c0_i32_1 = arith.constant 0 : i32
    return %c0_i32, %c0_i32_0 : i32, i32
  }
  func.func @transform_1(%arg0: i32) -> (i32, i32) {
    %c0_i32 = arith.constant 0 : i32
    %c0_i32_0 = arith.constant 0 : i32
    %c0_i32_1 = arith.constant 0 : i32
    return %c0_i32, %c0_i32_0 : i32, i32
  }
  func.func @transform_2(%arg0: i32) -> (i32, i32) {
    %c0_i32 = arith.constant 0 : i32
    %c0_i32_0 = arith.constant 0 : i32
    %c0_i32_1 = arith.constant 0 : i32
    return %c0_i32, %c0_i32_0 : i32, i32
  }
  func.func @transform_3(%arg0: i32) -> (i32, i32) {
    %c0_i32 = arith.constant 0 : i32
    %c0_i32_0 = arith.constant 0 : i32
    %c0_i32_1 = arith.constant 0 : i32
    return %c0_i32, %c0_i32_0 : i32, i32
  }
  func.func @transform_4(%arg0: i32) -> (i32, i32) {
    %c0_i32 = arith.constant 0 : i32
    %c0_i32_0 = arith.constant 0 : i32
    %c0_i32_1 = arith.constant 0 : i32
    return %c0_i32, %c0_i32_0 : i32, i32
  }
  func.func @transform_5(%arg0: i32) -> (i32, i32) {
    %c0_i32 = arith.constant 0 : i32
    %c0_i32_0 = arith.constant 0 : i32
    %c0_i32_1 = arith.constant 0 : i32
    return %c0_i32, %c0_i32_0 : i32, i32
  }
  func.func @transform_6(%arg0: i32) -> (i32, i32) {
    %c0_i32 = arith.constant 0 : i32
    %c0_i32_0 = arith.constant 0 : i32
    %c0_i32_1 = arith.constant 0 : i32
    return %c0_i32, %c0_i32_0 : i32, i32
  }
  func.func @transform_7(%arg0: i32) -> (i32, i32) {
    %c0_i32 = arith.constant 0 : i32
    %c0_i32_0 = arith.constant 0 : i32
    %c0_i32_1 = arith.constant 0 : i32
    return %c0_i32, %c0_i32_0 : i32, i32
  }
  func.func @transform_8(%arg0: i32) -> (i32, i32) {
    %c0_i32 = arith.constant 0 : i32
    %c0_i32_0 = arith.constant 0 : i32
    %c0_i32_1 = arith.constant 0 : i32
    return %c0_i32, %c0_i32_0 : i32, i32
  }
  func.func @transform_9(%arg0: i32) -> (i32, i32) {
    %c0_i32 = arith.constant 0 : i32
    %c0_i32_0 = arith.constant 0 : i32
    %c0_i32_1 = arith.constant 0 : i32
    return %c0_i32, %c0_i32_0 : i32, i32
  }
  func.func @transform_10(%arg0: i32) -> (i32, i32) {
    %c0_i32 = arith.constant 0 : i32
    %c0_i32_0 = arith.constant 0 : i32
    %c0_i32_1 = arith.constant 0 : i32
    return %c0_i32, %c0_i32_0 : i32, i32
  }
  func.func @transform_11(%arg0: i32) -> (i32, i32) {
    %c0_i32 = arith.constant 0 : i32
    %c0_i32_0 = arith.constant 0 : i32
    %c0_i32_1 = arith.constant 0 : i32
    return %c0_i32, %c0_i32_0 : i32, i32
  }
  func.func @transform_12(%arg0: i32) -> (i32, i32, i32) {
    %c0_i32 = arith.constant 0 : i32
    %c0_i32_0 = arith.constant 0 : i32
    %c0_i32_1 = arith.constant 0 : i32
    %c0_i32_2 = arith.constant 0 : i32
    return %c0_i32, %c0_i32_0, %c0_i32_1 : i32, i32, i32
  }
  func.func @transform_13(%arg0: i32) -> (i32, i32, i32) {
    %c0_i32 = arith.constant 0 : i32
    %c0_i32_0 = arith.constant 0 : i32
    %c0_i32_1 = arith.constant 0 : i32
    %c0_i32_2 = arith.constant 0 : i32
    return %c0_i32, %c0_i32_0, %c0_i32_1 : i32, i32, i32
  }
  func.func @transform_14(%arg0: i32) -> (i32, i32, i32) {
    %c0_i32 = arith.constant 0 : i32
    %c0_i32_0 = arith.constant 0 : i32
    %c0_i32_1 = arith.constant 0 : i32
    %c0_i32_2 = arith.constant 0 : i32
    return %c0_i32, %c0_i32_0, %c0_i32_1 : i32, i32, i32
  }
  func.func @transform_15(%arg0: i32) -> (i32, i32, i32) {
    %c0_i32 = arith.constant 0 : i32
    %c0_i32_0 = arith.constant 0 : i32
    %c0_i32_1 = arith.constant 0 : i32
    %c0_i32_2 = arith.constant 0 : i32
    return %c0_i32, %c0_i32_0, %c0_i32_1 : i32, i32, i32
  }
  func.func @transform_16(%arg0: i32) -> (i32, i32) {
    %c0_i32 = arith.constant 0 : i32
    %c0_i32_0 = arith.constant 0 : i32
    %c0_i32_1 = arith.constant 0 : i32
    return %c0_i32, %c0_i32_0 : i32, i32
  }
  func.func @transform_17(%arg0: i32) -> (i32, i32) {
    %c0_i32 = arith.constant 0 : i32
    %c0_i32_0 = arith.constant 0 : i32
    %c0_i32_1 = arith.constant 0 : i32
    return %c0_i32, %c0_i32_0 : i32, i32
  }
  func.func @transform_18(%arg0: i32) -> (i32, i32) {
    %c0_i32 = arith.constant 0 : i32
    %c0_i32_0 = arith.constant 0 : i32
    %c0_i32_1 = arith.constant 0 : i32
    return %c0_i32, %c0_i32_0 : i32, i32
  }
  func.func @transform_19(%arg0: i32) -> (i32, i32) {
    %c0_i32 = arith.constant 0 : i32
    %c0_i32_0 = arith.constant 0 : i32
    %c0_i32_1 = arith.constant 0 : i32
    return %c0_i32, %c0_i32_0 : i32, i32
  }
  func.func @transform_20(%arg0: i32) -> (i32, i32) {
    %c0_i32 = arith.constant 0 : i32
    %c0_i32_0 = arith.constant 0 : i32
    %c0_i32_1 = arith.constant 0 : i32
    return %c0_i32, %c0_i32_0 : i32, i32
  }
  func.func @transform_21(%arg0: i32) -> (i32, i32) {
    %c0_i32 = arith.constant 0 : i32
    %c0_i32_0 = arith.constant 0 : i32
    %c0_i32_1 = arith.constant 0 : i32
    return %c0_i32, %c0_i32_0 : i32, i32
  }
  func.func @transform_22(%arg0: i32) -> (i32, i32) {
    %c0_i32 = arith.constant 0 : i32
    %c0_i32_0 = arith.constant 0 : i32
    %c0_i32_1 = arith.constant 0 : i32
    return %c0_i32, %c0_i32_0 : i32, i32
  }
  func.func @transform_23(%arg0: i32) -> (i32, i32) {
    %c0_i32 = arith.constant 0 : i32
    %c0_i32_0 = arith.constant 0 : i32
    %c0_i32_1 = arith.constant 0 : i32
    return %c0_i32, %c0_i32_0 : i32, i32
  }
  func.func @transform_24(%arg0: i32) -> (i32, i32) {
    %c0_i32 = arith.constant 0 : i32
    %c0_i32_0 = arith.constant 0 : i32
    %c0_i32_1 = arith.constant 0 : i32
    return %c0_i32, %c0_i32_0 : i32, i32
  }
  func.func @transform_25(%arg0: i32) -> (i32, i32) {
    %c0_i32 = arith.constant 0 : i32
    %c0_i32_0 = arith.constant 0 : i32
    %c0_i32_1 = arith.constant 0 : i32
    return %c0_i32, %c0_i32_0 : i32, i32
  }
  func.func @transform_26(%arg0: i32) -> (i32, i32, i32) {
    %c0_i32 = arith.constant 0 : i32
    %c0_i32_0 = arith.constant 0 : i32
    %c0_i32_1 = arith.constant 0 : i32
    %c0_i32_2 = arith.constant 0 : i32
    return %c0_i32, %c0_i32_0, %c0_i32_1 : i32, i32, i32
  }
  func.func @transform_27(%arg0: i32) -> (i32, i32, i32) {
    %c0_i32 = arith.constant 0 : i32
    %c0_i32_0 = arith.constant 0 : i32
    %c0_i32_1 = arith.constant 0 : i32
    %c0_i32_2 = arith.constant 0 : i32
    return %c0_i32, %c0_i32_0, %c0_i32_1 : i32, i32, i32
  }
  func.func @transform_28(%arg0: i32) -> (i32, i32, i32) {
    %c0_i32 = arith.constant 0 : i32
    %c0_i32_0 = arith.constant 0 : i32
    %c0_i32_1 = arith.constant 0 : i32
    %c0_i32_2 = arith.constant 0 : i32
    return %c0_i32, %c0_i32_0, %c0_i32_1 : i32, i32, i32
  }
  func.func @transform_29(%arg0: i32) -> (i32, i32, i32) {
    %c0_i32 = arith.constant 0 : i32
    %c0_i32_0 = arith.constant 0 : i32
    %c0_i32_1 = arith.constant 0 : i32
    %c0_i32_2 = arith.constant 0 : i32
    return %c0_i32, %c0_i32_0, %c0_i32_1 : i32, i32, i32
  }
  func.func @transform_30(%arg0: i32) -> (i32, i32) {
    %c0_i32 = arith.constant 0 : i32
    %c0_i32_0 = arith.constant 0 : i32
    %c0_i32_1 = arith.constant 0 : i32
    return %c0_i32, %c0_i32_0 : i32, i32
  }
  func.func @transform_31(%arg0: i32) -> (i32, i32) {
    %c0_i32 = arith.constant 0 : i32
    %c0_i32_0 = arith.constant 0 : i32
    %c0_i32_1 = arith.constant 0 : i32
    return %c0_i32, %c0_i32_0 : i32, i32
  }
  func.func @transform_32(%arg0: i32) -> (i32, i32) {
    %c0_i32 = arith.constant 0 : i32
    %c0_i32_0 = arith.constant 0 : i32
    %c0_i32_1 = arith.constant 0 : i32
    return %c0_i32, %c0_i32_0 : i32, i32
  }
  func.func @transform_33(%arg0: i32) -> (i32, i32) {
    %c0_i32 = arith.constant 0 : i32
    %c0_i32_0 = arith.constant 0 : i32
    %c0_i32_1 = arith.constant 0 : i32
    return %c0_i32, %c0_i32_0 : i32, i32
  }
  func.func @transform_34(%arg0: i32) -> (i32, i32) {
    %c0_i32 = arith.constant 0 : i32
    %c0_i32_0 = arith.constant 0 : i32
    %c0_i32_1 = arith.constant 0 : i32
    return %c0_i32, %c0_i32_0 : i32, i32
  }
  func.func @transform_35(%arg0: i32) -> (i32, i32) {
    %c0_i32 = arith.constant 0 : i32
    %c0_i32_0 = arith.constant 0 : i32
    %c0_i32_1 = arith.constant 0 : i32
    return %c0_i32, %c0_i32_0 : i32, i32
  }
  func.func @transform_36(%arg0: i32) -> (i32, i32) {
    %c0_i32 = arith.constant 0 : i32
    %c0_i32_0 = arith.constant 0 : i32
    %c0_i32_1 = arith.constant 0 : i32
    return %c0_i32, %c0_i32_0 : i32, i32
  }
  func.func @transform_37(%arg0: i32) -> (i32, i32) {
    %c0_i32 = arith.constant 0 : i32
    %c0_i32_0 = arith.constant 0 : i32
    %c0_i32_1 = arith.constant 0 : i32
    return %c0_i32, %c0_i32_0 : i32, i32
  }
  func.func @transform_38(%arg0: i32) -> (i32, i32) {
    %c0_i32 = arith.constant 0 : i32
    %c0_i32_0 = arith.constant 0 : i32
    %c0_i32_1 = arith.constant 0 : i32
    return %c0_i32, %c0_i32_0 : i32, i32
  }
  func.func @transform_39(%arg0: i32) -> (i32, i32) {
    %c0_i32 = arith.constant 0 : i32
    %c0_i32_0 = arith.constant 0 : i32
    %c0_i32_1 = arith.constant 0 : i32
    return %c0_i32, %c0_i32_0 : i32, i32
  }
  func.func @transform_40(%arg0: i32) -> (i32, i32, i32) {
    %c0_i32 = arith.constant 0 : i32
    %c0_i32_0 = arith.constant 0 : i32
    %c0_i32_1 = arith.constant 0 : i32
    %c0_i32_2 = arith.constant 0 : i32
    return %c0_i32, %c0_i32_0, %c0_i32_1 : i32, i32, i32
  }
  func.func @transform_41(%arg0: i32) -> (i32, i32, i32) {
    %c0_i32 = arith.constant 0 : i32
    %c0_i32_0 = arith.constant 0 : i32
    %c0_i32_1 = arith.constant 0 : i32
    %c0_i32_2 = arith.constant 0 : i32
    return %c0_i32, %c0_i32_0, %c0_i32_1 : i32, i32, i32
  }
  func.func @transform_42(%arg0: i32) -> (i32, i32, i32) {
    %c0_i32 = arith.constant 0 : i32
    %c0_i32_0 = arith.constant 0 : i32
    %c0_i32_1 = arith.constant 0 : i32
    %c0_i32_2 = arith.constant 0 : i32
    return %c0_i32, %c0_i32_0, %c0_i32_1 : i32, i32, i32
  }
  func.func @transform_43(%arg0: i32) -> (i32, i32, i32) {
    %c0_i32 = arith.constant 0 : i32
    %c0_i32_0 = arith.constant 0 : i32
    %c0_i32_1 = arith.constant 0 : i32
    %c0_i32_2 = arith.constant 0 : i32
    return %c0_i32, %c0_i32_0, %c0_i32_1 : i32, i32, i32
  }
  func.func @transform_44(%arg0: i32) -> (i32, i32) {
    %c0_i32 = arith.constant 0 : i32
    %c0_i32_0 = arith.constant 0 : i32
    %c0_i32_1 = arith.constant 0 : i32
    return %c0_i32, %c0_i32_0 : i32, i32
  }
  func.func @transform_45(%arg0: i32) -> (i32, i32) {
    %c0_i32 = arith.constant 0 : i32
    %c0_i32_0 = arith.constant 0 : i32
    %c0_i32_1 = arith.constant 0 : i32
    return %c0_i32, %c0_i32_0 : i32, i32
  }
  func.func @transform_46(%arg0: i32) -> (i32, i32) {
    %c0_i32 = arith.constant 0 : i32
    %c0_i32_0 = arith.constant 0 : i32
    %c0_i32_1 = arith.constant 0 : i32
    return %c0_i32, %c0_i32_0 : i32, i32
  }
  func.func @transform_47(%arg0: i32) -> (i32, i32) {
    %c0_i32 = arith.constant 0 : i32
    %c0_i32_0 = arith.constant 0 : i32
    %c0_i32_1 = arith.constant 0 : i32
    return %c0_i32, %c0_i32_0 : i32, i32
  }
  func.func @transform_48(%arg0: i32) -> (i32, i32) {
    %c0_i32 = arith.constant 0 : i32
    %c0_i32_0 = arith.constant 0 : i32
    %c0_i32_1 = arith.constant 0 : i32
    return %c0_i32, %c0_i32_0 : i32, i32
  }
  func.func @transform_49(%arg0: i32) -> (i32, i32) {
    %c0_i32 = arith.constant 0 : i32
    %c0_i32_0 = arith.constant 0 : i32
    %c0_i32_1 = arith.constant 0 : i32
    return %c0_i32, %c0_i32_0 : i32, i32
  }
  func.func @transform_50(%arg0: i32) -> (i32, i32) {
    %c0_i32 = arith.constant 0 : i32
    %c0_i32_0 = arith.constant 0 : i32
    %c0_i32_1 = arith.constant 0 : i32
    return %c0_i32, %c0_i32_0 : i32, i32
  }
  func.func @transform_51(%arg0: i32) -> (i32, i32) {
    %c0_i32 = arith.constant 0 : i32
    %c0_i32_0 = arith.constant 0 : i32
    %c0_i32_1 = arith.constant 0 : i32
    return %c0_i32, %c0_i32_0 : i32, i32
  }
  func.func @transform_52(%arg0: i32) -> (i32, i32) {
    %c0_i32 = arith.constant 0 : i32
    %c0_i32_0 = arith.constant 0 : i32
    %c0_i32_1 = arith.constant 0 : i32
    return %c0_i32, %c0_i32_0 : i32, i32
  }
  func.func @transform_53(%arg0: i32) -> (i32, i32) {
    %c0_i32 = arith.constant 0 : i32
    %c0_i32_0 = arith.constant 0 : i32
    %c0_i32_1 = arith.constant 0 : i32
    return %c0_i32, %c0_i32_0 : i32, i32
  }
  func.func @transform_54(%arg0: i32) -> (i32, i32) {
    %c0_i32 = arith.constant 0 : i32
    %c0_i32_0 = arith.constant 0 : i32
    %c0_i32_1 = arith.constant 0 : i32
    return %c0_i32, %c0_i32_0 : i32, i32
  }
  func.func @transform_55(%arg0: i32) -> (i32, i32) {
    %c0_i32 = arith.constant 0 : i32
    %c0_i32_0 = arith.constant 0 : i32
    %c0_i32_1 = arith.constant 0 : i32
    return %c0_i32, %c0_i32_0 : i32, i32
  }
  func.func @transform_56(%arg0: i32) -> (i32, i32) {
    %c0_i32 = arith.constant 0 : i32
    %c0_i32_0 = arith.constant 0 : i32
    %c0_i32_1 = arith.constant 0 : i32
    return %c0_i32, %c0_i32_0 : i32, i32
  }
  func.func @transform_57(%arg0: i32) -> (i32, i32) {
    %c0_i32 = arith.constant 0 : i32
    %c0_i32_0 = arith.constant 0 : i32
    %c0_i32_1 = arith.constant 0 : i32
    return %c0_i32, %c0_i32_0 : i32, i32
  }
}

</mosaic_0001>

<llo_original>
// kernel: tpu_custom_call.1
$region0: #{tpu_custom_call.1}
  #allocation0 [shape = 'u32[]', space=smem, size = 0x4, offset = 0x4, fixed_abs, tag = 'smem constant byte address 0x4 - core index']
  #allocation1 [shape = 'u32[144,128]{1,0:T(1,128)}', space=vmem, size = 0x12000, scoped, tag = 'internal scratch']
  %s0 = inlined_call_operand.smem [shape: u32[58], index: -1, kind: input, shape index: {}]
  %s1 = sld [smem:[%s0]]
  %s2 = scalar_lea.smem %s0, 1
  %s3 = sld [smem:[%s2]]
  %s4 = scalar_lea.smem %s0, 2
  %s5 = sld [smem:[%s4]]
  %s6 = scalar_lea.smem %s0, 3
  %s7 = sld [smem:[%s6]]
  %s8 = scalar_lea.smem %s0, 4
  %s9 = sld [smem:[%s8]]
  %s10 = scalar_lea.smem %s0, 5
  %s11 = sld [smem:[%s10]]
  %s12 = scalar_lea.smem %s0, 6
  %s13 = sld [smem:[%s12]]
  %s14 = scalar_lea.smem %s0, 7
  %s15 = sld [smem:[%s14]]
  %s16 = scalar_lea.smem %s0, 8
  %s17 = sld [smem:[%s16]]
  %s18 = scalar_lea.smem %s0, 9
  %s19 = sld [smem:[%s18]]
  %s20 = scalar_lea.smem %s0, 10
  %s21 = sld [smem:[%s20]]
  %s22 = scalar_lea.smem %s0, 11
  %s23 = sld [smem:[%s22]]
  %s24 = scalar_lea.smem %s0, 12
  %s25 = sld [smem:[%s24]]
  %s26 = scalar_lea.smem %s0, 13
  %s27 = sld [smem:[%s26]]
  %s28 = scalar_lea.smem %s0, 14
  %s29 = sld [smem:[%s28]]
  %s30 = scalar_lea.smem %s0, 15
  %s31 = sld [smem:[%s30]]
  %s32 = scalar_lea.smem %s0, 16
  %s33 = sld [smem:[%s32]]
  %s34 = scalar_lea.smem %s0, 17
  %s35 = sld [smem:[%s34]]
  %s36 = scalar_lea.smem %s0, 18
  %s37 = sld [smem:[%s36]]
  %s38 = scalar_lea.smem %s0, 19
  %s39 = sld [smem:[%s38]]
  %s40 = scalar_lea.smem %s0, 20
  %s41 = sld [smem:[%s40]]
  %s42 = scalar_lea.smem %s0, 21
  %s43 = sld [smem:[%s42]]
  %s44 = scalar_lea.smem %s0, 22
  %s45 = sld [smem:[%s44]]
  %s46 = scalar_lea.smem %s0, 23
  %s47 = sld [smem:[%s46]]
  %s48 = scalar_lea.smem %s0, 24
  %s49 = sld [smem:[%s48]]
  %s50 = scalar_lea.smem %s0, 25
  %s51 = sld [smem:[%s50]]
  %s52 = scalar_lea.smem %s0, 26
  %s53 = sld [smem:[%s52]]
  %s54 = scalar_lea.smem %s0, 27
  %s55 = sld [smem:[%s54]]
  %s56 = scalar_lea.smem %s0, 28
  %s57 = sld [smem:[%s56]]
  %s58 = scalar_lea.smem %s0, 29
  %s59 = sld [smem:[%s58]]
  %s60 = scalar_lea.smem %s0, 30
  %s61 = sld [smem:[%s60]]
  %s62 = scalar_lea.smem %s0, 31
  %s63 = sld [smem:[%s62]]
  %s64 = scalar_lea.smem %s0, 32
  %s65 = sld [smem:[%s64]]
  %s66 = scalar_lea.smem %s0, 33
  %s67 = sld [smem:[%s66]]
  %s68 = scalar_lea.smem %s0, 34
  %s69 = sld [smem:[%s68]]
  %s70 = scalar_lea.smem %s0, 35
  %s71 = sld [smem:[%s70]]
  %s72 = scalar_lea.smem %s0, 36
  %s73 = sld [smem:[%s72]]
  %s74 = scalar_lea.smem %s0, 37
  %s75 = sld [smem:[%s74]]
  %s76 = scalar_lea.smem %s0, 38
  %s77 = sld [smem:[%s76]]
  %s78 = scalar_lea.smem %s0, 39
  %s79 = sld [smem:[%s78]]
  %s80 = scalar_lea.smem %s0, 40
  %s81 = sld [smem:[%s80]]
  %s82 = scalar_lea.smem %s0, 41
  %s83 = sld [smem:[%s82]]
  %s84 = scalar_lea.smem %s0, 42
  %s85 = sld [smem:[%s84]]
  %s86 = scalar_lea.smem %s0, 43
  %s87 = sld [smem:[%s86]]
  %s88 = scalar_lea.smem %s0, 44
  %s89 = sld [smem:[%s88]]
  %s90 = scalar_lea.smem %s0, 45
  %s91 = sld [smem:[%s90]]
  %s92 = scalar_lea.smem %s0, 46
  %s93 = sld [smem:[%s92]]
  %s94 = scalar_lea.smem %s0, 47
  %s95 = sld [smem:[%s94]]
  %s96 = scalar_lea.smem %s0, 48
  %s97 = sld [smem:[%s96]]
  %s98 = scalar_lea.smem %s0, 49
  %s99 = sld [smem:[%s98]]
  %s100 = scalar_lea.smem %s0, 50
  %s101 = sld [smem:[%s100]]
  %s102 = scalar_lea.smem %s0, 51
  %s103 = sld [smem:[%s102]]
  %s104 = scalar_lea.smem %s0, 52
  %s105 = sld [smem:[%s104]]
  %s106 = scalar_lea.smem %s0, 53
  %s107 = sld [smem:[%s106]]
  %s108 = scalar_lea.smem %s0, 54
  %s109 = sld [smem:[%s108]]
  %s110 = scalar_lea.smem %s0, 55
  %s111 = sld [smem:[%s110]]
  %s112 = scalar_lea.smem %s0, 56
  %s113 = sld [smem:[%s112]]
  %s114 = scalar_lea.smem %s0, 57
  %s115 = sld [smem:[%s114]]
  %116 = xla_tuple %s111, %s113, %s115
  %s117 = sld [smem:[#allocation0]]
  $region270: #{tpu_custom_call.1} parent=0
    _
  %s119 = ssub.s32 1, %s117
  %s120 = scalar_select 0, %s119, %s117
  $region1: #{tpu_custom_call.1} parent=0
    #allocation2 [shape = 'u8[512]{0}', space=vmem, size = 0x400, scoped, tag = 'input window, operand 22, single buffered']
    #allocation3 [shape = 's32[1]{0}', space=sflag, size = 0x4, scoped, tag = 'scoped memory for tpu_custom_call.1']
    #allocation4 [shape = 's32[1]{0}', space=sflag, size = 0x4, scoped, tag = 'scoped memory for tpu_custom_call.1']
    #allocation5 [shape = 'u8[512]{0}', space=vmem, size = 0x400, scoped, tag = 'input window, operand 31, single buffered']
    #allocation6 [shape = 's32[1]{0}', space=sflag, size = 0x4, scoped, tag = 'scoped memory for tpu_custom_call.1']
    #allocation7 [shape = 'u8[512]{0}', space=vmem, size = 0x400, scoped, tag = 'input window, operand 34, single buffered']
    #allocation8 [shape = 'u8[512]{0}', space=vmem, size = 0x400, scoped, tag = 'input window, operand 36, single buffered']
    #allocation9 [shape = 's32[1]{0}', space=sflag, size = 0x4, scoped, tag = 'scoped memory for tpu_custom_call.1']
    #allocation10 [shape = 'u8[512]{0}', space=vmem, size = 0x400, scoped, tag = 'input window, operand 49, single buffered']
    #allocation11 [shape = 'u8[512]{0}', space=vmem, size = 0x400, scoped, tag = 'input window, operand 51, single buffered']
    #allocation12 [shape = 's32[1]{0}', space=sflag, size = 0x4, scoped, tag = 'scoped memory for tpu_custom_call.1']
    #allocation13 [shape = 'u8[8192]{0}', space=vmem, size = 0x2000, scoped, tag = 'output window, operand 0, single buffered']
    #allocation14 [shape = 'u8[4096]{0}', space=vmem, size = 0x1000, scoped, tag = 'output window, operand 1, single buffered']
    #allocation15 [shape = 's32[1]{0}', space=sflag, size = 0x4, scoped, tag = 'scoped memory for tpu_custom_call.1']
    #allocation16 [shape = 'u8[4096]{0}', space=vmem, size = 0x1000, scoped, tag = 'output window, operand 2, single buffered']
    %121 = vsyncpa [#allocation3], 0
    %122 = vsyncpa [#allocation6], 0
    %123 = vsyncpa [#allocation9], 0
    %124 = vsyncpa [#allocation12], 0
    %125 = vsyncpa [#allocation4], 0
    %126 = vsyncpa [#allocation15], 0
    // Predicated region
    $region2: #{tpu_custom_call.1} parent=1 // pred_check
      _
    $region3: #{tpu_custom_call.1} parent=1 // pred_check_branch
      %128 = sbr.rel (0) target = $region5
    $region4: #{tpu_custom_call.1} parent=1 // pred_region
      _
    $region5: #{tpu_custom_call.1} parent=1 // pred_fallthru
      _
    // Predicated region
    $region6: #{tpu_custom_call.1} parent=1 // pred_check
      _
    $region7: #{tpu_custom_call.1} parent=1 // pred_check_branch
      %130 = sbr.rel (0) target = $region9
    $region8: #{tpu_custom_call.1} parent=1 // pred_region
      _
    $region9: #{tpu_custom_call.1} parent=1 // pred_fallthru
      _
    // Predicated region
    $region10: #{tpu_custom_call.1} parent=1 // pred_check
      _
    $region11: #{tpu_custom_call.1} parent=1 // pred_check_branch
      %132 = sbr.rel (0) target = $region13
    $region12: #{tpu_custom_call.1} parent=1 // pred_region
      _
    $region13: #{tpu_custom_call.1} parent=1 // pred_fallthru
      _
    // Predicated region
    $region14: #{tpu_custom_call.1} parent=1 // pred_check
      _
    $region15: #{tpu_custom_call.1} parent=1 // pred_check_branch
      %134 = sbr.rel (0) target = $region17
    $region16: #{tpu_custom_call.1} parent=1 // pred_region
      _
    $region17: #{tpu_custom_call.1} parent=1 // pred_fallthru
      _
    // Predicated region
    $region18: #{tpu_custom_call.1} parent=1 // pred_check
      _
    $region19: #{tpu_custom_call.1} parent=1 // pred_check_branch
      %136 = sbr.rel (0) target = $region21
    $region20: #{tpu_custom_call.1} parent=1 // pred_region
      _
    $region21: #{tpu_custom_call.1} parent=1 // pred_fallthru
      _
    // Predicated region
    $region22: #{tpu_custom_call.1} parent=1 // pred_check
      _
    $region23: #{tpu_custom_call.1} parent=1 // pred_check_branch
      %138 = sbr.rel (0) target = $region25
    $region24: #{tpu_custom_call.1} parent=1 // pred_region
      _
    $region25: #{tpu_custom_call.1} parent=1 // pred_fallthru
      _
    // Predicated region
    $region26: #{tpu_custom_call.1} parent=1 // pred_check
      _
    $region27: #{tpu_custom_call.1} parent=1 // pred_check_branch
      %140 = sbr.rel (0) target = $region29
    $region28: #{tpu_custom_call.1} parent=1 // pred_region
      _
    $region29: #{tpu_custom_call.1} parent=1 // pred_fallthru
      _
    // Predicated region
    $region30: #{tpu_custom_call.1} parent=1 // pred_check
      _
    $region31: #{tpu_custom_call.1} parent=1 // pred_check_branch
      %142 = sbr.rel (0) target = $region33
    $region32: #{tpu_custom_call.1} parent=1 // pred_region
      _
    $region33: #{tpu_custom_call.1} parent=1 // pred_fallthru
      _
    // Predicated region
    $region34: #{tpu_custom_call.1} parent=1 // pred_check
      _
    $region35: #{tpu_custom_call.1} parent=1 // pred_check_branch
      %144 = sbr.rel (0) target = $region37
    $region36: #{tpu_custom_call.1} parent=1 // pred_region
      _
    $region37: #{tpu_custom_call.1} parent=1 // pred_fallthru
      _
    // Predicated region
    $region38: #{tpu_custom_call.1} parent=1 // pred_check
      _
    $region39: #{tpu_custom_call.1} parent=1 // pred_check_branch
      %146 = sbr.rel (0) target = $region41
    $region40: #{tpu_custom_call.1} parent=1 // pred_region
      _
    $region41: #{tpu_custom_call.1} parent=1 // pred_fallthru
      _
    // Predicated region
    $region42: #{tpu_custom_call.1} parent=1 // pred_check
      _
    $region43: #{tpu_custom_call.1} parent=1 // pred_check_branch
      %148 = sbr.rel (0) target = $region45
    $region44: #{tpu_custom_call.1} parent=1 // pred_region
      _
    $region45: #{tpu_custom_call.1} parent=1 // pred_fallthru
      _
    // Predicated region
    $region46: #{tpu_custom_call.1} parent=1 // pred_check
      _
    $region47: #{tpu_custom_call.1} parent=1 // pred_check_branch
      %150 = sbr.rel (0) target = $region49
    $region48: #{tpu_custom_call.1} parent=1 // pred_region
      _
    $region49: #{tpu_custom_call.1} parent=1 // pred_fallthru
      _
    // Predicated region
    $region50: #{tpu_custom_call.1} parent=1 // pred_check
      _
    $region51: #{tpu_custom_call.1} parent=1 // pred_check_branch
      %152 = sbr.rel (0) target = $region53
    $region52: #{tpu_custom_call.1} parent=1 // pred_region
      _
    $region53: #{tpu_custom_call.1} parent=1 // pred_fallthru
      _
    // Predicated region
    $region54: #{tpu_custom_call.1} parent=1 // pred_check
      _
    $region55: #{tpu_custom_call.1} parent=1 // pred_check_branch
      %154 = sbr.rel (0) target = $region57
    $region56: #{tpu_custom_call.1} parent=1 // pred_region
      _
    $region57: #{tpu_custom_call.1} parent=1 // pred_fallthru
      _
    // Predicated region
    $region58: #{tpu_custom_call.1} parent=1 // pred_check
      _
    $region59: #{tpu_custom_call.1} parent=1 // pred_check_branch
      %156 = sbr.rel (0) target = $region61
    $region60: #{tpu_custom_call.1} parent=1 // pred_region
      _
    $region61: #{tpu_custom_call.1} parent=1 // pred_fallthru
      _
    // Predicated region
    $region62: #{tpu_custom_call.1} parent=1 // pred_check
      _
    $region63: #{tpu_custom_call.1} parent=1 // pred_check_branch
      %158 = sbr.rel (0) target = $region65
    $region64: #{tpu_custom_call.1} parent=1 // pred_region
      _
    $region65: #{tpu_custom_call.1} parent=1 // pred_fallthru
      _
    // Predicated region
    $region66: #{tpu_custom_call.1} parent=1 // pred_check
      _
    $region67: #{tpu_custom_call.1} parent=1 // pred_check_branch
      %160 = sbr.rel (0) target = $region69
    $region68: #{tpu_custom_call.1} parent=1 // pred_region
      _
    $region69: #{tpu_custom_call.1} parent=1 // pred_fallthru
      _
    // Predicated region
    $region70: #{tpu_custom_call.1} parent=1 // pred_check
      _
    $region71: #{tpu_custom_call.1} parent=1 // pred_check_branch
      %162 = sbr.rel (0) target = $region73
    $region72: #{tpu_custom_call.1} parent=1 // pred_region
      _
    $region73: #{tpu_custom_call.1} parent=1 // pred_fallthru
      _
    // Predicated region
    $region74: #{tpu_custom_call.1} parent=1 // pred_check
      _
    $region75: #{tpu_custom_call.1} parent=1 // pred_check_branch
      %164 = sbr.rel (0) target = $region77
    $region76: #{tpu_custom_call.1} parent=1 // pred_region
      _
    $region77: #{tpu_custom_call.1} parent=1 // pred_fallthru
      _
    // Predicated region
    $region78: #{tpu_custom_call.1} parent=1 // pred_check
      _
    $region79: #{tpu_custom_call.1} parent=1 // pred_check_branch
      %166 = sbr.rel (0) target = $region81
    $region80: #{tpu_custom_call.1} parent=1 // pred_region
      _
    $region81: #{tpu_custom_call.1} parent=1 // pred_fallthru
      _
    // Predicated region
    $region82: #{tpu_custom_call.1} parent=1 // pred_check
      _
    $region83: #{tpu_custom_call.1} parent=1 // pred_check_branch
      %168 = sbr.rel (0) target = $region85
    $region84: #{tpu_custom_call.1} parent=1 // pred_region
      _
    $region85: #{tpu_custom_call.1} parent=1 // pred_fallthru
      _
    // Predicated region
    $region86: #{tpu_custom_call.1} parent=1 // pred_check
      _
    $region87: #{tpu_custom_call.1} parent=1 // pred_check_branch
      %170 = sbr.rel (0) target = $region89
    $region88: #{tpu_custom_call.1} parent=1 // pred_region
      _
    $region89: #{tpu_custom_call.1} parent=1 // pred_fallthru
      _
    // Predicated region
    $region90: #{tpu_custom_call.1} parent=1 // pred_check
      _
    $region91: #{tpu_custom_call.1} parent=1 // pred_check_branch
      %172 = sbr.rel (0) target = $region93
    $region92: #{tpu_custom_call.1} parent=1 // pred_region
      %s174 = ssub.s32 16, 16
      %175 = vsyncadd [#allocation3], %s174
      %s177 = sshll.u32 [#allocation2], 4
      %s178 = int_to_ptr.vmem [resolvable:$true] %s177
      %180 = dma.hbm_to_vmem [thread:$0]  %s45, 16, %s178, [#allocation3]
    $region93: #{tpu_custom_call.1} parent=1 // pred_fallthru
      _
    // Predicated region
    $region94: #{tpu_custom_call.1} parent=1 // pred_check
      _
    $region95: #{tpu_custom_call.1} parent=1 // pred_check_branch
      %182 = sbr.rel (0) target = $region97
    $region96: #{tpu_custom_call.1} parent=1 // pred_region
      _
    $region97: #{tpu_custom_call.1} parent=1 // pred_fallthru
      _
    // Predicated region
    $region98: #{tpu_custom_call.1} parent=1 // pred_check
      _
    $region99: #{tpu_custom_call.1} parent=1 // pred_check_branch
      %184 = sbr.rel (0) target = $region101
    $region100: #{tpu_custom_call.1} parent=1 // pred_region
      _
    $region101: #{tpu_custom_call.1} parent=1 // pred_fallthru
      _
    // Predicated region
    $region102: #{tpu_custom_call.1} parent=1 // pred_check
      _
    $region103: #{tpu_custom_call.1} parent=1 // pred_check_branch
      %186 = sbr.rel (0) target = $region105
    $region104: #{tpu_custom_call.1} parent=1 // pred_region
      _
    $region105: #{tpu_custom_call.1} parent=1 // pred_fallthru
      _
    // Predicated region
    $region106: #{tpu_custom_call.1} parent=1 // pred_check
      _
    $region107: #{tpu_custom_call.1} parent=1 // pred_check_branch
      %188 = sbr.rel (0) target = $region109
    $region108: #{tpu_custom_call.1} parent=1 // pred_region
      _
    $region109: #{tpu_custom_call.1} parent=1 // pred_fallthru
      _
    // Predicated region
    $region110: #{tpu_custom_call.1} parent=1 // pred_check
      _
    $region111: #{tpu_custom_call.1} parent=1 // pred_check_branch
      %190 = sbr.rel (0) target = $region113
    $region112: #{tpu_custom_call.1} parent=1 // pred_region
      _
    $region113: #{tpu_custom_call.1} parent=1 // pred_fallthru
      _
    // Predicated region
    $region114: #{tpu_custom_call.1} parent=1 // pred_check
      _
    $region115: #{tpu_custom_call.1} parent=1 // pred_check_branch
      %192 = sbr.rel (0) target = $region117
    $region116: #{tpu_custom_call.1} parent=1 // pred_region
      _
    $region117: #{tpu_custom_call.1} parent=1 // pred_fallthru
      _
    // Predicated region
    $region118: #{tpu_custom_call.1} parent=1 // pred_check
      _
    $region119: #{tpu_custom_call.1} parent=1 // pred_check_branch
      %194 = sbr.rel (0) target = $region121
    $region120: #{tpu_custom_call.1} parent=1 // pred_region
      _
    $region121: #{tpu_custom_call.1} parent=1 // pred_fallthru
      _
    // Predicated region
    $region122: #{tpu_custom_call.1} parent=1 // pred_check
      _
    $region123: #{tpu_custom_call.1} parent=1 // pred_check_branch
      %196 = sbr.rel (0) target = $region125
    $region124: #{tpu_custom_call.1} parent=1 // pred_region
      _
    $region125: #{tpu_custom_call.1} parent=1 // pred_fallthru
      _
    // Predicated region
    $region126: #{tpu_custom_call.1} parent=1 // pred_check
      _
    $region127: #{tpu_custom_call.1} parent=1 // pred_check_branch
      %198 = sbr.rel (0) target = $region129
    $region128: #{tpu_custom_call.1} parent=1 // pred_region
      %s200 = ssub.s32 16, 16
      %201 = vsyncadd [#allocation6], %s200
      %s203 = sshll.u32 [#allocation5], 4
      %s204 = int_to_ptr.vmem [resolvable:$true] %s203
      %206 = dma.hbm_to_vmem [thread:$0]  %s63, 16, %s204, [#allocation6]
    $region129: #{tpu_custom_call.1} parent=1 // pred_fallthru
      _
    // Predicated region
    $region130: #{tpu_custom_call.1} parent=1 // pred_check
      _
    $region131: #{tpu_custom_call.1} parent=1 // pred_check_branch
      %208 = sbr.rel (0) target = $region133
    $region132: #{tpu_custom_call.1} parent=1 // pred_region
      _
    $region133: #{tpu_custom_call.1} parent=1 // pred_fallthru
      _
    // Predicated region
    $region134: #{tpu_custom_call.1} parent=1 // pred_check
      _
    $region135: #{tpu_custom_call.1} parent=1 // pred_check_branch
      %210 = sbr.rel (0) target = $region137
    $region136: #{tpu_custom_call.1} parent=1 // pred_region
      _
    $region137: #{tpu_custom_call.1} parent=1 // pred_fallthru
      _
    // Predicated region
    $region138: #{tpu_custom_call.1} parent=1 // pred_check
      _
    $region139: #{tpu_custom_call.1} parent=1 // pred_check_branch
      %212 = sbr.rel (0) target = $region141
    $region140: #{tpu_custom_call.1} parent=1 // pred_region
      %s214 = ssub.s32 16, 16
      %215 = vsyncadd [#allocation6], %s214
      %s217 = sshll.u32 [#allocation7], 4
      %s218 = int_to_ptr.vmem [resolvable:$true] %s217
      %220 = dma.hbm_to_vmem [thread:$0]  %s69, 16, %s218, [#allocation6]
    $region141: #{tpu_custom_call.1} parent=1 // pred_fallthru
      _
    // Predicated region
    $region142: #{tpu_custom_call.1} parent=1 // pred_check
      _
    $region143: #{tpu_custom_call.1} parent=1 // pred_check_branch
      %222 = sbr.rel (0) target = $region145
    $region144: #{tpu_custom_call.1} parent=1 // pred_region
      _
    $region145: #{tpu_custom_call.1} parent=1 // pred_fallthru
      _
    // Predicated region
    $region146: #{tpu_custom_call.1} parent=1 // pred_check
      _
    $region147: #{tpu_custom_call.1} parent=1 // pred_check_branch
      %224 = sbr.rel (0) target = $region149
    $region148: #{tpu_custom_call.1} parent=1 // pred_region
      %s226 = ssub.s32 16, 16
      %227 = vsyncadd [#allocation9], %s226
      %s229 = sshll.u32 [#allocation8], 4
      %s230 = int_to_ptr.vmem [resolvable:$true] %s229
      %232 = dma.hbm_to_vmem [thread:$0]  %s73, 16, %s230, [#allocation9]
    $region149: #{tpu_custom_call.1} parent=1 // pred_fallthru
      _
    // Predicated region
    $region150: #{tpu_custom_call.1} parent=1 // pred_check
      _
    $region151: #{tpu_custom_call.1} parent=1 // pred_check_branch
      %234 = sbr.rel (0) target = $region153
    $region152: #{tpu_custom_call.1} parent=1 // pred_region
      _
    $region153: #{tpu_custom_call.1} parent=1 // pred_fallthru
      _
    // Predicated region
    $region154: #{tpu_custom_call.1} parent=1 // pred_check
      _
    $region155: #{tpu_custom_call.1} parent=1 // pred_check_branch
      %236 = sbr.rel (0) target = $region157
    $region156: #{tpu_custom_call.1} parent=1 // pred_region
      _
    $region157: #{tpu_custom_call.1} parent=1 // pred_fallthru
      _
    // Predicated region
    $region158: #{tpu_custom_call.1} parent=1 // pred_check
      _
    $region159: #{tpu_custom_call.1} parent=1 // pred_check_branch
      %238 = sbr.rel (0) target = $region161
    $region160: #{tpu_custom_call.1} parent=1 // pred_region
      _
    $region161: #{tpu_custom_call.1} parent=1 // pred_fallthru
      _
    // Predicated region
    $region162: #{tpu_custom_call.1} parent=1 // pred_check
      _
    $region163: #{tpu_custom_call.1} parent=1 // pred_check_branch
      %240 = sbr.rel (0) target = $region165
    $region164: #{tpu_custom_call.1} parent=1 // pred_region
      _
    $region165: #{tpu_custom_call.1} parent=1 // pred_fallthru
      _
    // Predicated region
    $region166: #{tpu_custom_call.1} parent=1 // pred_check
      _
    $region167: #{tpu_custom_call.1} parent=1 // pred_check_branch
      %242 = sbr.rel (0) target = $region169
    $region168: #{tpu_custom_call.1} parent=1 // pred_region
      _
    $region169: #{tpu_custom_call.1} parent=1 // pred_fallthru
      _
    // Predicated region
    $region170: #{tpu_custom_call.1} parent=1 // pred_check
      _
    $region171: #{tpu_custom_call.1} parent=1 // pred_check_branch
      %244 = sbr.rel (0) target = $region173
    $region172: #{tpu_custom_call.1} parent=1 // pred_region
      _
    $region173: #{tpu_custom_call.1} parent=1 // pred_fallthru
      _
    // Predicated region
    $region174: #{tpu_custom_call.1} parent=1 // pred_check
      _
    $region175: #{tpu_custom_call.1} parent=1 // pred_check_branch
      %246 = sbr.rel (0) target = $region177
    $region176: #{tpu_custom_call.1} parent=1 // pred_region
      _
    $region177: #{tpu_custom_call.1} parent=1 // pred_fallthru
      _
    // Predicated region
    $region178: #{tpu_custom_call.1} parent=1 // pred_check
      _
    $region179: #{tpu_custom_call.1} parent=1 // pred_check_branch
      %248 = sbr.rel (0) target = $region181
    $region180: #{tpu_custom_call.1} parent=1 // pred_region
      _
    $region181: #{tpu_custom_call.1} parent=1 // pred_fallthru
      _
    // Predicated region
    $region182: #{tpu_custom_call.1} parent=1 // pred_check
      _
    $region183: #{tpu_custom_call.1} parent=1 // pred_check_branch
      %250 = sbr.rel (0) target = $region185
    $region184: #{tpu_custom_call.1} parent=1 // pred_region
      _
    $region185: #{tpu_custom_call.1} parent=1 // pred_fallthru
      _
    // Predicated region
    $region186: #{tpu_custom_call.1} parent=1 // pred_check
      _
    $region187: #{tpu_custom_call.1} parent=1 // pred_check_branch
      %252 = sbr.rel (0) target = $region189
    $region188: #{tpu_custom_call.1} parent=1 // pred_region
      _
    $region189: #{tpu_custom_call.1} parent=1 // pred_fallthru
      _
    // Predicated region
    $region190: #{tpu_custom_call.1} parent=1 // pred_check
      _
    $region191: #{tpu_custom_call.1} parent=1 // pred_check_branch
      %254 = sbr.rel (0) target = $region193
    $region192: #{tpu_custom_call.1} parent=1 // pred_region
      _
    $region193: #{tpu_custom_call.1} parent=1 // pred_fallthru
      _
    // Predicated region
    $region194: #{tpu_custom_call.1} parent=1 // pred_check
      _
    $region195: #{tpu_custom_call.1} parent=1 // pred_check_branch
      %256 = sbr.rel (0) target = $region197
    $region196: #{tpu_custom_call.1} parent=1 // pred_region
      _
    $region197: #{tpu_custom_call.1} parent=1 // pred_fallthru
      _
    // Predicated region
    $region198: #{tpu_custom_call.1} parent=1 // pred_check
      _
    $region199: #{tpu_custom_call.1} parent=1 // pred_check_branch
      %258 = sbr.rel (0) target = $region201
    $region200: #{tpu_custom_call.1} parent=1 // pred_region
      %s260 = ssub.s32 16, 16
      %261 = vsyncadd [#allocation9], %s260
      %s263 = sshll.u32 [#allocation10], 4
      %s264 = int_to_ptr.vmem [resolvable:$true] %s263
      %266 = dma.hbm_to_vmem [thread:$0]  %s99, 16, %s264, [#allocation9]
    $region201: #{tpu_custom_call.1} parent=1 // pred_fallthru
      _
    // Predicated region
    $region202: #{tpu_custom_call.1} parent=1 // pred_check
      _
    $region203: #{tpu_custom_call.1} parent=1 // pred_check_branch
      %268 = sbr.rel (0) target = $region205
    $region204: #{tpu_custom_call.1} parent=1 // pred_region
      _
    $region205: #{tpu_custom_call.1} parent=1 // pred_fallthru
      _
    // Predicated region
    $region206: #{tpu_custom_call.1} parent=1 // pred_check
      _
    $region207: #{tpu_custom_call.1} parent=1 // pred_check_branch
      %270 = sbr.rel (0) target = $region209
    $region208: #{tpu_custom_call.1} parent=1 // pred_region
      %s272 = ssub.s32 16, 16
      %273 = vsyncadd [#allocation12], %s272
      %s275 = sshll.u32 [#allocation11], 4
      %s276 = int_to_ptr.vmem [resolvable:$true] %s275
      %278 = dma.hbm_to_vmem [thread:$0]  %s103, 16, %s276, [#allocation12]
    $region209: #{tpu_custom_call.1} parent=1 // pred_fallthru
      _
    // Predicated region
    $region210: #{tpu_custom_call.1} parent=1 // pred_check
      _
    $region211: #{tpu_custom_call.1} parent=1 // pred_check_branch
      %280 = sbr.rel (0) target = $region213
    $region212: #{tpu_custom_call.1} parent=1 // pred_region
      _
    $region213: #{tpu_custom_call.1} parent=1 // pred_fallthru
      _
    // Predicated region
    $region214: #{tpu_custom_call.1} parent=1 // pred_check
      _
    $region215: #{tpu_custom_call.1} parent=1 // pred_check_branch
      %282 = sbr.rel (0) target = $region217
    $region216: #{tpu_custom_call.1} parent=1 // pred_region
      _
    $region217: #{tpu_custom_call.1} parent=1 // pred_fallthru
      _
    // Predicated region
    $region218: #{tpu_custom_call.1} parent=1 // pred_check
      _
    $region219: #{tpu_custom_call.1} parent=1 // pred_check_branch
      %284 = sbr.rel (0) target = $region221
    $region220: #{tpu_custom_call.1} parent=1 // pred_region
      _
    $region221: #{tpu_custom_call.1} parent=1 // pred_fallthru
      _
    // Predicated region
    $region222: #{tpu_custom_call.1} parent=1 // pred_check
      _
    $region223: #{tpu_custom_call.1} parent=1 // pred_check_branch
      %286 = sbr.rel (0) target = $region225
    $region224: #{tpu_custom_call.1} parent=1 // pred_region
      %287 = dma.done [#allocation3], 16
    $region225: #{tpu_custom_call.1} parent=1 // pred_fallthru
      _
    // Predicated region
    $region226: #{tpu_custom_call.1} parent=1 // pred_check
      _
    $region227: #{tpu_custom_call.1} parent=1 // pred_check_branch
      %289 = sbr.rel (0) target = $region229
    $region228: #{tpu_custom_call.1} parent=1 // pred_region
      %290 = dma.done [#allocation6], 16
    $region229: #{tpu_custom_call.1} parent=1 // pred_fallthru
      _
    // Predicated region
    $region230: #{tpu_custom_call.1} parent=1 // pred_check
      _
    $region231: #{tpu_custom_call.1} parent=1 // pred_check_branch
      %292 = sbr.rel (0) target = $region233
    $region232: #{tpu_custom_call.1} parent=1 // pred_region
      %293 = dma.done [#allocation6], 16
    $region233: #{tpu_custom_call.1} parent=1 // pred_fallthru
      _
    // Predicated region
    $region234: #{tpu_custom_call.1} parent=1 // pred_check
      _
    $region235: #{tpu_custom_call.1} parent=1 // pred_check_branch
      %295 = sbr.rel (0) target = $region237
    $region236: #{tpu_custom_call.1} parent=1 // pred_region
      %296 = dma.done [#allocation9], 16
    $region237: #{tpu_custom_call.1} parent=1 // pred_fallthru
      _
    // Predicated region
    $region238: #{tpu_custom_call.1} parent=1 // pred_check
      _
    $region239: #{tpu_custom_call.1} parent=1 // pred_check_branch
      %298 = sbr.rel (0) target = $region241
    $region240: #{tpu_custom_call.1} parent=1 // pred_region
      %299 = dma.done [#allocation9], 16
    $region241: #{tpu_custom_call.1} parent=1 // pred_fallthru
      _
    // Predicated region
    $region242: #{tpu_custom_call.1} parent=1 // pred_check
      _
    $region243: #{tpu_custom_call.1} parent=1 // pred_check_branch
      %301 = sbr.rel (0) target = $region245
    $region244: #{tpu_custom_call.1} parent=1 // pred_region
      %302 = dma.done [#allocation12], 16
    $region245: #{tpu_custom_call.1} parent=1 // pred_fallthru
      _
    %v304 = vld [vmem:[%s5] sm:$0xf]
    %v305 = vld [vmem:[%s7] sm:$0x1]
    %v306 = vld [vmem:[%s9] sm:$0xf]
    %v307 = vld [vmem:[%s11] sm:$0xf]
    %v308 = vld [vmem:[%s13] sm:$0x1]
    %v309 = vld [vmem:[%s15] sm:$0xf]
    %v310 = vld [vmem:[%s15 + $0x4] sm:$0xf]
    %v311 = vld [vmem:[%s15 + $0x8] sm:$0xf]
    %v312 = vld [vmem:[%s15 + $0xc] sm:$0xf]
    %v313 = vld [vmem:[%s17] sm:$0x1]
    %v314 = vld [vmem:[%s19] sm:$0xf]
    %v315 = vld [vmem:[%s19 + $0x4] sm:$0xf]
    %v316 = vld [vmem:[%s19 + $0x8] sm:$0xf]
    %v317 = vld [vmem:[%s19 + $0xc] sm:$0xf]
    %v318 = vld [vmem:[%s19 + $0x10] sm:$0xf]
    %v319 = vld [vmem:[%s19 + $0x14] sm:$0xf]
    %v320 = vld [vmem:[%s19 + $0x18] sm:$0xf]
    %v321 = vld [vmem:[%s19 + $0x1c] sm:$0xf]
    %v322 = vld [vmem:[%s19 + $0x20] sm:$0xf]
    %v323 = vld [vmem:[%s19 + $0x24] sm:$0xf]
    %v324 = vld [vmem:[%s19 + $0x28] sm:$0xf]
    %v325 = vld [vmem:[%s19 + $0x2c] sm:$0xf]
    %v326 = vld [vmem:[%s19 + $0x30] sm:$0xf]
    %v327 = vld [vmem:[%s19 + $0x34] sm:$0xf]
    %v328 = vld [vmem:[%s19 + $0x38] sm:$0xf]
    %v329 = vld [vmem:[%s19 + $0x3c] sm:$0xf]
    %v330 = vld [vmem:[%s21] sm:$0x3f]
    %v331 = vld [vmem:[%s23] sm:$0x3f]
    %v332 = vld [vmem:[%s25] sm:$0xf]
    %v333 = vld [vmem:[%s25 + $0x4] sm:$0xf]
    %v334 = vld [vmem:[%s25 + $0x8] sm:$0xf]
    %v335 = vld [vmem:[%s25 + $0xc] sm:$0xf]
    %v336 = vld [vmem:[%s25 + $0x10] sm:$0xf]
    %v337 = vld [vmem:[%s25 + $0x14] sm:$0xf]
    %v338 = vld [vmem:[%s25 + $0x18] sm:$0xf]
    %v339 = vld [vmem:[%s25 + $0x1c] sm:$0xf]
    %v340 = vld [vmem:[%s25 + $0x20] sm:$0xf]
    %v341 = vld [vmem:[%s25 + $0x24] sm:$0xf]
    %v342 = vld [vmem:[%s25 + $0x28] sm:$0xf]
    %v343 = vld [vmem:[%s25 + $0x2c] sm:$0xf]
    %v344 = vld [vmem:[%s25 + $0x30] sm:$0xf]
    %v345 = vld [vmem:[%s25 + $0x34] sm:$0xf]
    %v346 = vld [vmem:[%s25 + $0x38] sm:$0xf]
    %v347 = vld [vmem:[%s25 + $0x3c] sm:$0xf]
    %v348 = vld [vmem:[%s27] sm:$0xf]
    %v349 = vld [vmem:[%s27 + $0x4] sm:$0xf]
    %v350 = vld [vmem:[%s27 + $0x8] sm:$0xf]
    %v351 = vld [vmem:[%s27 + $0xc] sm:$0xf]
    %v352 = vld [vmem:[%s29] sm:$0xf]
    %v353 = vld [vmem:[%s29 + $0x4] sm:$0xf]
    %v354 = vld [vmem:[%s29 + $0x8] sm:$0xf]
    %v355 = vld [vmem:[%s29 + $0xc] sm:$0xf]
    %v356 = vld [vmem:[%s29 + $0x10] sm:$0xf]
    %v357 = vld [vmem:[%s29 + $0x14] sm:$0xf]
    %v358 = vld [vmem:[%s29 + $0x18] sm:$0xf]
    %v359 = vld [vmem:[%s29 + $0x1c] sm:$0xf]
    %v360 = vld [vmem:[%s29 + $0x20] sm:$0xf]
    %v361 = vld [vmem:[%s29 + $0x24] sm:$0xf]
    %v362 = vld [vmem:[%s29 + $0x28] sm:$0xf]
    %v363 = vld [vmem:[%s29 + $0x2c] sm:$0xf]
    %v364 = vld [vmem:[%s29 + $0x30] sm:$0xf]
    %v365 = vld [vmem:[%s29 + $0x34] sm:$0xf]
    %v366 = vld [vmem:[%s29 + $0x38] sm:$0xf]
    %v367 = vld [vmem:[%s29 + $0x3c] sm:$0xf]
    %v368 = vld [vmem:[%s31] sm:$0xf]
    %v369 = vld [vmem:[%s31 + $0x4] sm:$0xf]
    %v370 = vld [vmem:[%s31 + $0x8] sm:$0xf]
    %v371 = vld [vmem:[%s31 + $0xc] sm:$0xf]
    %v372 = vld [vmem:[%s31 + $0x10] sm:$0xf]
    %v373 = vld [vmem:[%s31 + $0x14] sm:$0xf]
    %v374 = vld [vmem:[%s31 + $0x18] sm:$0xf]
    %v375 = vld [vmem:[%s31 + $0x1c] sm:$0xf]
    %v376 = vld [vmem:[%s31 + $0x20] sm:$0xf]
    %v377 = vld [vmem:[%s31 + $0x24] sm:$0xf]
    %v378 = vld [vmem:[%s31 + $0x28] sm:$0xf]
    %v379 = vld [vmem:[%s31 + $0x2c] sm:$0xf]
    %v380 = vld [vmem:[%s31 + $0x30] sm:$0xf]
    %v381 = vld [vmem:[%s31 + $0x34] sm:$0xf]
    %v382 = vld [vmem:[%s31 + $0x38] sm:$0xf]
    %v383 = vld [vmem:[%s31 + $0x3c] sm:$0xf]
    %v384 = vld [vmem:[%s33] sm:$0xf]
    %v385 = vld [vmem:[%s35] sm:$0x1]
    %v386 = vld [vmem:[%s37] sm:$0xf]
    %v387 = vld [vmem:[%s39] sm:$0xf]
    %v388 = vld [vmem:[%s41] sm:$0x1]
    %v389 = vld [vmem:[%s43] sm:$0xf]
    %v390 = vld [vmem:[%s43 + $0x4] sm:$0xf]
    %v391 = vld [vmem:[%s43 + $0x8] sm:$0xf]
    %v392 = vld [vmem:[%s43 + $0xc] sm:$0xf]
    %v393 = vld [vmem:[#allocation2] sm:$0x1]
    %v394 = vld [vmem:[%s47] sm:$0xf]
    %v395 = vld [vmem:[%s47 + $0x4] sm:$0xf]
    %v396 = vld [vmem:[%s47 + $0x8] sm:$0xf]
    %v397 = vld [vmem:[%s47 + $0xc] sm:$0xf]
    %v398 = vld [vmem:[%s47 + $0x10] sm:$0xf]
    %v399 = vld [vmem:[%s47 + $0x14] sm:$0xf]
    %v400 = vld [vmem:[%s47 + $0x18] sm:$0xf]
    %v401 = vld [vmem:[%s47 + $0x1c] sm:$0xf]
    %v402 = vld [vmem:[%s47 + $0x20] sm:$0xf]
    %v403 = vld [vmem:[%s47 + $0x24] sm:$0xf]
    %v404 = vld [vmem:[%s47 + $0x28] sm:$0xf]
    %v405 = vld [vmem:[%s47 + $0x2c] sm:$0xf]
    %v406 = vld [vmem:[%s47 + $0x30] sm:$0xf]
    %v407 = vld [vmem:[%s47 + $0x34] sm:$0xf]
    %v408 = vld [vmem:[%s47 + $0x38] sm:$0xf]
    %v409 = vld [vmem:[%s47 + $0x3c] sm:$0xf]
    %v410 = vld [vmem:[%s49] sm:$0x3f]
    %v411 = vld [vmem:[%s51] sm:$0x3f]
    %v412 = vld [vmem:[%s53] sm:$0xf]
    %v413 = vld [vmem:[%s53 + $0x4] sm:$0xf]
    %v414 = vld [vmem:[%s53 + $0x8] sm:$0xf]
    %v415 = vld [vmem:[%s53 + $0xc] sm:$0xf]
    %v416 = vld [vmem:[%s53 + $0x10] sm:$0xf]
    %v417 = vld [vmem:[%s53 + $0x14] sm:$0xf]
    %v418 = vld [vmem:[%s53 + $0x18] sm:$0xf]
    %v419 = vld [vmem:[%s53 + $0x1c] sm:$0xf]
    %v420 = vld [vmem:[%s53 + $0x20] sm:$0xf]
    %v421 = vld [vmem:[%s53 + $0x24] sm:$0xf]
    %v422 = vld [vmem:[%s53 + $0x28] sm:$0xf]
    %v423 = vld [vmem:[%s53 + $0x2c] sm:$0xf]
    %v424 = vld [vmem:[%s53 + $0x30] sm:$0xf]
    %v425 = vld [vmem:[%s53 + $0x34] sm:$0xf]
    %v426 = vld [vmem:[%s53 + $0x38] sm:$0xf]
    %v427 = vld [vmem:[%s53 + $0x3c] sm:$0xf]
    %v428 = vld [vmem:[%s55] sm:$0xf]
    %v429 = vld [vmem:[%s55 + $0x4] sm:$0xf]
    %v430 = vld [vmem:[%s55 + $0x8] sm:$0xf]
    %v431 = vld [vmem:[%s55 + $0xc] sm:$0xf]
    %v432 = vld [vmem:[%s57] sm:$0xf]
    %v433 = vld [vmem:[%s57 + $0x4] sm:$0xf]
    %v434 = vld [vmem:[%s57 + $0x8] sm:$0xf]
    %v435 = vld [vmem:[%s57 + $0xc] sm:$0xf]
    %v436 = vld [vmem:[%s57 + $0x10] sm:$0xf]
    %v437 = vld [vmem:[%s57 + $0x14] sm:$0xf]
    %v438 = vld [vmem:[%s57 + $0x18] sm:$0xf]
    %v439 = vld [vmem:[%s57 + $0x1c] sm:$0xf]
    %v440 = vld [vmem:[%s57 + $0x20] sm:$0xf]
    %v441 = vld [vmem:[%s57 + $0x24] sm:$0xf]
    %v442 = vld [vmem:[%s57 + $0x28] sm:$0xf]
    %v443 = vld [vmem:[%s57 + $0x2c] sm:$0xf]
    %v444 = vld [vmem:[%s57 + $0x30] sm:$0xf]
    %v445 = vld [vmem:[%s57 + $0x34] sm:$0xf]
    %v446 = vld [vmem:[%s57 + $0x38] sm:$0xf]
    %v447 = vld [vmem:[%s57 + $0x3c] sm:$0xf]
    %v448 = vld [vmem:[%s59] sm:$0xf]
    %v449 = vld [vmem:[%s59 + $0x4] sm:$0xf]
    %v450 = vld [vmem:[%s59 + $0x8] sm:$0xf]
    %v451 = vld [vmem:[%s59 + $0xc] sm:$0xf]
    %v452 = vld [vmem:[%s59 + $0x10] sm:$0xf]
    %v453 = vld [vmem:[%s59 + $0x14] sm:$0xf]
    %v454 = vld [vmem:[%s59 + $0x18] sm:$0xf]
    %v455 = vld [vmem:[%s59 + $0x1c] sm:$0xf]
    %v456 = vld [vmem:[%s59 + $0x20] sm:$0xf]
    %v457 = vld [vmem:[%s59 + $0x24] sm:$0xf]
    %v458 = vld [vmem:[%s59 + $0x28] sm:$0xf]
    %v459 = vld [vmem:[%s59 + $0x2c] sm:$0xf]
    %v460 = vld [vmem:[%s59 + $0x30] sm:$0xf]
    %v461 = vld [vmem:[%s59 + $0x34] sm:$0xf]
    %v462 = vld [vmem:[%s59 + $0x38] sm:$0xf]
    %v463 = vld [vmem:[%s59 + $0x3c] sm:$0xf]
    %v464 = vld [vmem:[%s61] sm:$0xf]
    %v465 = vld [vmem:[#allocation5] sm:$0x1]
    %v466 = vld [vmem:[%s65] sm:$0xf]
    %v467 = vld [vmem:[%s67] sm:$0xf]
    %v468 = vld [vmem:[#allocation7] sm:$0x1]
    %v469 = vld [vmem:[%s71] sm:$0xf]
    %v470 = vld [vmem:[%s71 + $0x4] sm:$0xf]
    %v471 = vld [vmem:[%s71 + $0x8] sm:$0xf]
    %v472 = vld [vmem:[%s71 + $0xc] sm:$0xf]
    %v473 = vld [vmem:[#allocation8] sm:$0x1]
    %v474 = vld [vmem:[%s75] sm:$0xf]
    %v475 = vld [vmem:[%s75 + $0x4] sm:$0xf]
    %v476 = vld [vmem:[%s75 + $0x8] sm:$0xf]
    %v477 = vld [vmem:[%s75 + $0xc] sm:$0xf]
    %v478 = vld [vmem:[%s75 + $0x10] sm:$0xf]
    %v479 = vld [vmem:[%s75 + $0x14] sm:$0xf]
    %v480 = vld [vmem:[%s75 + $0x18] sm:$0xf]
    %v481 = vld [vmem:[%s75 + $0x1c] sm:$0xf]
    %v482 = vld [vmem:[%s75 + $0x20] sm:$0xf]
    %v483 = vld [vmem:[%s75 + $0x24] sm:$0xf]
    %v484 = vld [vmem:[%s75 + $0x28] sm:$0xf]
    %v485 = vld [vmem:[%s75 + $0x2c] sm:$0xf]
    %v486 = vld [vmem:[%s75 + $0x30] sm:$0xf]
    %v487 = vld [vmem:[%s75 + $0x34] sm:$0xf]
    %v488 = vld [vmem:[%s75 + $0x38] sm:$0xf]
    %v489 = vld [vmem:[%s75 + $0x3c] sm:$0xf]
    %v490 = vld [vmem:[%s77] sm:$0x3f]
    %v491 = vld [vmem:[%s79] sm:$0x3f]
    %v492 = vld [vmem:[%s81] sm:$0xf]
    %v493 = vld [vmem:[%s81 + $0x4] sm:$0xf]
    %v494 = vld [vmem:[%s81 + $0x8] sm:$0xf]
    %v495 = vld [vmem:[%s81 + $0xc] sm:$0xf]
    %v496 = vld [vmem:[%s81 + $0x10] sm:$0xf]
    %v497 = vld [vmem:[%s81 + $0x14] sm:$0xf]
    %v498 = vld [vmem:[%s81 + $0x18] sm:$0xf]
    %v499 = vld [vmem:[%s81 + $0x1c] sm:$0xf]
    %v500 = vld [vmem:[%s81 + $0x20] sm:$0xf]
    %v501 = vld [vmem:[%s81 + $0x24] sm:$0xf]
    %v502 = vld [vmem:[%s81 + $0x28] sm:$0xf]
    %v503 = vld [vmem:[%s81 + $0x2c] sm:$0xf]
    %v504 = vld [vmem:[%s81 + $0x30] sm:$0xf]
    %v505 = vld [vmem:[%s81 + $0x34] sm:$0xf]
    %v506 = vld [vmem:[%s81 + $0x38] sm:$0xf]
    %v507 = vld [vmem:[%s81 + $0x3c] sm:$0xf]
    %v508 = vld [vmem:[%s83] sm:$0xf]
    %v509 = vld [vmem:[%s83 + $0x4] sm:$0xf]
    %v510 = vld [vmem:[%s83 + $0x8] sm:$0xf]
    %v511 = vld [vmem:[%s83 + $0xc] sm:$0xf]
    %v512 = vld [vmem:[%s85] sm:$0xf]
    %v513 = vld [vmem:[%s85 + $0x4] sm:$0xf]
    %v514 = vld [vmem:[%s85 + $0x8] sm:$0xf]
    %v515 = vld [vmem:[%s85 + $0xc] sm:$0xf]
    %v516 = vld [vmem:[%s85 + $0x10] sm:$0xf]
    %v517 = vld [vmem:[%s85 + $0x14] sm:$0xf]
    %v518 = vld [vmem:[%s85 + $0x18] sm:$0xf]
    %v519 = vld [vmem:[%s85 + $0x1c] sm:$0xf]
    %v520 = vld [vmem:[%s85 + $0x20] sm:$0xf]
    %v521 = vld [vmem:[%s85 + $0x24] sm:$0xf]
    %v522 = vld [vmem:[%s85 + $0x28] sm:$0xf]
    %v523 = vld [vmem:[%s85 + $0x2c] sm:$0xf]
    %v524 = vld [vmem:[%s85 + $0x30] sm:$0xf]
    %v525 = vld [vmem:[%s85 + $0x34] sm:$0xf]
    %v526 = vld [vmem:[%s85 + $0x38] sm:$0xf]
    %v527 = vld [vmem:[%s85 + $0x3c] sm:$0xf]
    %v528 = vld [vmem:[%s87] sm:$0xf]
    %v529 = vld [vmem:[%s87 + $0x4] sm:$0xf]
    %v530 = vld [vmem:[%s87 + $0x8] sm:$0xf]
    %v531 = vld [vmem:[%s87 + $0xc] sm:$0xf]
    %v532 = vld [vmem:[%s87 + $0x10] sm:$0xf]
    %v533 = vld [vmem:[%s87 + $0x14] sm:$0xf]
    %v534 = vld [vmem:[%s87 + $0x18] sm:$0xf]
    %v535 = vld [vmem:[%s87 + $0x1c] sm:$0xf]
    %v536 = vld [vmem:[%s87 + $0x20] sm:$0xf]
    %v537 = vld [vmem:[%s87 + $0x24] sm:$0xf]
    %v538 = vld [vmem:[%s87 + $0x28] sm:$0xf]
    %v539 = vld [vmem:[%s87 + $0x2c] sm:$0xf]
    %v540 = vld [vmem:[%s87 + $0x30] sm:$0xf]
    %v541 = vld [vmem:[%s87 + $0x34] sm:$0xf]
    %v542 = vld [vmem:[%s87 + $0x38] sm:$0xf]
    %v543 = vld [vmem:[%s87 + $0x3c] sm:$0xf]
    %v544 = vld [vmem:[%s89] sm:$0x7]
    %v545 = vld [vmem:[%s91] sm:$0x7]
    %v546 = vld [vmem:[%s93] sm:$0xff]
    %v547 = vld [vmem:[%s95] sm:$0xff]
    %v548 = vld [vmem:[%s95 + $0x8] sm:$0xff]
    %v549 = vld [vmem:[%s97] sm:$0xff]
    %v550 = vld [vmem:[#allocation10] sm:$0x1]
    %v551 = vld [vmem:[%s101] sm:$0xf]
    %v552 = vld [vmem:[%s101 + $0x4] sm:$0xf]
    %v553 = vld [vmem:[%s101 + $0x8] sm:$0xf]
    %v554 = vld [vmem:[%s101 + $0xc] sm:$0xf]
    %v555 = vld [vmem:[%s101 + $0x10] sm:$0xf]
    %v556 = vld [vmem:[%s101 + $0x14] sm:$0xf]
    %v557 = vld [vmem:[%s101 + $0x18] sm:$0xf]
    %v558 = vld [vmem:[%s101 + $0x1c] sm:$0xf]
    %v559 = vld [vmem:[#allocation11] sm:$0x1]
    %v560 = vld [vmem:[%s105] sm:$0xf]
    %v561 = vld [vmem:[%s105 + $0x4] sm:$0xf]
    %v562 = vld [vmem:[%s105 + $0x8] sm:$0xf]
    %v563 = vld [vmem:[%s105 + $0xc] sm:$0xf]
    %v564 = vld [vmem:[%s105 + $0x10] sm:$0xf]
    %v565 = vld [vmem:[%s105 + $0x14] sm:$0xf]
    %v566 = vld [vmem:[%s105 + $0x18] sm:$0xf]
    %v567 = vld [vmem:[%s105 + $0x1c] sm:$0xf]
    %v568 = vld [vmem:[%s105 + $0x20] sm:$0xf]
    %v569 = vld [vmem:[%s105 + $0x24] sm:$0xf]
    %v570 = vld [vmem:[%s105 + $0x28] sm:$0xf]
    %v571 = vld [vmem:[%s105 + $0x2c] sm:$0xf]
    %v572 = vld [vmem:[%s105 + $0x30] sm:$0xf]
    %v573 = vld [vmem:[%s105 + $0x34] sm:$0xf]
    %v574 = vld [vmem:[%s105 + $0x38] sm:$0xf]
    %v575 = vld [vmem:[%s105 + $0x3c] sm:$0xf]
    %v576 = vld [vmem:[%s105 + $0x40] sm:$0xf]
    %v577 = vld [vmem:[%s105 + $0x44] sm:$0xf]
    %v578 = vld [vmem:[%s105 + $0x48] sm:$0xf]
    %v579 = vld [vmem:[%s105 + $0x4c] sm:$0xf]
    %v580 = vld [vmem:[%s105 + $0x50] sm:$0xf]
    %v581 = vld [vmem:[%s105 + $0x54] sm:$0xf]
    %v582 = vld [vmem:[%s105 + $0x58] sm:$0xf]
    %v583 = vld [vmem:[%s105 + $0x5c] sm:$0xf]
    %v584 = vld [vmem:[%s107] sm:$0xf]
    %v585 = vld [vmem:[%s109] sm:$0xf]
    %v586 = vld [vmem:[%s1] sm:$0xff]
    %v587 = vpack.c.bf16 %v586, %v586
    %v589 = vlaneseq
    %v590 = vshrl.u32 %v589, 7
    %v591 = vsub.s32 0, %v590
    %v592 = vrot.slane %v550, %v591
    %v602 = vunpack.c.l.b16 %v551
    %v603 = vunpack.c.l.b16 %v552
    %v604 = vunpack.c.l.b16 %v553
    %v605 = vunpack.c.l.b16 %v554
    %v606 = vunpack.c.l.b16 %v555
    %v607 = vunpack.c.l.b16 %v556
    %v608 = vunpack.c.l.b16 %v557
    %v609 = vunpack.c.l.b16 %v558
    %v610 = vpack.c.b16 %v603, %v602
    %v611 = vpack.c.b16 %v605, %v604
    %v612 = vpack.c.b16 %v607, %v606
    %v613 = vpack.c.b16 %v609, %v608
    %vm618 = vcmask 523264
    %v620 = vsel %vm618, %v587, 0
    %622 = vmatprep.subr.bf16.mxu0 0
    %623 = vmatpush1.bf16.msra.mxu0 0
    %624 = vmatprep.subr.bf16.mxu0 0
    %625 = vmatpush1.bf16.msra.mxu0 0
    %626 = vmatprep.subr.bf16.mxu0 0
    %627 = vmatpush1.bf16.msra.mxu0 0
    %628 = vmatprep.subr.bf16.mxu0 0
    %629 = vmatpush1.bf16.msra.mxu0 0
    %630 = vmatprep.subr.bf16.mxu0 0
    %631 = vmatpush1.bf16.msra.mxu0 %v613
    %632 = vmatprep.subr.bf16.mxu0 0
    %633 = vmatpush1.bf16.msra.mxu0 %v612
    %634 = vmatprep.subr.bf16.mxu0 0
    %635 = vmatpush1.bf16.msra.mxu0 %v611
    %636 = vmatprep.subr.bf16.mxu0 0
    %637 = vmatpush1.bf16.msra.mxu0 %v610
    %638 = vmatprep.subr.bf16.mxu0 0
    %639 = vmatpush2.bf16.msra.mxu0 0
    %640 = vmatprep.subr.bf16.mxu0 0
    %641 = vmatpush2.bf16.msra.mxu0 0
    %642 = vmatprep.subr.bf16.mxu0 0
    %643 = vmatpush2.bf16.msra.mxu0 0
    %644 = vmatprep.subr.bf16.mxu0 0
    %645 = vmatpush2.bf16.msra.mxu0 0
    %646 = vmatprep.subr.bf16.mxu0 0
    %647 = vmatpush2.bf16.msra.mxu0 0
    %648 = vmatprep.subr.bf16.mxu0 0
    %649 = vmatpush2.bf16.msra.mxu0 0
    %650 = vmatprep.subr.bf16.mxu0 0
    %651 = vmatpush2.bf16.msra.mxu0 0
    %652 = vmatprep.subr.bf16.mxu0 0
    %653 = vmatpush2.bf16.msra.mxu0 0
    %654 = vmatprep.mubr.bf16.mxu0 0
    %655 = vmatmul.mubr.bf16.gmra.mxu0 %v620
    %v656 = vpop.f32.mrf.mxu0
    %v657 = vadd.f32 %v592, %v656
    %v658 = vpop.f32.mrf.mxu0
    %v659 = vpop.f32.mrf.mxu0
    %v660 = vpop.f32.mrf.mxu0
    %661 = vdwg.mxu0
    %v663 = vrot.slane %v584, 4
    %vm665 = vcmask 1043456
    %v666 = vsel %vm665, %v584, %v663
    %v667 = vadd.f32 %v657, %v666
    %v668 = vld [vmem:[%s3] sm:$0xff]
    %v669 = vld [vmem:[%s3 + $0x8] sm:$0xff]
    %v670 = vpack.c.bf16 %v668, %v668
    %v671 = vpack.c.bf16 %v669, %v669
    %v673 = vlaneseq
    %v674 = vshrl.u32 %v673, 7
    %v675 = vsub.s32 0, %v674
    %v676 = vrot.slane %v559, %v675
    %v702 = vunpack.c.l.b16 %v560
    %v703 = vunpack.c.l.b16 %v561
    %v704 = vunpack.c.l.b16 %v562
    %v705 = vunpack.c.l.b16 %v563
    %v706 = vunpack.c.l.b16 %v564
    %v707 = vunpack.c.l.b16 %v565
    %v708 = vunpack.c.l.b16 %v566
    %v709 = vunpack.c.l.b16 %v567
    %v710 = vunpack.c.l.b16 %v568
    %v711 = vunpack.c.l.b16 %v569
    %v712 = vunpack.c.l.b16 %v570
    %v713 = vunpack.c.l.b16 %v571
    %v714 = vunpack.c.l.b16 %v572
    %v715 = vunpack.c.l.b16 %v573
    %v716 = vunpack.c.l.b16 %v574
    %v717 = vunpack.c.l.b16 %v575
    %v718 = vunpack.c.l.b16 %v576
    %v719 = vunpack.c.l.b16 %v577
    %v720 = vunpack.c.l.b16 %v578
    %v721 = vunpack.c.l.b16 %v579
    %v722 = vunpack.c.l.b16 %v580
    %v723 = vunpack.c.l.b16 %v581
    %v724 = vunpack.c.l.b16 %v582
    %v725 = vunpack.c.l.b16 %v583
    %v726 = vpack.c.b16 %v703, %v702
    %v727 = vpack.c.b16 %v705, %v704
    %v728 = vpack.c.b16 %v707, %v706
    %v729 = vpack.c.b16 %v709, %v708
    %v730 = vpack.c.b16 %v711, %v710
    %v731 = vpack.c.b16 %v713, %v712
    %v732 = vpack.c.b16 %v715, %v714
    %v733 = vpack.c.b16 %v717, %v716
    %v734 = vpack.c.b16 %v719, %v718
    %v735 = vpack.c.b16 %v721, %v720
    %v736 = vpack.c.b16 %v723, %v722
    %v737 = vpack.c.b16 %v725, %v724
    %v751 = vsel %vm618, %v671, 0
    %753 = vmatprep.subr.bf16.mxu0 0
    %754 = vmatpush1.bf16.msra.mxu0 %v733
    %755 = vmatprep.subr.bf16.mxu0 0
    %756 = vmatpush1.bf16.msra.mxu0 %v732
    %757 = vmatprep.subr.bf16.mxu0 0
    %758 = vmatpush1.bf16.msra.mxu0 %v731
    %759 = vmatprep.subr.bf16.mxu0 0
    %760 = vmatpush1.bf16.msra.mxu0 %v730
    %761 = vmatprep.subr.bf16.mxu0 0
    %762 = vmatpush1.bf16.msra.mxu0 %v729
    %763 = vmatprep.subr.bf16.mxu0 0
    %764 = vmatpush1.bf16.msra.mxu0 %v728
    %765 = vmatprep.subr.bf16.mxu0 0
    %766 = vmatpush1.bf16.msra.mxu0 %v727
    %767 = vmatprep.subr.bf16.mxu0 0
    %768 = vmatpush1.bf16.msra.mxu0 %v726
    %769 = vmatprep.subr.bf16.mxu0 0
    %770 = vmatpush2.bf16.msra.mxu0 0
    %771 = vmatprep.subr.bf16.mxu0 0
    %772 = vmatpush2.bf16.msra.mxu0 0
    %773 = vmatprep.subr.bf16.mxu0 0
    %774 = vmatpush2.bf16.msra.mxu0 0
    %775 = vmatprep.subr.bf16.mxu0 0
    %776 = vmatpush2.bf16.msra.mxu0 0
    %777 = vmatprep.subr.bf16.mxu0 0
    %778 = vmatpush2.bf16.msra.mxu0 %v737
    %779 = vmatprep.subr.bf16.mxu0 0
    %780 = vmatpush2.bf16.msra.mxu0 %v736
    %781 = vmatprep.subr.bf16.mxu0 0
    %782 = vmatpush2.bf16.msra.mxu0 %v735
    %783 = vmatprep.subr.bf16.mxu0 0
    %784 = vmatpush2.bf16.msra.mxu0 %v734
    %785 = vmatprep.mubr.bf16.mxu0 %v751
    %786 = vmatmul.mubr.bf16.gmra.mxu0 %v670
    %v787 = vpop.f32.mrf.mxu0
    %v788 = vadd.f32 %v676, %v787
    %v789 = vpop.f32.mrf.mxu0
    %v790 = vpop.f32.mrf.mxu0
    %v791 = vpop.f32.mrf.mxu0
    %792 = vdwg.mxu0
    %v794 = vrot.slane %v585, 4
    %v796 = vsel %vm665, %v585, %v794
    %v797 = vadd.f32 %v788, %v796
    %vm798 = vcmask 261120
    %v799 = vsel %vm798, %v667, 0.0
    %800 = vadd.xlane.f32.xlu0 %v799
    %v801 = vpop.xlane.xlu0 %800
    %v802 = vrcp.pop 32.0
    %v803 = vmul.f32 %v801, %v802
    %v804 = vsub.f32 %v667, %v803
    %v805 = vmul.f32 %v804, %v804
    %v806 = vsel %vm798, %v805, 0.0
    %807 = vadd.xlane.f32.xlu0 %v806
    %v808 = vpop.xlane.xlu0 %807
    %v809 = vmul.f32 %v808, %v802
    %v810 = vadd.f32 %v809, 1e-05
    %v811 = vrsqrt.pop %v810
    %v812 = vmul.f32 %v804, %v811
    %v813 = vlaneseq
    %v814 = vshrl.u32 %v813, 7
    %v815 = vsub.s32 0, %v814
    %v816 = vrot.slane %v331, %v815
    %v817 = vmul.f32 %v812, %v816
    %v818 = vlaneseq
    %v819 = vshrl.u32 %v818, 7
    %v820 = vsub.s32 0, %v819
    %v821 = vrot.slane %v330, %v820
    %v822 = vadd.f32 %v817, %v821
    %v823 = vpack.c.bf16 %v822, %v822
    %v824 = vlaneseq
    %v825 = vshrl.u32 %v824, 7
    %v826 = vsub.s32 0, %v825
    %v827 = vrot.slane %v306, %v826
    %v832 = vunpack.c.l.b16 %v352
    %v833 = vunpack.c.l.b16 %v353
    %v834 = vunpack.c.l.b16 %v354
    %v835 = vunpack.c.l.b16 %v355
    %v836 = vpack.c.b16 %v833, %v832
    %v837 = vpack.c.b16 %v835, %v834
    %v841 = vsel %vm798, %v823, 0
    %843 = vmatprep.subr.bf16.mxu0 0
    %844 = vmatpush1.bf16.msra.mxu0 0
    %845 = vmatprep.subr.bf16.mxu0 0
    %846 = vmatpush1.bf16.msra.mxu0 0
    %847 = vmatprep.subr.bf16.mxu0 0
    %848 = vmatpush1.bf16.msra.mxu0 0
    %849 = vmatprep.subr.bf16.mxu0 0
    %850 = vmatpush1.bf16.msra.mxu0 0
    %851 = vmatprep.subr.bf16.mxu0 0
    %852 = vmatpush1.bf16.msra.mxu0 0
    %853 = vmatprep.subr.bf16.mxu0 0
    %854 = vmatpush1.bf16.msra.mxu0 0
    %855 = vmatprep.subr.bf16.mxu0 0
    %856 = vmatpush1.bf16.msra.mxu0 %v837
    %857 = vmatprep.subr.bf16.mxu0 0
    %858 = vmatpush1.bf16.msra.mxu0 %v836
    %859 = vmatprep.subr.bf16.mxu0 0
    %860 = vmatpush2.bf16.msra.mxu0 0
    %861 = vmatprep.subr.bf16.mxu0 0
    %862 = vmatpush2.bf16.msra.mxu0 0
    %863 = vmatprep.subr.bf16.mxu0 0
    %864 = vmatpush2.bf16.msra.mxu0 0
    %865 = vmatprep.subr.bf16.mxu0 0
    %866 = vmatpush2.bf16.msra.mxu0 0
    %867 = vmatprep.subr.bf16.mxu0 0
    %868 = vmatpush2.bf16.msra.mxu0 0
    %869 = vmatprep.subr.bf16.mxu0 0
    %870 = vmatpush2.bf16.msra.mxu0 0
    %871 = vmatprep.subr.bf16.mxu0 0
    %872 = vmatpush2.bf16.msra.mxu0 0
    %873 = vmatprep.subr.bf16.mxu0 0
    %874 = vmatpush2.bf16.msra.mxu0 0
    %875 = vmatprep.mubr.bf16.mxu0 0
    %876 = vmatmul.mubr.bf16.gmra.mxu0 %v841
    %v877 = vpop.f32.mrf.mxu0
    %v878 = vadd.f32 %v827, %v877
    %v879 = vpop.f32.mrf.mxu0
    %v880 = vpop.f32.mrf.mxu0
    %v881 = vpop.f32.mrf.mxu0
    %882 = vdwg.mxu0
    %v883 = vlaneseq
    %v884 = vshrl.u32 %v883, 7
    %v885 = vsub.s32 0, %v884
    %v886 = vrot.slane %v304, %v885
    %v891 = vunpack.c.l.b16 %v332
    %v892 = vunpack.c.l.b16 %v333
    %v893 = vunpack.c.l.b16 %v334
    %v894 = vunpack.c.l.b16 %v335
    %v895 = vpack.c.b16 %v892, %v891
    %v896 = vpack.c.b16 %v894, %v893
    %899 = vmatprep.subr.bf16.mxu0 0
    %900 = vmatpush1.bf16.msra.mxu0 0
    %901 = vmatprep.subr.bf16.mxu0 0
    %902 = vmatpush1.bf16.msra.mxu0 0
    %903 = vmatprep.subr.bf16.mxu0 0
    %904 = vmatpush1.bf16.msra.mxu0 0
    %905 = vmatprep.subr.bf16.mxu0 0
    %906 = vmatpush1.bf16.msra.mxu0 0
    %907 = vmatprep.subr.bf16.mxu0 0
    %908 = vmatpush1.bf16.msra.mxu0 0
    %909 = vmatprep.subr.bf16.mxu0 0
    %910 = vmatpush1.bf16.msra.mxu0 0
    %911 = vmatprep.subr.bf16.mxu0 0
    %912 = vmatpush1.bf16.msra.mxu0 %v896
    %913 = vmatprep.subr.bf16.mxu0 0
    %914 = vmatpush1.bf16.msra.mxu0 %v895
    %915 = vmatprep.subr.bf16.mxu0 0
    %916 = vmatpush2.bf16.msra.mxu0 0
    %917 = vmatprep.subr.bf16.mxu0 0
    %918 = vmatpush2.bf16.msra.mxu0 0
    %919 = vmatprep.subr.bf16.mxu0 0
    %920 = vmatpush2.bf16.msra.mxu0 0
    %921 = vmatprep.subr.bf16.mxu0 0
    %922 = vmatpush2.bf16.msra.mxu0 0
    %923 = vmatprep.subr.bf16.mxu0 0
    %924 = vmatpush2.bf16.msra.mxu0 0
    %925 = vmatprep.subr.bf16.mxu0 0
    %926 = vmatpush2.bf16.msra.mxu0 0
    %927 = vmatprep.subr.bf16.mxu0 0
    %928 = vmatpush2.bf16.msra.mxu0 0
    %929 = vmatprep.subr.bf16.mxu0 0
    %930 = vmatpush2.bf16.msra.mxu0 0
    %931 = vmatprep.mubr.bf16.mxu0 0
    %932 = vmatmul.mubr.bf16.gmra.mxu0 %v841
    %v933 = vpop.f32.mrf.mxu0
    %v934 = vadd.f32 %v886, %v933
    %v935 = vpop.f32.mrf.mxu0
    %v936 = vpop.f32.mrf.mxu0
    %v937 = vpop.f32.mrf.mxu0
    %938 = vdwg.mxu0
    %v939 = vlaneseq
    %v940 = vshrl.u32 %v939, 7
    %v941 = vsub.s32 0, %v940
    %v942 = vrot.slane %v307, %v941
    %v947 = vunpack.c.l.b16 %v368
    %v948 = vunpack.c.l.b16 %v369
    %v949 = vunpack.c.l.b16 %v370
    %v950 = vunpack.c.l.b16 %v371
    %v951 = vpack.c.b16 %v948, %v947
    %v952 = vpack.c.b16 %v950, %v949
    %955 = vmatprep.subr.bf16.mxu0 0
    %956 = vmatpush1.bf16.msra.mxu0 0
    %957 = vmatprep.subr.bf16.mxu0 0
    %958 = vmatpush1.bf16.msra.mxu0 0
    %959 = vmatprep.subr.bf16.mxu0 0
    %960 = vmatpush1.bf16.msra.mxu0 0
    %961 = vmatprep.subr.bf16.mxu0 0
    %962 = vmatpush1.bf16.msra.mxu0 0
    %963 = vmatprep.subr.bf16.mxu0 0
    %964 = vmatpush1.bf16.msra.mxu0 0
    %965 = vmatprep.subr.bf16.mxu0 0
    %966 = vmatpush1.bf16.msra.mxu0 0
    %967 = vmatprep.subr.bf16.mxu0 0
    %968 = vmatpush1.bf16.msra.mxu0 %v952
    %969 = vmatprep.subr.bf16.mxu0 0
    %970 = vmatpush1.bf16.msra.mxu0 %v951
    %971 = vmatprep.subr.bf16.mxu0 0
    %972 = vmatpush2.bf16.msra.mxu0 0
    %973 = vmatprep.subr.bf16.mxu0 0
    %974 = vmatpush2.bf16.msra.mxu0 0
    %975 = vmatprep.subr.bf16.mxu0 0
    %976 = vmatpush2.bf16.msra.mxu0 0
    %977 = vmatprep.subr.bf16.mxu0 0
    %978 = vmatpush2.bf16.msra.mxu0 0
    %979 = vmatprep.subr.bf16.mxu0 0
    %980 = vmatpush2.bf16.msra.mxu0 0
    %981 = vmatprep.subr.bf16.mxu0 0
    %982 = vmatpush2.bf16.msra.mxu0 0
    %983 = vmatprep.subr.bf16.mxu0 0
    %984 = vmatpush2.bf16.msra.mxu0 0
    %985 = vmatprep.subr.bf16.mxu0 0
    %986 = vmatpush2.bf16.msra.mxu0 0
    %987 = vmatprep.mubr.bf16.mxu0 0
    %988 = vmatmul.mubr.bf16.gmra.mxu0 %v841
    %v989 = vpop.f32.mrf.mxu0
    %v990 = vadd.f32 %v942, %v989
    %v991 = vpop.f32.mrf.mxu0
    %v992 = vpop.f32.mrf.mxu0
    %v993 = vpop.f32.mrf.mxu0
    %994 = vdwg.mxu0
    %v995 = vpack.c.bf16 %v878, %v878
    %v996 = vpack.c.bf16 %v934, %v934
    %vm997 = vcmask 64512
    %v999 = vsel %vm997, %v995, 0
    %v1002 = vsel %vm997, %v996, 0
    %1004 = vmatprep.subr.bf16.mxu0 0
    %1005 = vmatpush1.bf16.xpose.msra.mxu0 0
    %1006 = vmatprep.subr.bf16.mxu0 0
    %1007 = vmatpush1.bf16.xpose.msra.mxu0 0
    %1008 = vmatprep.subr.bf16.mxu0 0
    %1009 = vmatpush1.bf16.xpose.msra.mxu0 0
    %1010 = vmatprep.subr.bf16.mxu0 0
    %1011 = vmatpush1.bf16.xpose.msra.mxu0 0
    %1012 = vmatprep.subr.bf16.mxu0 0
    %1013 = vmatpush1.bf16.xpose.msra.mxu0 0
    %1014 = vmatprep.subr.bf16.mxu0 0
    %1015 = vmatpush1.bf16.xpose.msra.mxu0 0
    %1016 = vmatprep.subr.bf16.mxu0 0
    %1017 = vmatpush1.bf16.xpose.msra.mxu0 0
    %1018 = vmatprep.subr.bf16.mxu0 0
    %1019 = vmatpush1.bf16.xpose.msra.mxu0 %v1002
    %1020 = vmatprep.subr.bf16.mxu0 0
    %1021 = vmatpush2.bf16.xpose.msra.mxu0 0
    %1022 = vmatprep.subr.bf16.mxu0 0
    %1023 = vmatpush2.bf16.xpose.msra.mxu0 0
    %1024 = vmatprep.subr.bf16.mxu0 0
    %1025 = vmatpush2.bf16.xpose.msra.mxu0 0
    %1026 = vmatprep.subr.bf16.mxu0 0
    %1027 = vmatpush2.bf16.xpose.msra.mxu0 0
    %1028 = vmatprep.subr.bf16.mxu0 0
    %1029 = vmatpush2.bf16.xpose.msra.mxu0 0
    %1030 = vmatprep.subr.bf16.mxu0 0
    %1031 = vmatpush2.bf16.xpose.msra.mxu0 0
    %1032 = vmatprep.subr.bf16.mxu0 0
    %1033 = vmatpush2.bf16.xpose.msra.mxu0 0
    %1034 = vmatprep.subr.bf16.mxu0 0
    %1035 = vmatpush2.bf16.xpose.msra.mxu0 0
    %1036 = vmatprep.mubr.bf16.mxu0 0
    %1037 = vmatmul.mubr.bf16.gmra.mxu0 %v999
    %v1038 = vpop.f32.mrf.mxu0
    %v1039 = vadd.f32 0.0, %v1038
    %v1040 = vpop.f32.mrf.mxu0
    %v1041 = vpop.f32.mrf.mxu0
    %v1042 = vpop.f32.mrf.mxu0
    %1043 = vdwg.mxu0
    %v1044 = vmul.f32 %v1039, 0.35355338
    %v1045 = vadd.f32 %v1044, %v546
    %v1046 = vsel %vm997, %v1045, -inf
    %1047 = vmax.xlane.f32.xlu0 %v1046
    %v1048 = vpop.xlane.xlu0 %1047
    %v1049 = vsub.f32 %v1045, %v1048
    %v1050 = vmul.f32 %v1049, 1.442695
    %v1051 = vpow.pop %v1050
    %v1052 = vsel %vm997, %v1051, 0.0
    %1053 = vadd.xlane.f32.xlu0 %v1052
    %v1054 = vpop.xlane.xlu0 %1053
    %v1055 = vrcp.pop %v1054
    %v1056 = vmul.f32 %v1051, %v1055
    %v1057 = vpack.c.bf16 %v1056, %v1056
    %v1058 = vpack.c.bf16 %v990, %v990
    %v1060 = vsel %vm997, %v1057, 0
    %v1063 = vsel %vm665, %v1058, 0
    %1065 = vmatprep.subr.bf16.mxu0 0
    %1066 = vmatpush1.bf16.msra.mxu0 0
    %1067 = vmatprep.subr.bf16.mxu0 0
    %1068 = vmatpush1.bf16.msra.mxu0 0
    %1069 = vmatprep.subr.bf16.mxu0 0
    %1070 = vmatpush1.bf16.msra.mxu0 0
    %1071 = vmatprep.subr.bf16.mxu0 0
    %1072 = vmatpush1.bf16.msra.mxu0 0
    %1073 = vmatprep.subr.bf16.mxu0 0
    %1074 = vmatpush1.bf16.msra.mxu0 0
    %1075 = vmatprep.subr.bf16.mxu0 0
    %1076 = vmatpush1.bf16.msra.mxu0 0
    %1077 = vmatprep.subr.bf16.mxu0 0
    %1078 = vmatpush1.bf16.msra.mxu0 0
    %1079 = vmatprep.subr.bf16.mxu0 0
    %1080 = vmatpush1.bf16.msra.mxu0 %v1063
    %1081 = vmatprep.subr.bf16.mxu0 0
    %1082 = vmatpush2.bf16.msra.mxu0 0
    %1083 = vmatprep.subr.bf16.mxu0 0
    %1084 = vmatpush2.bf16.msra.mxu0 0
    %1085 = vmatprep.subr.bf16.mxu0 0
    %1086 = vmatpush2.bf16.msra.mxu0 0
    %1087 = vmatprep.subr.bf16.mxu0 0
    %1088 = vmatpush2.bf16.msra.mxu0 0
    %1089 = vmatprep.subr.bf16.mxu0 0
    %1090 = vmatpush2.bf16.msra.mxu0 0
    %1091 = vmatprep.subr.bf16.mxu0 0
    %1092 = vmatpush2.bf16.msra.mxu0 0
    %1093 = vmatprep.subr.bf16.mxu0 0
    %1094 = vmatpush2.bf16.msra.mxu0 0
    %1095 = vmatprep.subr.bf16.mxu0 0
    %1096 = vmatpush2.bf16.msra.mxu0 0
    %1097 = vmatprep.mubr.bf16.mxu0 0
    %1098 = vmatmul.mubr.bf16.gmra.mxu0 %v1060
    %v1099 = vpop.f32.mrf.mxu0
    %v1100 = vadd.f32 0.0, %v1099
    %v1101 = vpop.f32.mrf.mxu0
    %v1102 = vpop.f32.mrf.mxu0
    %v1103 = vpop.f32.mrf.mxu0
    %1104 = vdwg.mxu0
    %v1105 = vpack.c.bf16 %v1100, %v1100
    %v1106 = vlaneseq
    %v1107 = vshrl.u32 %v1106, 7
    %v1108 = vsub.s32 1, %v1107
    %v1109 = vrot.slane %v306, %v1108
    %v1114 = vunpack.c.l.b16 %v356
    %v1115 = vunpack.c.l.b16 %v357
    %v1116 = vunpack.c.l.b16 %v358
    %v1117 = vunpack.c.l.b16 %v359
    %v1118 = vpack.c.b16 %v1115, %v1114
    %v1119 = vpack.c.b16 %v1117, %v1116
    %1122 = vmatprep.subr.bf16.mxu0 0
    %1123 = vmatpush1.bf16.msra.mxu0 0
    %1124 = vmatprep.subr.bf16.mxu0 0
    %1125 = vmatpush1.bf16.msra.mxu0 0
    %1126 = vmatprep.subr.bf16.mxu0 0
    %1127 = vmatpush1.bf16.msra.mxu0 0
    %1128 = vmatprep.subr.bf16.mxu0 0
    %1129 = vmatpush1.bf16.msra.mxu0 0
    %1130 = vmatprep.subr.bf16.mxu0 0
    %1131 = vmatpush1.bf16.msra.mxu0 0
    %1132 = vmatprep.subr.bf16.mxu0 0
    %1133 = vmatpush1.bf16.msra.mxu0 0
    %1134 = vmatprep.subr.bf16.mxu0 0
    %1135 = vmatpush1.bf16.msra.mxu0 %v1119
    %1136 = vmatprep.subr.bf16.mxu0 0
    %1137 = vmatpush1.bf16.msra.mxu0 %v1118
    %1138 = vmatprep.subr.bf16.mxu0 0
    %1139 = vmatpush2.bf16.msra.mxu0 0
    %1140 = vmatprep.subr.bf16.mxu0 0
    %1141 = vmatpush2.bf16.msra.mxu0 0
    %1142 = vmatprep.subr.bf16.mxu0 0
    %1143 = vmatpush2.bf16.msra.mxu0 0
    %1144 = vmatprep.subr.bf16.mxu0 0
    %1145 = vmatpush2.bf16.msra.mxu0 0
    %1146 = vmatprep.subr.bf16.mxu0 0
    %1147 = vmatpush2.bf16.msra.mxu0 0
    %1148 = vmatprep.subr.bf16.mxu0 0
    %1149 = vmatpush2.bf16.msra.mxu0 0
    %1150 = vmatprep.subr.bf16.mxu0 0
    %1151 = vmatpush2.bf16.msra.mxu0 0
    %1152 = vmatprep.subr.bf16.mxu0 0
    %1153 = vmatpush2.bf16.msra.mxu0 0
    %1154 = vmatprep.mubr.bf16.mxu0 0
    %1155 = vmatmul.mubr.bf16.gmra.mxu0 %v841
    %v1156 = vpop.f32.mrf.mxu0
    %v1157 = vadd.f32 %v1109, %v1156
    %v1158 = vpop.f32.mrf.mxu0
    %v1159 = vpop.f32.mrf.mxu0
    %v1160 = vpop.f32.mrf.mxu0
    %1161 = vdwg.mxu0
    %v1162 = vlaneseq
    %v1163 = vshrl.u32 %v1162, 7
    %v1164 = vsub.s32 1, %v1163
    %v1165 = vrot.slane %v304, %v1164
    %v1170 = vunpack.c.l.b16 %v336
    %v1171 = vunpack.c.l.b16 %v337
    %v1172 = vunpack.c.l.b16 %v338
    %v1173 = vunpack.c.l.b16 %v339
    %v1174 = vpack.c.b16 %v1171, %v1170
    %v1175 = vpack.c.b16 %v1173, %v1172
    %1178 = vmatprep.subr.bf16.mxu0 0
    %1179 = vmatpush1.bf16.msra.mxu0 0
    %1180 = vmatprep.subr.bf16.mxu0 0
    %1181 = vmatpush1.bf16.msra.mxu0 0
    %1182 = vmatprep.subr.bf16.mxu0 0
    %1183 = vmatpush1.bf16.msra.mxu0 0
    %1184 = vmatprep.subr.bf16.mxu0 0
    %1185 = vmatpush1.bf16.msra.mxu0 0
    %1186 = vmatprep.subr.bf16.mxu0 0
    %1187 = vmatpush1.bf16.msra.mxu0 0
    %1188 = vmatprep.subr.bf16.mxu0 0
    %1189 = vmatpush1.bf16.msra.mxu0 0
    %1190 = vmatprep.subr.bf16.mxu0 0
    %1191 = vmatpush1.bf16.msra.mxu0 %v1175
    %1192 = vmatprep.subr.bf16.mxu0 0
    %1193 = vmatpush1.bf16.msra.mxu0 %v1174
    %1194 = vmatprep.subr.bf16.mxu0 0
    %1195 = vmatpush2.bf16.msra.mxu0 0
    %1196 = vmatprep.subr.bf16.mxu0 0
    %1197 = vmatpush2.bf16.msra.mxu0 0
    %1198 = vmatprep.subr.bf16.mxu0 0
    %1199 = vmatpush2.bf16.msra.mxu0 0
    %1200 = vmatprep.subr.bf16.mxu0 0
    %1201 = vmatpush2.bf16.msra.mxu0 0
    %1202 = vmatprep.subr.bf16.mxu0 0
    %1203 = vmatpush2.bf16.msra.mxu0 0
    %1204 = vmatprep.subr.bf16.mxu0 0
    %1205 = vmatpush2.bf16.msra.mxu0 0
    %1206 = vmatprep.subr.bf16.mxu0 0
    %1207 = vmatpush2.bf16.msra.mxu0 0
    %1208 = vmatprep.subr.bf16.mxu0 0
    %1209 = vmatpush2.bf16.msra.mxu0 0
    %1210 = vmatprep.mubr.bf16.mxu0 0
    %1211 = vmatmul.mubr.bf16.gmra.mxu0 %v841
    %v1212 = vpop.f32.mrf.mxu0
    %v1213 = vadd.f32 %v1165, %v1212
    %v1214 = vpop.f32.mrf.mxu0
    %v1215 = vpop.f32.mrf.mxu0
    %v1216 = vpop.f32.mrf.mxu0
    %1217 = vdwg.mxu0
    %v1218 = vlaneseq
    %v1219 = vshrl.u32 %v1218, 7
    %v1220 = vsub.s32 1, %v1219
    %v1221 = vrot.slane %v307, %v1220
    %v1226 = vunpack.c.l.b16 %v372
    %v1227 = vunpack.c.l.b16 %v373
    %v1228 = vunpack.c.l.b16 %v374
    %v1229 = vunpack.c.l.b16 %v375
    %v1230 = vpack.c.b16 %v1227, %v1226
    %v1231 = vpack.c.b16 %v1229, %v1228
    %1234 = vmatprep.subr.bf16.mxu0 0
    %1235 = vmatpush1.bf16.msra.mxu0 0
    %1236 = vmatprep.subr.bf16.mxu0 0
    %1237 = vmatpush1.bf16.msra.mxu0 0
    %1238 = vmatprep.subr.bf16.mxu0 0
    %1239 = vmatpush1.bf16.msra.mxu0 0
    %1240 = vmatprep.subr.bf16.mxu0 0
    %1241 = vmatpush1.bf16.msra.mxu0 0
    %1242 = vmatprep.subr.bf16.mxu0 0
    %1243 = vmatpush1.bf16.msra.mxu0 0
    %1244 = vmatprep.subr.bf16.mxu0 0
    %1245 = vmatpush1.bf16.msra.mxu0 0
    %1246 = vmatprep.subr.bf16.mxu0 0
    %1247 = vmatpush1.bf16.msra.mxu0 %v1231
    %1248 = vmatprep.subr.bf16.mxu0 0
    %1249 = vmatpush1.bf16.msra.mxu0 %v1230
    %1250 = vmatprep.subr.bf16.mxu0 0
    %1251 = vmatpush2.bf16.msra.mxu0 0
    %1252 = vmatprep.subr.bf16.mxu0 0
    %1253 = vmatpush2.bf16.msra.mxu0 0
    %1254 = vmatprep.subr.bf16.mxu0 0
    %1255 = vmatpush2.bf16.msra.mxu0 0
    %1256 = vmatprep.subr.bf16.mxu0 0
    %1257 = vmatpush2.bf16.msra.mxu0 0
    %1258 = vmatprep.subr.bf16.mxu0 0
    %1259 = vmatpush2.bf16.msra.mxu0 0
    %1260 = vmatprep.subr.bf16.mxu0 0
    %1261 = vmatpush2.bf16.msra.mxu0 0
    %1262 = vmatprep.subr.bf16.mxu0 0
    %1263 = vmatpush2.bf16.msra.mxu0 0
    %1264 = vmatprep.subr.bf16.mxu0 0
    %1265 = vmatpush2.bf16.msra.mxu0 0
    %1266 = vmatprep.mubr.bf16.mxu0 0
    %1267 = vmatmul.mubr.bf16.gmra.mxu0 %v841
    %v1268 = vpop.f32.mrf.mxu0
    %v1269 = vadd.f32 %v1221, %v1268
    %v1270 = vpop.f32.mrf.mxu0
    %v1271 = vpop.f32.mrf.mxu0
    %v1272 = vpop.f32.mrf.mxu0
    %1273 = vdwg.mxu0
    %v1274 = vpack.c.bf16 %v1157, %v1157
    %v1275 = vpack.c.bf16 %v1213, %v1213
    %v1277 = vsel %vm997, %v1274, 0
    %v1280 = vsel %vm997, %v1275, 0
    %1282 = vmatprep.subr.bf16.mxu0 0
    %1283 = vmatpush1.bf16.xpose.msra.mxu0 0
    %1284 = vmatprep.subr.bf16.mxu0 0
    %1285 = vmatpush1.bf16.xpose.msra.mxu0 0
    %1286 = vmatprep.subr.bf16.mxu0 0
    %1287 = vmatpush1.bf16.xpose.msra.mxu0 0
    %1288 = vmatprep.subr.bf16.mxu0 0
    %1289 = vmatpush1.bf16.xpose.msra.mxu0 0
    %1290 = vmatprep.subr.bf16.mxu0 0
    %1291 = vmatpush1.bf16.xpose.msra.mxu0 0
    %1292 = vmatprep.subr.bf16.mxu0 0
    %1293 = vmatpush1.bf16.xpose.msra.mxu0 0
    %1294 = vmatprep.subr.bf16.mxu0 0
    %1295 = vmatpush1.bf16.xpose.msra.mxu0 0
    %1296 = vmatprep.subr.bf16.mxu0 0
    %1297 = vmatpush1.bf16.xpose.msra.mxu0 %v1280
    %1298 = vmatprep.subr.bf16.mxu0 0
    %1299 = vmatpush2.bf16.xpose.msra.mxu0 0
    %1300 = vmatprep.subr.bf16.mxu0 0
    %1301 = vmatpush2.bf16.xpose.msra.mxu0 0
    %1302 = vmatprep.subr.bf16.mxu0 0
    %1303 = vmatpush2.bf16.xpose.msra.mxu0 0
    %1304 = vmatprep.subr.bf16.mxu0 0
    %1305 = vmatpush2.bf16.xpose.msra.mxu0 0
    %1306 = vmatprep.subr.bf16.mxu0 0
    %1307 = vmatpush2.bf16.xpose.msra.mxu0 0
    %1308 = vmatprep.subr.bf16.mxu0 0
    %1309 = vmatpush2.bf16.xpose.msra.mxu0 0
    %1310 = vmatprep.subr.bf16.mxu0 0
    %1311 = vmatpush2.bf16.xpose.msra.mxu0 0
    %1312 = vmatprep.subr.bf16.mxu0 0
    %1313 = vmatpush2.bf16.xpose.msra.mxu0 0
    %1314 = vmatprep.mubr.bf16.mxu0 0
    %1315 = vmatmul.mubr.bf16.gmra.mxu0 %v1277
    %v1316 = vpop.f32.mrf.mxu0
    %v1317 = vadd.f32 0.0, %v1316
    %v1318 = vpop.f32.mrf.mxu0
    %v1319 = vpop.f32.mrf.mxu0
    %v1320 = vpop.f32.mrf.mxu0
    %1321 = vdwg.mxu0
    %v1322 = vmul.f32 %v1317, 0.35355338
    %v1323 = vadd.f32 %v1322, %v546
    %v1324 = vsel %vm997, %v1323, -inf
    %1325 = vmax.xlane.f32.xlu0 %v1324
    %v1326 = vpop.xlane.xlu0 %1325
    %v1327 = vsub.f32 %v1323, %v1326
    %v1328 = vmul.f32 %v1327, 1.442695
    %v1329 = vpow.pop %v1328
    %v1330 = vsel %vm997, %v1329, 0.0
    %1331 = vadd.xlane.f32.xlu0 %v1330
    %v1332 = vpop.xlane.xlu0 %1331
    %v1333 = vrcp.pop %v1332
    %v1334 = vmul.f32 %v1329, %v1333
    %v1335 = vpack.c.bf16 %v1334, %v1334
    %v1336 = vpack.c.bf16 %v1269, %v1269
    %v1338 = vsel %vm997, %v1335, 0
    %v1341 = vsel %vm665, %v1336, 0
    %1343 = vmatprep.subr.bf16.mxu0 0
    %1344 = vmatpush1.bf16.msra.mxu0 0
    %1345 = vmatprep.subr.bf16.mxu0 0
    %1346 = vmatpush1.bf16.msra.mxu0 0
    %1347 = vmatprep.subr.bf16.mxu0 0
    %1348 = vmatpush1.bf16.msra.mxu0 0
    %1349 = vmatprep.subr.bf16.mxu0 0
    %1350 = vmatpush1.bf16.msra.mxu0 0
    %1351 = vmatprep.subr.bf16.mxu0 0
    %1352 = vmatpush1.bf16.msra.mxu0 0
    %1353 = vmatprep.subr.bf16.mxu0 0
    %1354 = vmatpush1.bf16.msra.mxu0 0
    %1355 = vmatprep.subr.bf16.mxu0 0
    %1356 = vmatpush1.bf16.msra.mxu0 0
    %1357 = vmatprep.subr.bf16.mxu0 0
    %1358 = vmatpush1.bf16.msra.mxu0 %v1341
    %1359 = vmatprep.subr.bf16.mxu0 0
    %1360 = vmatpush2.bf16.msra.mxu0 0
    %1361 = vmatprep.subr.bf16.mxu0 0
    %1362 = vmatpush2.bf16.msra.mxu0 0
    %1363 = vmatprep.subr.bf16.mxu0 0
    %1364 = vmatpush2.bf16.msra.mxu0 0
    %1365 = vmatprep.subr.bf16.mxu0 0
    %1366 = vmatpush2.bf16.msra.mxu0 0
    %1367 = vmatprep.subr.bf16.mxu0 0
    %1368 = vmatpush2.bf16.msra.mxu0 0
    %1369 = vmatprep.subr.bf16.mxu0 0
    %1370 = vmatpush2.bf16.msra.mxu0 0
    %1371 = vmatprep.subr.bf16.mxu0 0
    %1372 = vmatpush2.bf16.msra.mxu0 0
    %1373 = vmatprep.subr.bf16.mxu0 0
    %1374 = vmatpush2.bf16.msra.mxu0 0
    %1375 = vmatprep.mubr.bf16.mxu0 0
    %1376 = vmatmul.mubr.bf16.gmra.mxu0 %v1338
    %v1377 = vpop.f32.mrf.mxu0
    %v1378 = vadd.f32 0.0, %v1377
    %v1379 = vpop.f32.mrf.mxu0
    %v1380 = vpop.f32.mrf.mxu0
    %v1381 = vpop.f32.mrf.mxu0
    %1382 = vdwg.mxu0
    %v1383 = vpack.c.bf16 %v1378, %v1378
    %v1385 = vsel %vm997, %v1383, 0
    %v1388 = vsel %vm665, %v349, 0
    %1390 = vmatprep.subr.bf16.mxu0 0
    %1391 = vmatpush1.bf16.msra.mxu0 0
    %1392 = vmatprep.subr.bf16.mxu0 0
    %1393 = vmatpush1.bf16.msra.mxu0 0
    %1394 = vmatprep.subr.bf16.mxu0 0
    %1395 = vmatpush1.bf16.msra.mxu0 0
    %1396 = vmatprep.subr.bf16.mxu0 0
    %1397 = vmatpush1.bf16.msra.mxu0 0
    %1398 = vmatprep.subr.bf16.mxu0 0
    %1399 = vmatpush1.bf16.msra.mxu0 0
    %1400 = vmatprep.subr.bf16.mxu0 0
    %1401 = vmatpush1.bf16.msra.mxu0 0
    %1402 = vmatprep.subr.bf16.mxu0 0
    %1403 = vmatpush1.bf16.msra.mxu0 0
    %1404 = vmatprep.subr.bf16.mxu0 0
    %1405 = vmatpush1.bf16.msra.mxu0 %v1388
    %1406 = vmatprep.subr.bf16.mxu0 0
    %1407 = vmatpush2.bf16.msra.mxu0 0
    %1408 = vmatprep.subr.bf16.mxu0 0
    %1409 = vmatpush2.bf16.msra.mxu0 0
    %1410 = vmatprep.subr.bf16.mxu0 0
    %1411 = vmatpush2.bf16.msra.mxu0 0
    %1412 = vmatprep.subr.bf16.mxu0 0
    %1413 = vmatpush2.bf16.msra.mxu0 0
    %1414 = vmatprep.subr.bf16.mxu0 0
    %1415 = vmatpush2.bf16.msra.mxu0 0
    %1416 = vmatprep.subr.bf16.mxu0 0
    %1417 = vmatpush2.bf16.msra.mxu0 0
    %1418 = vmatprep.subr.bf16.mxu0 0
    %1419 = vmatpush2.bf16.msra.mxu0 0
    %1420 = vmatprep.subr.bf16.mxu0 0
    %1421 = vmatpush2.bf16.msra.mxu0 0
    %1422 = vmatprep.mubr.bf16.mxu0 0
    %1423 = vmatmul.mubr.bf16.gmra.mxu0 %v1385
    %v1424 = vpop.f32.mrf.mxu0
    %v1425 = vadd.f32 0.0, %v1424
    %v1426 = vpop.f32.mrf.mxu0
    %v1427 = vpop.f32.mrf.mxu0
    %v1428 = vpop.f32.mrf.mxu0
    %1429 = vdwg.mxu0
    %v1431 = vsel %vm997, %v1105, 0
    %v1434 = vsel %vm665, %v348, 0
    %1436 = vmatprep.subr.bf16.mxu0 0
    %1437 = vmatpush1.bf16.msra.mxu0 0
    %1438 = vmatprep.subr.bf16.mxu0 0
    %1439 = vmatpush1.bf16.msra.mxu0 0
    %1440 = vmatprep.subr.bf16.mxu0 0
    %1441 = vmatpush1.bf16.msra.mxu0 0
    %1442 = vmatprep.subr.bf16.mxu0 0
    %1443 = vmatpush1.bf16.msra.mxu0 0
    %1444 = vmatprep.subr.bf16.mxu0 0
    %1445 = vmatpush1.bf16.msra.mxu0 0
    %1446 = vmatprep.subr.bf16.mxu0 0
    %1447 = vmatpush1.bf16.msra.mxu0 0
    %1448 = vmatprep.subr.bf16.mxu0 0
    %1449 = vmatpush1.bf16.msra.mxu0 0
    %1450 = vmatprep.subr.bf16.mxu0 0
    %1451 = vmatpush1.bf16.msra.mxu0 %v1434
    %1452 = vmatprep.subr.bf16.mxu0 0
    %1453 = vmatpush2.bf16.msra.mxu0 0
    %1454 = vmatprep.subr.bf16.mxu0 0
    %1455 = vmatpush2.bf16.msra.mxu0 0
    %1456 = vmatprep.subr.bf16.mxu0 0
    %1457 = vmatpush2.bf16.msra.mxu0 0
    %1458 = vmatprep.subr.bf16.mxu0 0
    %1459 = vmatpush2.bf16.msra.mxu0 0
    %1460 = vmatprep.subr.bf16.mxu0 0
    %1461 = vmatpush2.bf16.msra.mxu0 0
    %1462 = vmatprep.subr.bf16.mxu0 0
    %1463 = vmatpush2.bf16.msra.mxu0 0
    %1464 = vmatprep.subr.bf16.mxu0 0
    %1465 = vmatpush2.bf16.msra.mxu0 0
    %1466 = vmatprep.subr.bf16.mxu0 0
    %1467 = vmatpush2.bf16.msra.mxu0 0
    %1468 = vmatprep.mubr.bf16.mxu0 0
    %1469 = vmatmul.mubr.bf16.gmra.mxu0 %v1431
    %v1470 = vpop.f32.mrf.mxu0
    %v1471 = vadd.f32 %v1425, %v1470
    %v1472 = vpop.f32.mrf.mxu0
    %v1473 = vpop.f32.mrf.mxu0
    %v1474 = vpop.f32.mrf.mxu0
    %1475 = vdwg.mxu0
    %v1476 = vlaneseq
    %v1477 = vshrl.u32 %v1476, 7
    %v1478 = vsub.s32 2, %v1477
    %v1479 = vrot.slane %v306, %v1478
    %v1484 = vunpack.c.l.b16 %v360
    %v1485 = vunpack.c.l.b16 %v361
    %v1486 = vunpack.c.l.b16 %v362
    %v1487 = vunpack.c.l.b16 %v363
    %v1488 = vpack.c.b16 %v1485, %v1484
    %v1489 = vpack.c.b16 %v1487, %v1486
    %1492 = vmatprep.subr.bf16.mxu0 0
    %1493 = vmatpush1.bf16.msra.mxu0 0
    %1494 = vmatprep.subr.bf16.mxu0 0
    %1495 = vmatpush1.bf16.msra.mxu0 0
    %1496 = vmatprep.subr.bf16.mxu0 0
    %1497 = vmatpush1.bf16.msra.mxu0 0
    %1498 = vmatprep.subr.bf16.mxu0 0
    %1499 = vmatpush1.bf16.msra.mxu0 0
    %1500 = vmatprep.subr.bf16.mxu0 0
    %1501 = vmatpush1.bf16.msra.mxu0 0
    %1502 = vmatprep.subr.bf16.mxu0 0
    %1503 = vmatpush1.bf16.msra.mxu0 0
    %1504 = vmatprep.subr.bf16.mxu0 0
    %1505 = vmatpush1.bf16.msra.mxu0 %v1489
    %1506 = vmatprep.subr.bf16.mxu0 0
    %1507 = vmatpush1.bf16.msra.mxu0 %v1488
    %1508 = vmatprep.subr.bf16.mxu0 0
    %1509 = vmatpush2.bf16.msra.mxu0 0
    %1510 = vmatprep.subr.bf16.mxu0 0
    %1511 = vmatpush2.bf16.msra.mxu0 0
    %1512 = vmatprep.subr.bf16.mxu0 0
    %1513 = vmatpush2.bf16.msra.mxu0 0
    %1514 = vmatprep.subr.bf16.mxu0 0
    %1515 = vmatpush2.bf16.msra.mxu0 0
    %1516 = vmatprep.subr.bf16.mxu0 0
    %1517 = vmatpush2.bf16.msra.mxu0 0
    %1518 = vmatprep.subr.bf16.mxu0 0
    %1519 = vmatpush2.bf16.msra.mxu0 0
    %1520 = vmatprep.subr.bf16.mxu0 0
    %1521 = vmatpush2.bf16.msra.mxu0 0
    %1522 = vmatprep.subr.bf16.mxu0 0
    %1523 = vmatpush2.bf16.msra.mxu0 0
    %1524 = vmatprep.mubr.bf16.mxu0 0
    %1525 = vmatmul.mubr.bf16.gmra.mxu0 %v841
    %v1526 = vpop.f32.mrf.mxu0
    %v1527 = vadd.f32 %v1479, %v1526
    %v1528 = vpop.f32.mrf.mxu0
    %v1529 = vpop.f32.mrf.mxu0
    %v1530 = vpop.f32.mrf.mxu0
    %1531 = vdwg.mxu0
    %v1532 = vlaneseq
    %v1533 = vshrl.u32 %v1532, 7
    %v1534 = vsub.s32 2, %v1533
    %v1535 = vrot.slane %v304, %v1534
    %v1540 = vunpack.c.l.b16 %v340
    %v1541 = vunpack.c.l.b16 %v341
    %v1542 = vunpack.c.l.b16 %v342
    %v1543 = vunpack.c.l.b16 %v343
    %v1544 = vpack.c.b16 %v1541, %v1540
    %v1545 = vpack.c.b16 %v1543, %v1542
    %1548 = vmatprep.subr.bf16.mxu0 0
    %1549 = vmatpush1.bf16.msra.mxu0 0
    %1550 = vmatprep.subr.bf16.mxu0 0
    %1551 = vmatpush1.bf16.msra.mxu0 0
    %1552 = vmatprep.subr.bf16.mxu0 0
    %1553 = vmatpush1.bf16.msra.mxu0 0
    %1554 = vmatprep.subr.bf16.mxu0 0
    %1555 = vmatpush1.bf16.msra.mxu0 0
    %1556 = vmatprep.subr.bf16.mxu0 0
    %1557 = vmatpush1.bf16.msra.mxu0 0
    %1558 = vmatprep.subr.bf16.mxu0 0
    %1559 = vmatpush1.bf16.msra.mxu0 0
    %1560 = vmatprep.subr.bf16.mxu0 0
    %1561 = vmatpush1.bf16.msra.mxu0 %v1545
    %1562 = vmatprep.subr.bf16.mxu0 0
    %1563 = vmatpush1.bf16.msra.mxu0 %v1544
    %1564 = vmatprep.subr.bf16.mxu0 0
    %1565 = vmatpush2.bf16.msra.mxu0 0
    %1566 = vmatprep.subr.bf16.mxu0 0
    %1567 = vmatpush2.bf16.msra.mxu0 0
    %1568 = vmatprep.subr.bf16.mxu0 0
    %1569 = vmatpush2.bf16.msra.mxu0 0
    %1570 = vmatprep.subr.bf16.mxu0 0
    %1571 = vmatpush2.bf16.msra.mxu0 0
    %1572 = vmatprep.subr.bf16.mxu0 0
    %1573 = vmatpush2.bf16.msra.mxu0 0
    %1574 = vmatprep.subr.bf16.mxu0 0
    %1575 = vmatpush2.bf16.msra.mxu0 0
    %1576 = vmatprep.subr.bf16.mxu0 0
    %1577 = vmatpush2.bf16.msra.mxu0 0
    %1578 = vmatprep.subr.bf16.mxu0 0
    %1579 = vmatpush2.bf16.msra.mxu0 0
    %1580 = vmatprep.mubr.bf16.mxu0 0
    %1581 = vmatmul.mubr.bf16.gmra.mxu0 %v841
    %v1582 = vpop.f32.mrf.mxu0
    %v1583 = vadd.f32 %v1535, %v1582
    %v1584 = vpop.f32.mrf.mxu0
    %v1585 = vpop.f32.mrf.mxu0
    %v1586 = vpop.f32.mrf.mxu0
    %1587 = vdwg.mxu0
    %v1588 = vlaneseq
    %v1589 = vshrl.u32 %v1588, 7
    %v1590 = vsub.s32 2, %v1589
    %v1591 = vrot.slane %v307, %v1590
    %v1596 = vunpack.c.l.b16 %v376
    %v1597 = vunpack.c.l.b16 %v377
    %v1598 = vunpack.c.l.b16 %v378
    %v1599 = vunpack.c.l.b16 %v379
    %v1600 = vpack.c.b16 %v1597, %v1596
    %v1601 = vpack.c.b16 %v1599, %v1598
    %1604 = vmatprep.subr.bf16.mxu0 0
    %1605 = vmatpush1.bf16.msra.mxu0 0
    %1606 = vmatprep.subr.bf16.mxu0 0
    %1607 = vmatpush1.bf16.msra.mxu0 0
    %1608 = vmatprep.subr.bf16.mxu0 0
    %1609 = vmatpush1.bf16.msra.mxu0 0
    %1610 = vmatprep.subr.bf16.mxu0 0
    %1611 = vmatpush1.bf16.msra.mxu0 0
    %1612 = vmatprep.subr.bf16.mxu0 0
    %1613 = vmatpush1.bf16.msra.mxu0 0
    %1614 = vmatprep.subr.bf16.mxu0 0
    %1615 = vmatpush1.bf16.msra.mxu0 0
    %1616 = vmatprep.subr.bf16.mxu0 0
    %1617 = vmatpush1.bf16.msra.mxu0 %v1601
    %1618 = vmatprep.subr.bf16.mxu0 0
    %1619 = vmatpush1.bf16.msra.mxu0 %v1600
    %1620 = vmatprep.subr.bf16.mxu0 0
    %1621 = vmatpush2.bf16.msra.mxu0 0
    %1622 = vmatprep.subr.bf16.mxu0 0
    %1623 = vmatpush2.bf16.msra.mxu0 0
    %1624 = vmatprep.subr.bf16.mxu0 0
    %1625 = vmatpush2.bf16.msra.mxu0 0
    %1626 = vmatprep.subr.bf16.mxu0 0
    %1627 = vmatpush2.bf16.msra.mxu0 0
    %1628 = vmatprep.subr.bf16.mxu0 0
    %1629 = vmatpush2.bf16.msra.mxu0 0
    %1630 = vmatprep.subr.bf16.mxu0 0
    %1631 = vmatpush2.bf16.msra.mxu0 0
    %1632 = vmatprep.subr.bf16.mxu0 0
    %1633 = vmatpush2.bf16.msra.mxu0 0
    %1634 = vmatprep.subr.bf16.mxu0 0
    %1635 = vmatpush2.bf16.msra.mxu0 0
    %1636 = vmatprep.mubr.bf16.mxu0 0
    %1637 = vmatmul.mubr.bf16.gmra.mxu0 %v841
    %v1638 = vpop.f32.mrf.mxu0
    %v1639 = vadd.f32 %v1591, %v1638
    %v1640 = vpop.f32.mrf.mxu0
    %v1641 = vpop.f32.mrf.mxu0
    %v1642 = vpop.f32.mrf.mxu0
    %1643 = vdwg.mxu0
    %v1644 = vpack.c.bf16 %v1527, %v1527
    %v1645 = vpack.c.bf16 %v1583, %v1583
    %v1647 = vsel %vm997, %v1644, 0
    %v1650 = vsel %vm997, %v1645, 0
    %1652 = vmatprep.subr.bf16.mxu0 0
    %1653 = vmatpush1.bf16.xpose.msra.mxu0 0
    %1654 = vmatprep.subr.bf16.mxu0 0
    %1655 = vmatpush1.bf16.xpose.msra.mxu0 0
    %1656 = vmatprep.subr.bf16.mxu0 0
    %1657 = vmatpush1.bf16.xpose.msra.mxu0 0
    %1658 = vmatprep.subr.bf16.mxu0 0
    %1659 = vmatpush1.bf16.xpose.msra.mxu0 0
    %1660 = vmatprep.subr.bf16.mxu0 0
    %1661 = vmatpush1.bf16.xpose.msra.mxu0 0
    %1662 = vmatprep.subr.bf16.mxu0 0
    %1663 = vmatpush1.bf16.xpose.msra.mxu0 0
    %1664 = vmatprep.subr.bf16.mxu0 0
    %1665 = vmatpush1.bf16.xpose.msra.mxu0 0
    %1666 = vmatprep.subr.bf16.mxu0 0
    %1667 = vmatpush1.bf16.xpose.msra.mxu0 %v1650
    %1668 = vmatprep.subr.bf16.mxu0 0
    %1669 = vmatpush2.bf16.xpose.msra.mxu0 0
    %1670 = vmatprep.subr.bf16.mxu0 0
    %1671 = vmatpush2.bf16.xpose.msra.mxu0 0
    %1672 = vmatprep.subr.bf16.mxu0 0
    %1673 = vmatpush2.bf16.xpose.msra.mxu0 0
    %1674 = vmatprep.subr.bf16.mxu0 0
    %1675 = vmatpush2.bf16.xpose.msra.mxu0 0
    %1676 = vmatprep.subr.bf16.mxu0 0
    %1677 = vmatpush2.bf16.xpose.msra.mxu0 0
    %1678 = vmatprep.subr.bf16.mxu0 0
    %1679 = vmatpush2.bf16.xpose.msra.mxu0 0
    %1680 = vmatprep.subr.bf16.mxu0 0
    %1681 = vmatpush2.bf16.xpose.msra.mxu0 0
    %1682 = vmatprep.subr.bf16.mxu0 0
    %1683 = vmatpush2.bf16.xpose.msra.mxu0 0
    %1684 = vmatprep.mubr.bf16.mxu0 0
    %1685 = vmatmul.mubr.bf16.gmra.mxu0 %v1647
    %v1686 = vpop.f32.mrf.mxu0
    %v1687 = vadd.f32 0.0, %v1686
    %v1688 = vpop.f32.mrf.mxu0
    %v1689 = vpop.f32.mrf.mxu0
    %v1690 = vpop.f32.mrf.mxu0
    %1691 = vdwg.mxu0
    %v1692 = vmul.f32 %v1687, 0.35355338
    %v1693 = vadd.f32 %v1692, %v546
    %v1694 = vsel %vm997, %v1693, -inf
    %1695 = vmax.xlane.f32.xlu0 %v1694
    %v1696 = vpop.xlane.xlu0 %1695
    %v1697 = vsub.f32 %v1693, %v1696
    %v1698 = vmul.f32 %v1697, 1.442695
    %v1699 = vpow.pop %v1698
    %v1700 = vsel %vm997, %v1699, 0.0
    %1701 = vadd.xlane.f32.xlu0 %v1700
    %v1702 = vpop.xlane.xlu0 %1701
    %v1703 = vrcp.pop %v1702
    %v1704 = vmul.f32 %v1699, %v1703
    %v1705 = vpack.c.bf16 %v1704, %v1704
    %v1706 = vpack.c.bf16 %v1639, %v1639
    %v1708 = vsel %vm997, %v1705, 0
    %v1711 = vsel %vm665, %v1706, 0
    %1713 = vmatprep.subr.bf16.mxu0 0
    %1714 = vmatpush1.bf16.msra.mxu0 0
    %1715 = vmatprep.subr.bf16.mxu0 0
    %1716 = vmatpush1.bf16.msra.mxu0 0
    %1717 = vmatprep.subr.bf16.mxu0 0
    %1718 = vmatpush1.bf16.msra.mxu0 0
    %1719 = vmatprep.subr.bf16.mxu0 0
    %1720 = vmatpush1.bf16.msra.mxu0 0
    %1721 = vmatprep.subr.bf16.mxu0 0
    %1722 = vmatpush1.bf16.msra.mxu0 0
    %1723 = vmatprep.subr.bf16.mxu0 0
    %1724 = vmatpush1.bf16.msra.mxu0 0
    %1725 = vmatprep.subr.bf16.mxu0 0
    %1726 = vmatpush1.bf16.msra.mxu0 0
    %1727 = vmatprep.subr.bf16.mxu0 0
    %1728 = vmatpush1.bf16.msra.mxu0 %v1711
    %1729 = vmatprep.subr.bf16.mxu0 0
    %1730 = vmatpush2.bf16.msra.mxu0 0
    %1731 = vmatprep.subr.bf16.mxu0 0
    %1732 = vmatpush2.bf16.msra.mxu0 0
    %1733 = vmatprep.subr.bf16.mxu0 0
    %1734 = vmatpush2.bf16.msra.mxu0 0
    %1735 = vmatprep.subr.bf16.mxu0 0
    %1736 = vmatpush2.bf16.msra.mxu0 0
    %1737 = vmatprep.subr.bf16.mxu0 0
    %1738 = vmatpush2.bf16.msra.mxu0 0
    %1739 = vmatprep.subr.bf16.mxu0 0
    %1740 = vmatpush2.bf16.msra.mxu0 0
    %1741 = vmatprep.subr.bf16.mxu0 0
    %1742 = vmatpush2.bf16.msra.mxu0 0
    %1743 = vmatprep.subr.bf16.mxu0 0
    %1744 = vmatpush2.bf16.msra.mxu0 0
    %1745 = vmatprep.mubr.bf16.mxu0 0
    %1746 = vmatmul.mubr.bf16.gmra.mxu0 %v1708
    %v1747 = vpop.f32.mrf.mxu0
    %v1748 = vadd.f32 0.0, %v1747
    %v1749 = vpop.f32.mrf.mxu0
    %v1750 = vpop.f32.mrf.mxu0
    %v1751 = vpop.f32.mrf.mxu0
    %1752 = vdwg.mxu0
    %v1753 = vpack.c.bf16 %v1748, %v1748
    %v1755 = vsel %vm997, %v1753, 0
    %v1758 = vsel %vm665, %v350, 0
    %1760 = vmatprep.subr.bf16.mxu0 0
    %1761 = vmatpush1.bf16.msra.mxu0 0
    %1762 = vmatprep.subr.bf16.mxu0 0
    %1763 = vmatpush1.bf16.msra.mxu0 0
    %1764 = vmatprep.subr.bf16.mxu0 0
    %1765 = vmatpush1.bf16.msra.mxu0 0
    %1766 = vmatprep.subr.bf16.mxu0 0
    %1767 = vmatpush1.bf16.msra.mxu0 0
    %1768 = vmatprep.subr.bf16.mxu0 0
    %1769 = vmatpush1.bf16.msra.mxu0 0
    %1770 = vmatprep.subr.bf16.mxu0 0
    %1771 = vmatpush1.bf16.msra.mxu0 0
    %1772 = vmatprep.subr.bf16.mxu0 0
    %1773 = vmatpush1.bf16.msra.mxu0 0
    %1774 = vmatprep.subr.bf16.mxu0 0
    %1775 = vmatpush1.bf16.msra.mxu0 %v1758
    %1776 = vmatprep.subr.bf16.mxu0 0
    %1777 = vmatpush2.bf16.msra.mxu0 0
    %1778 = vmatprep.subr.bf16.mxu0 0
    %1779 = vmatpush2.bf16.msra.mxu0 0
    %1780 = vmatprep.subr.bf16.mxu0 0
    %1781 = vmatpush2.bf16.msra.mxu0 0
    %1782 = vmatprep.subr.bf16.mxu0 0
    %1783 = vmatpush2.bf16.msra.mxu0 0
    %1784 = vmatprep.subr.bf16.mxu0 0
    %1785 = vmatpush2.bf16.msra.mxu0 0
    %1786 = vmatprep.subr.bf16.mxu0 0
    %1787 = vmatpush2.bf16.msra.mxu0 0
    %1788 = vmatprep.subr.bf16.mxu0 0
    %1789 = vmatpush2.bf16.msra.mxu0 0
    %1790 = vmatprep.subr.bf16.mxu0 0
    %1791 = vmatpush2.bf16.msra.mxu0 0
    %1792 = vmatprep.mubr.bf16.mxu0 0
    %1793 = vmatmul.mubr.bf16.gmra.mxu0 %v1755
    %v1794 = vpop.f32.mrf.mxu0
    %v1795 = vadd.f32 0.0, %v1794
    %v1796 = vpop.f32.mrf.mxu0
    %v1797 = vpop.f32.mrf.mxu0
    %v1798 = vpop.f32.mrf.mxu0
    %1799 = vdwg.mxu0
    %v1800 = vadd.f32 %v1471, %v1795
    %v1801 = vlaneseq
    %v1802 = vshrl.u32 %v1801, 7
    %v1803 = vsub.s32 3, %v1802
    %v1804 = vrot.slane %v306, %v1803
    %v1809 = vunpack.c.l.b16 %v364
    %v1810 = vunpack.c.l.b16 %v365
    %v1811 = vunpack.c.l.b16 %v366
    %v1812 = vunpack.c.l.b16 %v367
    %v1813 = vpack.c.b16 %v1810, %v1809
    %v1814 = vpack.c.b16 %v1812, %v1811
    %1817 = vmatprep.subr.bf16.mxu0 0
    %1818 = vmatpush1.bf16.msra.mxu0 0
    %1819 = vmatprep.subr.bf16.mxu0 0
    %1820 = vmatpush1.bf16.msra.mxu0 0
    %1821 = vmatprep.subr.bf16.mxu0 0
    %1822 = vmatpush1.bf16.msra.mxu0 0
    %1823 = vmatprep.subr.bf16.mxu0 0
    %1824 = vmatpush1.bf16.msra.mxu0 0
    %1825 = vmatprep.subr.bf16.mxu0 0
    %1826 = vmatpush1.bf16.msra.mxu0 0
    %1827 = vmatprep.subr.bf16.mxu0 0
    %1828 = vmatpush1.bf16.msra.mxu0 0
    %1829 = vmatprep.subr.bf16.mxu0 0
    %1830 = vmatpush1.bf16.msra.mxu0 %v1814
    %1831 = vmatprep.subr.bf16.mxu0 0
    %1832 = vmatpush1.bf16.msra.mxu0 %v1813
    %1833 = vmatprep.subr.bf16.mxu0 0
    %1834 = vmatpush2.bf16.msra.mxu0 0
    %1835 = vmatprep.subr.bf16.mxu0 0
    %1836 = vmatpush2.bf16.msra.mxu0 0
    %1837 = vmatprep.subr.bf16.mxu0 0
    %1838 = vmatpush2.bf16.msra.mxu0 0
    %1839 = vmatprep.subr.bf16.mxu0 0
    %1840 = vmatpush2.bf16.msra.mxu0 0
    %1841 = vmatprep.subr.bf16.mxu0 0
    %1842 = vmatpush2.bf16.msra.mxu0 0
    %1843 = vmatprep.subr.bf16.mxu0 0
    %1844 = vmatpush2.bf16.msra.mxu0 0
    %1845 = vmatprep.subr.bf16.mxu0 0
    %1846 = vmatpush2.bf16.msra.mxu0 0
    %1847 = vmatprep.subr.bf16.mxu0 0
    %1848 = vmatpush2.bf16.msra.mxu0 0
    %1849 = vmatprep.mubr.bf16.mxu0 0
    %1850 = vmatmul.mubr.bf16.gmra.mxu0 %v841
    %v1851 = vpop.f32.mrf.mxu0
    %v1852 = vadd.f32 %v1804, %v1851
    %v1853 = vpop.f32.mrf.mxu0
    %v1854 = vpop.f32.mrf.mxu0
    %v1855 = vpop.f32.mrf.mxu0
    %1856 = vdwg.mxu0
    %v1857 = vlaneseq
    %v1858 = vshrl.u32 %v1857, 7
    %v1859 = vsub.s32 3, %v1858
    %v1860 = vrot.slane %v304, %v1859
    %v1865 = vunpack.c.l.b16 %v344
    %v1866 = vunpack.c.l.b16 %v345
    %v1867 = vunpack.c.l.b16 %v346
    %v1868 = vunpack.c.l.b16 %v347
    %v1869 = vpack.c.b16 %v1866, %v1865
    %v1870 = vpack.c.b16 %v1868, %v1867
    %1873 = vmatprep.subr.bf16.mxu0 0
    %1874 = vmatpush1.bf16.msra.mxu0 0
    %1875 = vmatprep.subr.bf16.mxu0 0
    %1876 = vmatpush1.bf16.msra.mxu0 0
    %1877 = vmatprep.subr.bf16.mxu0 0
    %1878 = vmatpush1.bf16.msra.mxu0 0
    %1879 = vmatprep.subr.bf16.mxu0 0
    %1880 = vmatpush1.bf16.msra.mxu0 0
    %1881 = vmatprep.subr.bf16.mxu0 0
    %1882 = vmatpush1.bf16.msra.mxu0 0
    %1883 = vmatprep.subr.bf16.mxu0 0
    %1884 = vmatpush1.bf16.msra.mxu0 0
    %1885 = vmatprep.subr.bf16.mxu0 0
    %1886 = vmatpush1.bf16.msra.mxu0 %v1870
    %1887 = vmatprep.subr.bf16.mxu0 0
    %1888 = vmatpush1.bf16.msra.mxu0 %v1869
    %1889 = vmatprep.subr.bf16.mxu0 0
    %1890 = vmatpush2.bf16.msra.mxu0 0
    %1891 = vmatprep.subr.bf16.mxu0 0
    %1892 = vmatpush2.bf16.msra.mxu0 0
    %1893 = vmatprep.subr.bf16.mxu0 0
    %1894 = vmatpush2.bf16.msra.mxu0 0
    %1895 = vmatprep.subr.bf16.mxu0 0
    %1896 = vmatpush2.bf16.msra.mxu0 0
    %1897 = vmatprep.subr.bf16.mxu0 0
    %1898 = vmatpush2.bf16.msra.mxu0 0
    %1899 = vmatprep.subr.bf16.mxu0 0
    %1900 = vmatpush2.bf16.msra.mxu0 0
    %1901 = vmatprep.subr.bf16.mxu0 0
    %1902 = vmatpush2.bf16.msra.mxu0 0
    %1903 = vmatprep.subr.bf16.mxu0 0
    %1904 = vmatpush2.bf16.msra.mxu0 0
    %1905 = vmatprep.mubr.bf16.mxu0 0
    %1906 = vmatmul.mubr.bf16.gmra.mxu0 %v841
    %v1907 = vpop.f32.mrf.mxu0
    %v1908 = vadd.f32 %v1860, %v1907
    %v1909 = vpop.f32.mrf.mxu0
    %v1910 = vpop.f32.mrf.mxu0
    %v1911 = vpop.f32.mrf.mxu0
    %1912 = vdwg.mxu0
    %v1913 = vlaneseq
    %v1914 = vshrl.u32 %v1913, 7
    %v1915 = vsub.s32 3, %v1914
    %v1916 = vrot.slane %v307, %v1915
    %v1921 = vunpack.c.l.b16 %v380
    %v1922 = vunpack.c.l.b16 %v381
    %v1923 = vunpack.c.l.b16 %v382
    %v1924 = vunpack.c.l.b16 %v383
    %v1925 = vpack.c.b16 %v1922, %v1921
    %v1926 = vpack.c.b16 %v1924, %v1923
    %1929 = vmatprep.subr.bf16.mxu0 0
    %1930 = vmatpush1.bf16.msra.mxu0 0
    %1931 = vmatprep.subr.bf16.mxu0 0
    %1932 = vmatpush1.bf16.msra.mxu0 0
    %1933 = vmatprep.subr.bf16.mxu0 0
    %1934 = vmatpush1.bf16.msra.mxu0 0
    %1935 = vmatprep.subr.bf16.mxu0 0
    %1936 = vmatpush1.bf16.msra.mxu0 0
    %1937 = vmatprep.subr.bf16.mxu0 0
    %1938 = vmatpush1.bf16.msra.mxu0 0
    %1939 = vmatprep.subr.bf16.mxu0 0
    %1940 = vmatpush1.bf16.msra.mxu0 0
    %1941 = vmatprep.subr.bf16.mxu0 0
    %1942 = vmatpush1.bf16.msra.mxu0 %v1926
    %1943 = vmatprep.subr.bf16.mxu0 0
    %1944 = vmatpush1.bf16.msra.mxu0 %v1925
    %1945 = vmatprep.subr.bf16.mxu0 0
    %1946 = vmatpush2.bf16.msra.mxu0 0
    %1947 = vmatprep.subr.bf16.mxu0 0
    %1948 = vmatpush2.bf16.msra.mxu0 0
    %1949 = vmatprep.subr.bf16.mxu0 0
    %1950 = vmatpush2.bf16.msra.mxu0 0
    %1951 = vmatprep.subr.bf16.mxu0 0
    %1952 = vmatpush2.bf16.msra.mxu0 0
    %1953 = vmatprep.subr.bf16.mxu0 0
    %1954 = vmatpush2.bf16.msra.mxu0 0
    %1955 = vmatprep.subr.bf16.mxu0 0
    %1956 = vmatpush2.bf16.msra.mxu0 0
    %1957 = vmatprep.subr.bf16.mxu0 0
    %1958 = vmatpush2.bf16.msra.mxu0 0
    %1959 = vmatprep.subr.bf16.mxu0 0
    %1960 = vmatpush2.bf16.msra.mxu0 0
    %1961 = vmatprep.mubr.bf16.mxu0 0
    %1962 = vmatmul.mubr.bf16.gmra.mxu0 %v841
    %v1963 = vpop.f32.mrf.mxu0
    %v1964 = vadd.f32 %v1916, %v1963
    %v1965 = vpop.f32.mrf.mxu0
    %v1966 = vpop.f32.mrf.mxu0
    %v1967 = vpop.f32.mrf.mxu0
    %1968 = vdwg.mxu0
    %v1969 = vpack.c.bf16 %v1852, %v1852
    %v1970 = vpack.c.bf16 %v1908, %v1908
    %v1972 = vsel %vm997, %v1969, 0
    %v1975 = vsel %vm997, %v1970, 0
    %1977 = vmatprep.subr.bf16.mxu0 0
    %1978 = vmatpush1.bf16.xpose.msra.mxu0 0
    %1979 = vmatprep.subr.bf16.mxu0 0
    %1980 = vmatpush1.bf16.xpose.msra.mxu0 0
    %1981 = vmatprep.subr.bf16.mxu0 0
    %1982 = vmatpush1.bf16.xpose.msra.mxu0 0
    %1983 = vmatprep.subr.bf16.mxu0 0
    %1984 = vmatpush1.bf16.xpose.msra.mxu0 0
    %1985 = vmatprep.subr.bf16.mxu0 0
    %1986 = vmatpush1.bf16.xpose.msra.mxu0 0
    %1987 = vmatprep.subr.bf16.mxu0 0
    %1988 = vmatpush1.bf16.xpose.msra.mxu0 0
    %1989 = vmatprep.subr.bf16.mxu0 0
    %1990 = vmatpush1.bf16.xpose.msra.mxu0 0
    %1991 = vmatprep.subr.bf16.mxu0 0
    %1992 = vmatpush1.bf16.xpose.msra.mxu0 %v1975
    %1993 = vmatprep.subr.bf16.mxu0 0
    %1994 = vmatpush2.bf16.xpose.msra.mxu0 0
    %1995 = vmatprep.subr.bf16.mxu0 0
    %1996 = vmatpush2.bf16.xpose.msra.mxu0 0
    %1997 = vmatprep.subr.bf16.mxu0 0
    %1998 = vmatpush2.bf16.xpose.msra.mxu0 0
    %1999 = vmatprep.subr.bf16.mxu0 0
    %2000 = vmatpush2.bf16.xpose.msra.mxu0 0
    %2001 = vmatprep.subr.bf16.mxu0 0
    %2002 = vmatpush2.bf16.xpose.msra.mxu0 0
    %2003 = vmatprep.subr.bf16.mxu0 0
    %2004 = vmatpush2.bf16.xpose.msra.mxu0 0
    %2005 = vmatprep.subr.bf16.mxu0 0
    %2006 = vmatpush2.bf16.xpose.msra.mxu0 0
    %2007 = vmatprep.subr.bf16.mxu0 0
    %2008 = vmatpush2.bf16.xpose.msra.mxu0 0
    %2009 = vmatprep.mubr.bf16.mxu0 0
    %2010 = vmatmul.mubr.bf16.gmra.mxu0 %v1972
    %v2011 = vpop.f32.mrf.mxu0
    %v2012 = vadd.f32 0.0, %v2011
    %v2013 = vpop.f32.mrf.mxu0
    %v2014 = vpop.f32.mrf.mxu0
    %v2015 = vpop.f32.mrf.mxu0
    %2016 = vdwg.mxu0
    %v2017 = vmul.f32 %v2012, 0.35355338
    %v2018 = vadd.f32 %v2017, %v546
    %v2019 = vsel %vm997, %v2018, -inf
    %2020 = vmax.xlane.f32.xlu0 %v2019
    %v2021 = vpop.xlane.xlu0 %2020
    %v2022 = vsub.f32 %v2018, %v2021
    %v2023 = vmul.f32 %v2022, 1.442695
    %v2024 = vpow.pop %v2023
    %v2025 = vsel %vm997, %v2024, 0.0
    %2026 = vadd.xlane.f32.xlu0 %v2025
    %v2027 = vpop.xlane.xlu0 %2026
    %v2028 = vrcp.pop %v2027
    %v2029 = vmul.f32 %v2024, %v2028
    %v2030 = vpack.c.bf16 %v2029, %v2029
    %v2031 = vpack.c.bf16 %v1964, %v1964
    %v2033 = vsel %vm997, %v2030, 0
    %v2036 = vsel %vm665, %v2031, 0
    %2038 = vmatprep.subr.bf16.mxu0 0
    %2039 = vmatpush1.bf16.msra.mxu0 0
    %2040 = vmatprep.subr.bf16.mxu0 0
    %2041 = vmatpush1.bf16.msra.mxu0 0
    %2042 = vmatprep.subr.bf16.mxu0 0
    %2043 = vmatpush1.bf16.msra.mxu0 0
    %2044 = vmatprep.subr.bf16.mxu0 0
    %2045 = vmatpush1.bf16.msra.mxu0 0
    %2046 = vmatprep.subr.bf16.mxu0 0
    %2047 = vmatpush1.bf16.msra.mxu0 0
    %2048 = vmatprep.subr.bf16.mxu0 0
    %2049 = vmatpush1.bf16.msra.mxu0 0
    %2050 = vmatprep.subr.bf16.mxu0 0
    %2051 = vmatpush1.bf16.msra.mxu0 0
    %2052 = vmatprep.subr.bf16.mxu0 0
    %2053 = vmatpush1.bf16.msra.mxu0 %v2036
    %2054 = vmatprep.subr.bf16.mxu0 0
    %2055 = vmatpush2.bf16.msra.mxu0 0
    %2056 = vmatprep.subr.bf16.mxu0 0
    %2057 = vmatpush2.bf16.msra.mxu0 0
    %2058 = vmatprep.subr.bf16.mxu0 0
    %2059 = vmatpush2.bf16.msra.mxu0 0
    %2060 = vmatprep.subr.bf16.mxu0 0
    %2061 = vmatpush2.bf16.msra.mxu0 0
    %2062 = vmatprep.subr.bf16.mxu0 0
    %2063 = vmatpush2.bf16.msra.mxu0 0
    %2064 = vmatprep.subr.bf16.mxu0 0
    %2065 = vmatpush2.bf16.msra.mxu0 0
    %2066 = vmatprep.subr.bf16.mxu0 0
    %2067 = vmatpush2.bf16.msra.mxu0 0
    %2068 = vmatprep.subr.bf16.mxu0 0
    %2069 = vmatpush2.bf16.msra.mxu0 0
    %2070 = vmatprep.mubr.bf16.mxu0 0
    %2071 = vmatmul.mubr.bf16.gmra.mxu0 %v2033
    %v2072 = vpop.f32.mrf.mxu0
    %v2073 = vadd.f32 0.0, %v2072
    %v2074 = vpop.f32.mrf.mxu0
    %v2075 = vpop.f32.mrf.mxu0
    %v2076 = vpop.f32.mrf.mxu0
    %2077 = vdwg.mxu0
    %v2078 = vpack.c.bf16 %v2073, %v2073
    %v2080 = vsel %vm997, %v2078, 0
    %v2083 = vsel %vm665, %v351, 0
    %2085 = vmatprep.subr.bf16.mxu0 0
    %2086 = vmatpush1.bf16.msra.mxu0 0
    %2087 = vmatprep.subr.bf16.mxu0 0
    %2088 = vmatpush1.bf16.msra.mxu0 0
    %2089 = vmatprep.subr.bf16.mxu0 0
    %2090 = vmatpush1.bf16.msra.mxu0 0
    %2091 = vmatprep.subr.bf16.mxu0 0
    %2092 = vmatpush1.bf16.msra.mxu0 0
    %2093 = vmatprep.subr.bf16.mxu0 0
    %2094 = vmatpush1.bf16.msra.mxu0 0
    %2095 = vmatprep.subr.bf16.mxu0 0
    %2096 = vmatpush1.bf16.msra.mxu0 0
    %2097 = vmatprep.subr.bf16.mxu0 0
    %2098 = vmatpush1.bf16.msra.mxu0 0
    %2099 = vmatprep.subr.bf16.mxu0 0
    %2100 = vmatpush1.bf16.msra.mxu0 %v2083
    %2101 = vmatprep.subr.bf16.mxu0 0
    %2102 = vmatpush2.bf16.msra.mxu0 0
    %2103 = vmatprep.subr.bf16.mxu0 0
    %2104 = vmatpush2.bf16.msra.mxu0 0
    %2105 = vmatprep.subr.bf16.mxu0 0
    %2106 = vmatpush2.bf16.msra.mxu0 0
    %2107 = vmatprep.subr.bf16.mxu0 0
    %2108 = vmatpush2.bf16.msra.mxu0 0
    %2109 = vmatprep.subr.bf16.mxu0 0
    %2110 = vmatpush2.bf16.msra.mxu0 0
    %2111 = vmatprep.subr.bf16.mxu0 0
    %2112 = vmatpush2.bf16.msra.mxu0 0
    %2113 = vmatprep.subr.bf16.mxu0 0
    %2114 = vmatpush2.bf16.msra.mxu0 0
    %2115 = vmatprep.subr.bf16.mxu0 0
    %2116 = vmatpush2.bf16.msra.mxu0 0
    %2117 = vmatprep.mubr.bf16.mxu0 0
    %2118 = vmatmul.mubr.bf16.gmra.mxu0 %v2080
    %v2119 = vpop.f32.mrf.mxu0
    %v2120 = vadd.f32 0.0, %v2119
    %v2121 = vpop.f32.mrf.mxu0
    %v2122 = vpop.f32.mrf.mxu0
    %v2123 = vpop.f32.mrf.mxu0
    %2124 = vdwg.mxu0
    %v2125 = vadd.f32 %v1800, %v2120
    %v2126 = vadd.f32 %v667, %v2125
    %v2128 = vlaneseq
    %v2129 = vshrl.u32 %v2128, 7
    %v2130 = vsub.s32 0, %v2129
    %v2131 = vrot.slane %v305, %v2130
    %v2133 = vadd.f32 %v2126, %v2131
    %v2134 = vsel %vm798, %v2133, 0.0
    %2135 = vadd.xlane.f32.xlu0 %v2134
    %v2136 = vpop.xlane.xlu0 %2135
    %v2137 = vmul.f32 %v2136, %v802
    %v2138 = vsub.f32 %v2133, %v2137
    %v2139 = vmul.f32 %v2138, %v2138
    %v2140 = vsel %vm798, %v2139, 0.0
    %2141 = vadd.xlane.f32.xlu0 %v2140
    %v2142 = vpop.xlane.xlu0 %2141
    %v2143 = vmul.f32 %v2142, %v802
    %v2144 = vadd.f32 %v2143, 1e-05
    %v2145 = vrsqrt.pop %v2144
    %v2146 = vmul.f32 %v2138, %v2145
    %v2147 = vlaneseq
    %v2148 = vshrl.u32 %v2147, 7
    %v2149 = vsub.s32 3, %v2148
    %v2150 = vrot.slane %v331, %v2149
    %v2151 = vmul.f32 %v2146, %v2150
    %v2152 = vlaneseq
    %v2153 = vshrl.u32 %v2152, 7
    %v2154 = vsub.s32 3, %v2153
    %v2155 = vrot.slane %v330, %v2154
    %v2156 = vadd.f32 %v2151, %v2155
    %v2157 = vpack.c.bf16 %v2156, %v2156
    %v2159 = vlaneseq
    %v2160 = vshrl.u32 %v2159, 7
    %v2161 = vsub.s32 0, %v2160
    %v2162 = vrot.slane %v308, %v2161
    %v2168 = vunpack.c.l.b16 %v309
    %v2169 = vunpack.c.l.b16 %v310
    %v2170 = vunpack.c.l.b16 %v311
    %v2171 = vunpack.c.l.b16 %v312
    %v2172 = vpack.c.b16 %v2169, %v2168
    %v2173 = vpack.c.b16 %v2171, %v2170
    %v2177 = vsel %vm798, %v2157, 0
    %2179 = vmatprep.subr.bf16.mxu0 0
    %2180 = vmatpush1.bf16.msra.mxu0 0
    %2181 = vmatprep.subr.bf16.mxu0 0
    %2182 = vmatpush1.bf16.msra.mxu0 0
    %2183 = vmatprep.subr.bf16.mxu0 0
    %2184 = vmatpush1.bf16.msra.mxu0 0
    %2185 = vmatprep.subr.bf16.mxu0 0
    %2186 = vmatpush1.bf16.msra.mxu0 0
    %2187 = vmatprep.subr.bf16.mxu0 0
    %2188 = vmatpush1.bf16.msra.mxu0 0
    %2189 = vmatprep.subr.bf16.mxu0 0
    %2190 = vmatpush1.bf16.msra.mxu0 0
    %2191 = vmatprep.subr.bf16.mxu0 0
    %2192 = vmatpush1.bf16.msra.mxu0 %v2173
    %2193 = vmatprep.subr.bf16.mxu0 0
    %2194 = vmatpush1.bf16.msra.mxu0 %v2172
    %2195 = vmatprep.subr.bf16.mxu0 0
    %2196 = vmatpush2.bf16.msra.mxu0 0
    %2197 = vmatprep.subr.bf16.mxu0 0
    %2198 = vmatpush2.bf16.msra.mxu0 0
    %2199 = vmatprep.subr.bf16.mxu0 0
    %2200 = vmatpush2.bf16.msra.mxu0 0
    %2201 = vmatprep.subr.bf16.mxu0 0
    %2202 = vmatpush2.bf16.msra.mxu0 0
    %2203 = vmatprep.subr.bf16.mxu0 0
    %2204 = vmatpush2.bf16.msra.mxu0 0
    %2205 = vmatprep.subr.bf16.mxu0 0
    %2206 = vmatpush2.bf16.msra.mxu0 0
    %2207 = vmatprep.subr.bf16.mxu0 0
    %2208 = vmatpush2.bf16.msra.mxu0 0
    %2209 = vmatprep.subr.bf16.mxu0 0
    %2210 = vmatpush2.bf16.msra.mxu0 0
    %2211 = vmatprep.mubr.bf16.mxu0 0
    %2212 = vmatmul.mubr.bf16.gmra.mxu0 %v2177
    %v2213 = vpop.f32.mrf.mxu0
    %v2214 = vadd.f32 %v2162, %v2213
    %v2215 = vpop.f32.mrf.mxu0
    %v2216 = vpop.f32.mrf.mxu0
    %v2217 = vpop.f32.mrf.mxu0
    %2218 = vdwg.mxu0
    %v2219 = vmul.f32 %v2214, 0.5
    %v2220 = vmul.f32 %v2214, 0.70710677
    %v2221 = verf.f32.pop %v2220
    %v2222 = vadd.f32 %v2221, 1.0
    %v2223 = vmul.f32 %v2219, %v2222
    %v2224 = vpack.c.bf16 %v2223, %v2223
    %v2226 = vlaneseq
    %v2227 = vshrl.u32 %v2226, 7
    %v2228 = vsub.s32 0, %v2227
    %v2229 = vrot.slane %v313, %v2228
    %v2247 = vunpack.c.l.b16 %v314
    %v2248 = vunpack.c.l.b16 %v315
    %v2249 = vunpack.c.l.b16 %v316
    %v2250 = vunpack.c.l.b16 %v317
    %v2251 = vunpack.c.l.b16 %v318
    %v2252 = vunpack.c.l.b16 %v319
    %v2253 = vunpack.c.l.b16 %v320
    %v2254 = vunpack.c.l.b16 %v321
    %v2255 = vunpack.c.l.b16 %v322
    %v2256 = vunpack.c.l.b16 %v323
    %v2257 = vunpack.c.l.b16 %v324
    %v2258 = vunpack.c.l.b16 %v325
    %v2259 = vunpack.c.l.b16 %v326
    %v2260 = vunpack.c.l.b16 %v327
    %v2261 = vunpack.c.l.b16 %v328
    %v2262 = vunpack.c.l.b16 %v329
    %v2263 = vpack.c.b16 %v2248, %v2247
    %v2264 = vpack.c.b16 %v2250, %v2249
    %v2265 = vpack.c.b16 %v2252, %v2251
    %v2266 = vpack.c.b16 %v2254, %v2253
    %v2267 = vpack.c.b16 %v2256, %v2255
    %v2268 = vpack.c.b16 %v2258, %v2257
    %v2269 = vpack.c.b16 %v2260, %v2259
    %v2270 = vpack.c.b16 %v2262, %v2261
    %2279 = vmatprep.subr.bf16.mxu0 0
    %2280 = vmatpush1.bf16.msra.mxu0 %v2270
    %2281 = vmatprep.subr.bf16.mxu0 0
    %2282 = vmatpush1.bf16.msra.mxu0 %v2269
    %2283 = vmatprep.subr.bf16.mxu0 0
    %2284 = vmatpush1.bf16.msra.mxu0 %v2268
    %2285 = vmatprep.subr.bf16.mxu0 0
    %2286 = vmatpush1.bf16.msra.mxu0 %v2267
    %2287 = vmatprep.subr.bf16.mxu0 0
    %2288 = vmatpush1.bf16.msra.mxu0 %v2266
    %2289 = vmatprep.subr.bf16.mxu0 0
    %2290 = vmatpush1.bf16.msra.mxu0 %v2265
    %2291 = vmatprep.subr.bf16.mxu0 0
    %2292 = vmatpush1.bf16.msra.mxu0 %v2264
    %2293 = vmatprep.subr.bf16.mxu0 0
    %2294 = vmatpush1.bf16.msra.mxu0 %v2263
    %2295 = vmatprep.subr.bf16.mxu0 0
    %2296 = vmatpush2.bf16.msra.mxu0 0
    %2297 = vmatprep.subr.bf16.mxu0 0
    %2298 = vmatpush2.bf16.msra.mxu0 0
    %2299 = vmatprep.subr.bf16.mxu0 0
    %2300 = vmatpush2.bf16.msra.mxu0 0
    %2301 = vmatprep.subr.bf16.mxu0 0
    %2302 = vmatpush2.bf16.msra.mxu0 0
    %2303 = vmatprep.subr.bf16.mxu0 0
    %2304 = vmatpush2.bf16.msra.mxu0 0
    %2305 = vmatprep.subr.bf16.mxu0 0
    %2306 = vmatpush2.bf16.msra.mxu0 0
    %2307 = vmatprep.subr.bf16.mxu0 0
    %2308 = vmatpush2.bf16.msra.mxu0 0
    %2309 = vmatprep.subr.bf16.mxu0 0
    %2310 = vmatpush2.bf16.msra.mxu0 0
    %2311 = vmatprep.mubr.bf16.mxu0 0
    %2312 = vmatmul.mubr.bf16.gmra.mxu0 %v2224
    %v2313 = vpop.f32.mrf.mxu0
    %v2314 = vadd.f32 %v2229, %v2313
    %v2315 = vpop.f32.mrf.mxu0
    %v2316 = vpop.f32.mrf.mxu0
    %v2317 = vpop.f32.mrf.mxu0
    %2318 = vdwg.mxu0
    %v2319 = vadd.f32 %v2133, %v2314
    %v2320 = vsel %vm798, %v797, 0.0
    %2321 = vadd.xlane.f32.xlu0 %v2320
    %v2322 = vpop.xlane.xlu0 %2321
    %v2323 = vmul.f32 %v2322, %v802
    %v2324 = vsub.f32 %v797, %v2323
    %v2325 = vmul.f32 %v2324, %v2324
    %v2326 = vsel %vm798, %v2325, 0.0
    %2327 = vadd.xlane.f32.xlu0 %v2326
    %v2328 = vpop.xlane.xlu0 %2327
    %v2329 = vmul.f32 %v2328, %v802
    %v2330 = vadd.f32 %v2329, 1e-05
    %v2331 = vrsqrt.pop %v2330
    %v2332 = vmul.f32 %v2324, %v2331
    %v2333 = vlaneseq
    %v2334 = vshrl.u32 %v2333, 7
    %v2335 = vsub.s32 0, %v2334
    %v2336 = vrot.slane %v491, %v2335
    %v2337 = vmul.f32 %v2332, %v2336
    %v2338 = vlaneseq
    %v2339 = vshrl.u32 %v2338, 7
    %v2340 = vsub.s32 0, %v2339
    %v2341 = vrot.slane %v490, %v2340
    %v2342 = vadd.f32 %v2337, %v2341
    %v2343 = vpack.c.bf16 %v2342, %v2342
    %v2344 = vlaneseq
    %v2345 = vshrl.u32 %v2344, 7
    %v2346 = vsub.s32 0, %v2345
    %v2347 = vrot.slane %v466, %v2346
    %v2352 = vunpack.c.l.b16 %v512
    %v2353 = vunpack.c.l.b16 %v513
    %v2354 = vunpack.c.l.b16 %v514
    %v2355 = vunpack.c.l.b16 %v515
    %v2356 = vpack.c.b16 %v2353, %v2352
    %v2357 = vpack.c.b16 %v2355, %v2354
    %v2361 = vsel %vm798, %v2343, 0
    %2363 = vmatprep.subr.bf16.mxu0 0
    %2364 = vmatpush1.bf16.msra.mxu0 0
    %2365 = vmatprep.subr.bf16.mxu0 0
    %2366 = vmatpush1.bf16.msra.mxu0 0
    %2367 = vmatprep.subr.bf16.mxu0 0
    %2368 = vmatpush1.bf16.msra.mxu0 0
    %2369 = vmatprep.subr.bf16.mxu0 0
    %2370 = vmatpush1.bf16.msra.mxu0 0
    %2371 = vmatprep.subr.bf16.mxu0 0
    %2372 = vmatpush1.bf16.msra.mxu0 0
    %2373 = vmatprep.subr.bf16.mxu0 0
    %2374 = vmatpush1.bf16.msra.mxu0 0
    %2375 = vmatprep.subr.bf16.mxu0 0
    %2376 = vmatpush1.bf16.msra.mxu0 %v2357
    %2377 = vmatprep.subr.bf16.mxu0 0
    %2378 = vmatpush1.bf16.msra.mxu0 %v2356
    %2379 = vmatprep.subr.bf16.mxu0 0
    %2380 = vmatpush2.bf16.msra.mxu0 0
    %2381 = vmatprep.subr.bf16.mxu0 0
    %2382 = vmatpush2.bf16.msra.mxu0 0
    %2383 = vmatprep.subr.bf16.mxu0 0
    %2384 = vmatpush2.bf16.msra.mxu0 0
    %2385 = vmatprep.subr.bf16.mxu0 0
    %2386 = vmatpush2.bf16.msra.mxu0 0
    %2387 = vmatprep.subr.bf16.mxu0 0
    %2388 = vmatpush2.bf16.msra.mxu0 0
    %2389 = vmatprep.subr.bf16.mxu0 0
    %2390 = vmatpush2.bf16.msra.mxu0 0
    %2391 = vmatprep.subr.bf16.mxu0 0
    %2392 = vmatpush2.bf16.msra.mxu0 0
    %2393 = vmatprep.subr.bf16.mxu0 0
    %2394 = vmatpush2.bf16.msra.mxu0 0
    %2395 = vmatprep.mubr.bf16.mxu0 0
    %2396 = vmatmul.mubr.bf16.gmra.mxu0 %v2361
    %v2397 = vpop.f32.mrf.mxu0
    %v2398 = vadd.f32 %v2347, %v2397
    %v2399 = vpop.f32.mrf.mxu0
    %v2400 = vpop.f32.mrf.mxu0
    %v2401 = vpop.f32.mrf.mxu0
    %2402 = vdwg.mxu0
    %v2403 = vlaneseq
    %v2404 = vshrl.u32 %v2403, 7
    %v2405 = vsub.s32 0, %v2404
    %v2406 = vrot.slane %v464, %v2405
    %v2411 = vunpack.c.l.b16 %v492
    %v2412 = vunpack.c.l.b16 %v493
    %v2413 = vunpack.c.l.b16 %v494
    %v2414 = vunpack.c.l.b16 %v495
    %v2415 = vpack.c.b16 %v2412, %v2411
    %v2416 = vpack.c.b16 %v2414, %v2413
    %2419 = vmatprep.subr.bf16.mxu0 0
    %2420 = vmatpush1.bf16.msra.mxu0 0
    %2421 = vmatprep.subr.bf16.mxu0 0
    %2422 = vmatpush1.bf16.msra.mxu0 0
    %2423 = vmatprep.subr.bf16.mxu0 0
    %2424 = vmatpush1.bf16.msra.mxu0 0
    %2425 = vmatprep.subr.bf16.mxu0 0
    %2426 = vmatpush1.bf16.msra.mxu0 0
    %2427 = vmatprep.subr.bf16.mxu0 0
    %2428 = vmatpush1.bf16.msra.mxu0 0
    %2429 = vmatprep.subr.bf16.mxu0 0
    %2430 = vmatpush1.bf16.msra.mxu0 0
    %2431 = vmatprep.subr.bf16.mxu0 0
    %2432 = vmatpush1.bf16.msra.mxu0 %v2416
    %2433 = vmatprep.subr.bf16.mxu0 0
    %2434 = vmatpush1.bf16.msra.mxu0 %v2415
    %2435 = vmatprep.subr.bf16.mxu0 0
    %2436 = vmatpush2.bf16.msra.mxu0 0
    %2437 = vmatprep.subr.bf16.mxu0 0
    %2438 = vmatpush2.bf16.msra.mxu0 0
    %2439 = vmatprep.subr.bf16.mxu0 0
    %2440 = vmatpush2.bf16.msra.mxu0 0
    %2441 = vmatprep.subr.bf16.mxu0 0
    %2442 = vmatpush2.bf16.msra.mxu0 0
    %2443 = vmatprep.subr.bf16.mxu0 0
    %2444 = vmatpush2.bf16.msra.mxu0 0
    %2445 = vmatprep.subr.bf16.mxu0 0
    %2446 = vmatpush2.bf16.msra.mxu0 0
    %2447 = vmatprep.subr.bf16.mxu0 0
    %2448 = vmatpush2.bf16.msra.mxu0 0
    %2449 = vmatprep.subr.bf16.mxu0 0
    %2450 = vmatpush2.bf16.msra.mxu0 0
    %2451 = vmatprep.mubr.bf16.mxu0 0
    %2452 = vmatmul.mubr.bf16.gmra.mxu0 %v2361
    %v2453 = vpop.f32.mrf.mxu0
    %v2454 = vadd.f32 %v2406, %v2453
    %v2455 = vpop.f32.mrf.mxu0
    %v2456 = vpop.f32.mrf.mxu0
    %v2457 = vpop.f32.mrf.mxu0
    %2458 = vdwg.mxu0
    %v2459 = vlaneseq
    %v2460 = vshrl.u32 %v2459, 7
    %v2461 = vsub.s32 0, %v2460
    %v2462 = vrot.slane %v467, %v2461
    %v2467 = vunpack.c.l.b16 %v528
    %v2468 = vunpack.c.l.b16 %v529
    %v2469 = vunpack.c.l.b16 %v530
    %v2470 = vunpack.c.l.b16 %v531
    %v2471 = vpack.c.b16 %v2468, %v2467
    %v2472 = vpack.c.b16 %v2470, %v2469
    %2475 = vmatprep.subr.bf16.mxu0 0
    %2476 = vmatpush1.bf16.msra.mxu0 0
    %2477 = vmatprep.subr.bf16.mxu0 0
    %2478 = vmatpush1.bf16.msra.mxu0 0
    %2479 = vmatprep.subr.bf16.mxu0 0
    %2480 = vmatpush1.bf16.msra.mxu0 0
    %2481 = vmatprep.subr.bf16.mxu0 0
    %2482 = vmatpush1.bf16.msra.mxu0 0
    %2483 = vmatprep.subr.bf16.mxu0 0
    %2484 = vmatpush1.bf16.msra.mxu0 0
    %2485 = vmatprep.subr.bf16.mxu0 0
    %2486 = vmatpush1.bf16.msra.mxu0 0
    %2487 = vmatprep.subr.bf16.mxu0 0
    %2488 = vmatpush1.bf16.msra.mxu0 %v2472
    %2489 = vmatprep.subr.bf16.mxu0 0
    %2490 = vmatpush1.bf16.msra.mxu0 %v2471
    %2491 = vmatprep.subr.bf16.mxu0 0
    %2492 = vmatpush2.bf16.msra.mxu0 0
    %2493 = vmatprep.subr.bf16.mxu0 0
    %2494 = vmatpush2.bf16.msra.mxu0 0
    %2495 = vmatprep.subr.bf16.mxu0 0
    %2496 = vmatpush2.bf16.msra.mxu0 0
    %2497 = vmatprep.subr.bf16.mxu0 0
    %2498 = vmatpush2.bf16.msra.mxu0 0
    %2499 = vmatprep.subr.bf16.mxu0 0
    %2500 = vmatpush2.bf16.msra.mxu0 0
    %2501 = vmatprep.subr.bf16.mxu0 0
    %2502 = vmatpush2.bf16.msra.mxu0 0
    %2503 = vmatprep.subr.bf16.mxu0 0
    %2504 = vmatpush2.bf16.msra.mxu0 0
    %2505 = vmatprep.subr.bf16.mxu0 0
    %2506 = vmatpush2.bf16.msra.mxu0 0
    %2507 = vmatprep.mubr.bf16.mxu0 0
    %2508 = vmatmul.mubr.bf16.gmra.mxu0 %v2361
    %v2509 = vpop.f32.mrf.mxu0
    %v2510 = vadd.f32 %v2462, %v2509
    %v2511 = vpop.f32.mrf.mxu0
    %v2512 = vpop.f32.mrf.mxu0
    %v2513 = vpop.f32.mrf.mxu0
    %2514 = vdwg.mxu0
    %v2515 = vpack.c.bf16 %v2398, %v2398
    %v2516 = vpack.c.bf16 %v2454, %v2454
    %v2518 = vsel %vm997, %v2515, 0
    %v2521 = vsel %vm997, %v2516, 0
    %2523 = vmatprep.subr.bf16.mxu0 0
    %2524 = vmatpush1.bf16.xpose.msra.mxu0 0
    %2525 = vmatprep.subr.bf16.mxu0 0
    %2526 = vmatpush1.bf16.xpose.msra.mxu0 0
    %2527 = vmatprep.subr.bf16.mxu0 0
    %2528 = vmatpush1.bf16.xpose.msra.mxu0 0
    %2529 = vmatprep.subr.bf16.mxu0 0
    %2530 = vmatpush1.bf16.xpose.msra.mxu0 0
    %2531 = vmatprep.subr.bf16.mxu0 0
    %2532 = vmatpush1.bf16.xpose.msra.mxu0 0
    %2533 = vmatprep.subr.bf16.mxu0 0
    %2534 = vmatpush1.bf16.xpose.msra.mxu0 0
    %2535 = vmatprep.subr.bf16.mxu0 0
    %2536 = vmatpush1.bf16.xpose.msra.mxu0 0
    %2537 = vmatprep.subr.bf16.mxu0 0
    %2538 = vmatpush1.bf16.xpose.msra.mxu0 %v2521
    %2539 = vmatprep.subr.bf16.mxu0 0
    %2540 = vmatpush2.bf16.xpose.msra.mxu0 0
    %2541 = vmatprep.subr.bf16.mxu0 0
    %2542 = vmatpush2.bf16.xpose.msra.mxu0 0
    %2543 = vmatprep.subr.bf16.mxu0 0
    %2544 = vmatpush2.bf16.xpose.msra.mxu0 0
    %2545 = vmatprep.subr.bf16.mxu0 0
    %2546 = vmatpush2.bf16.xpose.msra.mxu0 0
    %2547 = vmatprep.subr.bf16.mxu0 0
    %2548 = vmatpush2.bf16.xpose.msra.mxu0 0
    %2549 = vmatprep.subr.bf16.mxu0 0
    %2550 = vmatpush2.bf16.xpose.msra.mxu0 0
    %2551 = vmatprep.subr.bf16.mxu0 0
    %2552 = vmatpush2.bf16.xpose.msra.mxu0 0
    %2553 = vmatprep.subr.bf16.mxu0 0
    %2554 = vmatpush2.bf16.xpose.msra.mxu0 0
    %2555 = vmatprep.mubr.bf16.mxu0 0
    %2556 = vmatmul.mubr.bf16.gmra.mxu0 %v2518
    %v2557 = vpop.f32.mrf.mxu0
    %v2558 = vadd.f32 0.0, %v2557
    %v2559 = vpop.f32.mrf.mxu0
    %v2560 = vpop.f32.mrf.mxu0
    %v2561 = vpop.f32.mrf.mxu0
    %2562 = vdwg.mxu0
    %v2563 = vmul.f32 %v2558, 0.35355338
    %v2564 = vadd.f32 %v2563, %v549
    %v2565 = vsel %vm997, %v2564, -inf
    %2566 = vmax.xlane.f32.xlu0 %v2565
    %v2567 = vpop.xlane.xlu0 %2566
    %v2568 = vsub.f32 %v2564, %v2567
    %v2569 = vmul.f32 %v2568, 1.442695
    %v2570 = vpow.pop %v2569
    %v2571 = vsel %vm997, %v2570, 0.0
    %2572 = vadd.xlane.f32.xlu0 %v2571
    %v2573 = vpop.xlane.xlu0 %2572
    %v2574 = vrcp.pop %v2573
    %v2575 = vmul.f32 %v2570, %v2574
    %v2576 = vpack.c.bf16 %v2575, %v2575
    %v2577 = vpack.c.bf16 %v2510, %v2510
    %v2579 = vsel %vm997, %v2576, 0
    %v2582 = vsel %vm665, %v2577, 0
    %2584 = vmatprep.subr.bf16.mxu0 0
    %2585 = vmatpush1.bf16.msra.mxu0 0
    %2586 = vmatprep.subr.bf16.mxu0 0
    %2587 = vmatpush1.bf16.msra.mxu0 0
    %2588 = vmatprep.subr.bf16.mxu0 0
    %2589 = vmatpush1.bf16.msra.mxu0 0
    %2590 = vmatprep.subr.bf16.mxu0 0
    %2591 = vmatpush1.bf16.msra.mxu0 0
    %2592 = vmatprep.subr.bf16.mxu0 0
    %2593 = vmatpush1.bf16.msra.mxu0 0
    %2594 = vmatprep.subr.bf16.mxu0 0
    %2595 = vmatpush1.bf16.msra.mxu0 0
    %2596 = vmatprep.subr.bf16.mxu0 0
    %2597 = vmatpush1.bf16.msra.mxu0 0
    %2598 = vmatprep.subr.bf16.mxu0 0
    %2599 = vmatpush1.bf16.msra.mxu0 %v2582
    %2600 = vmatprep.subr.bf16.mxu0 0
    %2601 = vmatpush2.bf16.msra.mxu0 0
    %2602 = vmatprep.subr.bf16.mxu0 0
    %2603 = vmatpush2.bf16.msra.mxu0 0
    %2604 = vmatprep.subr.bf16.mxu0 0
    %2605 = vmatpush2.bf16.msra.mxu0 0
    %2606 = vmatprep.subr.bf16.mxu0 0
    %2607 = vmatpush2.bf16.msra.mxu0 0
    %2608 = vmatprep.subr.bf16.mxu0 0
    %2609 = vmatpush2.bf16.msra.mxu0 0
    %2610 = vmatprep.subr.bf16.mxu0 0
    %2611 = vmatpush2.bf16.msra.mxu0 0
    %2612 = vmatprep.subr.bf16.mxu0 0
    %2613 = vmatpush2.bf16.msra.mxu0 0
    %2614 = vmatprep.subr.bf16.mxu0 0
    %2615 = vmatpush2.bf16.msra.mxu0 0
    %2616 = vmatprep.mubr.bf16.mxu0 0
    %2617 = vmatmul.mubr.bf16.gmra.mxu0 %v2579
    %v2618 = vpop.f32.mrf.mxu0
    %v2619 = vadd.f32 0.0, %v2618
    %v2620 = vpop.f32.mrf.mxu0
    %v2621 = vpop.f32.mrf.mxu0
    %v2622 = vpop.f32.mrf.mxu0
    %2623 = vdwg.mxu0
    %v2624 = vpack.c.bf16 %v2619, %v2619
    %v2625 = vlaneseq
    %v2626 = vshrl.u32 %v2625, 7
    %v2627 = vsub.s32 1, %v2626
    %v2628 = vrot.slane %v466, %v2627
    %v2633 = vunpack.c.l.b16 %v516
    %v2634 = vunpack.c.l.b16 %v517
    %v2635 = vunpack.c.l.b16 %v518
    %v2636 = vunpack.c.l.b16 %v519
    %v2637 = vpack.c.b16 %v2634, %v2633
    %v2638 = vpack.c.b16 %v2636, %v2635
    %2641 = vmatprep.subr.bf16.mxu0 0
    %2642 = vmatpush1.bf16.msra.mxu0 0
    %2643 = vmatprep.subr.bf16.mxu0 0
    %2644 = vmatpush1.bf16.msra.mxu0 0
    %2645 = vmatprep.subr.bf16.mxu0 0
    %2646 = vmatpush1.bf16.msra.mxu0 0
    %2647 = vmatprep.subr.bf16.mxu0 0
    %2648 = vmatpush1.bf16.msra.mxu0 0
    %2649 = vmatprep.subr.bf16.mxu0 0
    %2650 = vmatpush1.bf16.msra.mxu0 0
    %2651 = vmatprep.subr.bf16.mxu0 0
    %2652 = vmatpush1.bf16.msra.mxu0 0
    %2653 = vmatprep.subr.bf16.mxu0 0
    %2654 = vmatpush1.bf16.msra.mxu0 %v2638
    %2655 = vmatprep.subr.bf16.mxu0 0
    %2656 = vmatpush1.bf16.msra.mxu0 %v2637
    %2657 = vmatprep.subr.bf16.mxu0 0
    %2658 = vmatpush2.bf16.msra.mxu0 0
    %2659 = vmatprep.subr.bf16.mxu0 0
    %2660 = vmatpush2.bf16.msra.mxu0 0
    %2661 = vmatprep.subr.bf16.mxu0 0
    %2662 = vmatpush2.bf16.msra.mxu0 0
    %2663 = vmatprep.subr.bf16.mxu0 0
    %2664 = vmatpush2.bf16.msra.mxu0 0
    %2665 = vmatprep.subr.bf16.mxu0 0
    %2666 = vmatpush2.bf16.msra.mxu0 0
    %2667 = vmatprep.subr.bf16.mxu0 0
    %2668 = vmatpush2.bf16.msra.mxu0 0
    %2669 = vmatprep.subr.bf16.mxu0 0
    %2670 = vmatpush2.bf16.msra.mxu0 0
    %2671 = vmatprep.subr.bf16.mxu0 0
    %2672 = vmatpush2.bf16.msra.mxu0 0
    %2673 = vmatprep.mubr.bf16.mxu0 0
    %2674 = vmatmul.mubr.bf16.gmra.mxu0 %v2361
    %v2675 = vpop.f32.mrf.mxu0
    %v2676 = vadd.f32 %v2628, %v2675
    %v2677 = vpop.f32.mrf.mxu0
    %v2678 = vpop.f32.mrf.mxu0
    %v2679 = vpop.f32.mrf.mxu0
    %2680 = vdwg.mxu0
    %v2681 = vlaneseq
    %v2682 = vshrl.u32 %v2681, 7
    %v2683 = vsub.s32 1, %v2682
    %v2684 = vrot.slane %v464, %v2683
    %v2689 = vunpack.c.l.b16 %v496
    %v2690 = vunpack.c.l.b16 %v497
    %v2691 = vunpack.c.l.b16 %v498
    %v2692 = vunpack.c.l.b16 %v499
    %v2693 = vpack.c.b16 %v2690, %v2689
    %v2694 = vpack.c.b16 %v2692, %v2691
    %2697 = vmatprep.subr.bf16.mxu0 0
    %2698 = vmatpush1.bf16.msra.mxu0 0
    %2699 = vmatprep.subr.bf16.mxu0 0
    %2700 = vmatpush1.bf16.msra.mxu0 0
    %2701 = vmatprep.subr.bf16.mxu0 0
    %2702 = vmatpush1.bf16.msra.mxu0 0
    %2703 = vmatprep.subr.bf16.mxu0 0
    %2704 = vmatpush1.bf16.msra.mxu0 0
    %2705 = vmatprep.subr.bf16.mxu0 0
    %2706 = vmatpush1.bf16.msra.mxu0 0
    %2707 = vmatprep.subr.bf16.mxu0 0
    %2708 = vmatpush1.bf16.msra.mxu0 0
    %2709 = vmatprep.subr.bf16.mxu0 0
    %2710 = vmatpush1.bf16.msra.mxu0 %v2694
    %2711 = vmatprep.subr.bf16.mxu0 0
    %2712 = vmatpush1.bf16.msra.mxu0 %v2693
    %2713 = vmatprep.subr.bf16.mxu0 0
    %2714 = vmatpush2.bf16.msra.mxu0 0
    %2715 = vmatprep.subr.bf16.mxu0 0
    %2716 = vmatpush2.bf16.msra.mxu0 0
    %2717 = vmatprep.subr.bf16.mxu0 0
    %2718 = vmatpush2.bf16.msra.mxu0 0
    %2719 = vmatprep.subr.bf16.mxu0 0
    %2720 = vmatpush2.bf16.msra.mxu0 0
    %2721 = vmatprep.subr.bf16.mxu0 0
    %2722 = vmatpush2.bf16.msra.mxu0 0
    %2723 = vmatprep.subr.bf16.mxu0 0
    %2724 = vmatpush2.bf16.msra.mxu0 0
    %2725 = vmatprep.subr.bf16.mxu0 0
    %2726 = vmatpush2.bf16.msra.mxu0 0
    %2727 = vmatprep.subr.bf16.mxu0 0
    %2728 = vmatpush2.bf16.msra.mxu0 0
    %2729 = vmatprep.mubr.bf16.mxu0 0
    %2730 = vmatmul.mubr.bf16.gmra.mxu0 %v2361
    %v2731 = vpop.f32.mrf.mxu0
    %v2732 = vadd.f32 %v2684, %v2731
    %v2733 = vpop.f32.mrf.mxu0
    %v2734 = vpop.f32.mrf.mxu0
    %v2735 = vpop.f32.mrf.mxu0
    %2736 = vdwg.mxu0
    %v2737 = vlaneseq
    %v2738 = vshrl.u32 %v2737, 7
    %v2739 = vsub.s32 1, %v2738
    %v2740 = vrot.slane %v467, %v2739
    %v2745 = vunpack.c.l.b16 %v532
    %v2746 = vunpack.c.l.b16 %v533
    %v2747 = vunpack.c.l.b16 %v534
    %v2748 = vunpack.c.l.b16 %v535
    %v2749 = vpack.c.b16 %v2746, %v2745
    %v2750 = vpack.c.b16 %v2748, %v2747
    %2753 = vmatprep.subr.bf16.mxu0 0
    %2754 = vmatpush1.bf16.msra.mxu0 0
    %2755 = vmatprep.subr.bf16.mxu0 0
    %2756 = vmatpush1.bf16.msra.mxu0 0
    %2757 = vmatprep.subr.bf16.mxu0 0
    %2758 = vmatpush1.bf16.msra.mxu0 0
    %2759 = vmatprep.subr.bf16.mxu0 0
    %2760 = vmatpush1.bf16.msra.mxu0 0
    %2761 = vmatprep.subr.bf16.mxu0 0
    %2762 = vmatpush1.bf16.msra.mxu0 0
    %2763 = vmatprep.subr.bf16.mxu0 0
    %2764 = vmatpush1.bf16.msra.mxu0 0
    %2765 = vmatprep.subr.bf16.mxu0 0
    %2766 = vmatpush1.bf16.msra.mxu0 %v2750
    %2767 = vmatprep.subr.bf16.mxu0 0
    %2768 = vmatpush1.bf16.msra.mxu0 %v2749
    %2769 = vmatprep.subr.bf16.mxu0 0
    %2770 = vmatpush2.bf16.msra.mxu0 0
    %2771 = vmatprep.subr.bf16.mxu0 0
    %2772 = vmatpush2.bf16.msra.mxu0 0
    %2773 = vmatprep.subr.bf16.mxu0 0
    %2774 = vmatpush2.bf16.msra.mxu0 0
    %2775 = vmatprep.subr.bf16.mxu0 0
    %2776 = vmatpush2.bf16.msra.mxu0 0
    %2777 = vmatprep.subr.bf16.mxu0 0
    %2778 = vmatpush2.bf16.msra.mxu0 0
    %2779 = vmatprep.subr.bf16.mxu0 0
    %2780 = vmatpush2.bf16.msra.mxu0 0
    %2781 = vmatprep.subr.bf16.mxu0 0
    %2782 = vmatpush2.bf16.msra.mxu0 0
    %2783 = vmatprep.subr.bf16.mxu0 0
    %2784 = vmatpush2.bf16.msra.mxu0 0
    %2785 = vmatprep.mubr.bf16.mxu0 0
    %2786 = vmatmul.mubr.bf16.gmra.mxu0 %v2361
    %v2787 = vpop.f32.mrf.mxu0
    %v2788 = vadd.f32 %v2740, %v2787
    %v2789 = vpop.f32.mrf.mxu0
    %v2790 = vpop.f32.mrf.mxu0
    %v2791 = vpop.f32.mrf.mxu0
    %2792 = vdwg.mxu0
    %v2793 = vpack.c.bf16 %v2676, %v2676
    %v2794 = vpack.c.bf16 %v2732, %v2732
    %v2796 = vsel %vm997, %v2793, 0
    %v2799 = vsel %vm997, %v2794, 0
    %2801 = vmatprep.subr.bf16.mxu0 0
    %2802 = vmatpush1.bf16.xpose.msra.mxu0 0
    %2803 = vmatprep.subr.bf16.mxu0 0
    %2804 = vmatpush1.bf16.xpose.msra.mxu0 0
    %2805 = vmatprep.subr.bf16.mxu0 0
    %2806 = vmatpush1.bf16.xpose.msra.mxu0 0
    %2807 = vmatprep.subr.bf16.mxu0 0
    %2808 = vmatpush1.bf16.xpose.msra.mxu0 0
    %2809 = vmatprep.subr.bf16.mxu0 0
    %2810 = vmatpush1.bf16.xpose.msra.mxu0 0
    %2811 = vmatprep.subr.bf16.mxu0 0
    %2812 = vmatpush1.bf16.xpose.msra.mxu0 0
    %2813 = vmatprep.subr.bf16.mxu0 0
    %2814 = vmatpush1.bf16.xpose.msra.mxu0 0
    %2815 = vmatprep.subr.bf16.mxu0 0
    %2816 = vmatpush1.bf16.xpose.msra.mxu0 %v2799
    %2817 = vmatprep.subr.bf16.mxu0 0
    %2818 = vmatpush2.bf16.xpose.msra.mxu0 0
    %2819 = vmatprep.subr.bf16.mxu0 0
    %2820 = vmatpush2.bf16.xpose.msra.mxu0 0
    %2821 = vmatprep.subr.bf16.mxu0 0
    %2822 = vmatpush2.bf16.xpose.msra.mxu0 0
    %2823 = vmatprep.subr.bf16.mxu0 0
    %2824 = vmatpush2.bf16.xpose.msra.mxu0 0
    %2825 = vmatprep.subr.bf16.mxu0 0
    %2826 = vmatpush2.bf16.xpose.msra.mxu0 0
    %2827 = vmatprep.subr.bf16.mxu0 0
    %2828 = vmatpush2.bf16.xpose.msra.mxu0 0
    %2829 = vmatprep.subr.bf16.mxu0 0
    %2830 = vmatpush2.bf16.xpose.msra.mxu0 0
    %2831 = vmatprep.subr.bf16.mxu0 0
    %2832 = vmatpush2.bf16.xpose.msra.mxu0 0
    %2833 = vmatprep.mubr.bf16.mxu0 0
    %2834 = vmatmul.mubr.bf16.gmra.mxu0 %v2796
    %v2835 = vpop.f32.mrf.mxu0
    %v2836 = vadd.f32 0.0, %v2835
    %v2837 = vpop.f32.mrf.mxu0
    %v2838 = vpop.f32.mrf.mxu0
    %v2839 = vpop.f32.mrf.mxu0
    %2840 = vdwg.mxu0
    %v2841 = vmul.f32 %v2836, 0.35355338
    %v2842 = vadd.f32 %v2841, %v549
    %v2843 = vsel %vm997, %v2842, -inf
    %2844 = vmax.xlane.f32.xlu0 %v2843
    %v2845 = vpop.xlane.xlu0 %2844
    %v2846 = vsub.f32 %v2842, %v2845
    %v2847 = vmul.f32 %v2846, 1.442695
    %v2848 = vpow.pop %v2847
    %v2849 = vsel %vm997, %v2848, 0.0
    %2850 = vadd.xlane.f32.xlu0 %v2849
    %v2851 = vpop.xlane.xlu0 %2850
    %v2852 = vrcp.pop %v2851
    %v2853 = vmul.f32 %v2848, %v2852
    %v2854 = vpack.c.bf16 %v2853, %v2853
    %v2855 = vpack.c.bf16 %v2788, %v2788
    %v2857 = vsel %vm997, %v2854, 0
    %v2860 = vsel %vm665, %v2855, 0
    %2862 = vmatprep.subr.bf16.mxu0 0
    %2863 = vmatpush1.bf16.msra.mxu0 0
    %2864 = vmatprep.subr.bf16.mxu0 0
    %2865 = vmatpush1.bf16.msra.mxu0 0
    %2866 = vmatprep.subr.bf16.mxu0 0
    %2867 = vmatpush1.bf16.msra.mxu0 0
    %2868 = vmatprep.subr.bf16.mxu0 0
    %2869 = vmatpush1.bf16.msra.mxu0 0
    %2870 = vmatprep.subr.bf16.mxu0 0
    %2871 = vmatpush1.bf16.msra.mxu0 0
    %2872 = vmatprep.subr.bf16.mxu0 0
    %2873 = vmatpush1.bf16.msra.mxu0 0
    %2874 = vmatprep.subr.bf16.mxu0 0
    %2875 = vmatpush1.bf16.msra.mxu0 0
    %2876 = vmatprep.subr.bf16.mxu0 0
    %2877 = vmatpush1.bf16.msra.mxu0 %v2860
    %2878 = vmatprep.subr.bf16.mxu0 0
    %2879 = vmatpush2.bf16.msra.mxu0 0
    %2880 = vmatprep.subr.bf16.mxu0 0
    %2881 = vmatpush2.bf16.msra.mxu0 0
    %2882 = vmatprep.subr.bf16.mxu0 0
    %2883 = vmatpush2.bf16.msra.mxu0 0
    %2884 = vmatprep.subr.bf16.mxu0 0
    %2885 = vmatpush2.bf16.msra.mxu0 0
    %2886 = vmatprep.subr.bf16.mxu0 0
    %2887 = vmatpush2.bf16.msra.mxu0 0
    %2888 = vmatprep.subr.bf16.mxu0 0
    %2889 = vmatpush2.bf16.msra.mxu0 0
    %2890 = vmatprep.subr.bf16.mxu0 0
    %2891 = vmatpush2.bf16.msra.mxu0 0
    %2892 = vmatprep.subr.bf16.mxu0 0
    %2893 = vmatpush2.bf16.msra.mxu0 0
    %2894 = vmatprep.mubr.bf16.mxu0 0
    %2895 = vmatmul.mubr.bf16.gmra.mxu0 %v2857
    %v2896 = vpop.f32.mrf.mxu0
    %v2897 = vadd.f32 0.0, %v2896
    %v2898 = vpop.f32.mrf.mxu0
    %v2899 = vpop.f32.mrf.mxu0
    %v2900 = vpop.f32.mrf.mxu0
    %2901 = vdwg.mxu0
    %v2902 = vpack.c.bf16 %v2897, %v2897
    %v2904 = vsel %vm997, %v2902, 0
    %v2907 = vsel %vm665, %v509, 0
    %2909 = vmatprep.subr.bf16.mxu0 0
    %2910 = vmatpush1.bf16.msra.mxu0 0
    %2911 = vmatprep.subr.bf16.mxu0 0
    %2912 = vmatpush1.bf16.msra.mxu0 0
    %2913 = vmatprep.subr.bf16.mxu0 0
    %2914 = vmatpush1.bf16.msra.mxu0 0
    %2915 = vmatprep.subr.bf16.mxu0 0
    %2916 = vmatpush1.bf16.msra.mxu0 0
    %2917 = vmatprep.subr.bf16.mxu0 0
    %2918 = vmatpush1.bf16.msra.mxu0 0
    %2919 = vmatprep.subr.bf16.mxu0 0
    %2920 = vmatpush1.bf16.msra.mxu0 0
    %2921 = vmatprep.subr.bf16.mxu0 0
    %2922 = vmatpush1.bf16.msra.mxu0 0
    %2923 = vmatprep.subr.bf16.mxu0 0
    %2924 = vmatpush1.bf16.msra.mxu0 %v2907
    %2925 = vmatprep.subr.bf16.mxu0 0
    %2926 = vmatpush2.bf16.msra.mxu0 0
    %2927 = vmatprep.subr.bf16.mxu0 0
    %2928 = vmatpush2.bf16.msra.mxu0 0
    %2929 = vmatprep.subr.bf16.mxu0 0
    %2930 = vmatpush2.bf16.msra.mxu0 0
    %2931 = vmatprep.subr.bf16.mxu0 0
    %2932 = vmatpush2.bf16.msra.mxu0 0
    %2933 = vmatprep.subr.bf16.mxu0 0
    %2934 = vmatpush2.bf16.msra.mxu0 0
    %2935 = vmatprep.subr.bf16.mxu0 0
    %2936 = vmatpush2.bf16.msra.mxu0 0
    %2937 = vmatprep.subr.bf16.mxu0 0
    %2938 = vmatpush2.bf16.msra.mxu0 0
    %2939 = vmatprep.subr.bf16.mxu0 0
    %2940 = vmatpush2.bf16.msra.mxu0 0
    %2941 = vmatprep.mubr.bf16.mxu0 0
    %2942 = vmatmul.mubr.bf16.gmra.mxu0 %v2904
    %v2943 = vpop.f32.mrf.mxu0
    %v2944 = vadd.f32 0.0, %v2943
    %v2945 = vpop.f32.mrf.mxu0
    %v2946 = vpop.f32.mrf.mxu0
    %v2947 = vpop.f32.mrf.mxu0
    %2948 = vdwg.mxu0
    %v2950 = vsel %vm997, %v2624, 0
    %v2953 = vsel %vm665, %v508, 0
    %2955 = vmatprep.subr.bf16.mxu0 0
    %2956 = vmatpush1.bf16.msra.mxu0 0
    %2957 = vmatprep.subr.bf16.mxu0 0
    %2958 = vmatpush1.bf16.msra.mxu0 0
    %2959 = vmatprep.subr.bf16.mxu0 0
    %2960 = vmatpush1.bf16.msra.mxu0 0
    %2961 = vmatprep.subr.bf16.mxu0 0
    %2962 = vmatpush1.bf16.msra.mxu0 0
    %2963 = vmatprep.subr.bf16.mxu0 0
    %2964 = vmatpush1.bf16.msra.mxu0 0
    %2965 = vmatprep.subr.bf16.mxu0 0
    %2966 = vmatpush1.bf16.msra.mxu0 0
    %2967 = vmatprep.subr.bf16.mxu0 0
    %2968 = vmatpush1.bf16.msra.mxu0 0
    %2969 = vmatprep.subr.bf16.mxu0 0
    %2970 = vmatpush1.bf16.msra.mxu0 %v2953
    %2971 = vmatprep.subr.bf16.mxu0 0
    %2972 = vmatpush2.bf16.msra.mxu0 0
    %2973 = vmatprep.subr.bf16.mxu0 0
    %2974 = vmatpush2.bf16.msra.mxu0 0
    %2975 = vmatprep.subr.bf16.mxu0 0
    %2976 = vmatpush2.bf16.msra.mxu0 0
    %2977 = vmatprep.subr.bf16.mxu0 0
    %2978 = vmatpush2.bf16.msra.mxu0 0
    %2979 = vmatprep.subr.bf16.mxu0 0
    %2980 = vmatpush2.bf16.msra.mxu0 0
    %2981 = vmatprep.subr.bf16.mxu0 0
    %2982 = vmatpush2.bf16.msra.mxu0 0
    %2983 = vmatprep.subr.bf16.mxu0 0
    %2984 = vmatpush2.bf16.msra.mxu0 0
    %2985 = vmatprep.subr.bf16.mxu0 0
    %2986 = vmatpush2.bf16.msra.mxu0 0
    %2987 = vmatprep.mubr.bf16.mxu0 0
    %2988 = vmatmul.mubr.bf16.gmra.mxu0 %v2950
    %v2989 = vpop.f32.mrf.mxu0
    %v2990 = vadd.f32 %v2944, %v2989
    %v2991 = vpop.f32.mrf.mxu0
    %v2992 = vpop.f32.mrf.mxu0
    %v2993 = vpop.f32.mrf.mxu0
    %2994 = vdwg.mxu0
    %v2995 = vlaneseq
    %v2996 = vshrl.u32 %v2995, 7
    %v2997 = vsub.s32 2, %v2996
    %v2998 = vrot.slane %v466, %v2997
    %v3003 = vunpack.c.l.b16 %v520
    %v3004 = vunpack.c.l.b16 %v521
    %v3005 = vunpack.c.l.b16 %v522
    %v3006 = vunpack.c.l.b16 %v523
    %v3007 = vpack.c.b16 %v3004, %v3003
    %v3008 = vpack.c.b16 %v3006, %v3005
    %3011 = vmatprep.subr.bf16.mxu0 0
    %3012 = vmatpush1.bf16.msra.mxu0 0
    %3013 = vmatprep.subr.bf16.mxu0 0
    %3014 = vmatpush1.bf16.msra.mxu0 0
    %3015 = vmatprep.subr.bf16.mxu0 0
    %3016 = vmatpush1.bf16.msra.mxu0 0
    %3017 = vmatprep.subr.bf16.mxu0 0
    %3018 = vmatpush1.bf16.msra.mxu0 0
    %3019 = vmatprep.subr.bf16.mxu0 0
    %3020 = vmatpush1.bf16.msra.mxu0 0
    %3021 = vmatprep.subr.bf16.mxu0 0
    %3022 = vmatpush1.bf16.msra.mxu0 0
    %3023 = vmatprep.subr.bf16.mxu0 0
    %3024 = vmatpush1.bf16.msra.mxu0 %v3008
    %3025 = vmatprep.subr.bf16.mxu0 0
    %3026 = vmatpush1.bf16.msra.mxu0 %v3007
    %3027 = vmatprep.subr.bf16.mxu0 0
    %3028 = vmatpush2.bf16.msra.mxu0 0
    %3029 = vmatprep.subr.bf16.mxu0 0
    %3030 = vmatpush2.bf16.msra.mxu0 0
    %3031 = vmatprep.subr.bf16.mxu0 0
    %3032 = vmatpush2.bf16.msra.mxu0 0
    %3033 = vmatprep.subr.bf16.mxu0 0
    %3034 = vmatpush2.bf16.msra.mxu0 0
    %3035 = vmatprep.subr.bf16.mxu0 0
    %3036 = vmatpush2.bf16.msra.mxu0 0
    %3037 = vmatprep.subr.bf16.mxu0 0
    %3038 = vmatpush2.bf16.msra.mxu0 0
    %3039 = vmatprep.subr.bf16.mxu0 0
    %3040 = vmatpush2.bf16.msra.mxu0 0
    %3041 = vmatprep.subr.bf16.mxu0 0
    %3042 = vmatpush2.bf16.msra.mxu0 0
    %3043 = vmatprep.mubr.bf16.mxu0 0
    %3044 = vmatmul.mubr.bf16.gmra.mxu0 %v2361
    %v3045 = vpop.f32.mrf.mxu0
    %v3046 = vadd.f32 %v2998, %v3045
    %v3047 = vpop.f32.mrf.mxu0
    %v3048 = vpop.f32.mrf.mxu0
    %v3049 = vpop.f32.mrf.mxu0
    %3050 = vdwg.mxu0
    %v3051 = vlaneseq
    %v3052 = vshrl.u32 %v3051, 7
    %v3053 = vsub.s32 2, %v3052
    %v3054 = vrot.slane %v464, %v3053
    %v3059 = vunpack.c.l.b16 %v500
    %v3060 = vunpack.c.l.b16 %v501
    %v3061 = vunpack.c.l.b16 %v502
    %v3062 = vunpack.c.l.b16 %v503
    %v3063 = vpack.c.b16 %v3060, %v3059
    %v3064 = vpack.c.b16 %v3062, %v3061
    %3067 = vmatprep.subr.bf16.mxu0 0
    %3068 = vmatpush1.bf16.msra.mxu0 0
    %3069 = vmatprep.subr.bf16.mxu0 0
    %3070 = vmatpush1.bf16.msra.mxu0 0
    %3071 = vmatprep.subr.bf16.mxu0 0
    %3072 = vmatpush1.bf16.msra.mxu0 0
    %3073 = vmatprep.subr.bf16.mxu0 0
    %3074 = vmatpush1.bf16.msra.mxu0 0
    %3075 = vmatprep.subr.bf16.mxu0 0
    %3076 = vmatpush1.bf16.msra.mxu0 0
    %3077 = vmatprep.subr.bf16.mxu0 0
    %3078 = vmatpush1.bf16.msra.mxu0 0
    %3079 = vmatprep.subr.bf16.mxu0 0
    %3080 = vmatpush1.bf16.msra.mxu0 %v3064
    %3081 = vmatprep.subr.bf16.mxu0 0
    %3082 = vmatpush1.bf16.msra.mxu0 %v3063
    %3083 = vmatprep.subr.bf16.mxu0 0
    %3084 = vmatpush2.bf16.msra.mxu0 0
    %3085 = vmatprep.subr.bf16.mxu0 0
    %3086 = vmatpush2.bf16.msra.mxu0 0
    %3087 = vmatprep.subr.bf16.mxu0 0
    %3088 = vmatpush2.bf16.msra.mxu0 0
    %3089 = vmatprep.subr.bf16.mxu0 0
    %3090 = vmatpush2.bf16.msra.mxu0 0
    %3091 = vmatprep.subr.bf16.mxu0 0
    %3092 = vmatpush2.bf16.msra.mxu0 0
    %3093 = vmatprep.subr.bf16.mxu0 0
    %3094 = vmatpush2.bf16.msra.mxu0 0
    %3095 = vmatprep.subr.bf16.mxu0 0
    %3096 = vmatpush2.bf16.msra.mxu0 0
    %3097 = vmatprep.subr.bf16.mxu0 0
    %3098 = vmatpush2.bf16.msra.mxu0 0
    %3099 = vmatprep.mubr.bf16.mxu0 0
    %3100 = vmatmul.mubr.bf16.gmra.mxu0 %v2361
    %v3101 = vpop.f32.mrf.mxu0
    %v3102 = vadd.f32 %v3054, %v3101
    %v3103 = vpop.f32.mrf.mxu0
    %v3104 = vpop.f32.mrf.mxu0
    %v3105 = vpop.f32.mrf.mxu0
    %3106 = vdwg.mxu0
    %v3107 = vlaneseq
    %v3108 = vshrl.u32 %v3107, 7
    %v3109 = vsub.s32 2, %v3108
    %v3110 = vrot.slane %v467, %v3109
    %v3115 = vunpack.c.l.b16 %v536
    %v3116 = vunpack.c.l.b16 %v537
    %v3117 = vunpack.c.l.b16 %v538
    %v3118 = vunpack.c.l.b16 %v539
    %v3119 = vpack.c.b16 %v3116, %v3115
    %v3120 = vpack.c.b16 %v3118, %v3117
    %3123 = vmatprep.subr.bf16.mxu0 0
    %3124 = vmatpush1.bf16.msra.mxu0 0
    %3125 = vmatprep.subr.bf16.mxu0 0
    %3126 = vmatpush1.bf16.msra.mxu0 0
    %3127 = vmatprep.subr.bf16.mxu0 0
    %3128 = vmatpush1.bf16.msra.mxu0 0
    %3129 = vmatprep.subr.bf16.mxu0 0
    %3130 = vmatpush1.bf16.msra.mxu0 0
    %3131 = vmatprep.subr.bf16.mxu0 0
    %3132 = vmatpush1.bf16.msra.mxu0 0
    %3133 = vmatprep.subr.bf16.mxu0 0
    %3134 = vmatpush1.bf16.msra.mxu0 0
    %3135 = vmatprep.subr.bf16.mxu0 0
    %3136 = vmatpush1.bf16.msra.mxu0 %v3120
    %3137 = vmatprep.subr.bf16.mxu0 0
    %3138 = vmatpush1.bf16.msra.mxu0 %v3119
    %3139 = vmatprep.subr.bf16.mxu0 0
    %3140 = vmatpush2.bf16.msra.mxu0 0
    %3141 = vmatprep.subr.bf16.mxu0 0
    %3142 = vmatpush2.bf16.msra.mxu0 0
    %3143 = vmatprep.subr.bf16.mxu0 0
    %3144 = vmatpush2.bf16.msra.mxu0 0
    %3145 = vmatprep.subr.bf16.mxu0 0
    %3146 = vmatpush2.bf16.msra.mxu0 0
    %3147 = vmatprep.subr.bf16.mxu0 0
    %3148 = vmatpush2.bf16.msra.mxu0 0
    %3149 = vmatprep.subr.bf16.mxu0 0
    %3150 = vmatpush2.bf16.msra.mxu0 0
    %3151 = vmatprep.subr.bf16.mxu0 0
    %3152 = vmatpush2.bf16.msra.mxu0 0
    %3153 = vmatprep.subr.bf16.mxu0 0
    %3154 = vmatpush2.bf16.msra.mxu0 0
    %3155 = vmatprep.mubr.bf16.mxu0 0
    %3156 = vmatmul.mubr.bf16.gmra.mxu0 %v2361
    %v3157 = vpop.f32.mrf.mxu0
    %v3158 = vadd.f32 %v3110, %v3157
    %v3159 = vpop.f32.mrf.mxu0
    %v3160 = vpop.f32.mrf.mxu0
    %v3161 = vpop.f32.mrf.mxu0
    %3162 = vdwg.mxu0
    %v3163 = vpack.c.bf16 %v3046, %v3046
    %v3164 = vpack.c.bf16 %v3102, %v3102
    %v3166 = vsel %vm997, %v3163, 0
    %v3169 = vsel %vm997, %v3164, 0
    %3171 = vmatprep.subr.bf16.mxu0 0
    %3172 = vmatpush1.bf16.xpose.msra.mxu0 0
    %3173 = vmatprep.subr.bf16.mxu0 0
    %3174 = vmatpush1.bf16.xpose.msra.mxu0 0
    %3175 = vmatprep.subr.bf16.mxu0 0
    %3176 = vmatpush1.bf16.xpose.msra.mxu0 0
    %3177 = vmatprep.subr.bf16.mxu0 0
    %3178 = vmatpush1.bf16.xpose.msra.mxu0 0
    %3179 = vmatprep.subr.bf16.mxu0 0
    %3180 = vmatpush1.bf16.xpose.msra.mxu0 0
    %3181 = vmatprep.subr.bf16.mxu0 0
    %3182 = vmatpush1.bf16.xpose.msra.mxu0 0
    %3183 = vmatprep.subr.bf16.mxu0 0
    %3184 = vmatpush1.bf16.xpose.msra.mxu0 0
    %3185 = vmatprep.subr.bf16.mxu0 0
    %3186 = vmatpush1.bf16.xpose.msra.mxu0 %v3169
    %3187 = vmatprep.subr.bf16.mxu0 0
    %3188 = vmatpush2.bf16.xpose.msra.mxu0 0
    %3189 = vmatprep.subr.bf16.mxu0 0
    %3190 = vmatpush2.bf16.xpose.msra.mxu0 0
    %3191 = vmatprep.subr.bf16.mxu0 0
    %3192 = vmatpush2.bf16.xpose.msra.mxu0 0
    %3193 = vmatprep.subr.bf16.mxu0 0
    %3194 = vmatpush2.bf16.xpose.msra.mxu0 0
    %3195 = vmatprep.subr.bf16.mxu0 0
    %3196 = vmatpush2.bf16.xpose.msra.mxu0 0
    %3197 = vmatprep.subr.bf16.mxu0 0
    %3198 = vmatpush2.bf16.xpose.msra.mxu0 0
    %3199 = vmatprep.subr.bf16.mxu0 0
    %3200 = vmatpush2.bf16.xpose.msra.mxu0 0
    %3201 = vmatprep.subr.bf16.mxu0 0
    %3202 = vmatpush2.bf16.xpose.msra.mxu0 0
    %3203 = vmatprep.mubr.bf16.mxu0 0
    %3204 = vmatmul.mubr.bf16.gmra.mxu0 %v3166
    %v3205 = vpop.f32.mrf.mxu0
    %v3206 = vadd.f32 0.0, %v3205
    %v3207 = vpop.f32.mrf.mxu0
    %v3208 = vpop.f32.mrf.mxu0
    %v3209 = vpop.f32.mrf.mxu0
    %3210 = vdwg.mxu0
    %v3211 = vmul.f32 %v3206, 0.35355338
    %v3212 = vadd.f32 %v3211, %v549
    %v3213 = vsel %vm997, %v3212, -inf
    %3214 = vmax.xlane.f32.xlu0 %v3213
    %v3215 = vpop.xlane.xlu0 %3214
    %v3216 = vsub.f32 %v3212, %v3215
    %v3217 = vmul.f32 %v3216, 1.442695
    %v3218 = vpow.pop %v3217
    %v3219 = vsel %vm997, %v3218, 0.0
    %3220 = vadd.xlane.f32.xlu0 %v3219
    %v3221 = vpop.xlane.xlu0 %3220
    %v3222 = vrcp.pop %v3221
    %v3223 = vmul.f32 %v3218, %v3222
    %v3224 = vpack.c.bf16 %v3223, %v3223
    %v3225 = vpack.c.bf16 %v3158, %v3158
    %v3227 = vsel %vm997, %v3224, 0
    %v3230 = vsel %vm665, %v3225, 0
    %3232 = vmatprep.subr.bf16.mxu0 0
    %3233 = vmatpush1.bf16.msra.mxu0 0
    %3234 = vmatprep.subr.bf16.mxu0 0
    %3235 = vmatpush1.bf16.msra.mxu0 0
    %3236 = vmatprep.subr.bf16.mxu0 0
    %3237 = vmatpush1.bf16.msra.mxu0 0
    %3238 = vmatprep.subr.bf16.mxu0 0
    %3239 = vmatpush1.bf16.msra.mxu0 0
    %3240 = vmatprep.subr.bf16.mxu0 0
    %3241 = vmatpush1.bf16.msra.mxu0 0
    %3242 = vmatprep.subr.bf16.mxu0 0
    %3243 = vmatpush1.bf16.msra.mxu0 0
    %3244 = vmatprep.subr.bf16.mxu0 0
    %3245 = vmatpush1.bf16.msra.mxu0 0
    %3246 = vmatprep.subr.bf16.mxu0 0
    %3247 = vmatpush1.bf16.msra.mxu0 %v3230
    %3248 = vmatprep.subr.bf16.mxu0 0
    %3249 = vmatpush2.bf16.msra.mxu0 0
    %3250 = vmatprep.subr.bf16.mxu0 0
    %3251 = vmatpush2.bf16.msra.mxu0 0
    %3252 = vmatprep.subr.bf16.mxu0 0
    %3253 = vmatpush2.bf16.msra.mxu0 0
    %3254 = vmatprep.subr.bf16.mxu0 0
    %3255 = vmatpush2.bf16.msra.mxu0 0
    %3256 = vmatprep.subr.bf16.mxu0 0
    %3257 = vmatpush2.bf16.msra.mxu0 0
    %3258 = vmatprep.subr.bf16.mxu0 0
    %3259 = vmatpush2.bf16.msra.mxu0 0
    %3260 = vmatprep.subr.bf16.mxu0 0
    %3261 = vmatpush2.bf16.msra.mxu0 0
    %3262 = vmatprep.subr.bf16.mxu0 0
    %3263 = vmatpush2.bf16.msra.mxu0 0
    %3264 = vmatprep.mubr.bf16.mxu0 0
    %3265 = vmatmul.mubr.bf16.gmra.mxu0 %v3227
    %v3266 = vpop.f32.mrf.mxu0
    %v3267 = vadd.f32 0.0, %v3266
    %v3268 = vpop.f32.mrf.mxu0
    %v3269 = vpop.f32.mrf.mxu0
    %v3270 = vpop.f32.mrf.mxu0
    %3271 = vdwg.mxu0
    %v3272 = vpack.c.bf16 %v3267, %v3267
    %v3274 = vsel %vm997, %v3272, 0
    %v3277 = vsel %vm665, %v510, 0
    %3279 = vmatprep.subr.bf16.mxu0 0
    %3280 = vmatpush1.bf16.msra.mxu0 0
    %3281 = vmatprep.subr.bf16.mxu0 0
    %3282 = vmatpush1.bf16.msra.mxu0 0
    %3283 = vmatprep.subr.bf16.mxu0 0
    %3284 = vmatpush1.bf16.msra.mxu0 0
    %3285 = vmatprep.subr.bf16.mxu0 0
    %3286 = vmatpush1.bf16.msra.mxu0 0
    %3287 = vmatprep.subr.bf16.mxu0 0
    %3288 = vmatpush1.bf16.msra.mxu0 0
    %3289 = vmatprep.subr.bf16.mxu0 0
    %3290 = vmatpush1.bf16.msra.mxu0 0
    %3291 = vmatprep.subr.bf16.mxu0 0
    %3292 = vmatpush1.bf16.msra.mxu0 0
    %3293 = vmatprep.subr.bf16.mxu0 0
    %3294 = vmatpush1.bf16.msra.mxu0 %v3277
    %3295 = vmatprep.subr.bf16.mxu0 0
    %3296 = vmatpush2.bf16.msra.mxu0 0
    %3297 = vmatprep.subr.bf16.mxu0 0
    %3298 = vmatpush2.bf16.msra.mxu0 0
    %3299 = vmatprep.subr.bf16.mxu0 0
    %3300 = vmatpush2.bf16.msra.mxu0 0
    %3301 = vmatprep.subr.bf16.mxu0 0
    %3302 = vmatpush2.bf16.msra.mxu0 0
    %3303 = vmatprep.subr.bf16.mxu0 0
    %3304 = vmatpush2.bf16.msra.mxu0 0
    %3305 = vmatprep.subr.bf16.mxu0 0
    %3306 = vmatpush2.bf16.msra.mxu0 0
    %3307 = vmatprep.subr.bf16.mxu0 0
    %3308 = vmatpush2.bf16.msra.mxu0 0
    %3309 = vmatprep.subr.bf16.mxu0 0
    %3310 = vmatpush2.bf16.msra.mxu0 0
    %3311 = vmatprep.mubr.bf16.mxu0 0
    %3312 = vmatmul.mubr.bf16.gmra.mxu0 %v3274
    %v3313 = vpop.f32.mrf.mxu0
    %v3314 = vadd.f32 0.0, %v3313
    %v3315 = vpop.f32.mrf.mxu0
    %v3316 = vpop.f32.mrf.mxu0
    %v3317 = vpop.f32.mrf.mxu0
    %3318 = vdwg.mxu0
    %v3319 = vadd.f32 %v2990, %v3314
    %v3320 = vlaneseq
    %v3321 = vshrl.u32 %v3320, 7
    %v3322 = vsub.s32 3, %v3321
    %v3323 = vrot.slane %v466, %v3322
    %v3328 = vunpack.c.l.b16 %v524
    %v3329 = vunpack.c.l.b16 %v525
    %v3330 = vunpack.c.l.b16 %v526
    %v3331 = vunpack.c.l.b16 %v527
    %v3332 = vpack.c.b16 %v3329, %v3328
    %v3333 = vpack.c.b16 %v3331, %v3330
    %3336 = vmatprep.subr.bf16.mxu0 0
    %3337 = vmatpush1.bf16.msra.mxu0 0
    %3338 = vmatprep.subr.bf16.mxu0 0
    %3339 = vmatpush1.bf16.msra.mxu0 0
    %3340 = vmatprep.subr.bf16.mxu0 0
    %3341 = vmatpush1.bf16.msra.mxu0 0
    %3342 = vmatprep.subr.bf16.mxu0 0
    %3343 = vmatpush1.bf16.msra.mxu0 0
    %3344 = vmatprep.subr.bf16.mxu0 0
    %3345 = vmatpush1.bf16.msra.mxu0 0
    %3346 = vmatprep.subr.bf16.mxu0 0
    %3347 = vmatpush1.bf16.msra.mxu0 0
    %3348 = vmatprep.subr.bf16.mxu0 0
    %3349 = vmatpush1.bf16.msra.mxu0 %v3333
    %3350 = vmatprep.subr.bf16.mxu0 0
    %3351 = vmatpush1.bf16.msra.mxu0 %v3332
    %3352 = vmatprep.subr.bf16.mxu0 0
    %3353 = vmatpush2.bf16.msra.mxu0 0
    %3354 = vmatprep.subr.bf16.mxu0 0
    %3355 = vmatpush2.bf16.msra.mxu0 0
    %3356 = vmatprep.subr.bf16.mxu0 0
    %3357 = vmatpush2.bf16.msra.mxu0 0
    %3358 = vmatprep.subr.bf16.mxu0 0
    %3359 = vmatpush2.bf16.msra.mxu0 0
    %3360 = vmatprep.subr.bf16.mxu0 0
    %3361 = vmatpush2.bf16.msra.mxu0 0
    %3362 = vmatprep.subr.bf16.mxu0 0
    %3363 = vmatpush2.bf16.msra.mxu0 0
    %3364 = vmatprep.subr.bf16.mxu0 0
    %3365 = vmatpush2.bf16.msra.mxu0 0
    %3366 = vmatprep.subr.bf16.mxu0 0
    %3367 = vmatpush2.bf16.msra.mxu0 0
    %3368 = vmatprep.mubr.bf16.mxu0 0
    %3369 = vmatmul.mubr.bf16.gmra.mxu0 %v2361
    %v3370 = vpop.f32.mrf.mxu0
    %v3371 = vadd.f32 %v3323, %v3370
    %v3372 = vpop.f32.mrf.mxu0
    %v3373 = vpop.f32.mrf.mxu0
    %v3374 = vpop.f32.mrf.mxu0
    %3375 = vdwg.mxu0
    %v3376 = vlaneseq
    %v3377 = vshrl.u32 %v3376, 7
    %v3378 = vsub.s32 3, %v3377
    %v3379 = vrot.slane %v464, %v3378
    %v3384 = vunpack.c.l.b16 %v504
    %v3385 = vunpack.c.l.b16 %v505
    %v3386 = vunpack.c.l.b16 %v506
    %v3387 = vunpack.c.l.b16 %v507
    %v3388 = vpack.c.b16 %v3385, %v3384
    %v3389 = vpack.c.b16 %v3387, %v3386
    %3392 = vmatprep.subr.bf16.mxu0 0
    %3393 = vmatpush1.bf16.msra.mxu0 0
    %3394 = vmatprep.subr.bf16.mxu0 0
    %3395 = vmatpush1.bf16.msra.mxu0 0
    %3396 = vmatprep.subr.bf16.mxu0 0
    %3397 = vmatpush1.bf16.msra.mxu0 0
    %3398 = vmatprep.subr.bf16.mxu0 0
    %3399 = vmatpush1.bf16.msra.mxu0 0
    %3400 = vmatprep.subr.bf16.mxu0 0
    %3401 = vmatpush1.bf16.msra.mxu0 0
    %3402 = vmatprep.subr.bf16.mxu0 0
    %3403 = vmatpush1.bf16.msra.mxu0 0
    %3404 = vmatprep.subr.bf16.mxu0 0
    %3405 = vmatpush1.bf16.msra.mxu0 %v3389
    %3406 = vmatprep.subr.bf16.mxu0 0
    %3407 = vmatpush1.bf16.msra.mxu0 %v3388
    %3408 = vmatprep.subr.bf16.mxu0 0
    %3409 = vmatpush2.bf16.msra.mxu0 0
    %3410 = vmatprep.subr.bf16.mxu0 0
    %3411 = vmatpush2.bf16.msra.mxu0 0
    %3412 = vmatprep.subr.bf16.mxu0 0
    %3413 = vmatpush2.bf16.msra.mxu0 0
    %3414 = vmatprep.subr.bf16.mxu0 0
    %3415 = vmatpush2.bf16.msra.mxu0 0
    %3416 = vmatprep.subr.bf16.mxu0 0
    %3417 = vmatpush2.bf16.msra.mxu0 0
    %3418 = vmatprep.subr.bf16.mxu0 0
    %3419 = vmatpush2.bf16.msra.mxu0 0
    %3420 = vmatprep.subr.bf16.mxu0 0
    %3421 = vmatpush2.bf16.msra.mxu0 0
    %3422 = vmatprep.subr.bf16.mxu0 0
    %3423 = vmatpush2.bf16.msra.mxu0 0
    %3424 = vmatprep.mubr.bf16.mxu0 0
    %3425 = vmatmul.mubr.bf16.gmra.mxu0 %v2361
    %v3426 = vpop.f32.mrf.mxu0
    %v3427 = vadd.f32 %v3379, %v3426
    %v3428 = vpop.f32.mrf.mxu0
    %v3429 = vpop.f32.mrf.mxu0
    %v3430 = vpop.f32.mrf.mxu0
    %3431 = vdwg.mxu0
    %v3432 = vlaneseq
    %v3433 = vshrl.u32 %v3432, 7
    %v3434 = vsub.s32 3, %v3433
    %v3435 = vrot.slane %v467, %v3434
    %v3440 = vunpack.c.l.b16 %v540
    %v3441 = vunpack.c.l.b16 %v541
    %v3442 = vunpack.c.l.b16 %v542
    %v3443 = vunpack.c.l.b16 %v543
    %v3444 = vpack.c.b16 %v3441, %v3440
    %v3445 = vpack.c.b16 %v3443, %v3442
    %3448 = vmatprep.subr.bf16.mxu0 0
    %3449 = vmatpush1.bf16.msra.mxu0 0
    %3450 = vmatprep.subr.bf16.mxu0 0
    %3451 = vmatpush1.bf16.msra.mxu0 0
    %3452 = vmatprep.subr.bf16.mxu0 0
    %3453 = vmatpush1.bf16.msra.mxu0 0
    %3454 = vmatprep.subr.bf16.mxu0 0
    %3455 = vmatpush1.bf16.msra.mxu0 0
    %3456 = vmatprep.subr.bf16.mxu0 0
    %3457 = vmatpush1.bf16.msra.mxu0 0
    %3458 = vmatprep.subr.bf16.mxu0 0
    %3459 = vmatpush1.bf16.msra.mxu0 0
    %3460 = vmatprep.subr.bf16.mxu0 0
    %3461 = vmatpush1.bf16.msra.mxu0 %v3445
    %3462 = vmatprep.subr.bf16.mxu0 0
    %3463 = vmatpush1.bf16.msra.mxu0 %v3444
    %3464 = vmatprep.subr.bf16.mxu0 0
    %3465 = vmatpush2.bf16.msra.mxu0 0
    %3466 = vmatprep.subr.bf16.mxu0 0
    %3467 = vmatpush2.bf16.msra.mxu0 0
    %3468 = vmatprep.subr.bf16.mxu0 0
    %3469 = vmatpush2.bf16.msra.mxu0 0
    %3470 = vmatprep.subr.bf16.mxu0 0
    %3471 = vmatpush2.bf16.msra.mxu0 0
    %3472 = vmatprep.subr.bf16.mxu0 0
    %3473 = vmatpush2.bf16.msra.mxu0 0
    %3474 = vmatprep.subr.bf16.mxu0 0
    %3475 = vmatpush2.bf16.msra.mxu0 0
    %3476 = vmatprep.subr.bf16.mxu0 0
    %3477 = vmatpush2.bf16.msra.mxu0 0
    %3478 = vmatprep.subr.bf16.mxu0 0
    %3479 = vmatpush2.bf16.msra.mxu0 0
    %3480 = vmatprep.mubr.bf16.mxu0 0
    %3481 = vmatmul.mubr.bf16.gmra.mxu0 %v2361
    %v3482 = vpop.f32.mrf.mxu0
    %v3483 = vadd.f32 %v3435, %v3482
    %v3484 = vpop.f32.mrf.mxu0
    %v3485 = vpop.f32.mrf.mxu0
    %v3486 = vpop.f32.mrf.mxu0
    %3487 = vdwg.mxu0
    %v3488 = vpack.c.bf16 %v3371, %v3371
    %v3489 = vpack.c.bf16 %v3427, %v3427
    %v3491 = vsel %vm997, %v3488, 0
    %v3494 = vsel %vm997, %v3489, 0
    %3496 = vmatprep.subr.bf16.mxu0 0
    %3497 = vmatpush1.bf16.xpose.msra.mxu0 0
    %3498 = vmatprep.subr.bf16.mxu0 0
    %3499 = vmatpush1.bf16.xpose.msra.mxu0 0
    %3500 = vmatprep.subr.bf16.mxu0 0
    %3501 = vmatpush1.bf16.xpose.msra.mxu0 0
    %3502 = vmatprep.subr.bf16.mxu0 0
    %3503 = vmatpush1.bf16.xpose.msra.mxu0 0
    %3504 = vmatprep.subr.bf16.mxu0 0
    %3505 = vmatpush1.bf16.xpose.msra.mxu0 0
    %3506 = vmatprep.subr.bf16.mxu0 0
    %3507 = vmatpush1.bf16.xpose.msra.mxu0 0
    %3508 = vmatprep.subr.bf16.mxu0 0
    %3509 = vmatpush1.bf16.xpose.msra.mxu0 0
    %3510 = vmatprep.subr.bf16.mxu0 0
    %3511 = vmatpush1.bf16.xpose.msra.mxu0 %v3494
    %3512 = vmatprep.subr.bf16.mxu0 0
    %3513 = vmatpush2.bf16.xpose.msra.mxu0 0
    %3514 = vmatprep.subr.bf16.mxu0 0
    %3515 = vmatpush2.bf16.xpose.msra.mxu0 0
    %3516 = vmatprep.subr.bf16.mxu0 0
    %3517 = vmatpush2.bf16.xpose.msra.mxu0 0
    %3518 = vmatprep.subr.bf16.mxu0 0
    %3519 = vmatpush2.bf16.xpose.msra.mxu0 0
    %3520 = vmatprep.subr.bf16.mxu0 0
    %3521 = vmatpush2.bf16.xpose.msra.mxu0 0
    %3522 = vmatprep.subr.bf16.mxu0 0
    %3523 = vmatpush2.bf16.xpose.msra.mxu0 0
    %3524 = vmatprep.subr.bf16.mxu0 0
    %3525 = vmatpush2.bf16.xpose.msra.mxu0 0
    %3526 = vmatprep.subr.bf16.mxu0 0
    %3527 = vmatpush2.bf16.xpose.msra.mxu0 0
    %3528 = vmatprep.mubr.bf16.mxu0 0
    %3529 = vmatmul.mubr.bf16.gmra.mxu0 %v3491
    %v3530 = vpop.f32.mrf.mxu0
    %v3531 = vadd.f32 0.0, %v3530
    %v3532 = vpop.f32.mrf.mxu0
    %v3533 = vpop.f32.mrf.mxu0
    %v3534 = vpop.f32.mrf.mxu0
    %3535 = vdwg.mxu0
    %v3536 = vmul.f32 %v3531, 0.35355338
    %v3537 = vadd.f32 %v3536, %v549
    %v3538 = vsel %vm997, %v3537, -inf
    %3539 = vmax.xlane.f32.xlu0 %v3538
    %v3540 = vpop.xlane.xlu0 %3539
    %v3541 = vsub.f32 %v3537, %v3540
    %v3542 = vmul.f32 %v3541, 1.442695
    %v3543 = vpow.pop %v3542
    %v3544 = vsel %vm997, %v3543, 0.0
    %3545 = vadd.xlane.f32.xlu0 %v3544
    %v3546 = vpop.xlane.xlu0 %3545
    %v3547 = vrcp.pop %v3546
    %v3548 = vmul.f32 %v3543, %v3547
    %v3549 = vpack.c.bf16 %v3548, %v3548
    %v3550 = vpack.c.bf16 %v3483, %v3483
    %v3552 = vsel %vm997, %v3549, 0
    %v3555 = vsel %vm665, %v3550, 0
    %3557 = vmatprep.subr.bf16.mxu0 0
    %3558 = vmatpush1.bf16.msra.mxu0 0
    %3559 = vmatprep.subr.bf16.mxu0 0
    %3560 = vmatpush1.bf16.msra.mxu0 0
    %3561 = vmatprep.subr.bf16.mxu0 0
    %3562 = vmatpush1.bf16.msra.mxu0 0
    %3563 = vmatprep.subr.bf16.mxu0 0
    %3564 = vmatpush1.bf16.msra.mxu0 0
    %3565 = vmatprep.subr.bf16.mxu0 0
    %3566 = vmatpush1.bf16.msra.mxu0 0
    %3567 = vmatprep.subr.bf16.mxu0 0
    %3568 = vmatpush1.bf16.msra.mxu0 0
    %3569 = vmatprep.subr.bf16.mxu0 0
    %3570 = vmatpush1.bf16.msra.mxu0 0
    %3571 = vmatprep.subr.bf16.mxu0 0
    %3572 = vmatpush1.bf16.msra.mxu0 %v3555
    %3573 = vmatprep.subr.bf16.mxu0 0
    %3574 = vmatpush2.bf16.msra.mxu0 0
    %3575 = vmatprep.subr.bf16.mxu0 0
    %3576 = vmatpush2.bf16.msra.mxu0 0
    %3577 = vmatprep.subr.bf16.mxu0 0
    %3578 = vmatpush2.bf16.msra.mxu0 0
    %3579 = vmatprep.subr.bf16.mxu0 0
    %3580 = vmatpush2.bf16.msra.mxu0 0
    %3581 = vmatprep.subr.bf16.mxu0 0
    %3582 = vmatpush2.bf16.msra.mxu0 0
    %3583 = vmatprep.subr.bf16.mxu0 0
    %3584 = vmatpush2.bf16.msra.mxu0 0
    %3585 = vmatprep.subr.bf16.mxu0 0
    %3586 = vmatpush2.bf16.msra.mxu0 0
    %3587 = vmatprep.subr.bf16.mxu0 0
    %3588 = vmatpush2.bf16.msra.mxu0 0
    %3589 = vmatprep.mubr.bf16.mxu0 0
    %3590 = vmatmul.mubr.bf16.gmra.mxu0 %v3552
    %v3591 = vpop.f32.mrf.mxu0
    %v3592 = vadd.f32 0.0, %v3591
    %v3593 = vpop.f32.mrf.mxu0
    %v3594 = vpop.f32.mrf.mxu0
    %v3595 = vpop.f32.mrf.mxu0
    %3596 = vdwg.mxu0
    %v3597 = vpack.c.bf16 %v3592, %v3592
    %v3599 = vsel %vm997, %v3597, 0
    %v3602 = vsel %vm665, %v511, 0
    %3604 = vmatprep.subr.bf16.mxu0 0
    %3605 = vmatpush1.bf16.msra.mxu0 0
    %3606 = vmatprep.subr.bf16.mxu0 0
    %3607 = vmatpush1.bf16.msra.mxu0 0
    %3608 = vmatprep.subr.bf16.mxu0 0
    %3609 = vmatpush1.bf16.msra.mxu0 0
    %3610 = vmatprep.subr.bf16.mxu0 0
    %3611 = vmatpush1.bf16.msra.mxu0 0
    %3612 = vmatprep.subr.bf16.mxu0 0
    %3613 = vmatpush1.bf16.msra.mxu0 0
    %3614 = vmatprep.subr.bf16.mxu0 0
    %3615 = vmatpush1.bf16.msra.mxu0 0
    %3616 = vmatprep.subr.bf16.mxu0 0
    %3617 = vmatpush1.bf16.msra.mxu0 0
    %3618 = vmatprep.subr.bf16.mxu0 0
    %3619 = vmatpush1.bf16.msra.mxu0 %v3602
    %3620 = vmatprep.subr.bf16.mxu0 0
    %3621 = vmatpush2.bf16.msra.mxu0 0
    %3622 = vmatprep.subr.bf16.mxu0 0
    %3623 = vmatpush2.bf16.msra.mxu0 0
    %3624 = vmatprep.subr.bf16.mxu0 0
    %3625 = vmatpush2.bf16.msra.mxu0 0
    %3626 = vmatprep.subr.bf16.mxu0 0
    %3627 = vmatpush2.bf16.msra.mxu0 0
    %3628 = vmatprep.subr.bf16.mxu0 0
    %3629 = vmatpush2.bf16.msra.mxu0 0
    %3630 = vmatprep.subr.bf16.mxu0 0
    %3631 = vmatpush2.bf16.msra.mxu0 0
    %3632 = vmatprep.subr.bf16.mxu0 0
    %3633 = vmatpush2.bf16.msra.mxu0 0
    %3634 = vmatprep.subr.bf16.mxu0 0
    %3635 = vmatpush2.bf16.msra.mxu0 0
    %3636 = vmatprep.mubr.bf16.mxu0 0
    %3637 = vmatmul.mubr.bf16.gmra.mxu0 %v3599
    %v3638 = vpop.f32.mrf.mxu0
    %v3639 = vadd.f32 0.0, %v3638
    %v3640 = vpop.f32.mrf.mxu0
    %v3641 = vpop.f32.mrf.mxu0
    %v3642 = vpop.f32.mrf.mxu0
    %3643 = vdwg.mxu0
    %v3644 = vadd.f32 %v3319, %v3639
    %v3645 = vadd.f32 %v797, %v3644
    %v3647 = vlaneseq
    %v3648 = vshrl.u32 %v3647, 7
    %v3649 = vsub.s32 0, %v3648
    %v3650 = vrot.slane %v465, %v3649
    %v3652 = vadd.f32 %v3645, %v3650
    %v3653 = vsel %vm798, %v3652, 0.0
    %3654 = vadd.xlane.f32.xlu0 %v3653
    %v3655 = vpop.xlane.xlu0 %3654
    %v3656 = vmul.f32 %v3655, %v802
    %v3657 = vsub.f32 %v3652, %v3656
    %v3658 = vmul.f32 %v3657, %v3657
    %v3659 = vsel %vm798, %v3658, 0.0
    %3660 = vadd.xlane.f32.xlu0 %v3659
    %v3661 = vpop.xlane.xlu0 %3660
    %v3662 = vmul.f32 %v3661, %v802
    %v3663 = vadd.f32 %v3662, 1e-05
    %v3664 = vrsqrt.pop %v3663
    %v3665 = vmul.f32 %v3657, %v3664
    %v3666 = vlaneseq
    %v3667 = vshrl.u32 %v3666, 7
    %v3668 = vsub.s32 3, %v3667
    %v3669 = vrot.slane %v491, %v3668
    %v3670 = vmul.f32 %v3665, %v3669
    %v3671 = vlaneseq
    %v3672 = vshrl.u32 %v3671, 7
    %v3673 = vsub.s32 3, %v3672
    %v3674 = vrot.slane %v490, %v3673
    %v3675 = vadd.f32 %v3670, %v3674
    %v3676 = vpack.c.bf16 %v3675, %v3675
    %v3678 = vlaneseq
    %v3679 = vshrl.u32 %v3678, 7
    %v3680 = vsub.s32 0, %v3679
    %v3681 = vrot.slane %v468, %v3680
    %v3687 = vunpack.c.l.b16 %v469
    %v3688 = vunpack.c.l.b16 %v470
    %v3689 = vunpack.c.l.b16 %v471
    %v3690 = vunpack.c.l.b16 %v472
    %v3691 = vpack.c.b16 %v3688, %v3687
    %v3692 = vpack.c.b16 %v3690, %v3689
    %v3696 = vsel %vm798, %v3676, 0
    %3698 = vmatprep.subr.bf16.mxu0 0
    %3699 = vmatpush1.bf16.msra.mxu0 0
    %3700 = vmatprep.subr.bf16.mxu0 0
    %3701 = vmatpush1.bf16.msra.mxu0 0
    %3702 = vmatprep.subr.bf16.mxu0 0
    %3703 = vmatpush1.bf16.msra.mxu0 0
    %3704 = vmatprep.subr.bf16.mxu0 0
    %3705 = vmatpush1.bf16.msra.mxu0 0
    %3706 = vmatprep.subr.bf16.mxu0 0
    %3707 = vmatpush1.bf16.msra.mxu0 0
    %3708 = vmatprep.subr.bf16.mxu0 0
    %3709 = vmatpush1.bf16.msra.mxu0 0
    %3710 = vmatprep.subr.bf16.mxu0 0
    %3711 = vmatpush1.bf16.msra.mxu0 %v3692
    %3712 = vmatprep.subr.bf16.mxu0 0
    %3713 = vmatpush1.bf16.msra.mxu0 %v3691
    %3714 = vmatprep.subr.bf16.mxu0 0
    %3715 = vmatpush2.bf16.msra.mxu0 0
    %3716 = vmatprep.subr.bf16.mxu0 0
    %3717 = vmatpush2.bf16.msra.mxu0 0
    %3718 = vmatprep.subr.bf16.mxu0 0
    %3719 = vmatpush2.bf16.msra.mxu0 0
    %3720 = vmatprep.subr.bf16.mxu0 0
    %3721 = vmatpush2.bf16.msra.mxu0 0
    %3722 = vmatprep.subr.bf16.mxu0 0
    %3723 = vmatpush2.bf16.msra.mxu0 0
    %3724 = vmatprep.subr.bf16.mxu0 0
    %3725 = vmatpush2.bf16.msra.mxu0 0
    %3726 = vmatprep.subr.bf16.mxu0 0
    %3727 = vmatpush2.bf16.msra.mxu0 0
    %3728 = vmatprep.subr.bf16.mxu0 0
    %3729 = vmatpush2.bf16.msra.mxu0 0
    %3730 = vmatprep.mubr.bf16.mxu0 0
    %3731 = vmatmul.mubr.bf16.gmra.mxu0 %v3696
    %v3732 = vpop.f32.mrf.mxu0
    %v3733 = vadd.f32 %v3681, %v3732
    %v3734 = vpop.f32.mrf.mxu0
    %v3735 = vpop.f32.mrf.mxu0
    %v3736 = vpop.f32.mrf.mxu0
    %3737 = vdwg.mxu0
    %v3738 = vmul.f32 %v3733, 0.5
    %v3739 = vmul.f32 %v3733, 0.70710677
    %v3740 = verf.f32.pop %v3739
    %v3741 = vadd.f32 %v3740, 1.0
    %v3742 = vmul.f32 %v3738, %v3741
    %v3743 = vpack.c.bf16 %v3742, %v3742
    %v3745 = vlaneseq
    %v3746 = vshrl.u32 %v3745, 7
    %v3747 = vsub.s32 0, %v3746
    %v3748 = vrot.slane %v473, %v3747
    %v3766 = vunpack.c.l.b16 %v474
    %v3767 = vunpack.c.l.b16 %v475
    %v3768 = vunpack.c.l.b16 %v476
    %v3769 = vunpack.c.l.b16 %v477
    %v3770 = vunpack.c.l.b16 %v478
    %v3771 = vunpack.c.l.b16 %v479
    %v3772 = vunpack.c.l.b16 %v480
    %v3773 = vunpack.c.l.b16 %v481
    %v3774 = vunpack.c.l.b16 %v482
    %v3775 = vunpack.c.l.b16 %v483
    %v3776 = vunpack.c.l.b16 %v484
    %v3777 = vunpack.c.l.b16 %v485
    %v3778 = vunpack.c.l.b16 %v486
    %v3779 = vunpack.c.l.b16 %v487
    %v3780 = vunpack.c.l.b16 %v488
    %v3781 = vunpack.c.l.b16 %v489
    %v3782 = vpack.c.b16 %v3767, %v3766
    %v3783 = vpack.c.b16 %v3769, %v3768
    %v3784 = vpack.c.b16 %v3771, %v3770
    %v3785 = vpack.c.b16 %v3773, %v3772
    %v3786 = vpack.c.b16 %v3775, %v3774
    %v3787 = vpack.c.b16 %v3777, %v3776
    %v3788 = vpack.c.b16 %v3779, %v3778
    %v3789 = vpack.c.b16 %v3781, %v3780
    %3798 = vmatprep.subr.bf16.mxu0 0
    %3799 = vmatpush1.bf16.msra.mxu0 %v3789
    %3800 = vmatprep.subr.bf16.mxu0 0
    %3801 = vmatpush1.bf16.msra.mxu0 %v3788
    %3802 = vmatprep.subr.bf16.mxu0 0
    %3803 = vmatpush1.bf16.msra.mxu0 %v3787
    %3804 = vmatprep.subr.bf16.mxu0 0
    %3805 = vmatpush1.bf16.msra.mxu0 %v3786
    %3806 = vmatprep.subr.bf16.mxu0 0
    %3807 = vmatpush1.bf16.msra.mxu0 %v3785
    %3808 = vmatprep.subr.bf16.mxu0 0
    %3809 = vmatpush1.bf16.msra.mxu0 %v3784
    %3810 = vmatprep.subr.bf16.mxu0 0
    %3811 = vmatpush1.bf16.msra.mxu0 %v3783
    %3812 = vmatprep.subr.bf16.mxu0 0
    %3813 = vmatpush1.bf16.msra.mxu0 %v3782
    %3814 = vmatprep.subr.bf16.mxu0 0
    %3815 = vmatpush2.bf16.msra.mxu0 0
    %3816 = vmatprep.subr.bf16.mxu0 0
    %3817 = vmatpush2.bf16.msra.mxu0 0
    %3818 = vmatprep.subr.bf16.mxu0 0
    %3819 = vmatpush2.bf16.msra.mxu0 0
    %3820 = vmatprep.subr.bf16.mxu0 0
    %3821 = vmatpush2.bf16.msra.mxu0 0
    %3822 = vmatprep.subr.bf16.mxu0 0
    %3823 = vmatpush2.bf16.msra.mxu0 0
    %3824 = vmatprep.subr.bf16.mxu0 0
    %3825 = vmatpush2.bf16.msra.mxu0 0
    %3826 = vmatprep.subr.bf16.mxu0 0
    %3827 = vmatpush2.bf16.msra.mxu0 0
    %3828 = vmatprep.subr.bf16.mxu0 0
    %3829 = vmatpush2.bf16.msra.mxu0 0
    %3830 = vmatprep.mubr.bf16.mxu0 0
    %3831 = vmatmul.mubr.bf16.gmra.mxu0 %v3743
    %v3832 = vpop.f32.mrf.mxu0
    %v3833 = vadd.f32 %v3748, %v3832
    %v3834 = vpop.f32.mrf.mxu0
    %v3835 = vpop.f32.mrf.mxu0
    %v3836 = vpop.f32.mrf.mxu0
    %3837 = vdwg.mxu0
    %v3838 = vadd.f32 %v3652, %v3833
    %v3840 = vrot.slane %v3838, 4
    %v3843 = vrot.slane %v2319, 4
    %v3845 = vsel %vm665, %v2319, %v3840
    %v3846 = vsel %vm665, %v3843, %v3838
    %v3847 = vsel %vm798, %v3845, 0.0
    %3848 = vadd.xlane.f32.xlu0 %v3847
    %v3849 = vpop.xlane.xlu0 %3848
    %v3850 = vsel %vm798, %v3846, 0.0
    %3851 = vadd.xlane.f32.xlu0 %v3850
    %v3852 = vpop.xlane.xlu0 %3851
    %v3853 = vmul.f32 %v3849, %v802
    %v3854 = vmul.f32 %v3852, %v802
    %v3855 = vsub.f32 %v3845, %v3853
    %v3856 = vsub.f32 %v3846, %v3854
    %v3857 = vmul.f32 %v3855, %v3855
    %v3858 = vmul.f32 %v3856, %v3856
    %v3859 = vsel %vm798, %v3857, 0.0
    %3860 = vadd.xlane.f32.xlu0 %v3859
    %v3861 = vpop.xlane.xlu0 %3860
    %v3862 = vsel %vm798, %v3858, 0.0
    %3863 = vadd.xlane.f32.xlu0 %v3862
    %v3864 = vpop.xlane.xlu0 %3863
    %v3865 = vmul.f32 %v3861, %v802
    %v3866 = vmul.f32 %v3864, %v802
    %v3867 = vadd.f32 %v3865, 1e-05
    %v3868 = vadd.f32 %v3866, 1e-05
    %v3869 = vrsqrt.pop %v3867
    %v3870 = vrsqrt.pop %v3868
    %v3871 = vmul.f32 %v3855, %v3869
    %v3872 = vmul.f32 %v3856, %v3870
    %v3873 = vlaneseq
    %v3874 = vshrl.u32 %v3873, 7
    %v3875 = vsub.s32 0, %v3874
    %v3876 = vrot.slane %v411, %v3875
    %v3877 = vmul.f32 %v3871, %v3876
    %v3878 = vmul.f32 %v3872, %v3876
    %v3879 = vlaneseq
    %v3880 = vshrl.u32 %v3879, 7
    %v3881 = vsub.s32 0, %v3880
    %v3882 = vrot.slane %v410, %v3881
    %v3883 = vadd.f32 %v3877, %v3882
    %v3884 = vadd.f32 %v3878, %v3882
    %v3885 = vpack.c.bf16 %v3884, %v3883
    %v3886 = vlaneseq
    %v3887 = vshrl.u32 %v3886, 7
    %v3888 = vsub.s32 0, %v3887
    %v3889 = vrot.slane %v386, %v3888
    %v3894 = vunpack.c.l.b16 %v432
    %v3895 = vunpack.c.l.b16 %v433
    %v3896 = vunpack.c.l.b16 %v434
    %v3897 = vunpack.c.l.b16 %v435
    %v3898 = vpack.c.b16 %v3895, %v3894
    %v3899 = vpack.c.b16 %v3897, %v3896
    %v3903 = vsel %vm798, %v3885, 0
    %3905 = vmatprep.subr.bf16.mxu0 0
    %3906 = vmatpush1.bf16.msra.mxu0 0
    %3907 = vmatprep.subr.bf16.mxu0 0
    %3908 = vmatpush1.bf16.msra.mxu0 0
    %3909 = vmatprep.subr.bf16.mxu0 0
    %3910 = vmatpush1.bf16.msra.mxu0 0
    %3911 = vmatprep.subr.bf16.mxu0 0
    %3912 = vmatpush1.bf16.msra.mxu0 0
    %3913 = vmatprep.subr.bf16.mxu0 0
    %3914 = vmatpush1.bf16.msra.mxu0 0
    %3915 = vmatprep.subr.bf16.mxu0 0
    %3916 = vmatpush1.bf16.msra.mxu0 0
    %3917 = vmatprep.subr.bf16.mxu0 0
    %3918 = vmatpush1.bf16.msra.mxu0 %v3899
    %3919 = vmatprep.subr.bf16.mxu0 0
    %3920 = vmatpush1.bf16.msra.mxu0 %v3898
    %3921 = vmatprep.subr.bf16.mxu0 0
    %3922 = vmatpush2.bf16.msra.mxu0 0
    %3923 = vmatprep.subr.bf16.mxu0 0
    %3924 = vmatpush2.bf16.msra.mxu0 0
    %3925 = vmatprep.subr.bf16.mxu0 0
    %3926 = vmatpush2.bf16.msra.mxu0 0
    %3927 = vmatprep.subr.bf16.mxu0 0
    %3928 = vmatpush2.bf16.msra.mxu0 0
    %3929 = vmatprep.subr.bf16.mxu0 0
    %3930 = vmatpush2.bf16.msra.mxu0 0
    %3931 = vmatprep.subr.bf16.mxu0 0
    %3932 = vmatpush2.bf16.msra.mxu0 0
    %3933 = vmatprep.subr.bf16.mxu0 0
    %3934 = vmatpush2.bf16.msra.mxu0 0
    %3935 = vmatprep.subr.bf16.mxu0 0
    %3936 = vmatpush2.bf16.msra.mxu0 0
    %3937 = vmatprep.mubr.bf16.mxu0 0
    %3938 = vmatmul.mubr.bf16.gmra.mxu0 %v3903
    %v3939 = vpop.f32.mrf.mxu0
    %v3940 = vadd.f32 %v3889, %v3939
    %v3941 = vpop.f32.mrf.mxu0
    %v3942 = vpop.f32.mrf.mxu0
    %v3943 = vadd.f32 %v3889, %v3942
    %v3944 = vpop.f32.mrf.mxu0
    %3945 = vdwg.mxu0
    %v3946 = vlaneseq
    %v3947 = vshrl.u32 %v3946, 7
    %v3948 = vsub.s32 0, %v3947
    %v3949 = vrot.slane %v384, %v3948
    %v3954 = vunpack.c.l.b16 %v412
    %v3955 = vunpack.c.l.b16 %v413
    %v3956 = vunpack.c.l.b16 %v414
    %v3957 = vunpack.c.l.b16 %v415
    %v3958 = vpack.c.b16 %v3955, %v3954
    %v3959 = vpack.c.b16 %v3957, %v3956
    %3962 = vmatprep.subr.bf16.mxu0 0
    %3963 = vmatpush1.bf16.msra.mxu0 0
    %3964 = vmatprep.subr.bf16.mxu0 0
    %3965 = vmatpush1.bf16.msra.mxu0 0
    %3966 = vmatprep.subr.bf16.mxu0 0
    %3967 = vmatpush1.bf16.msra.mxu0 0
    %3968 = vmatprep.subr.bf16.mxu0 0
    %3969 = vmatpush1.bf16.msra.mxu0 0
    %3970 = vmatprep.subr.bf16.mxu0 0
    %3971 = vmatpush1.bf16.msra.mxu0 0
    %3972 = vmatprep.subr.bf16.mxu0 0
    %3973 = vmatpush1.bf16.msra.mxu0 0
    %3974 = vmatprep.subr.bf16.mxu0 0
    %3975 = vmatpush1.bf16.msra.mxu0 %v3959
    %3976 = vmatprep.subr.bf16.mxu0 0
    %3977 = vmatpush1.bf16.msra.mxu0 %v3958
    %3978 = vmatprep.subr.bf16.mxu0 0
    %3979 = vmatpush2.bf16.msra.mxu0 0
    %3980 = vmatprep.subr.bf16.mxu0 0
    %3981 = vmatpush2.bf16.msra.mxu0 0
    %3982 = vmatprep.subr.bf16.mxu0 0
    %3983 = vmatpush2.bf16.msra.mxu0 0
    %3984 = vmatprep.subr.bf16.mxu0 0
    %3985 = vmatpush2.bf16.msra.mxu0 0
    %3986 = vmatprep.subr.bf16.mxu0 0
    %3987 = vmatpush2.bf16.msra.mxu0 0
    %3988 = vmatprep.subr.bf16.mxu0 0
    %3989 = vmatpush2.bf16.msra.mxu0 0
    %3990 = vmatprep.subr.bf16.mxu0 0
    %3991 = vmatpush2.bf16.msra.mxu0 0
    %3992 = vmatprep.subr.bf16.mxu0 0
    %3993 = vmatpush2.bf16.msra.mxu0 0
    %3994 = vmatprep.mubr.bf16.mxu0 0
    %3995 = vmatmul.mubr.bf16.gmra.mxu0 %v3903
    %v3996 = vpop.f32.mrf.mxu0
    %v3997 = vadd.f32 %v3949, %v3996
    %v3998 = vpop.f32.mrf.mxu0
    %v3999 = vpop.f32.mrf.mxu0
    %v4000 = vadd.f32 %v3949, %v3999
    %v4001 = vpop.f32.mrf.mxu0
    %4002 = vdwg.mxu0
    %v4003 = vlaneseq
    %v4004 = vshrl.u32 %v4003, 7
    %v4005 = vsub.s32 0, %v4004
    %v4006 = vrot.slane %v387, %v4005
    %v4011 = vunpack.c.l.b16 %v448
    %v4012 = vunpack.c.l.b16 %v449
    %v4013 = vunpack.c.l.b16 %v450
    %v4014 = vunpack.c.l.b16 %v451
    %v4015 = vpack.c.b16 %v4012, %v4011
    %v4016 = vpack.c.b16 %v4014, %v4013
    %4019 = vmatprep.subr.bf16.mxu0 0
    %4020 = vmatpush1.bf16.msra.mxu0 0
    %4021 = vmatprep.subr.bf16.mxu0 0
    %4022 = vmatpush1.bf16.msra.mxu0 0
    %4023 = vmatprep.subr.bf16.mxu0 0
    %4024 = vmatpush1.bf16.msra.mxu0 0
    %4025 = vmatprep.subr.bf16.mxu0 0
    %4026 = vmatpush1.bf16.msra.mxu0 0
    %4027 = vmatprep.subr.bf16.mxu0 0
    %4028 = vmatpush1.bf16.msra.mxu0 0
    %4029 = vmatprep.subr.bf16.mxu0 0
    %4030 = vmatpush1.bf16.msra.mxu0 0
    %4031 = vmatprep.subr.bf16.mxu0 0
    %4032 = vmatpush1.bf16.msra.mxu0 %v4016
    %4033 = vmatprep.subr.bf16.mxu0 0
    %4034 = vmatpush1.bf16.msra.mxu0 %v4015
    %4035 = vmatprep.subr.bf16.mxu0 0
    %4036 = vmatpush2.bf16.msra.mxu0 0
    %4037 = vmatprep.subr.bf16.mxu0 0
    %4038 = vmatpush2.bf16.msra.mxu0 0
    %4039 = vmatprep.subr.bf16.mxu0 0
    %4040 = vmatpush2.bf16.msra.mxu0 0
    %4041 = vmatprep.subr.bf16.mxu0 0
    %4042 = vmatpush2.bf16.msra.mxu0 0
    %4043 = vmatprep.subr.bf16.mxu0 0
    %4044 = vmatpush2.bf16.msra.mxu0 0
    %4045 = vmatprep.subr.bf16.mxu0 0
    %4046 = vmatpush2.bf16.msra.mxu0 0
    %4047 = vmatprep.subr.bf16.mxu0 0
    %4048 = vmatpush2.bf16.msra.mxu0 0
    %4049 = vmatprep.subr.bf16.mxu0 0
    %4050 = vmatpush2.bf16.msra.mxu0 0
    %4051 = vmatprep.mubr.bf16.mxu0 0
    %4052 = vmatmul.mubr.bf16.gmra.mxu0 %v3903
    %v4053 = vpop.f32.mrf.mxu0
    %v4054 = vadd.f32 %v4006, %v4053
    %v4055 = vpop.f32.mrf.mxu0
    %v4056 = vpop.f32.mrf.mxu0
    %v4057 = vadd.f32 %v4006, %v4056
    %v4058 = vpop.f32.mrf.mxu0
    %4059 = vdwg.mxu0
    %v4060 = vpack.c.bf16 %v3943, %v3940
    %v4061 = vpack.c.bf16 %v4000, %v3997
    %v4063 = vsel %vm997, %v4060, 0
    %v4066 = vsel %vm997, %v4061, 0
    %4068 = vmatprep.subr.bf16.mxu0 0
    %4069 = vmatpush1.bf16.xpose.msra.mxu0 0
    %4070 = vmatprep.subr.bf16.mxu0 0
    %4071 = vmatpush1.bf16.xpose.msra.mxu0 0
    %4072 = vmatprep.subr.bf16.mxu0 0
    %4073 = vmatpush1.bf16.xpose.msra.mxu0 0
    %4074 = vmatprep.subr.bf16.mxu0 0
    %4075 = vmatpush1.bf16.xpose.msra.mxu0 0
    %4076 = vmatprep.subr.bf16.mxu0 0
    %4077 = vmatpush1.bf16.xpose.msra.mxu0 0
    %4078 = vmatprep.subr.bf16.mxu0 0
    %4079 = vmatpush1.bf16.xpose.msra.mxu0 0
    %4080 = vmatprep.subr.bf16.mxu0 0
    %4081 = vmatpush1.bf16.xpose.msra.mxu0 0
    %4082 = vmatprep.subr.bf16.mxu0 0
    %4083 = vmatpush1.bf16.xpose.msra.mxu0 %v4066
    %4084 = vmatprep.subr.bf16.mxu0 0
    %4085 = vmatpush2.bf16.xpose.msra.mxu0 0
    %4086 = vmatprep.subr.bf16.mxu0 0
    %4087 = vmatpush2.bf16.xpose.msra.mxu0 0
    %4088 = vmatprep.subr.bf16.mxu0 0
    %4089 = vmatpush2.bf16.xpose.msra.mxu0 0
    %4090 = vmatprep.subr.bf16.mxu0 0
    %4091 = vmatpush2.bf16.xpose.msra.mxu0 0
    %4092 = vmatprep.subr.bf16.mxu0 0
    %4093 = vmatpush2.bf16.xpose.msra.mxu0 0
    %4094 = vmatprep.subr.bf16.mxu0 0
    %4095 = vmatpush2.bf16.xpose.msra.mxu0 0
    %4096 = vmatprep.subr.bf16.mxu0 0
    %4097 = vmatpush2.bf16.xpose.msra.mxu0 0
    %4098 = vmatprep.subr.bf16.mxu0 0
    %4099 = vmatpush2.bf16.xpose.msra.mxu0 0
    %4100 = vmatprep.mubr.bf16.mxu0 0
    %4101 = vmatmul.mubr.bf16.gmra.mxu0 %v4063
    %v4102 = vpop.f32.mrf.mxu0
    %v4103 = vadd.f32 0.0, %v4102
    %v4104 = vpop.f32.mrf.mxu0
    %v4105 = vpop.f32.mrf.mxu0
    %v4106 = vadd.f32 0.0, %v4105
    %v4107 = vpop.f32.mrf.mxu0
    %4108 = vdwg.mxu0
    %v4109 = vmul.f32 %v4103, 0.35355338
    %v4110 = vmul.f32 %v4106, 0.35355338
    %v4111 = vadd.f32 %v4109, %v547
    %v4112 = vadd.f32 %v4110, %v548
    %vm4113 = vcmask 130048
    %v4114 = vsel %vm4113, %v4111, -inf
    %4115 = vmax.xlane.f32.xlu0 %v4114
    %v4116 = vpop.xlane.xlu0 %4115
    %v4117 = vsel %vm4113, %v4112, -inf
    %4118 = vmax.xlane.f32.xlu0 %v4117
    %v4119 = vpop.xlane.xlu0 %4118
    %v4120 = vsub.f32 %v4111, %v4116
    %v4121 = vsub.f32 %v4112, %v4119
    %v4122 = vmul.f32 %v4120, 1.442695
    %v4123 = vpow.pop %v4122
    %v4124 = vmul.f32 %v4121, 1.442695
    %v4125 = vpow.pop %v4124
    %v4126 = vsel %vm4113, %v4123, 0.0
    %4127 = vadd.xlane.f32.xlu0 %v4126
    %v4128 = vpop.xlane.xlu0 %4127
    %v4129 = vsel %vm4113, %v4125, 0.0
    %4130 = vadd.xlane.f32.xlu0 %v4129
    %v4131 = vpop.xlane.xlu0 %4130
    %v4132 = vrcp.pop %v4128
    %v4133 = vrcp.pop %v4131
    %v4134 = vmul.f32 %v4123, %v4132
    %v4135 = vmul.f32 %v4125, %v4133
    %v4136 = vpack.c.bf16 %v4135, %v4134
    %v4137 = vpack.c.bf16 %v4057, %v4054
    %v4139 = vsel %vm4113, %v4136, 0
    %4141 = vmatprep.subr.bf16.mxu0 0
    %4142 = vmatpush1.bf16.msra.mxu0 0
    %4143 = vmatprep.subr.bf16.mxu0 0
    %4144 = vmatpush1.bf16.msra.mxu0 0
    %4145 = vmatprep.subr.bf16.mxu0 0
    %4146 = vmatpush1.bf16.msra.mxu0 0
    %4147 = vmatprep.subr.bf16.mxu0 0
    %4148 = vmatpush1.bf16.msra.mxu0 0
    %4149 = vmatprep.subr.bf16.mxu0 0
    %4150 = vmatpush1.bf16.msra.mxu0 0
    %4151 = vmatprep.subr.bf16.mxu0 0
    %4152 = vmatpush1.bf16.msra.mxu0 0
    %4153 = vmatprep.subr.bf16.mxu0 0
    %4154 = vmatpush1.bf16.msra.mxu0 0
    %4155 = vmatprep.subr.bf16.mxu0 0
    %4156 = vmatpush1.bf16.msra.mxu0 %v4137
    %4157 = vmatprep.subr.bf16.mxu0 0
    %4158 = vmatpush2.bf16.msra.mxu0 0
    %4159 = vmatprep.subr.bf16.mxu0 0
    %4160 = vmatpush2.bf16.msra.mxu0 0
    %4161 = vmatprep.subr.bf16.mxu0 0
    %4162 = vmatpush2.bf16.msra.mxu0 0
    %4163 = vmatprep.subr.bf16.mxu0 0
    %4164 = vmatpush2.bf16.msra.mxu0 0
    %4165 = vmatprep.subr.bf16.mxu0 0
    %4166 = vmatpush2.bf16.msra.mxu0 0
    %4167 = vmatprep.subr.bf16.mxu0 0
    %4168 = vmatpush2.bf16.msra.mxu0 0
    %4169 = vmatprep.subr.bf16.mxu0 0
    %4170 = vmatpush2.bf16.msra.mxu0 0
    %4171 = vmatprep.subr.bf16.mxu0 0
    %4172 = vmatpush2.bf16.msra.mxu0 0
    %4173 = vmatprep.mubr.bf16.mxu0 0
    %4174 = vmatmul.mubr.bf16.gmra.mxu0 %v4139
    %v4175 = vpop.f32.mrf.mxu0
    %v4176 = vadd.f32 0.0, %v4175
    %v4177 = vpop.f32.mrf.mxu0
    %v4178 = vpop.f32.mrf.mxu0
    %v4179 = vadd.f32 0.0, %v4178
    %v4180 = vpop.f32.mrf.mxu0
    %4181 = vdwg.mxu0
    %v4182 = vpack.c.bf16 %v4179, %v4176
    %v4183 = vlaneseq
    %v4184 = vshrl.u32 %v4183, 7
    %v4185 = vsub.s32 1, %v4184
    %v4186 = vrot.slane %v386, %v4185
    %v4191 = vunpack.c.l.b16 %v436
    %v4192 = vunpack.c.l.b16 %v437
    %v4193 = vunpack.c.l.b16 %v438
    %v4194 = vunpack.c.l.b16 %v439
    %v4195 = vpack.c.b16 %v4192, %v4191
    %v4196 = vpack.c.b16 %v4194, %v4193
    %4199 = vmatprep.subr.bf16.mxu0 0
    %4200 = vmatpush1.bf16.msra.mxu0 0
    %4201 = vmatprep.subr.bf16.mxu0 0
    %4202 = vmatpush1.bf16.msra.mxu0 0
    %4203 = vmatprep.subr.bf16.mxu0 0
    %4204 = vmatpush1.bf16.msra.mxu0 0
    %4205 = vmatprep.subr.bf16.mxu0 0
    %4206 = vmatpush1.bf16.msra.mxu0 0
    %4207 = vmatprep.subr.bf16.mxu0 0
    %4208 = vmatpush1.bf16.msra.mxu0 0
    %4209 = vmatprep.subr.bf16.mxu0 0
    %4210 = vmatpush1.bf16.msra.mxu0 0
    %4211 = vmatprep.subr.bf16.mxu0 0
    %4212 = vmatpush1.bf16.msra.mxu0 %v4196
    %4213 = vmatprep.subr.bf16.mxu0 0
    %4214 = vmatpush1.bf16.msra.mxu0 %v4195
    %4215 = vmatprep.subr.bf16.mxu0 0
    %4216 = vmatpush2.bf16.msra.mxu0 0
    %4217 = vmatprep.subr.bf16.mxu0 0
    %4218 = vmatpush2.bf16.msra.mxu0 0
    %4219 = vmatprep.subr.bf16.mxu0 0
    %4220 = vmatpush2.bf16.msra.mxu0 0
    %4221 = vmatprep.subr.bf16.mxu0 0
    %4222 = vmatpush2.bf16.msra.mxu0 0
    %4223 = vmatprep.subr.bf16.mxu0 0
    %4224 = vmatpush2.bf16.msra.mxu0 0
    %4225 = vmatprep.subr.bf16.mxu0 0
    %4226 = vmatpush2.bf16.msra.mxu0 0
    %4227 = vmatprep.subr.bf16.mxu0 0
    %4228 = vmatpush2.bf16.msra.mxu0 0
    %4229 = vmatprep.subr.bf16.mxu0 0
    %4230 = vmatpush2.bf16.msra.mxu0 0
    %4231 = vmatprep.mubr.bf16.mxu0 0
    %4232 = vmatmul.mubr.bf16.gmra.mxu0 %v3903
    %v4233 = vpop.f32.mrf.mxu0
    %v4234 = vadd.f32 %v4186, %v4233
    %v4235 = vpop.f32.mrf.mxu0
    %v4236 = vpop.f32.mrf.mxu0
    %v4237 = vadd.f32 %v4186, %v4236
    %v4238 = vpop.f32.mrf.mxu0
    %4239 = vdwg.mxu0
    %v4240 = vlaneseq
    %v4241 = vshrl.u32 %v4240, 7
    %v4242 = vsub.s32 1, %v4241
    %v4243 = vrot.slane %v384, %v4242
    %v4248 = vunpack.c.l.b16 %v416
    %v4249 = vunpack.c.l.b16 %v417
    %v4250 = vunpack.c.l.b16 %v418
    %v4251 = vunpack.c.l.b16 %v419
    %v4252 = vpack.c.b16 %v4249, %v4248
    %v4253 = vpack.c.b16 %v4251, %v4250
    %4256 = vmatprep.subr.bf16.mxu0 0
    %4257 = vmatpush1.bf16.msra.mxu0 0
    %4258 = vmatprep.subr.bf16.mxu0 0
    %4259 = vmatpush1.bf16.msra.mxu0 0
    %4260 = vmatprep.subr.bf16.mxu0 0
    %4261 = vmatpush1.bf16.msra.mxu0 0
    %4262 = vmatprep.subr.bf16.mxu0 0
    %4263 = vmatpush1.bf16.msra.mxu0 0
    %4264 = vmatprep.subr.bf16.mxu0 0
    %4265 = vmatpush1.bf16.msra.mxu0 0
    %4266 = vmatprep.subr.bf16.mxu0 0
    %4267 = vmatpush1.bf16.msra.mxu0 0
    %4268 = vmatprep.subr.bf16.mxu0 0
    %4269 = vmatpush1.bf16.msra.mxu0 %v4253
    %4270 = vmatprep.subr.bf16.mxu0 0
    %4271 = vmatpush1.bf16.msra.mxu0 %v4252
    %4272 = vmatprep.subr.bf16.mxu0 0
    %4273 = vmatpush2.bf16.msra.mxu0 0
    %4274 = vmatprep.subr.bf16.mxu0 0
    %4275 = vmatpush2.bf16.msra.mxu0 0
    %4276 = vmatprep.subr.bf16.mxu0 0
    %4277 = vmatpush2.bf16.msra.mxu0 0
    %4278 = vmatprep.subr.bf16.mxu0 0
    %4279 = vmatpush2.bf16.msra.mxu0 0
    %4280 = vmatprep.subr.bf16.mxu0 0
    %4281 = vmatpush2.bf16.msra.mxu0 0
    %4282 = vmatprep.subr.bf16.mxu0 0
    %4283 = vmatpush2.bf16.msra.mxu0 0
    %4284 = vmatprep.subr.bf16.mxu0 0
    %4285 = vmatpush2.bf16.msra.mxu0 0
    %4286 = vmatprep.subr.bf16.mxu0 0
    %4287 = vmatpush2.bf16.msra.mxu0 0
    %4288 = vmatprep.mubr.bf16.mxu0 0
    %4289 = vmatmul.mubr.bf16.gmra.mxu0 %v3903
    %v4290 = vpop.f32.mrf.mxu0
    %v4291 = vadd.f32 %v4243, %v4290
    %v4292 = vpop.f32.mrf.mxu0
    %v4293 = vpop.f32.mrf.mxu0
    %v4294 = vadd.f32 %v4243, %v4293
    %v4295 = vpop.f32.mrf.mxu0
    %4296 = vdwg.mxu0
    %v4297 = vlaneseq
    %v4298 = vshrl.u32 %v4297, 7
    %v4299 = vsub.s32 1, %v4298
    %v4300 = vrot.slane %v387, %v4299
    %v4305 = vunpack.c.l.b16 %v452
    %v4306 = vunpack.c.l.b16 %v453
    %v4307 = vunpack.c.l.b16 %v454
    %v4308 = vunpack.c.l.b16 %v455
    %v4309 = vpack.c.b16 %v4306, %v4305
    %v4310 = vpack.c.b16 %v4308, %v4307
    %4313 = vmatprep.subr.bf16.mxu0 0
    %4314 = vmatpush1.bf16.msra.mxu0 0
    %4315 = vmatprep.subr.bf16.mxu0 0
    %4316 = vmatpush1.bf16.msra.mxu0 0
    %4317 = vmatprep.subr.bf16.mxu0 0
    %4318 = vmatpush1.bf16.msra.mxu0 0
    %4319 = vmatprep.subr.bf16.mxu0 0
    %4320 = vmatpush1.bf16.msra.mxu0 0
    %4321 = vmatprep.subr.bf16.mxu0 0
    %4322 = vmatpush1.bf16.msra.mxu0 0
    %4323 = vmatprep.subr.bf16.mxu0 0
    %4324 = vmatpush1.bf16.msra.mxu0 0
    %4325 = vmatprep.subr.bf16.mxu0 0
    %4326 = vmatpush1.bf16.msra.mxu0 %v4310
    %4327 = vmatprep.subr.bf16.mxu0 0
    %4328 = vmatpush1.bf16.msra.mxu0 %v4309
    %4329 = vmatprep.subr.bf16.mxu0 0
    %4330 = vmatpush2.bf16.msra.mxu0 0
    %4331 = vmatprep.subr.bf16.mxu0 0
    %4332 = vmatpush2.bf16.msra.mxu0 0
    %4333 = vmatprep.subr.bf16.mxu0 0
    %4334 = vmatpush2.bf16.msra.mxu0 0
    %4335 = vmatprep.subr.bf16.mxu0 0
    %4336 = vmatpush2.bf16.msra.mxu0 0
    %4337 = vmatprep.subr.bf16.mxu0 0
    %4338 = vmatpush2.bf16.msra.mxu0 0
    %4339 = vmatprep.subr.bf16.mxu0 0
    %4340 = vmatpush2.bf16.msra.mxu0 0
    %4341 = vmatprep.subr.bf16.mxu0 0
    %4342 = vmatpush2.bf16.msra.mxu0 0
    %4343 = vmatprep.subr.bf16.mxu0 0
    %4344 = vmatpush2.bf16.msra.mxu0 0
    %4345 = vmatprep.mubr.bf16.mxu0 0
    %4346 = vmatmul.mubr.bf16.gmra.mxu0 %v3903
    %v4347 = vpop.f32.mrf.mxu0
    %v4348 = vadd.f32 %v4300, %v4347
    %v4349 = vpop.f32.mrf.mxu0
    %v4350 = vpop.f32.mrf.mxu0
    %v4351 = vadd.f32 %v4300, %v4350
    %v4352 = vpop.f32.mrf.mxu0
    %4353 = vdwg.mxu0
    %v4354 = vpack.c.bf16 %v4237, %v4234
    %v4355 = vpack.c.bf16 %v4294, %v4291
    %v4357 = vsel %vm997, %v4354, 0
    %v4360 = vsel %vm997, %v4355, 0
    %4362 = vmatprep.subr.bf16.mxu0 0
    %4363 = vmatpush1.bf16.xpose.msra.mxu0 0
    %4364 = vmatprep.subr.bf16.mxu0 0
    %4365 = vmatpush1.bf16.xpose.msra.mxu0 0
    %4366 = vmatprep.subr.bf16.mxu0 0
    %4367 = vmatpush1.bf16.xpose.msra.mxu0 0
    %4368 = vmatprep.subr.bf16.mxu0 0
    %4369 = vmatpush1.bf16.xpose.msra.mxu0 0
    %4370 = vmatprep.subr.bf16.mxu0 0
    %4371 = vmatpush1.bf16.xpose.msra.mxu0 0
    %4372 = vmatprep.subr.bf16.mxu0 0
    %4373 = vmatpush1.bf16.xpose.msra.mxu0 0
    %4374 = vmatprep.subr.bf16.mxu0 0
    %4375 = vmatpush1.bf16.xpose.msra.mxu0 0
    %4376 = vmatprep.subr.bf16.mxu0 0
    %4377 = vmatpush1.bf16.xpose.msra.mxu0 %v4360
    %4378 = vmatprep.subr.bf16.mxu0 0
    %4379 = vmatpush2.bf16.xpose.msra.mxu0 0
    %4380 = vmatprep.subr.bf16.mxu0 0
    %4381 = vmatpush2.bf16.xpose.msra.mxu0 0
    %4382 = vmatprep.subr.bf16.mxu0 0
    %4383 = vmatpush2.bf16.xpose.msra.mxu0 0
    %4384 = vmatprep.subr.bf16.mxu0 0
    %4385 = vmatpush2.bf16.xpose.msra.mxu0 0
    %4386 = vmatprep.subr.bf16.mxu0 0
    %4387 = vmatpush2.bf16.xpose.msra.mxu0 0
    %4388 = vmatprep.subr.bf16.mxu0 0
    %4389 = vmatpush2.bf16.xpose.msra.mxu0 0
    %4390 = vmatprep.subr.bf16.mxu0 0
    %4391 = vmatpush2.bf16.xpose.msra.mxu0 0
    %4392 = vmatprep.subr.bf16.mxu0 0
    %4393 = vmatpush2.bf16.xpose.msra.mxu0 0
    %4394 = vmatprep.mubr.bf16.mxu0 0
    %4395 = vmatmul.mubr.bf16.gmra.mxu0 %v4357
    %v4396 = vpop.f32.mrf.mxu0
    %v4397 = vadd.f32 0.0, %v4396
    %v4398 = vpop.f32.mrf.mxu0
    %v4399 = vpop.f32.mrf.mxu0
    %v4400 = vadd.f32 0.0, %v4399
    %v4401 = vpop.f32.mrf.mxu0
    %4402 = vdwg.mxu0
    %v4403 = vmul.f32 %v4397, 0.35355338
    %v4404 = vmul.f32 %v4400, 0.35355338
    %v4405 = vadd.f32 %v4403, %v547
    %v4406 = vadd.f32 %v4404, %v548
    %v4407 = vsel %vm4113, %v4405, -inf
    %4408 = vmax.xlane.f32.xlu0 %v4407
    %v4409 = vpop.xlane.xlu0 %4408
    %v4410 = vsel %vm4113, %v4406, -inf
    %4411 = vmax.xlane.f32.xlu0 %v4410
    %v4412 = vpop.xlane.xlu0 %4411
    %v4413 = vsub.f32 %v4405, %v4409
    %v4414 = vsub.f32 %v4406, %v4412
    %v4415 = vmul.f32 %v4413, 1.442695
    %v4416 = vpow.pop %v4415
    %v4417 = vmul.f32 %v4414, 1.442695
    %v4418 = vpow.pop %v4417
    %v4419 = vsel %vm4113, %v4416, 0.0
    %4420 = vadd.xlane.f32.xlu0 %v4419
    %v4421 = vpop.xlane.xlu0 %4420
    %v4422 = vsel %vm4113, %v4418, 0.0
    %4423 = vadd.xlane.f32.xlu0 %v4422
    %v4424 = vpop.xlane.xlu0 %4423
    %v4425 = vrcp.pop %v4421
    %v4426 = vrcp.pop %v4424
    %v4427 = vmul.f32 %v4416, %v4425
    %v4428 = vmul.f32 %v4418, %v4426
    %v4429 = vpack.c.bf16 %v4428, %v4427
    %v4430 = vpack.c.bf16 %v4351, %v4348
    %v4432 = vsel %vm4113, %v4429, 0
    %4434 = vmatprep.subr.bf16.mxu0 0
    %4435 = vmatpush1.bf16.msra.mxu0 0
    %4436 = vmatprep.subr.bf16.mxu0 0
    %4437 = vmatpush1.bf16.msra.mxu0 0
    %4438 = vmatprep.subr.bf16.mxu0 0
    %4439 = vmatpush1.bf16.msra.mxu0 0
    %4440 = vmatprep.subr.bf16.mxu0 0
    %4441 = vmatpush1.bf16.msra.mxu0 0
    %4442 = vmatprep.subr.bf16.mxu0 0
    %4443 = vmatpush1.bf16.msra.mxu0 0
    %4444 = vmatprep.subr.bf16.mxu0 0
    %4445 = vmatpush1.bf16.msra.mxu0 0
    %4446 = vmatprep.subr.bf16.mxu0 0
    %4447 = vmatpush1.bf16.msra.mxu0 0
    %4448 = vmatprep.subr.bf16.mxu0 0
    %4449 = vmatpush1.bf16.msra.mxu0 %v4430
    %4450 = vmatprep.subr.bf16.mxu0 0
    %4451 = vmatpush2.bf16.msra.mxu0 0
    %4452 = vmatprep.subr.bf16.mxu0 0
    %4453 = vmatpush2.bf16.msra.mxu0 0
    %4454 = vmatprep.subr.bf16.mxu0 0
    %4455 = vmatpush2.bf16.msra.mxu0 0
    %4456 = vmatprep.subr.bf16.mxu0 0
    %4457 = vmatpush2.bf16.msra.mxu0 0
    %4458 = vmatprep.subr.bf16.mxu0 0
    %4459 = vmatpush2.bf16.msra.mxu0 0
    %4460 = vmatprep.subr.bf16.mxu0 0
    %4461 = vmatpush2.bf16.msra.mxu0 0
    %4462 = vmatprep.subr.bf16.mxu0 0
    %4463 = vmatpush2.bf16.msra.mxu0 0
    %4464 = vmatprep.subr.bf16.mxu0 0
    %4465 = vmatpush2.bf16.msra.mxu0 0
    %4466 = vmatprep.mubr.bf16.mxu0 0
    %4467 = vmatmul.mubr.bf16.gmra.mxu0 %v4432
    %v4468 = vpop.f32.mrf.mxu0
    %v4469 = vadd.f32 0.0, %v4468
    %v4470 = vpop.f32.mrf.mxu0
    %v4471 = vpop.f32.mrf.mxu0
    %v4472 = vadd.f32 0.0, %v4471
    %v4473 = vpop.f32.mrf.mxu0
    %4474 = vdwg.mxu0
    %v4475 = vpack.c.bf16 %v4472, %v4469
    %v4477 = vsel %vm997, %v4475, 0
    %v4480 = vsel %vm665, %v429, 0
    %4482 = vmatprep.subr.bf16.mxu0 0
    %4483 = vmatpush1.bf16.msra.mxu0 0
    %4484 = vmatprep.subr.bf16.mxu0 0
    %4485 = vmatpush1.bf16.msra.mxu0 0
    %4486 = vmatprep.subr.bf16.mxu0 0
    %4487 = vmatpush1.bf16.msra.mxu0 0
    %4488 = vmatprep.subr.bf16.mxu0 0
    %4489 = vmatpush1.bf16.msra.mxu0 0
    %4490 = vmatprep.subr.bf16.mxu0 0
    %4491 = vmatpush1.bf16.msra.mxu0 0
    %4492 = vmatprep.subr.bf16.mxu0 0
    %4493 = vmatpush1.bf16.msra.mxu0 0
    %4494 = vmatprep.subr.bf16.mxu0 0
    %4495 = vmatpush1.bf16.msra.mxu0 0
    %4496 = vmatprep.subr.bf16.mxu0 0
    %4497 = vmatpush1.bf16.msra.mxu0 %v4480
    %4498 = vmatprep.subr.bf16.mxu0 0
    %4499 = vmatpush2.bf16.msra.mxu0 0
    %4500 = vmatprep.subr.bf16.mxu0 0
    %4501 = vmatpush2.bf16.msra.mxu0 0
    %4502 = vmatprep.subr.bf16.mxu0 0
    %4503 = vmatpush2.bf16.msra.mxu0 0
    %4504 = vmatprep.subr.bf16.mxu0 0
    %4505 = vmatpush2.bf16.msra.mxu0 0
    %4506 = vmatprep.subr.bf16.mxu0 0
    %4507 = vmatpush2.bf16.msra.mxu0 0
    %4508 = vmatprep.subr.bf16.mxu0 0
    %4509 = vmatpush2.bf16.msra.mxu0 0
    %4510 = vmatprep.subr.bf16.mxu0 0
    %4511 = vmatpush2.bf16.msra.mxu0 0
    %4512 = vmatprep.subr.bf16.mxu0 0
    %4513 = vmatpush2.bf16.msra.mxu0 0
    %4514 = vmatprep.mubr.bf16.mxu0 0
    %4515 = vmatmul.mubr.bf16.gmra.mxu0 %v4477
    %v4516 = vpop.f32.mrf.mxu0
    %v4517 = vadd.f32 0.0, %v4516
    %v4518 = vpop.f32.mrf.mxu0
    %v4519 = vpop.f32.mrf.mxu0
    %v4520 = vadd.f32 0.0, %v4519
    %v4521 = vpop.f32.mrf.mxu0
    %4522 = vdwg.mxu0
    %v4524 = vsel %vm997, %v4182, 0
    %v4527 = vsel %vm665, %v428, 0
    %4529 = vmatprep.subr.bf16.mxu0 0
    %4530 = vmatpush1.bf16.msra.mxu0 0
    %4531 = vmatprep.subr.bf16.mxu0 0
    %4532 = vmatpush1.bf16.msra.mxu0 0
    %4533 = vmatprep.subr.bf16.mxu0 0
    %4534 = vmatpush1.bf16.msra.mxu0 0
    %4535 = vmatprep.subr.bf16.mxu0 0
    %4536 = vmatpush1.bf16.msra.mxu0 0
    %4537 = vmatprep.subr.bf16.mxu0 0
    %4538 = vmatpush1.bf16.msra.mxu0 0
    %4539 = vmatprep.subr.bf16.mxu0 0
    %4540 = vmatpush1.bf16.msra.mxu0 0
    %4541 = vmatprep.subr.bf16.mxu0 0
    %4542 = vmatpush1.bf16.msra.mxu0 0
    %4543 = vmatprep.subr.bf16.mxu0 0
    %4544 = vmatpush1.bf16.msra.mxu0 %v4527
    %4545 = vmatprep.subr.bf16.mxu0 0
    %4546 = vmatpush2.bf16.msra.mxu0 0
    %4547 = vmatprep.subr.bf16.mxu0 0
    %4548 = vmatpush2.bf16.msra.mxu0 0
    %4549 = vmatprep.subr.bf16.mxu0 0
    %4550 = vmatpush2.bf16.msra.mxu0 0
    %4551 = vmatprep.subr.bf16.mxu0 0
    %4552 = vmatpush2.bf16.msra.mxu0 0
    %4553 = vmatprep.subr.bf16.mxu0 0
    %4554 = vmatpush2.bf16.msra.mxu0 0
    %4555 = vmatprep.subr.bf16.mxu0 0
    %4556 = vmatpush2.bf16.msra.mxu0 0
    %4557 = vmatprep.subr.bf16.mxu0 0
    %4558 = vmatpush2.bf16.msra.mxu0 0
    %4559 = vmatprep.subr.bf16.mxu0 0
    %4560 = vmatpush2.bf16.msra.mxu0 0
    %4561 = vmatprep.mubr.bf16.mxu0 0
    %4562 = vmatmul.mubr.bf16.gmra.mxu0 %v4524
    %v4563 = vpop.f32.mrf.mxu0
    %v4564 = vadd.f32 %v4517, %v4563
    %v4565 = vpop.f32.mrf.mxu0
    %v4566 = vpop.f32.mrf.mxu0
    %v4567 = vadd.f32 %v4520, %v4566
    %v4568 = vpop.f32.mrf.mxu0
    %4569 = vdwg.mxu0
    %v4570 = vlaneseq
    %v4571 = vshrl.u32 %v4570, 7
    %v4572 = vsub.s32 2, %v4571
    %v4573 = vrot.slane %v386, %v4572
    %v4578 = vunpack.c.l.b16 %v440
    %v4579 = vunpack.c.l.b16 %v441
    %v4580 = vunpack.c.l.b16 %v442
    %v4581 = vunpack.c.l.b16 %v443
    %v4582 = vpack.c.b16 %v4579, %v4578
    %v4583 = vpack.c.b16 %v4581, %v4580
    %4586 = vmatprep.subr.bf16.mxu0 0
    %4587 = vmatpush1.bf16.msra.mxu0 0
    %4588 = vmatprep.subr.bf16.mxu0 0
    %4589 = vmatpush1.bf16.msra.mxu0 0
    %4590 = vmatprep.subr.bf16.mxu0 0
    %4591 = vmatpush1.bf16.msra.mxu0 0
    %4592 = vmatprep.subr.bf16.mxu0 0
    %4593 = vmatpush1.bf16.msra.mxu0 0
    %4594 = vmatprep.subr.bf16.mxu0 0
    %4595 = vmatpush1.bf16.msra.mxu0 0
    %4596 = vmatprep.subr.bf16.mxu0 0
    %4597 = vmatpush1.bf16.msra.mxu0 0
    %4598 = vmatprep.subr.bf16.mxu0 0
    %4599 = vmatpush1.bf16.msra.mxu0 %v4583
    %4600 = vmatprep.subr.bf16.mxu0 0
    %4601 = vmatpush1.bf16.msra.mxu0 %v4582
    %4602 = vmatprep.subr.bf16.mxu0 0
    %4603 = vmatpush2.bf16.msra.mxu0 0
    %4604 = vmatprep.subr.bf16.mxu0 0
    %4605 = vmatpush2.bf16.msra.mxu0 0
    %4606 = vmatprep.subr.bf16.mxu0 0
    %4607 = vmatpush2.bf16.msra.mxu0 0
    %4608 = vmatprep.subr.bf16.mxu0 0
    %4609 = vmatpush2.bf16.msra.mxu0 0
    %4610 = vmatprep.subr.bf16.mxu0 0
    %4611 = vmatpush2.bf16.msra.mxu0 0
    %4612 = vmatprep.subr.bf16.mxu0 0
    %4613 = vmatpush2.bf16.msra.mxu0 0
    %4614 = vmatprep.subr.bf16.mxu0 0
    %4615 = vmatpush2.bf16.msra.mxu0 0
    %4616 = vmatprep.subr.bf16.mxu0 0
    %4617 = vmatpush2.bf16.msra.mxu0 0
    %4618 = vmatprep.mubr.bf16.mxu0 0
    %4619 = vmatmul.mubr.bf16.gmra.mxu0 %v3903
    %v4620 = vpop.f32.mrf.mxu0
    %v4621 = vadd.f32 %v4573, %v4620
    %v4622 = vpop.f32.mrf.mxu0
    %v4623 = vpop.f32.mrf.mxu0
    %v4624 = vadd.f32 %v4573, %v4623
    %v4625 = vpop.f32.mrf.mxu0
    %4626 = vdwg.mxu0
    %v4627 = vlaneseq
    %v4628 = vshrl.u32 %v4627, 7
    %v4629 = vsub.s32 2, %v4628
    %v4630 = vrot.slane %v384, %v4629
    %v4635 = vunpack.c.l.b16 %v420
    %v4636 = vunpack.c.l.b16 %v421
    %v4637 = vunpack.c.l.b16 %v422
    %v4638 = vunpack.c.l.b16 %v423
    %v4639 = vpack.c.b16 %v4636, %v4635
    %v4640 = vpack.c.b16 %v4638, %v4637
    %4643 = vmatprep.subr.bf16.mxu0 0
    %4644 = vmatpush1.bf16.msra.mxu0 0
    %4645 = vmatprep.subr.bf16.mxu0 0
    %4646 = vmatpush1.bf16.msra.mxu0 0
    %4647 = vmatprep.subr.bf16.mxu0 0
    %4648 = vmatpush1.bf16.msra.mxu0 0
    %4649 = vmatprep.subr.bf16.mxu0 0
    %4650 = vmatpush1.bf16.msra.mxu0 0
    %4651 = vmatprep.subr.bf16.mxu0 0
    %4652 = vmatpush1.bf16.msra.mxu0 0
    %4653 = vmatprep.subr.bf16.mxu0 0
    %4654 = vmatpush1.bf16.msra.mxu0 0
    %4655 = vmatprep.subr.bf16.mxu0 0
    %4656 = vmatpush1.bf16.msra.mxu0 %v4640
    %4657 = vmatprep.subr.bf16.mxu0 0
    %4658 = vmatpush1.bf16.msra.mxu0 %v4639
    %4659 = vmatprep.subr.bf16.mxu0 0
    %4660 = vmatpush2.bf16.msra.mxu0 0
    %4661 = vmatprep.subr.bf16.mxu0 0
    %4662 = vmatpush2.bf16.msra.mxu0 0
    %4663 = vmatprep.subr.bf16.mxu0 0
    %4664 = vmatpush2.bf16.msra.mxu0 0
    %4665 = vmatprep.subr.bf16.mxu0 0
    %4666 = vmatpush2.bf16.msra.mxu0 0
    %4667 = vmatprep.subr.bf16.mxu0 0
    %4668 = vmatpush2.bf16.msra.mxu0 0
    %4669 = vmatprep.subr.bf16.mxu0 0
    %4670 = vmatpush2.bf16.msra.mxu0 0
    %4671 = vmatprep.subr.bf16.mxu0 0
    %4672 = vmatpush2.bf16.msra.mxu0 0
    %4673 = vmatprep.subr.bf16.mxu0 0
    %4674 = vmatpush2.bf16.msra.mxu0 0
    %4675 = vmatprep.mubr.bf16.mxu0 0
    %4676 = vmatmul.mubr.bf16.gmra.mxu0 %v3903
    %v4677 = vpop.f32.mrf.mxu0
    %v4678 = vadd.f32 %v4630, %v4677
    %v4679 = vpop.f32.mrf.mxu0
    %v4680 = vpop.f32.mrf.mxu0
    %v4681 = vadd.f32 %v4630, %v4680
    %v4682 = vpop.f32.mrf.mxu0
    %4683 = vdwg.mxu0
    %v4684 = vlaneseq
    %v4685 = vshrl.u32 %v4684, 7
    %v4686 = vsub.s32 2, %v4685
    %v4687 = vrot.slane %v387, %v4686
    %v4692 = vunpack.c.l.b16 %v456
    %v4693 = vunpack.c.l.b16 %v457
    %v4694 = vunpack.c.l.b16 %v458
    %v4695 = vunpack.c.l.b16 %v459
    %v4696 = vpack.c.b16 %v4693, %v4692
    %v4697 = vpack.c.b16 %v4695, %v4694
    %4700 = vmatprep.subr.bf16.mxu0 0
    %4701 = vmatpush1.bf16.msra.mxu0 0
    %4702 = vmatprep.subr.bf16.mxu0 0
    %4703 = vmatpush1.bf16.msra.mxu0 0
    %4704 = vmatprep.subr.bf16.mxu0 0
    %4705 = vmatpush1.bf16.msra.mxu0 0
    %4706 = vmatprep.subr.bf16.mxu0 0
    %4707 = vmatpush1.bf16.msra.mxu0 0
    %4708 = vmatprep.subr.bf16.mxu0 0
    %4709 = vmatpush1.bf16.msra.mxu0 0
    %4710 = vmatprep.subr.bf16.mxu0 0
    %4711 = vmatpush1.bf16.msra.mxu0 0
    %4712 = vmatprep.subr.bf16.mxu0 0
    %4713 = vmatpush1.bf16.msra.mxu0 %v4697
    %4714 = vmatprep.subr.bf16.mxu0 0
    %4715 = vmatpush1.bf16.msra.mxu0 %v4696
    %4716 = vmatprep.subr.bf16.mxu0 0
    %4717 = vmatpush2.bf16.msra.mxu0 0
    %4718 = vmatprep.subr.bf16.mxu0 0
    %4719 = vmatpush2.bf16.msra.mxu0 0
    %4720 = vmatprep.subr.bf16.mxu0 0
    %4721 = vmatpush2.bf16.msra.mxu0 0
    %4722 = vmatprep.subr.bf16.mxu0 0
    %4723 = vmatpush2.bf16.msra.mxu0 0
    %4724 = vmatprep.subr.bf16.mxu0 0
    %4725 = vmatpush2.bf16.msra.mxu0 0
    %4726 = vmatprep.subr.bf16.mxu0 0
    %4727 = vmatpush2.bf16.msra.mxu0 0
    %4728 = vmatprep.subr.bf16.mxu0 0
    %4729 = vmatpush2.bf16.msra.mxu0 0
    %4730 = vmatprep.subr.bf16.mxu0 0
    %4731 = vmatpush2.bf16.msra.mxu0 0
    %4732 = vmatprep.mubr.bf16.mxu0 0
    %4733 = vmatmul.mubr.bf16.gmra.mxu0 %v3903
    %v4734 = vpop.f32.mrf.mxu0
    %v4735 = vadd.f32 %v4687, %v4734
    %v4736 = vpop.f32.mrf.mxu0
    %v4737 = vpop.f32.mrf.mxu0
    %v4738 = vadd.f32 %v4687, %v4737
    %v4739 = vpop.f32.mrf.mxu0
    %4740 = vdwg.mxu0
    %v4741 = vpack.c.bf16 %v4624, %v4621
    %v4742 = vpack.c.bf16 %v4681, %v4678
    %v4744 = vsel %vm997, %v4741, 0
    %v4747 = vsel %vm997, %v4742, 0
    %4749 = vmatprep.subr.bf16.mxu0 0
    %4750 = vmatpush1.bf16.xpose.msra.mxu0 0
    %4751 = vmatprep.subr.bf16.mxu0 0
    %4752 = vmatpush1.bf16.xpose.msra.mxu0 0
    %4753 = vmatprep.subr.bf16.mxu0 0
    %4754 = vmatpush1.bf16.xpose.msra.mxu0 0
    %4755 = vmatprep.subr.bf16.mxu0 0
    %4756 = vmatpush1.bf16.xpose.msra.mxu0 0
    %4757 = vmatprep.subr.bf16.mxu0 0
    %4758 = vmatpush1.bf16.xpose.msra.mxu0 0
    %4759 = vmatprep.subr.bf16.mxu0 0
    %4760 = vmatpush1.bf16.xpose.msra.mxu0 0
    %4761 = vmatprep.subr.bf16.mxu0 0
    %4762 = vmatpush1.bf16.xpose.msra.mxu0 0
    %4763 = vmatprep.subr.bf16.mxu0 0
    %4764 = vmatpush1.bf16.xpose.msra.mxu0 %v4747
    %4765 = vmatprep.subr.bf16.mxu0 0
    %4766 = vmatpush2.bf16.xpose.msra.mxu0 0
    %4767 = vmatprep.subr.bf16.mxu0 0
    %4768 = vmatpush2.bf16.xpose.msra.mxu0 0
    %4769 = vmatprep.subr.bf16.mxu0 0
    %4770 = vmatpush2.bf16.xpose.msra.mxu0 0
    %4771 = vmatprep.subr.bf16.mxu0 0
    %4772 = vmatpush2.bf16.xpose.msra.mxu0 0
    %4773 = vmatprep.subr.bf16.mxu0 0
    %4774 = vmatpush2.bf16.xpose.msra.mxu0 0
    %4775 = vmatprep.subr.bf16.mxu0 0
    %4776 = vmatpush2.bf16.xpose.msra.mxu0 0
    %4777 = vmatprep.subr.bf16.mxu0 0
    %4778 = vmatpush2.bf16.xpose.msra.mxu0 0
    %4779 = vmatprep.subr.bf16.mxu0 0
    %4780 = vmatpush2.bf16.xpose.msra.mxu0 0
    %4781 = vmatprep.mubr.bf16.mxu0 0
    %4782 = vmatmul.mubr.bf16.gmra.mxu0 %v4744
    %v4783 = vpop.f32.mrf.mxu0
    %v4784 = vadd.f32 0.0, %v4783
    %v4785 = vpop.f32.mrf.mxu0
    %v4786 = vpop.f32.mrf.mxu0
    %v4787 = vadd.f32 0.0, %v4786
    %v4788 = vpop.f32.mrf.mxu0
    %4789 = vdwg.mxu0
    %v4790 = vmul.f32 %v4784, 0.35355338
    %v4791 = vmul.f32 %v4787, 0.35355338
    %v4792 = vadd.f32 %v4790, %v547
    %v4793 = vadd.f32 %v4791, %v548
    %v4794 = vsel %vm4113, %v4792, -inf
    %4795 = vmax.xlane.f32.xlu0 %v4794
    %v4796 = vpop.xlane.xlu0 %4795
    %v4797 = vsel %vm4113, %v4793, -inf
    %4798 = vmax.xlane.f32.xlu0 %v4797
    %v4799 = vpop.xlane.xlu0 %4798
    %v4800 = vsub.f32 %v4792, %v4796
    %v4801 = vsub.f32 %v4793, %v4799
    %v4802 = vmul.f32 %v4800, 1.442695
    %v4803 = vpow.pop %v4802
    %v4804 = vmul.f32 %v4801, 1.442695
    %v4805 = vpow.pop %v4804
    %v4806 = vsel %vm4113, %v4803, 0.0
    %4807 = vadd.xlane.f32.xlu0 %v4806
    %v4808 = vpop.xlane.xlu0 %4807
    %v4809 = vsel %vm4113, %v4805, 0.0
    %4810 = vadd.xlane.f32.xlu0 %v4809
    %v4811 = vpop.xlane.xlu0 %4810
    %v4812 = vrcp.pop %v4808
    %v4813 = vrcp.pop %v4811
    %v4814 = vmul.f32 %v4803, %v4812
    %v4815 = vmul.f32 %v4805, %v4813
    %v4816 = vpack.c.bf16 %v4815, %v4814
    %v4817 = vpack.c.bf16 %v4738, %v4735
    %v4819 = vsel %vm4113, %v4816, 0
    %4821 = vmatprep.subr.bf16.mxu0 0
    %4822 = vmatpush1.bf16.msra.mxu0 0
    %4823 = vmatprep.subr.bf16.mxu0 0
    %4824 = vmatpush1.bf16.msra.mxu0 0
    %4825 = vmatprep.subr.bf16.mxu0 0
    %4826 = vmatpush1.bf16.msra.mxu0 0
    %4827 = vmatprep.subr.bf16.mxu0 0
    %4828 = vmatpush1.bf16.msra.mxu0 0
    %4829 = vmatprep.subr.bf16.mxu0 0
    %4830 = vmatpush1.bf16.msra.mxu0 0
    %4831 = vmatprep.subr.bf16.mxu0 0
    %4832 = vmatpush1.bf16.msra.mxu0 0
    %4833 = vmatprep.subr.bf16.mxu0 0
    %4834 = vmatpush1.bf16.msra.mxu0 0
    %4835 = vmatprep.subr.bf16.mxu0 0
    %4836 = vmatpush1.bf16.msra.mxu0 %v4817
    %4837 = vmatprep.subr.bf16.mxu0 0
    %4838 = vmatpush2.bf16.msra.mxu0 0
    %4839 = vmatprep.subr.bf16.mxu0 0
    %4840 = vmatpush2.bf16.msra.mxu0 0
    %4841 = vmatprep.subr.bf16.mxu0 0
    %4842 = vmatpush2.bf16.msra.mxu0 0
    %4843 = vmatprep.subr.bf16.mxu0 0
    %4844 = vmatpush2.bf16.msra.mxu0 0
    %4845 = vmatprep.subr.bf16.mxu0 0
    %4846 = vmatpush2.bf16.msra.mxu0 0
    %4847 = vmatprep.subr.bf16.mxu0 0
    %4848 = vmatpush2.bf16.msra.mxu0 0
    %4849 = vmatprep.subr.bf16.mxu0 0
    %4850 = vmatpush2.bf16.msra.mxu0 0
    %4851 = vmatprep.subr.bf16.mxu0 0
    %4852 = vmatpush2.bf16.msra.mxu0 0
    %4853 = vmatprep.mubr.bf16.mxu0 0
    %4854 = vmatmul.mubr.bf16.gmra.mxu0 %v4819
    %v4855 = vpop.f32.mrf.mxu0
    %v4856 = vadd.f32 0.0, %v4855
    %v4857 = vpop.f32.mrf.mxu0
    %v4858 = vpop.f32.mrf.mxu0
    %v4859 = vadd.f32 0.0, %v4858
    %v4860 = vpop.f32.mrf.mxu0
    %4861 = vdwg.mxu0
    %v4862 = vpack.c.bf16 %v4859, %v4856
    %v4864 = vsel %vm997, %v4862, 0
    %v4867 = vsel %vm665, %v430, 0
    %4869 = vmatprep.subr.bf16.mxu0 0
    %4870 = vmatpush1.bf16.msra.mxu0 0
    %4871 = vmatprep.subr.bf16.mxu0 0
    %4872 = vmatpush1.bf16.msra.mxu0 0
    %4873 = vmatprep.subr.bf16.mxu0 0
    %4874 = vmatpush1.bf16.msra.mxu0 0
    %4875 = vmatprep.subr.bf16.mxu0 0
    %4876 = vmatpush1.bf16.msra.mxu0 0
    %4877 = vmatprep.subr.bf16.mxu0 0
    %4878 = vmatpush1.bf16.msra.mxu0 0
    %4879 = vmatprep.subr.bf16.mxu0 0
    %4880 = vmatpush1.bf16.msra.mxu0 0
    %4881 = vmatprep.subr.bf16.mxu0 0
    %4882 = vmatpush1.bf16.msra.mxu0 0
    %4883 = vmatprep.subr.bf16.mxu0 0
    %4884 = vmatpush1.bf16.msra.mxu0 %v4867
    %4885 = vmatprep.subr.bf16.mxu0 0
    %4886 = vmatpush2.bf16.msra.mxu0 0
    %4887 = vmatprep.subr.bf16.mxu0 0
    %4888 = vmatpush2.bf16.msra.mxu0 0
    %4889 = vmatprep.subr.bf16.mxu0 0
    %4890 = vmatpush2.bf16.msra.mxu0 0
    %4891 = vmatprep.subr.bf16.mxu0 0
    %4892 = vmatpush2.bf16.msra.mxu0 0
    %4893 = vmatprep.subr.bf16.mxu0 0
    %4894 = vmatpush2.bf16.msra.mxu0 0
    %4895 = vmatprep.subr.bf16.mxu0 0
    %4896 = vmatpush2.bf16.msra.mxu0 0
    %4897 = vmatprep.subr.bf16.mxu0 0
    %4898 = vmatpush2.bf16.msra.mxu0 0
    %4899 = vmatprep.subr.bf16.mxu0 0
    %4900 = vmatpush2.bf16.msra.mxu0 0
    %4901 = vmatprep.mubr.bf16.mxu0 0
    %4902 = vmatmul.mubr.bf16.gmra.mxu0 %v4864
    %v4903 = vpop.f32.mrf.mxu0
    %v4904 = vadd.f32 0.0, %v4903
    %v4905 = vpop.f32.mrf.mxu0
    %v4906 = vpop.f32.mrf.mxu0
    %v4907 = vadd.f32 0.0, %v4906
    %v4908 = vpop.f32.mrf.mxu0
    %4909 = vdwg.mxu0
    %v4910 = vadd.f32 %v4564, %v4904
    %v4911 = vadd.f32 %v4567, %v4907
    %v4912 = vlaneseq
    %v4913 = vshrl.u32 %v4912, 7
    %v4914 = vsub.s32 3, %v4913
    %v4915 = vrot.slane %v386, %v4914
    %v4920 = vunpack.c.l.b16 %v444
    %v4921 = vunpack.c.l.b16 %v445
    %v4922 = vunpack.c.l.b16 %v446
    %v4923 = vunpack.c.l.b16 %v447
    %v4924 = vpack.c.b16 %v4921, %v4920
    %v4925 = vpack.c.b16 %v4923, %v4922
    %4928 = vmatprep.subr.bf16.mxu0 0
    %4929 = vmatpush1.bf16.msra.mxu0 0
    %4930 = vmatprep.subr.bf16.mxu0 0
    %4931 = vmatpush1.bf16.msra.mxu0 0
    %4932 = vmatprep.subr.bf16.mxu0 0
    %4933 = vmatpush1.bf16.msra.mxu0 0
    %4934 = vmatprep.subr.bf16.mxu0 0
    %4935 = vmatpush1.bf16.msra.mxu0 0
    %4936 = vmatprep.subr.bf16.mxu0 0
    %4937 = vmatpush1.bf16.msra.mxu0 0
    %4938 = vmatprep.subr.bf16.mxu0 0
    %4939 = vmatpush1.bf16.msra.mxu0 0
    %4940 = vmatprep.subr.bf16.mxu0 0
    %4941 = vmatpush1.bf16.msra.mxu0 %v4925
    %4942 = vmatprep.subr.bf16.mxu0 0
    %4943 = vmatpush1.bf16.msra.mxu0 %v4924
    %4944 = vmatprep.subr.bf16.mxu0 0
    %4945 = vmatpush2.bf16.msra.mxu0 0
    %4946 = vmatprep.subr.bf16.mxu0 0
    %4947 = vmatpush2.bf16.msra.mxu0 0
    %4948 = vmatprep.subr.bf16.mxu0 0
    %4949 = vmatpush2.bf16.msra.mxu0 0
    %4950 = vmatprep.subr.bf16.mxu0 0
    %4951 = vmatpush2.bf16.msra.mxu0 0
    %4952 = vmatprep.subr.bf16.mxu0 0
    %4953 = vmatpush2.bf16.msra.mxu0 0
    %4954 = vmatprep.subr.bf16.mxu0 0
    %4955 = vmatpush2.bf16.msra.mxu0 0
    %4956 = vmatprep.subr.bf16.mxu0 0
    %4957 = vmatpush2.bf16.msra.mxu0 0
    %4958 = vmatprep.subr.bf16.mxu0 0
    %4959 = vmatpush2.bf16.msra.mxu0 0
    %4960 = vmatprep.mubr.bf16.mxu0 0
    %4961 = vmatmul.mubr.bf16.gmra.mxu0 %v3903
    %v4962 = vpop.f32.mrf.mxu0
    %v4963 = vadd.f32 %v4915, %v4962
    %v4964 = vpop.f32.mrf.mxu0
    %v4965 = vpop.f32.mrf.mxu0
    %v4966 = vadd.f32 %v4915, %v4965
    %v4967 = vpop.f32.mrf.mxu0
    %4968 = vdwg.mxu0
    %v4969 = vlaneseq
    %v4970 = vshrl.u32 %v4969, 7
    %v4971 = vsub.s32 3, %v4970
    %v4972 = vrot.slane %v384, %v4971
    %v4977 = vunpack.c.l.b16 %v424
    %v4978 = vunpack.c.l.b16 %v425
    %v4979 = vunpack.c.l.b16 %v426
    %v4980 = vunpack.c.l.b16 %v427
    %v4981 = vpack.c.b16 %v4978, %v4977
    %v4982 = vpack.c.b16 %v4980, %v4979
    %4985 = vmatprep.subr.bf16.mxu0 0
    %4986 = vmatpush1.bf16.msra.mxu0 0
    %4987 = vmatprep.subr.bf16.mxu0 0
    %4988 = vmatpush1.bf16.msra.mxu0 0
    %4989 = vmatprep.subr.bf16.mxu0 0
    %4990 = vmatpush1.bf16.msra.mxu0 0
    %4991 = vmatprep.subr.bf16.mxu0 0
    %4992 = vmatpush1.bf16.msra.mxu0 0
    %4993 = vmatprep.subr.bf16.mxu0 0
    %4994 = vmatpush1.bf16.msra.mxu0 0
    %4995 = vmatprep.subr.bf16.mxu0 0
    %4996 = vmatpush1.bf16.msra.mxu0 0
    %4997 = vmatprep.subr.bf16.mxu0 0
    %4998 = vmatpush1.bf16.msra.mxu0 %v4982
    %4999 = vmatprep.subr.bf16.mxu0 0
    %5000 = vmatpush1.bf16.msra.mxu0 %v4981
    %5001 = vmatprep.subr.bf16.mxu0 0
    %5002 = vmatpush2.bf16.msra.mxu0 0
    %5003 = vmatprep.subr.bf16.mxu0 0
    %5004 = vmatpush2.bf16.msra.mxu0 0
    %5005 = vmatprep.subr.bf16.mxu0 0
    %5006 = vmatpush2.bf16.msra.mxu0 0
    %5007 = vmatprep.subr.bf16.mxu0 0
    %5008 = vmatpush2.bf16.msra.mxu0 0
    %5009 = vmatprep.subr.bf16.mxu0 0
    %5010 = vmatpush2.bf16.msra.mxu0 0
    %5011 = vmatprep.subr.bf16.mxu0 0
    %5012 = vmatpush2.bf16.msra.mxu0 0
    %5013 = vmatprep.subr.bf16.mxu0 0
    %5014 = vmatpush2.bf16.msra.mxu0 0
    %5015 = vmatprep.subr.bf16.mxu0 0
    %5016 = vmatpush2.bf16.msra.mxu0 0
    %5017 = vmatprep.mubr.bf16.mxu0 0
    %5018 = vmatmul.mubr.bf16.gmra.mxu0 %v3903
    %v5019 = vpop.f32.mrf.mxu0
    %v5020 = vadd.f32 %v4972, %v5019
    %v5021 = vpop.f32.mrf.mxu0
    %v5022 = vpop.f32.mrf.mxu0
    %v5023 = vadd.f32 %v4972, %v5022
    %v5024 = vpop.f32.mrf.mxu0
    %5025 = vdwg.mxu0
    %v5026 = vlaneseq
    %v5027 = vshrl.u32 %v5026, 7
    %v5028 = vsub.s32 3, %v5027
    %v5029 = vrot.slane %v387, %v5028
    %v5034 = vunpack.c.l.b16 %v460
    %v5035 = vunpack.c.l.b16 %v461
    %v5036 = vunpack.c.l.b16 %v462
    %v5037 = vunpack.c.l.b16 %v463
    %v5038 = vpack.c.b16 %v5035, %v5034
    %v5039 = vpack.c.b16 %v5037, %v5036
    %5042 = vmatprep.subr.bf16.mxu0 0
    %5043 = vmatpush1.bf16.msra.mxu0 0
    %5044 = vmatprep.subr.bf16.mxu0 0
    %5045 = vmatpush1.bf16.msra.mxu0 0
    %5046 = vmatprep.subr.bf16.mxu0 0
    %5047 = vmatpush1.bf16.msra.mxu0 0
    %5048 = vmatprep.subr.bf16.mxu0 0
    %5049 = vmatpush1.bf16.msra.mxu0 0
    %5050 = vmatprep.subr.bf16.mxu0 0
    %5051 = vmatpush1.bf16.msra.mxu0 0
    %5052 = vmatprep.subr.bf16.mxu0 0
    %5053 = vmatpush1.bf16.msra.mxu0 0
    %5054 = vmatprep.subr.bf16.mxu0 0
    %5055 = vmatpush1.bf16.msra.mxu0 %v5039
    %5056 = vmatprep.subr.bf16.mxu0 0
    %5057 = vmatpush1.bf16.msra.mxu0 %v5038
    %5058 = vmatprep.subr.bf16.mxu0 0
    %5059 = vmatpush2.bf16.msra.mxu0 0
    %5060 = vmatprep.subr.bf16.mxu0 0
    %5061 = vmatpush2.bf16.msra.mxu0 0
    %5062 = vmatprep.subr.bf16.mxu0 0
    %5063 = vmatpush2.bf16.msra.mxu0 0
    %5064 = vmatprep.subr.bf16.mxu0 0
    %5065 = vmatpush2.bf16.msra.mxu0 0
    %5066 = vmatprep.subr.bf16.mxu0 0
    %5067 = vmatpush2.bf16.msra.mxu0 0
    %5068 = vmatprep.subr.bf16.mxu0 0
    %5069 = vmatpush2.bf16.msra.mxu0 0
    %5070 = vmatprep.subr.bf16.mxu0 0
    %5071 = vmatpush2.bf16.msra.mxu0 0
    %5072 = vmatprep.subr.bf16.mxu0 0
    %5073 = vmatpush2.bf16.msra.mxu0 0
    %5074 = vmatprep.mubr.bf16.mxu0 0
    %5075 = vmatmul.mubr.bf16.gmra.mxu0 %v3903
    %v5076 = vpop.f32.mrf.mxu0
    %v5077 = vadd.f32 %v5029, %v5076
    %v5078 = vpop.f32.mrf.mxu0
    %v5079 = vpop.f32.mrf.mxu0
    %v5080 = vadd.f32 %v5029, %v5079
    %v5081 = vpop.f32.mrf.mxu0
    %5082 = vdwg.mxu0
    %v5083 = vpack.c.bf16 %v4966, %v4963
    %v5084 = vpack.c.bf16 %v5023, %v5020
    %v5086 = vsel %vm997, %v5083, 0
    %v5089 = vsel %vm997, %v5084, 0
    %5091 = vmatprep.subr.bf16.mxu0 0
    %5092 = vmatpush1.bf16.xpose.msra.mxu0 0
    %5093 = vmatprep.subr.bf16.mxu0 0
    %5094 = vmatpush1.bf16.xpose.msra.mxu0 0
    %5095 = vmatprep.subr.bf16.mxu0 0
    %5096 = vmatpush1.bf16.xpose.msra.mxu0 0
    %5097 = vmatprep.subr.bf16.mxu0 0
    %5098 = vmatpush1.bf16.xpose.msra.mxu0 0
    %5099 = vmatprep.subr.bf16.mxu0 0
    %5100 = vmatpush1.bf16.xpose.msra.mxu0 0
    %5101 = vmatprep.subr.bf16.mxu0 0
    %5102 = vmatpush1.bf16.xpose.msra.mxu0 0
    %5103 = vmatprep.subr.bf16.mxu0 0
    %5104 = vmatpush1.bf16.xpose.msra.mxu0 0
    %5105 = vmatprep.subr.bf16.mxu0 0
    %5106 = vmatpush1.bf16.xpose.msra.mxu0 %v5089
    %5107 = vmatprep.subr.bf16.mxu0 0
    %5108 = vmatpush2.bf16.xpose.msra.mxu0 0
    %5109 = vmatprep.subr.bf16.mxu0 0
    %5110 = vmatpush2.bf16.xpose.msra.mxu0 0
    %5111 = vmatprep.subr.bf16.mxu0 0
    %5112 = vmatpush2.bf16.xpose.msra.mxu0 0
    %5113 = vmatprep.subr.bf16.mxu0 0
    %5114 = vmatpush2.bf16.xpose.msra.mxu0 0
    %5115 = vmatprep.subr.bf16.mxu0 0
    %5116 = vmatpush2.bf16.xpose.msra.mxu0 0
    %5117 = vmatprep.subr.bf16.mxu0 0
    %5118 = vmatpush2.bf16.xpose.msra.mxu0 0
    %5119 = vmatprep.subr.bf16.mxu0 0
    %5120 = vmatpush2.bf16.xpose.msra.mxu0 0
    %5121 = vmatprep.subr.bf16.mxu0 0
    %5122 = vmatpush2.bf16.xpose.msra.mxu0 0
    %5123 = vmatprep.mubr.bf16.mxu0 0
    %5124 = vmatmul.mubr.bf16.gmra.mxu0 %v5086
    %v5125 = vpop.f32.mrf.mxu0
    %v5126 = vadd.f32 0.0, %v5125
    %v5127 = vpop.f32.mrf.mxu0
    %v5128 = vpop.f32.mrf.mxu0
    %v5129 = vadd.f32 0.0, %v5128
    %v5130 = vpop.f32.mrf.mxu0
    %5131 = vdwg.mxu0
    %v5132 = vmul.f32 %v5126, 0.35355338
    %v5133 = vmul.f32 %v5129, 0.35355338
    %v5134 = vadd.f32 %v5132, %v547
    %v5135 = vadd.f32 %v5133, %v548
    %v5136 = vsel %vm4113, %v5134, -inf
    %5137 = vmax.xlane.f32.xlu0 %v5136
    %v5138 = vpop.xlane.xlu0 %5137
    %v5139 = vsel %vm4113, %v5135, -inf
    %5140 = vmax.xlane.f32.xlu0 %v5139
    %v5141 = vpop.xlane.xlu0 %5140
    %v5142 = vsub.f32 %v5134, %v5138
    %v5143 = vsub.f32 %v5135, %v5141
    %v5144 = vmul.f32 %v5142, 1.442695
    %v5145 = vpow.pop %v5144
    %v5146 = vmul.f32 %v5143, 1.442695
    %v5147 = vpow.pop %v5146
    %v5148 = vsel %vm4113, %v5145, 0.0
    %5149 = vadd.xlane.f32.xlu0 %v5148
    %v5150 = vpop.xlane.xlu0 %5149
    %v5151 = vsel %vm4113, %v5147, 0.0
    %5152 = vadd.xlane.f32.xlu0 %v5151
    %v5153 = vpop.xlane.xlu0 %5152
    %v5154 = vrcp.pop %v5150
    %v5155 = vrcp.pop %v5153
    %v5156 = vmul.f32 %v5145, %v5154
    %v5157 = vmul.f32 %v5147, %v5155
    %v5158 = vpack.c.bf16 %v5157, %v5156
    %v5159 = vpack.c.bf16 %v5080, %v5077
    %v5161 = vsel %vm4113, %v5158, 0
    %5163 = vmatprep.subr.bf16.mxu0 0
    %5164 = vmatpush1.bf16.msra.mxu0 0
    %5165 = vmatprep.subr.bf16.mxu0 0
    %5166 = vmatpush1.bf16.msra.mxu0 0
    %5167 = vmatprep.subr.bf16.mxu0 0
    %5168 = vmatpush1.bf16.msra.mxu0 0
    %5169 = vmatprep.subr.bf16.mxu0 0
    %5170 = vmatpush1.bf16.msra.mxu0 0
    %5171 = vmatprep.subr.bf16.mxu0 0
    %5172 = vmatpush1.bf16.msra.mxu0 0
    %5173 = vmatprep.subr.bf16.mxu0 0
    %5174 = vmatpush1.bf16.msra.mxu0 0
    %5175 = vmatprep.subr.bf16.mxu0 0
    %5176 = vmatpush1.bf16.msra.mxu0 0
    %5177 = vmatprep.subr.bf16.mxu0 0
    %5178 = vmatpush1.bf16.msra.mxu0 %v5159
    %5179 = vmatprep.subr.bf16.mxu0 0
    %5180 = vmatpush2.bf16.msra.mxu0 0
    %5181 = vmatprep.subr.bf16.mxu0 0
    %5182 = vmatpush2.bf16.msra.mxu0 0
    %5183 = vmatprep.subr.bf16.mxu0 0
    %5184 = vmatpush2.bf16.msra.mxu0 0
    %5185 = vmatprep.subr.bf16.mxu0 0
    %5186 = vmatpush2.bf16.msra.mxu0 0
    %5187 = vmatprep.subr.bf16.mxu0 0
    %5188 = vmatpush2.bf16.msra.mxu0 0
    %5189 = vmatprep.subr.bf16.mxu0 0
    %5190 = vmatpush2.bf16.msra.mxu0 0
    %5191 = vmatprep.subr.bf16.mxu0 0
    %5192 = vmatpush2.bf16.msra.mxu0 0
    %5193 = vmatprep.subr.bf16.mxu0 0
    %5194 = vmatpush2.bf16.msra.mxu0 0
    %5195 = vmatprep.mubr.bf16.mxu0 0
    %5196 = vmatmul.mubr.bf16.gmra.mxu0 %v5161
    %v5197 = vpop.f32.mrf.mxu0
    %v5198 = vadd.f32 0.0, %v5197
    %v5199 = vpop.f32.mrf.mxu0
    %v5200 = vpop.f32.mrf.mxu0
    %v5201 = vadd.f32 0.0, %v5200
    %v5202 = vpop.f32.mrf.mxu0
    %5203 = vdwg.mxu0
    %v5204 = vpack.c.bf16 %v5201, %v5198
    %v5206 = vsel %vm997, %v5204, 0
    %v5209 = vsel %vm665, %v431, 0
    %5211 = vmatprep.subr.bf16.mxu0 0
    %5212 = vmatpush1.bf16.msra.mxu0 0
    %5213 = vmatprep.subr.bf16.mxu0 0
    %5214 = vmatpush1.bf16.msra.mxu0 0
    %5215 = vmatprep.subr.bf16.mxu0 0
    %5216 = vmatpush1.bf16.msra.mxu0 0
    %5217 = vmatprep.subr.bf16.mxu0 0
    %5218 = vmatpush1.bf16.msra.mxu0 0
    %5219 = vmatprep.subr.bf16.mxu0 0
    %5220 = vmatpush1.bf16.msra.mxu0 0
    %5221 = vmatprep.subr.bf16.mxu0 0
    %5222 = vmatpush1.bf16.msra.mxu0 0
    %5223 = vmatprep.subr.bf16.mxu0 0
    %5224 = vmatpush1.bf16.msra.mxu0 0
    %5225 = vmatprep.subr.bf16.mxu0 0
    %5226 = vmatpush1.bf16.msra.mxu0 %v5209
    %5227 = vmatprep.subr.bf16.mxu0 0
    %5228 = vmatpush2.bf16.msra.mxu0 0
    %5229 = vmatprep.subr.bf16.mxu0 0
    %5230 = vmatpush2.bf16.msra.mxu0 0
    %5231 = vmatprep.subr.bf16.mxu0 0
    %5232 = vmatpush2.bf16.msra.mxu0 0
    %5233 = vmatprep.subr.bf16.mxu0 0
    %5234 = vmatpush2.bf16.msra.mxu0 0
    %5235 = vmatprep.subr.bf16.mxu0 0
    %5236 = vmatpush2.bf16.msra.mxu0 0
    %5237 = vmatprep.subr.bf16.mxu0 0
    %5238 = vmatpush2.bf16.msra.mxu0 0
    %5239 = vmatprep.subr.bf16.mxu0 0
    %5240 = vmatpush2.bf16.msra.mxu0 0
    %5241 = vmatprep.subr.bf16.mxu0 0
    %5242 = vmatpush2.bf16.msra.mxu0 0
    %5243 = vmatprep.mubr.bf16.mxu0 0
    %5244 = vmatmul.mubr.bf16.gmra.mxu0 %v5206
    %v5245 = vpop.f32.mrf.mxu0
    %v5246 = vadd.f32 0.0, %v5245
    %v5247 = vpop.f32.mrf.mxu0
    %v5248 = vpop.f32.mrf.mxu0
    %v5249 = vadd.f32 0.0, %v5248
    %v5250 = vpop.f32.mrf.mxu0
    %5251 = vdwg.mxu0
    %v5252 = vadd.f32 %v4910, %v5246
    %v5253 = vadd.f32 %v4911, %v5249
    %v5254 = vadd.f32 %v3845, %v5252
    %v5255 = vadd.f32 %v3846, %v5253
    %v5257 = vlaneseq
    %v5258 = vshrl.u32 %v5257, 7
    %v5259 = vsub.s32 0, %v5258
    %v5260 = vrot.slane %v385, %v5259
    %v5262 = vadd.f32 %v5254, %v5260
    %v5263 = vadd.f32 %v5255, %v5260
    %v5264 = vsel %vm798, %v5262, 0.0
    %5265 = vadd.xlane.f32.xlu0 %v5264
    %v5266 = vpop.xlane.xlu0 %5265
    %v5267 = vsel %vm798, %v5263, 0.0
    %5268 = vadd.xlane.f32.xlu0 %v5267
    %v5269 = vpop.xlane.xlu0 %5268
    %v5270 = vmul.f32 %v5266, %v802
    %v5271 = vmul.f32 %v5269, %v802
    %v5272 = vsub.f32 %v5262, %v5270
    %v5273 = vsub.f32 %v5263, %v5271
    %v5274 = vmul.f32 %v5272, %v5272
    %v5275 = vmul.f32 %v5273, %v5273
    %v5276 = vsel %vm798, %v5274, 0.0
    %5277 = vadd.xlane.f32.xlu0 %v5276
    %v5278 = vpop.xlane.xlu0 %5277
    %v5279 = vsel %vm798, %v5275, 0.0
    %5280 = vadd.xlane.f32.xlu0 %v5279
    %v5281 = vpop.xlane.xlu0 %5280
    %v5282 = vmul.f32 %v5278, %v802
    %v5283 = vmul.f32 %v5281, %v802
    %v5284 = vadd.f32 %v5282, 1e-05
    %v5285 = vadd.f32 %v5283, 1e-05
    %v5286 = vrsqrt.pop %v5284
    %v5287 = vrsqrt.pop %v5285
    %v5288 = vmul.f32 %v5272, %v5286
    %v5289 = vmul.f32 %v5273, %v5287
    %v5290 = vlaneseq
    %v5291 = vshrl.u32 %v5290, 7
    %v5292 = vsub.s32 3, %v5291
    %v5293 = vrot.slane %v411, %v5292
    %v5294 = vmul.f32 %v5288, %v5293
    %v5295 = vmul.f32 %v5289, %v5293
    %v5296 = vlaneseq
    %v5297 = vshrl.u32 %v5296, 7
    %v5298 = vsub.s32 3, %v5297
    %v5299 = vrot.slane %v410, %v5298
    %v5300 = vadd.f32 %v5294, %v5299
    %v5301 = vadd.f32 %v5295, %v5299
    %v5302 = vpack.c.bf16 %v5301, %v5300
    %v5304 = vlaneseq
    %v5305 = vshrl.u32 %v5304, 7
    %v5306 = vsub.s32 0, %v5305
    %v5307 = vrot.slane %v388, %v5306
    %v5313 = vunpack.c.l.b16 %v389
    %v5314 = vunpack.c.l.b16 %v390
    %v5315 = vunpack.c.l.b16 %v391
    %v5316 = vunpack.c.l.b16 %v392
    %v5317 = vpack.c.b16 %v5314, %v5313
    %v5318 = vpack.c.b16 %v5316, %v5315
    %v5322 = vsel %vm798, %v5302, 0
    %5324 = vmatprep.subr.bf16.mxu0 0
    %5325 = vmatpush1.bf16.msra.mxu0 0
    %5326 = vmatprep.subr.bf16.mxu0 0
    %5327 = vmatpush1.bf16.msra.mxu0 0
    %5328 = vmatprep.subr.bf16.mxu0 0
    %5329 = vmatpush1.bf16.msra.mxu0 0
    %5330 = vmatprep.subr.bf16.mxu0 0
    %5331 = vmatpush1.bf16.msra.mxu0 0
    %5332 = vmatprep.subr.bf16.mxu0 0
    %5333 = vmatpush1.bf16.msra.mxu0 0
    %5334 = vmatprep.subr.bf16.mxu0 0
    %5335 = vmatpush1.bf16.msra.mxu0 0
    %5336 = vmatprep.subr.bf16.mxu0 0
    %5337 = vmatpush1.bf16.msra.mxu0 %v5318
    %5338 = vmatprep.subr.bf16.mxu0 0
    %5339 = vmatpush1.bf16.msra.mxu0 %v5317
    %5340 = vmatprep.subr.bf16.mxu0 0
    %5341 = vmatpush2.bf16.msra.mxu0 0
    %5342 = vmatprep.subr.bf16.mxu0 0
    %5343 = vmatpush2.bf16.msra.mxu0 0
    %5344 = vmatprep.subr.bf16.mxu0 0
    %5345 = vmatpush2.bf16.msra.mxu0 0
    %5346 = vmatprep.subr.bf16.mxu0 0
    %5347 = vmatpush2.bf16.msra.mxu0 0
    %5348 = vmatprep.subr.bf16.mxu0 0
    %5349 = vmatpush2.bf16.msra.mxu0 0
    %5350 = vmatprep.subr.bf16.mxu0 0
    %5351 = vmatpush2.bf16.msra.mxu0 0
    %5352 = vmatprep.subr.bf16.mxu0 0
    %5353 = vmatpush2.bf16.msra.mxu0 0
    %5354 = vmatprep.subr.bf16.mxu0 0
    %5355 = vmatpush2.bf16.msra.mxu0 0
    %5356 = vmatprep.mubr.bf16.mxu0 0
    %5357 = vmatmul.mubr.bf16.gmra.mxu0 %v5322
    %v5358 = vpop.f32.mrf.mxu0
    %v5359 = vadd.f32 %v5307, %v5358
    %v5360 = vpop.f32.mrf.mxu0
    %v5361 = vpop.f32.mrf.mxu0
    %v5362 = vadd.f32 %v5307, %v5361
    %v5363 = vpop.f32.mrf.mxu0
    %5364 = vdwg.mxu0
    %v5365 = vmul.f32 %v5359, 0.5
    %v5366 = vmul.f32 %v5362, 0.5
    %v5367 = vmul.f32 %v5359, 0.70710677
    %v5368 = vmul.f32 %v5362, 0.70710677
    %v5369 = verf.f32.pop %v5367
    %v5370 = verf.f32.pop %v5368
    %v5371 = vadd.f32 %v5369, 1.0
    %v5372 = vadd.f32 %v5370, 1.0
    %v5373 = vmul.f32 %v5365, %v5371
    %v5374 = vmul.f32 %v5366, %v5372
    %v5375 = vpack.c.bf16 %v5374, %v5373
    %v5377 = vlaneseq
    %v5378 = vshrl.u32 %v5377, 7
    %v5379 = vsub.s32 0, %v5378
    %v5380 = vrot.slane %v393, %v5379
    %v5398 = vunpack.c.l.b16 %v394
    %v5399 = vunpack.c.l.b16 %v395
    %v5400 = vunpack.c.l.b16 %v396
    %v5401 = vunpack.c.l.b16 %v397
    %v5402 = vunpack.c.l.b16 %v398
    %v5403 = vunpack.c.l.b16 %v399
    %v5404 = vunpack.c.l.b16 %v400
    %v5405 = vunpack.c.l.b16 %v401
    %v5406 = vunpack.c.l.b16 %v402
    %v5407 = vunpack.c.l.b16 %v403
    %v5408 = vunpack.c.l.b16 %v404
    %v5409 = vunpack.c.l.b16 %v405
    %v5410 = vunpack.c.l.b16 %v406
    %v5411 = vunpack.c.l.b16 %v407
    %v5412 = vunpack.c.l.b16 %v408
    %v5413 = vunpack.c.l.b16 %v409
    %v5414 = vpack.c.b16 %v5399, %v5398
    %v5415 = vpack.c.b16 %v5401, %v5400
    %v5416 = vpack.c.b16 %v5403, %v5402
    %v5417 = vpack.c.b16 %v5405, %v5404
    %v5418 = vpack.c.b16 %v5407, %v5406
    %v5419 = vpack.c.b16 %v5409, %v5408
    %v5420 = vpack.c.b16 %v5411, %v5410
    %v5421 = vpack.c.b16 %v5413, %v5412
    %5430 = vmatprep.subr.bf16.mxu0 0
    %5431 = vmatpush1.bf16.msra.mxu0 %v5421
    %5432 = vmatprep.subr.bf16.mxu0 0
    %5433 = vmatpush1.bf16.msra.mxu0 %v5420
    %5434 = vmatprep.subr.bf16.mxu0 0
    %5435 = vmatpush1.bf16.msra.mxu0 %v5419
    %5436 = vmatprep.subr.bf16.mxu0 0
    %5437 = vmatpush1.bf16.msra.mxu0 %v5418
    %5438 = vmatprep.subr.bf16.mxu0 0
    %5439 = vmatpush1.bf16.msra.mxu0 %v5417
    %5440 = vmatprep.subr.bf16.mxu0 0
    %5441 = vmatpush1.bf16.msra.mxu0 %v5416
    %5442 = vmatprep.subr.bf16.mxu0 0
    %5443 = vmatpush1.bf16.msra.mxu0 %v5415
    %5444 = vmatprep.subr.bf16.mxu0 0
    %5445 = vmatpush1.bf16.msra.mxu0 %v5414
    %5446 = vmatprep.subr.bf16.mxu0 0
    %5447 = vmatpush2.bf16.msra.mxu0 0
    %5448 = vmatprep.subr.bf16.mxu0 0
    %5449 = vmatpush2.bf16.msra.mxu0 0
    %5450 = vmatprep.subr.bf16.mxu0 0
    %5451 = vmatpush2.bf16.msra.mxu0 0
    %5452 = vmatprep.subr.bf16.mxu0 0
    %5453 = vmatpush2.bf16.msra.mxu0 0
    %5454 = vmatprep.subr.bf16.mxu0 0
    %5455 = vmatpush2.bf16.msra.mxu0 0
    %5456 = vmatprep.subr.bf16.mxu0 0
    %5457 = vmatpush2.bf16.msra.mxu0 0
    %5458 = vmatprep.subr.bf16.mxu0 0
    %5459 = vmatpush2.bf16.msra.mxu0 0
    %5460 = vmatprep.subr.bf16.mxu0 0
    %5461 = vmatpush2.bf16.msra.mxu0 0
    %5462 = vmatprep.mubr.bf16.mxu0 0
    %5463 = vmatmul.mubr.bf16.gmra.mxu0 %v5375
    %v5464 = vpop.f32.mrf.mxu0
    %v5465 = vadd.f32 %v5380, %v5464
    %v5466 = vpop.f32.mrf.mxu0
    %v5467 = vpop.f32.mrf.mxu0
    %v5468 = vadd.f32 %v5380, %v5467
    %v5469 = vpop.f32.mrf.mxu0
    %5470 = vdwg.mxu0
    %v5471 = vadd.f32 %v5262, %v5465
    %v5472 = vadd.f32 %v5263, %v5468
    %v5473 = vsel %vm798, %v5471, 0.0
    %5474 = vadd.xlane.f32.xlu0 %v5473
    %v5475 = vpop.xlane.xlu0 %5474
    %v5476 = vsel %vm798, %v5472, 0.0
    %5477 = vadd.xlane.f32.xlu0 %v5476
    %v5478 = vpop.xlane.xlu0 %5477
    %v5479 = vmul.f32 %v5475, %v802
    %v5480 = vmul.f32 %v5478, %v802
    %v5481 = vsub.f32 %v5471, %v5479
    %v5482 = vsub.f32 %v5472, %v5480
    %v5483 = vmul.f32 %v5481, %v5481
    %v5484 = vmul.f32 %v5482, %v5482
    %v5485 = vsel %vm798, %v5483, 0.0
    %5486 = vadd.xlane.f32.xlu0 %v5485
    %v5487 = vpop.xlane.xlu0 %5486
    %v5488 = vsel %vm798, %v5484, 0.0
    %5489 = vadd.xlane.f32.xlu0 %v5488
    %v5490 = vpop.xlane.xlu0 %5489
    %v5491 = vmul.f32 %v5487, %v802
    %v5492 = vmul.f32 %v5490, %v802
    %v5493 = vadd.f32 %v5491, 1e-05
    %v5494 = vadd.f32 %v5492, 1e-05
    %v5495 = vrsqrt.pop %v5493
    %v5496 = vrsqrt.pop %v5494
    %v5497 = vmul.f32 %v5481, %v5495
    %v5498 = vmul.f32 %v5482, %v5496
    %v5499 = vlaneseq
    %v5500 = vshrl.u32 %v5499, 7
    %v5501 = vsub.s32 0, %v5500
    %v5502 = vrot.slane %v545, %v5501
    %v5503 = vmul.f32 %v5497, %v5502
    %v5504 = vmul.f32 %v5498, %v5502
    %v5505 = vlaneseq
    %v5506 = vshrl.u32 %v5505, 7
    %v5507 = vsub.s32 0, %v5506
    %v5508 = vrot.slane %v544, %v5507
    %v5509 = vadd.f32 %v5503, %v5508
    %v5510 = vadd.f32 %v5504, %v5508
    %5511 = vst.msk [vmem:[#allocation13] sm:$0xff] %vm798, %v5509
    %5512 = vst.msk [vmem:[#allocation13 + $0x8] sm:$0xff] %vm798, %v5510
    %v5513 = vsel %vm798, %v2319, 0.0
    %5514 = vadd.xlane.f32.xlu0 %v5513
    %v5515 = vpop.xlane.xlu0 %5514
    %v5516 = vmul.f32 %v5515, %v802
    %v5517 = vsub.f32 %v2319, %v5516
    %v5518 = vmul.f32 %v5517, %v5517
    %v5519 = vsel %vm798, %v5518, 0.0
    %5520 = vadd.xlane.f32.xlu0 %v5519
    %v5521 = vpop.xlane.xlu0 %5520
    %v5522 = vmul.f32 %v5521, %v802
    %v5523 = vadd.f32 %v5522, 1e-05
    %v5524 = vrsqrt.pop %v5523
    %v5525 = vmul.f32 %v5517, %v5524
    %v5526 = vlaneseq
    %v5527 = vshrl.u32 %v5526, 7
    %v5528 = vsub.s32 1, %v5527
    %v5529 = vrot.slane %v411, %v5528
    %v5530 = vmul.f32 %v5525, %v5529
    %v5531 = vlaneseq
    %v5532 = vshrl.u32 %v5531, 7
    %v5533 = vsub.s32 1, %v5532
    %v5534 = vrot.slane %v410, %v5533
    %v5535 = vadd.f32 %v5530, %v5534
    %v5536 = vpack.c.bf16 %v5535, %v5535
    %v5538 = vsel %vm798, %v5536, 0
    %5540 = vmatprep.subr.bf16.mxu0 0
    %5541 = vmatpush1.bf16.msra.mxu0 0
    %5542 = vmatprep.subr.bf16.mxu0 0
    %5543 = vmatpush1.bf16.msra.mxu0 0
    %5544 = vmatprep.subr.bf16.mxu0 0
    %5545 = vmatpush1.bf16.msra.mxu0 0
    %5546 = vmatprep.subr.bf16.mxu0 0
    %5547 = vmatpush1.bf16.msra.mxu0 0
    %5548 = vmatprep.subr.bf16.mxu0 0
    %5549 = vmatpush1.bf16.msra.mxu0 0
    %5550 = vmatprep.subr.bf16.mxu0 0
    %5551 = vmatpush1.bf16.msra.mxu0 0
    %5552 = vmatprep.subr.bf16.mxu0 0
    %5553 = vmatpush1.bf16.msra.mxu0 %v3899
    %5554 = vmatprep.subr.bf16.mxu0 0
    %5555 = vmatpush1.bf16.msra.mxu0 %v3898
    %5556 = vmatprep.subr.bf16.mxu0 0
    %5557 = vmatpush2.bf16.msra.mxu0 0
    %5558 = vmatprep.subr.bf16.mxu0 0
    %5559 = vmatpush2.bf16.msra.mxu0 0
    %5560 = vmatprep.subr.bf16.mxu0 0
    %5561 = vmatpush2.bf16.msra.mxu0 0
    %5562 = vmatprep.subr.bf16.mxu0 0
    %5563 = vmatpush2.bf16.msra.mxu0 0
    %5564 = vmatprep.subr.bf16.mxu0 0
    %5565 = vmatpush2.bf16.msra.mxu0 0
    %5566 = vmatprep.subr.bf16.mxu0 0
    %5567 = vmatpush2.bf16.msra.mxu0 0
    %5568 = vmatprep.subr.bf16.mxu0 0
    %5569 = vmatpush2.bf16.msra.mxu0 0
    %5570 = vmatprep.subr.bf16.mxu0 0
    %5571 = vmatpush2.bf16.msra.mxu0 0
    %5572 = vmatprep.mubr.bf16.mxu0 0
    %5573 = vmatmul.mubr.bf16.gmra.mxu0 %v5538
    %v5574 = vpop.f32.mrf.mxu0
    %v5575 = vadd.f32 %v3889, %v5574
    %v5576 = vpop.f32.mrf.mxu0
    %v5577 = vpop.f32.mrf.mxu0
    %v5578 = vpop.f32.mrf.mxu0
    %5579 = vdwg.mxu0
    %5580 = vmatprep.subr.bf16.mxu0 0
    %5581 = vmatpush1.bf16.msra.mxu0 0
    %5582 = vmatprep.subr.bf16.mxu0 0
    %5583 = vmatpush1.bf16.msra.mxu0 0
    %5584 = vmatprep.subr.bf16.mxu0 0
    %5585 = vmatpush1.bf16.msra.mxu0 0
    %5586 = vmatprep.subr.bf16.mxu0 0
    %5587 = vmatpush1.bf16.msra.mxu0 0
    %5588 = vmatprep.subr.bf16.mxu0 0
    %5589 = vmatpush1.bf16.msra.mxu0 0
    %5590 = vmatprep.subr.bf16.mxu0 0
    %5591 = vmatpush1.bf16.msra.mxu0 0
    %5592 = vmatprep.subr.bf16.mxu0 0
    %5593 = vmatpush1.bf16.msra.mxu0 %v3959
    %5594 = vmatprep.subr.bf16.mxu0 0
    %5595 = vmatpush1.bf16.msra.mxu0 %v3958
    %5596 = vmatprep.subr.bf16.mxu0 0
    %5597 = vmatpush2.bf16.msra.mxu0 0
    %5598 = vmatprep.subr.bf16.mxu0 0
    %5599 = vmatpush2.bf16.msra.mxu0 0
    %5600 = vmatprep.subr.bf16.mxu0 0
    %5601 = vmatpush2.bf16.msra.mxu0 0
    %5602 = vmatprep.subr.bf16.mxu0 0
    %5603 = vmatpush2.bf16.msra.mxu0 0
    %5604 = vmatprep.subr.bf16.mxu0 0
    %5605 = vmatpush2.bf16.msra.mxu0 0
    %5606 = vmatprep.subr.bf16.mxu0 0
    %5607 = vmatpush2.bf16.msra.mxu0 0
    %5608 = vmatprep.subr.bf16.mxu0 0
    %5609 = vmatpush2.bf16.msra.mxu0 0
    %5610 = vmatprep.subr.bf16.mxu0 0
    %5611 = vmatpush2.bf16.msra.mxu0 0
    %5612 = vmatprep.mubr.bf16.mxu0 0
    %5613 = vmatmul.mubr.bf16.gmra.mxu0 %v5538
    %v5614 = vpop.f32.mrf.mxu0
    %v5615 = vadd.f32 %v3949, %v5614
    %v5616 = vpop.f32.mrf.mxu0
    %v5617 = vpop.f32.mrf.mxu0
    %v5618 = vpop.f32.mrf.mxu0
    %5619 = vdwg.mxu0
    %5620 = vmatprep.subr.bf16.mxu0 0
    %5621 = vmatpush1.bf16.msra.mxu0 0
    %5622 = vmatprep.subr.bf16.mxu0 0
    %5623 = vmatpush1.bf16.msra.mxu0 0
    %5624 = vmatprep.subr.bf16.mxu0 0
    %5625 = vmatpush1.bf16.msra.mxu0 0
    %5626 = vmatprep.subr.bf16.mxu0 0
    %5627 = vmatpush1.bf16.msra.mxu0 0
    %5628 = vmatprep.subr.bf16.mxu0 0
    %5629 = vmatpush1.bf16.msra.mxu0 0
    %5630 = vmatprep.subr.bf16.mxu0 0
    %5631 = vmatpush1.bf16.msra.mxu0 0
    %5632 = vmatprep.subr.bf16.mxu0 0
    %5633 = vmatpush1.bf16.msra.mxu0 %v4016
    %5634 = vmatprep.subr.bf16.mxu0 0
    %5635 = vmatpush1.bf16.msra.mxu0 %v4015
    %5636 = vmatprep.subr.bf16.mxu0 0
    %5637 = vmatpush2.bf16.msra.mxu0 0
    %5638 = vmatprep.subr.bf16.mxu0 0
    %5639 = vmatpush2.bf16.msra.mxu0 0
    %5640 = vmatprep.subr.bf16.mxu0 0
    %5641 = vmatpush2.bf16.msra.mxu0 0
    %5642 = vmatprep.subr.bf16.mxu0 0
    %5643 = vmatpush2.bf16.msra.mxu0 0
    %5644 = vmatprep.subr.bf16.mxu0 0
    %5645 = vmatpush2.bf16.msra.mxu0 0
    %5646 = vmatprep.subr.bf16.mxu0 0
    %5647 = vmatpush2.bf16.msra.mxu0 0
    %5648 = vmatprep.subr.bf16.mxu0 0
    %5649 = vmatpush2.bf16.msra.mxu0 0
    %5650 = vmatprep.subr.bf16.mxu0 0
    %5651 = vmatpush2.bf16.msra.mxu0 0
    %5652 = vmatprep.mubr.bf16.mxu0 0
    %5653 = vmatmul.mubr.bf16.gmra.mxu0 %v5538
    %v5654 = vpop.f32.mrf.mxu0
    %v5655 = vadd.f32 %v4006, %v5654
    %v5656 = vpop.f32.mrf.mxu0
    %v5657 = vpop.f32.mrf.mxu0
    %v5658 = vpop.f32.mrf.mxu0
    %5659 = vdwg.mxu0
    %v5660 = vpack.c.bf16 %v5575, %v5575
    %v5661 = vpack.c.bf16 %v5615, %v5615
    %v5663 = vsel %vm997, %v5660, 0
    %v5666 = vsel %vm997, %v5661, 0
    %5668 = vmatprep.subr.bf16.mxu0 0
    %5669 = vmatpush1.bf16.xpose.msra.mxu0 0
    %5670 = vmatprep.subr.bf16.mxu0 0
    %5671 = vmatpush1.bf16.xpose.msra.mxu0 0
    %5672 = vmatprep.subr.bf16.mxu0 0
    %5673 = vmatpush1.bf16.xpose.msra.mxu0 0
    %5674 = vmatprep.subr.bf16.mxu0 0
    %5675 = vmatpush1.bf16.xpose.msra.mxu0 0
    %5676 = vmatprep.subr.bf16.mxu0 0
    %5677 = vmatpush1.bf16.xpose.msra.mxu0 0
    %5678 = vmatprep.subr.bf16.mxu0 0
    %5679 = vmatpush1.bf16.xpose.msra.mxu0 0
    %5680 = vmatprep.subr.bf16.mxu0 0
    %5681 = vmatpush1.bf16.xpose.msra.mxu0 0
    %5682 = vmatprep.subr.bf16.mxu0 0
    %5683 = vmatpush1.bf16.xpose.msra.mxu0 %v5666
    %5684 = vmatprep.subr.bf16.mxu0 0
    %5685 = vmatpush2.bf16.xpose.msra.mxu0 0
    %5686 = vmatprep.subr.bf16.mxu0 0
    %5687 = vmatpush2.bf16.xpose.msra.mxu0 0
    %5688 = vmatprep.subr.bf16.mxu0 0
    %5689 = vmatpush2.bf16.xpose.msra.mxu0 0
    %5690 = vmatprep.subr.bf16.mxu0 0
    %5691 = vmatpush2.bf16.xpose.msra.mxu0 0
    %5692 = vmatprep.subr.bf16.mxu0 0
    %5693 = vmatpush2.bf16.xpose.msra.mxu0 0
    %5694 = vmatprep.subr.bf16.mxu0 0
    %5695 = vmatpush2.bf16.xpose.msra.mxu0 0
    %5696 = vmatprep.subr.bf16.mxu0 0
    %5697 = vmatpush2.bf16.xpose.msra.mxu0 0
    %5698 = vmatprep.subr.bf16.mxu0 0
    %5699 = vmatpush2.bf16.xpose.msra.mxu0 0
    %5700 = vmatprep.mubr.bf16.mxu0 0
    %5701 = vmatmul.mubr.bf16.gmra.mxu0 %v5663
    %v5702 = vpop.f32.mrf.mxu0
    %v5703 = vadd.f32 0.0, %v5702
    %v5704 = vpop.f32.mrf.mxu0
    %v5705 = vpop.f32.mrf.mxu0
    %v5706 = vpop.f32.mrf.mxu0
    %5707 = vdwg.mxu0
    %v5708 = vmul.f32 %v5703, 0.35355338
    %v5709 = vadd.f32 %v5708, %v546
    %v5710 = vsel %vm997, %v5709, -inf
    %5711 = vmax.xlane.f32.xlu0 %v5710
    %v5712 = vpop.xlane.xlu0 %5711
    %v5713 = vsub.f32 %v5709, %v5712
    %v5714 = vmul.f32 %v5713, 1.442695
    %v5715 = vpow.pop %v5714
    %v5716 = vsel %vm997, %v5715, 0.0
    %5717 = vadd.xlane.f32.xlu0 %v5716
    %v5718 = vpop.xlane.xlu0 %5717
    %v5719 = vrcp.pop %v5718
    %v5720 = vmul.f32 %v5715, %v5719
    %v5721 = vpack.c.bf16 %v5720, %v5720
    %v5722 = vpack.c.bf16 %v5655, %v5655
    %v5724 = vsel %vm997, %v5721, 0
    %v5727 = vsel %vm665, %v5722, 0
    %5729 = vmatprep.subr.bf16.mxu0 0
    %5730 = vmatpush1.bf16.msra.mxu0 0
    %5731 = vmatprep.subr.bf16.mxu0 0
    %5732 = vmatpush1.bf16.msra.mxu0 0
    %5733 = vmatprep.subr.bf16.mxu0 0
    %5734 = vmatpush1.bf16.msra.mxu0 0
    %5735 = vmatprep.subr.bf16.mxu0 0
    %5736 = vmatpush1.bf16.msra.mxu0 0
    %5737 = vmatprep.subr.bf16.mxu0 0
    %5738 = vmatpush1.bf16.msra.mxu0 0
    %5739 = vmatprep.subr.bf16.mxu0 0
    %5740 = vmatpush1.bf16.msra.mxu0 0
    %5741 = vmatprep.subr.bf16.mxu0 0
    %5742 = vmatpush1.bf16.msra.mxu0 0
    %5743 = vmatprep.subr.bf16.mxu0 0
    %5744 = vmatpush1.bf16.msra.mxu0 %v5727
    %5745 = vmatprep.subr.bf16.mxu0 0
    %5746 = vmatpush2.bf16.msra.mxu0 0
    %5747 = vmatprep.subr.bf16.mxu0 0
    %5748 = vmatpush2.bf16.msra.mxu0 0
    %5749 = vmatprep.subr.bf16.mxu0 0
    %5750 = vmatpush2.bf16.msra.mxu0 0
    %5751 = vmatprep.subr.bf16.mxu0 0
    %5752 = vmatpush2.bf16.msra.mxu0 0
    %5753 = vmatprep.subr.bf16.mxu0 0
    %5754 = vmatpush2.bf16.msra.mxu0 0
    %5755 = vmatprep.subr.bf16.mxu0 0
    %5756 = vmatpush2.bf16.msra.mxu0 0
    %5757 = vmatprep.subr.bf16.mxu0 0
    %5758 = vmatpush2.bf16.msra.mxu0 0
    %5759 = vmatprep.subr.bf16.mxu0 0
    %5760 = vmatpush2.bf16.msra.mxu0 0
    %5761 = vmatprep.mubr.bf16.mxu0 0
    %5762 = vmatmul.mubr.bf16.gmra.mxu0 %v5724
    %v5763 = vpop.f32.mrf.mxu0
    %v5764 = vadd.f32 0.0, %v5763
    %v5765 = vpop.f32.mrf.mxu0
    %v5766 = vpop.f32.mrf.mxu0
    %v5767 = vpop.f32.mrf.mxu0
    %5768 = vdwg.mxu0
    %v5769 = vpack.c.bf16 %v5764, %v5764
    %5770 = vmatprep.subr.bf16.mxu0 0
    %5771 = vmatpush1.bf16.msra.mxu0 0
    %5772 = vmatprep.subr.bf16.mxu0 0
    %5773 = vmatpush1.bf16.msra.mxu0 0
    %5774 = vmatprep.subr.bf16.mxu0 0
    %5775 = vmatpush1.bf16.msra.mxu0 0
    %5776 = vmatprep.subr.bf16.mxu0 0
    %5777 = vmatpush1.bf16.msra.mxu0 0
    %5778 = vmatprep.subr.bf16.mxu0 0
    %5779 = vmatpush1.bf16.msra.mxu0 0
    %5780 = vmatprep.subr.bf16.mxu0 0
    %5781 = vmatpush1.bf16.msra.mxu0 0
    %5782 = vmatprep.subr.bf16.mxu0 0
    %5783 = vmatpush1.bf16.msra.mxu0 %v4196
    %5784 = vmatprep.subr.bf16.mxu0 0
    %5785 = vmatpush1.bf16.msra.mxu0 %v4195
    %5786 = vmatprep.subr.bf16.mxu0 0
    %5787 = vmatpush2.bf16.msra.mxu0 0
    %5788 = vmatprep.subr.bf16.mxu0 0
    %5789 = vmatpush2.bf16.msra.mxu0 0
    %5790 = vmatprep.subr.bf16.mxu0 0
    %5791 = vmatpush2.bf16.msra.mxu0 0
    %5792 = vmatprep.subr.bf16.mxu0 0
    %5793 = vmatpush2.bf16.msra.mxu0 0
    %5794 = vmatprep.subr.bf16.mxu0 0
    %5795 = vmatpush2.bf16.msra.mxu0 0
    %5796 = vmatprep.subr.bf16.mxu0 0
    %5797 = vmatpush2.bf16.msra.mxu0 0
    %5798 = vmatprep.subr.bf16.mxu0 0
    %5799 = vmatpush2.bf16.msra.mxu0 0
    %5800 = vmatprep.subr.bf16.mxu0 0
    %5801 = vmatpush2.bf16.msra.mxu0 0
    %5802 = vmatprep.mubr.bf16.mxu0 0
    %5803 = vmatmul.mubr.bf16.gmra.mxu0 %v5538
    %v5804 = vpop.f32.mrf.mxu0
    %v5805 = vadd.f32 %v4186, %v5804
    %v5806 = vpop.f32.mrf.mxu0
    %v5807 = vpop.f32.mrf.mxu0
    %v5808 = vpop.f32.mrf.mxu0
    %5809 = vdwg.mxu0
    %5810 = vmatprep.subr.bf16.mxu0 0
    %5811 = vmatpush1.bf16.msra.mxu0 0
    %5812 = vmatprep.subr.bf16.mxu0 0
    %5813 = vmatpush1.bf16.msra.mxu0 0
    %5814 = vmatprep.subr.bf16.mxu0 0
    %5815 = vmatpush1.bf16.msra.mxu0 0
    %5816 = vmatprep.subr.bf16.mxu0 0
    %5817 = vmatpush1.bf16.msra.mxu0 0
    %5818 = vmatprep.subr.bf16.mxu0 0
    %5819 = vmatpush1.bf16.msra.mxu0 0
    %5820 = vmatprep.subr.bf16.mxu0 0
    %5821 = vmatpush1.bf16.msra.mxu0 0
    %5822 = vmatprep.subr.bf16.mxu0 0
    %5823 = vmatpush1.bf16.msra.mxu0 %v4253
    %5824 = vmatprep.subr.bf16.mxu0 0
    %5825 = vmatpush1.bf16.msra.mxu0 %v4252
    %5826 = vmatprep.subr.bf16.mxu0 0
    %5827 = vmatpush2.bf16.msra.mxu0 0
    %5828 = vmatprep.subr.bf16.mxu0 0
    %5829 = vmatpush2.bf16.msra.mxu0 0
    %5830 = vmatprep.subr.bf16.mxu0 0
    %5831 = vmatpush2.bf16.msra.mxu0 0
    %5832 = vmatprep.subr.bf16.mxu0 0
    %5833 = vmatpush2.bf16.msra.mxu0 0
    %5834 = vmatprep.subr.bf16.mxu0 0
    %5835 = vmatpush2.bf16.msra.mxu0 0
    %5836 = vmatprep.subr.bf16.mxu0 0
    %5837 = vmatpush2.bf16.msra.mxu0 0
    %5838 = vmatprep.subr.bf16.mxu0 0
    %5839 = vmatpush2.bf16.msra.mxu0 0
    %5840 = vmatprep.subr.bf16.mxu0 0
    %5841 = vmatpush2.bf16.msra.mxu0 0
    %5842 = vmatprep.mubr.bf16.mxu0 0
    %5843 = vmatmul.mubr.bf16.gmra.mxu0 %v5538
    %v5844 = vpop.f32.mrf.mxu0
    %v5845 = vadd.f32 %v4243, %v5844
    %v5846 = vpop.f32.mrf.mxu0
    %v5847 = vpop.f32.mrf.mxu0
    %v5848 = vpop.f32.mrf.mxu0
    %5849 = vdwg.mxu0
    %5850 = vmatprep.subr.bf16.mxu0 0
    %5851 = vmatpush1.bf16.msra.mxu0 0
    %5852 = vmatprep.subr.bf16.mxu0 0
    %5853 = vmatpush1.bf16.msra.mxu0 0
    %5854 = vmatprep.subr.bf16.mxu0 0
    %5855 = vmatpush1.bf16.msra.mxu0 0
    %5856 = vmatprep.subr.bf16.mxu0 0
    %5857 = vmatpush1.bf16.msra.mxu0 0
    %5858 = vmatprep.subr.bf16.mxu0 0
    %5859 = vmatpush1.bf16.msra.mxu0 0
    %5860 = vmatprep.subr.bf16.mxu0 0
    %5861 = vmatpush1.bf16.msra.mxu0 0
    %5862 = vmatprep.subr.bf16.mxu0 0
    %5863 = vmatpush1.bf16.msra.mxu0 %v4310
    %5864 = vmatprep.subr.bf16.mxu0 0
    %5865 = vmatpush1.bf16.msra.mxu0 %v4309
    %5866 = vmatprep.subr.bf16.mxu0 0
    %5867 = vmatpush2.bf16.msra.mxu0 0
    %5868 = vmatprep.subr.bf16.mxu0 0
    %5869 = vmatpush2.bf16.msra.mxu0 0
    %5870 = vmatprep.subr.bf16.mxu0 0
    %5871 = vmatpush2.bf16.msra.mxu0 0
    %5872 = vmatprep.subr.bf16.mxu0 0
    %5873 = vmatpush2.bf16.msra.mxu0 0
    %5874 = vmatprep.subr.bf16.mxu0 0
    %5875 = vmatpush2.bf16.msra.mxu0 0
    %5876 = vmatprep.subr.bf16.mxu0 0
    %5877 = vmatpush2.bf16.msra.mxu0 0
    %5878 = vmatprep.subr.bf16.mxu0 0
    %5879 = vmatpush2.bf16.msra.mxu0 0
    %5880 = vmatprep.subr.bf16.mxu0 0
    %5881 = vmatpush2.bf16.msra.mxu0 0
    %5882 = vmatprep.mubr.bf16.mxu0 0
    %5883 = vmatmul.mubr.bf16.gmra.mxu0 %v5538
    %v5884 = vpop.f32.mrf.mxu0
    %v5885 = vadd.f32 %v4300, %v5884
    %v5886 = vpop.f32.mrf.mxu0
    %v5887 = vpop.f32.mrf.mxu0
    %v5888 = vpop.f32.mrf.mxu0
    %5889 = vdwg.mxu0
    %v5890 = vpack.c.bf16 %v5805, %v5805
    %v5891 = vpack.c.bf16 %v5845, %v5845
    %v5893 = vsel %vm997, %v5890, 0
    %v5896 = vsel %vm997, %v5891, 0
    %5898 = vmatprep.subr.bf16.mxu0 0
    %5899 = vmatpush1.bf16.xpose.msra.mxu0 0
    %5900 = vmatprep.subr.bf16.mxu0 0
    %5901 = vmatpush1.bf16.xpose.msra.mxu0 0
    %5902 = vmatprep.subr.bf16.mxu0 0
    %5903 = vmatpush1.bf16.xpose.msra.mxu0 0
    %5904 = vmatprep.subr.bf16.mxu0 0
    %5905 = vmatpush1.bf16.xpose.msra.mxu0 0
    %5906 = vmatprep.subr.bf16.mxu0 0
    %5907 = vmatpush1.bf16.xpose.msra.mxu0 0
    %5908 = vmatprep.subr.bf16.mxu0 0
    %5909 = vmatpush1.bf16.xpose.msra.mxu0 0
    %5910 = vmatprep.subr.bf16.mxu0 0
    %5911 = vmatpush1.bf16.xpose.msra.mxu0 0
    %5912 = vmatprep.subr.bf16.mxu0 0
    %5913 = vmatpush1.bf16.xpose.msra.mxu0 %v5896
    %5914 = vmatprep.subr.bf16.mxu0 0
    %5915 = vmatpush2.bf16.xpose.msra.mxu0 0
    %5916 = vmatprep.subr.bf16.mxu0 0
    %5917 = vmatpush2.bf16.xpose.msra.mxu0 0
    %5918 = vmatprep.subr.bf16.mxu0 0
    %5919 = vmatpush2.bf16.xpose.msra.mxu0 0
    %5920 = vmatprep.subr.bf16.mxu0 0
    %5921 = vmatpush2.bf16.xpose.msra.mxu0 0
    %5922 = vmatprep.subr.bf16.mxu0 0
    %5923 = vmatpush2.bf16.xpose.msra.mxu0 0
    %5924 = vmatprep.subr.bf16.mxu0 0
    %5925 = vmatpush2.bf16.xpose.msra.mxu0 0
    %5926 = vmatprep.subr.bf16.mxu0 0
    %5927 = vmatpush2.bf16.xpose.msra.mxu0 0
    %5928 = vmatprep.subr.bf16.mxu0 0
    %5929 = vmatpush2.bf16.xpose.msra.mxu0 0
    %5930 = vmatprep.mubr.bf16.mxu0 0
    %5931 = vmatmul.mubr.bf16.gmra.mxu0 %v5893
    %v5932 = vpop.f32.mrf.mxu0
    %v5933 = vadd.f32 0.0, %v5932
    %v5934 = vpop.f32.mrf.mxu0
    %v5935 = vpop.f32.mrf.mxu0
    %v5936 = vpop.f32.mrf.mxu0
    %5937 = vdwg.mxu0
    %v5938 = vmul.f32 %v5933, 0.35355338
    %v5939 = vadd.f32 %v5938, %v546
    %v5940 = vsel %vm997, %v5939, -inf
    %5941 = vmax.xlane.f32.xlu0 %v5940
    %v5942 = vpop.xlane.xlu0 %5941
    %v5943 = vsub.f32 %v5939, %v5942
    %v5944 = vmul.f32 %v5943, 1.442695
    %v5945 = vpow.pop %v5944
    %v5946 = vsel %vm997, %v5945, 0.0
    %5947 = vadd.xlane.f32.xlu0 %v5946
    %v5948 = vpop.xlane.xlu0 %5947
    %v5949 = vrcp.pop %v5948
    %v5950 = vmul.f32 %v5945, %v5949
    %v5951 = vpack.c.bf16 %v5950, %v5950
    %v5952 = vpack.c.bf16 %v5885, %v5885
    %v5954 = vsel %vm997, %v5951, 0
    %v5957 = vsel %vm665, %v5952, 0
    %5959 = vmatprep.subr.bf16.mxu0 0
    %5960 = vmatpush1.bf16.msra.mxu0 0
    %5961 = vmatprep.subr.bf16.mxu0 0
    %5962 = vmatpush1.bf16.msra.mxu0 0
    %5963 = vmatprep.subr.bf16.mxu0 0
    %5964 = vmatpush1.bf16.msra.mxu0 0
    %5965 = vmatprep.subr.bf16.mxu0 0
    %5966 = vmatpush1.bf16.msra.mxu0 0
    %5967 = vmatprep.subr.bf16.mxu0 0
    %5968 = vmatpush1.bf16.msra.mxu0 0
    %5969 = vmatprep.subr.bf16.mxu0 0
    %5970 = vmatpush1.bf16.msra.mxu0 0
    %5971 = vmatprep.subr.bf16.mxu0 0
    %5972 = vmatpush1.bf16.msra.mxu0 0
    %5973 = vmatprep.subr.bf16.mxu0 0
    %5974 = vmatpush1.bf16.msra.mxu0 %v5957
    %5975 = vmatprep.subr.bf16.mxu0 0
    %5976 = vmatpush2.bf16.msra.mxu0 0
    %5977 = vmatprep.subr.bf16.mxu0 0
    %5978 = vmatpush2.bf16.msra.mxu0 0
    %5979 = vmatprep.subr.bf16.mxu0 0
    %5980 = vmatpush2.bf16.msra.mxu0 0
    %5981 = vmatprep.subr.bf16.mxu0 0
    %5982 = vmatpush2.bf16.msra.mxu0 0
    %5983 = vmatprep.subr.bf16.mxu0 0
    %5984 = vmatpush2.bf16.msra.mxu0 0
    %5985 = vmatprep.subr.bf16.mxu0 0
    %5986 = vmatpush2.bf16.msra.mxu0 0
    %5987 = vmatprep.subr.bf16.mxu0 0
    %5988 = vmatpush2.bf16.msra.mxu0 0
    %5989 = vmatprep.subr.bf16.mxu0 0
    %5990 = vmatpush2.bf16.msra.mxu0 0
    %5991 = vmatprep.mubr.bf16.mxu0 0
    %5992 = vmatmul.mubr.bf16.gmra.mxu0 %v5954
    %v5993 = vpop.f32.mrf.mxu0
    %v5994 = vadd.f32 0.0, %v5993
    %v5995 = vpop.f32.mrf.mxu0
    %v5996 = vpop.f32.mrf.mxu0
    %v5997 = vpop.f32.mrf.mxu0
    %5998 = vdwg.mxu0
    %v5999 = vpack.c.bf16 %v5994, %v5994
    %v6001 = vsel %vm997, %v5999, 0
    %6003 = vmatprep.subr.bf16.mxu0 0
    %6004 = vmatpush1.bf16.msra.mxu0 0
    %6005 = vmatprep.subr.bf16.mxu0 0
    %6006 = vmatpush1.bf16.msra.mxu0 0
    %6007 = vmatprep.subr.bf16.mxu0 0
    %6008 = vmatpush1.bf16.msra.mxu0 0
    %6009 = vmatprep.subr.bf16.mxu0 0
    %6010 = vmatpush1.bf16.msra.mxu0 0
    %6011 = vmatprep.subr.bf16.mxu0 0
    %6012 = vmatpush1.bf16.msra.mxu0 0
    %6013 = vmatprep.subr.bf16.mxu0 0
    %6014 = vmatpush1.bf16.msra.mxu0 0
    %6015 = vmatprep.subr.bf16.mxu0 0
    %6016 = vmatpush1.bf16.msra.mxu0 0
    %6017 = vmatprep.subr.bf16.mxu0 0
    %6018 = vmatpush1.bf16.msra.mxu0 %v4480
    %6019 = vmatprep.subr.bf16.mxu0 0
    %6020 = vmatpush2.bf16.msra.mxu0 0
    %6021 = vmatprep.subr.bf16.mxu0 0
    %6022 = vmatpush2.bf16.msra.mxu0 0
    %6023 = vmatprep.subr.bf16.mxu0 0
    %6024 = vmatpush2.bf16.msra.mxu0 0
    %6025 = vmatprep.subr.bf16.mxu0 0
    %6026 = vmatpush2.bf16.msra.mxu0 0
    %6027 = vmatprep.subr.bf16.mxu0 0
    %6028 = vmatpush2.bf16.msra.mxu0 0
    %6029 = vmatprep.subr.bf16.mxu0 0
    %6030 = vmatpush2.bf16.msra.mxu0 0
    %6031 = vmatprep.subr.bf16.mxu0 0
    %6032 = vmatpush2.bf16.msra.mxu0 0
    %6033 = vmatprep.subr.bf16.mxu0 0
    %6034 = vmatpush2.bf16.msra.mxu0 0
    %6035 = vmatprep.mubr.bf16.mxu0 0
    %6036 = vmatmul.mubr.bf16.gmra.mxu0 %v6001
    %v6037 = vpop.f32.mrf.mxu0
    %v6038 = vadd.f32 0.0, %v6037
    %v6039 = vpop.f32.mrf.mxu0
    %v6040 = vpop.f32.mrf.mxu0
    %v6041 = vpop.f32.mrf.mxu0
    %6042 = vdwg.mxu0
    %v6044 = vsel %vm997, %v5769, 0
    %6046 = vmatprep.subr.bf16.mxu0 0
    %6047 = vmatpush1.bf16.msra.mxu0 0
    %6048 = vmatprep.subr.bf16.mxu0 0
    %6049 = vmatpush1.bf16.msra.mxu0 0
    %6050 = vmatprep.subr.bf16.mxu0 0
    %6051 = vmatpush1.bf16.msra.mxu0 0
    %6052 = vmatprep.subr.bf16.mxu0 0
    %6053 = vmatpush1.bf16.msra.mxu0 0
    %6054 = vmatprep.subr.bf16.mxu0 0
    %6055 = vmatpush1.bf16.msra.mxu0 0
    %6056 = vmatprep.subr.bf16.mxu0 0
    %6057 = vmatpush1.bf16.msra.mxu0 0
    %6058 = vmatprep.subr.bf16.mxu0 0
    %6059 = vmatpush1.bf16.msra.mxu0 0
    %6060 = vmatprep.subr.bf16.mxu0 0
    %6061 = vmatpush1.bf16.msra.mxu0 %v4527
    %6062 = vmatprep.subr.bf16.mxu0 0
    %6063 = vmatpush2.bf16.msra.mxu0 0
    %6064 = vmatprep.subr.bf16.mxu0 0
    %6065 = vmatpush2.bf16.msra.mxu0 0
    %6066 = vmatprep.subr.bf16.mxu0 0
    %6067 = vmatpush2.bf16.msra.mxu0 0
    %6068 = vmatprep.subr.bf16.mxu0 0
    %6069 = vmatpush2.bf16.msra.mxu0 0
    %6070 = vmatprep.subr.bf16.mxu0 0
    %6071 = vmatpush2.bf16.msra.mxu0 0
    %6072 = vmatprep.subr.bf16.mxu0 0
    %6073 = vmatpush2.bf16.msra.mxu0 0
    %6074 = vmatprep.subr.bf16.mxu0 0
    %6075 = vmatpush2.bf16.msra.mxu0 0
    %6076 = vmatprep.subr.bf16.mxu0 0
    %6077 = vmatpush2.bf16.msra.mxu0 0
    %6078 = vmatprep.mubr.bf16.mxu0 0
    %6079 = vmatmul.mubr.bf16.gmra.mxu0 %v6044
    %v6080 = vpop.f32.mrf.mxu0
    %v6081 = vadd.f32 %v6038, %v6080
    %v6082 = vpop.f32.mrf.mxu0
    %v6083 = vpop.f32.mrf.mxu0
    %v6084 = vpop.f32.mrf.mxu0
    %6085 = vdwg.mxu0
    %6086 = vmatprep.subr.bf16.mxu0 0
    %6087 = vmatpush1.bf16.msra.mxu0 0
    %6088 = vmatprep.subr.bf16.mxu0 0
    %6089 = vmatpush1.bf16.msra.mxu0 0
    %6090 = vmatprep.subr.bf16.mxu0 0
    %6091 = vmatpush1.bf16.msra.mxu0 0
    %6092 = vmatprep.subr.bf16.mxu0 0
    %6093 = vmatpush1.bf16.msra.mxu0 0
    %6094 = vmatprep.subr.bf16.mxu0 0
    %6095 = vmatpush1.bf16.msra.mxu0 0
    %6096 = vmatprep.subr.bf16.mxu0 0
    %6097 = vmatpush1.bf16.msra.mxu0 0
    %6098 = vmatprep.subr.bf16.mxu0 0
    %6099 = vmatpush1.bf16.msra.mxu0 %v4583
    %6100 = vmatprep.subr.bf16.mxu0 0
    %6101 = vmatpush1.bf16.msra.mxu0 %v4582
    %6102 = vmatprep.subr.bf16.mxu0 0
    %6103 = vmatpush2.bf16.msra.mxu0 0
    %6104 = vmatprep.subr.bf16.mxu0 0
    %6105 = vmatpush2.bf16.msra.mxu0 0
    %6106 = vmatprep.subr.bf16.mxu0 0
    %6107 = vmatpush2.bf16.msra.mxu0 0
    %6108 = vmatprep.subr.bf16.mxu0 0
    %6109 = vmatpush2.bf16.msra.mxu0 0
    %6110 = vmatprep.subr.bf16.mxu0 0
    %6111 = vmatpush2.bf16.msra.mxu0 0
    %6112 = vmatprep.subr.bf16.mxu0 0
    %6113 = vmatpush2.bf16.msra.mxu0 0
    %6114 = vmatprep.subr.bf16.mxu0 0
    %6115 = vmatpush2.bf16.msra.mxu0 0
    %6116 = vmatprep.subr.bf16.mxu0 0
    %6117 = vmatpush2.bf16.msra.mxu0 0
    %6118 = vmatprep.mubr.bf16.mxu0 0
    %6119 = vmatmul.mubr.bf16.gmra.mxu0 %v5538
    %v6120 = vpop.f32.mrf.mxu0
    %v6121 = vadd.f32 %v4573, %v6120
    %v6122 = vpop.f32.mrf.mxu0
    %v6123 = vpop.f32.mrf.mxu0
    %v6124 = vpop.f32.mrf.mxu0
    %6125 = vdwg.mxu0
    %6126 = vmatprep.subr.bf16.mxu0 0
    %6127 = vmatpush1.bf16.msra.mxu0 0
    %6128 = vmatprep.subr.bf16.mxu0 0
    %6129 = vmatpush1.bf16.msra.mxu0 0
    %6130 = vmatprep.subr.bf16.mxu0 0
    %6131 = vmatpush1.bf16.msra.mxu0 0
    %6132 = vmatprep.subr.bf16.mxu0 0
    %6133 = vmatpush1.bf16.msra.mxu0 0
    %6134 = vmatprep.subr.bf16.mxu0 0
    %6135 = vmatpush1.bf16.msra.mxu0 0
    %6136 = vmatprep.subr.bf16.mxu0 0
    %6137 = vmatpush1.bf16.msra.mxu0 0
    %6138 = vmatprep.subr.bf16.mxu0 0
    %6139 = vmatpush1.bf16.msra.mxu0 %v4640
    %6140 = vmatprep.subr.bf16.mxu0 0
    %6141 = vmatpush1.bf16.msra.mxu0 %v4639
    %6142 = vmatprep.subr.bf16.mxu0 0
    %6143 = vmatpush2.bf16.msra.mxu0 0
    %6144 = vmatprep.subr.bf16.mxu0 0
    %6145 = vmatpush2.bf16.msra.mxu0 0
    %6146 = vmatprep.subr.bf16.mxu0 0
    %6147 = vmatpush2.bf16.msra.mxu0 0
    %6148 = vmatprep.subr.bf16.mxu0 0
    %6149 = vmatpush2.bf16.msra.mxu0 0
    %6150 = vmatprep.subr.bf16.mxu0 0
    %6151 = vmatpush2.bf16.msra.mxu0 0
    %6152 = vmatprep.subr.bf16.mxu0 0
    %6153 = vmatpush2.bf16.msra.mxu0 0
    %6154 = vmatprep.subr.bf16.mxu0 0
    %6155 = vmatpush2.bf16.msra.mxu0 0
    %6156 = vmatprep.subr.bf16.mxu0 0
    %6157 = vmatpush2.bf16.msra.mxu0 0
    %6158 = vmatprep.mubr.bf16.mxu0 0
    %6159 = vmatmul.mubr.bf16.gmra.mxu0 %v5538
    %v6160 = vpop.f32.mrf.mxu0
    %v6161 = vadd.f32 %v4630, %v6160
    %v6162 = vpop.f32.mrf.mxu0
    %v6163 = vpop.f32.mrf.mxu0
    %v6164 = vpop.f32.mrf.mxu0
    %6165 = vdwg.mxu0
    %6166 = vmatprep.subr.bf16.mxu0 0
    %6167 = vmatpush1.bf16.msra.mxu0 0
    %6168 = vmatprep.subr.bf16.mxu0 0
    %6169 = vmatpush1.bf16.msra.mxu0 0
    %6170 = vmatprep.subr.bf16.mxu0 0
    %6171 = vmatpush1.bf16.msra.mxu0 0
    %6172 = vmatprep.subr.bf16.mxu0 0
    %6173 = vmatpush1.bf16.msra.mxu0 0
    %6174 = vmatprep.subr.bf16.mxu0 0
    %6175 = vmatpush1.bf16.msra.mxu0 0
    %6176 = vmatprep.subr.bf16.mxu0 0
    %6177 = vmatpush1.bf16.msra.mxu0 0
    %6178 = vmatprep.subr.bf16.mxu0 0
    %6179 = vmatpush1.bf16.msra.mxu0 %v4697
    %6180 = vmatprep.subr.bf16.mxu0 0
    %6181 = vmatpush1.bf16.msra.mxu0 %v4696
    %6182 = vmatprep.subr.bf16.mxu0 0
    %6183 = vmatpush2.bf16.msra.mxu0 0
    %6184 = vmatprep.subr.bf16.mxu0 0
    %6185 = vmatpush2.bf16.msra.mxu0 0
    %6186 = vmatprep.subr.bf16.mxu0 0
    %6187 = vmatpush2.bf16.msra.mxu0 0
    %6188 = vmatprep.subr.bf16.mxu0 0
    %6189 = vmatpush2.bf16.msra.mxu0 0
    %6190 = vmatprep.subr.bf16.mxu0 0
    %6191 = vmatpush2.bf16.msra.mxu0 0
    %6192 = vmatprep.subr.bf16.mxu0 0
    %6193 = vmatpush2.bf16.msra.mxu0 0
    %6194 = vmatprep.subr.bf16.mxu0 0
    %6195 = vmatpush2.bf16.msra.mxu0 0
    %6196 = vmatprep.subr.bf16.mxu0 0
    %6197 = vmatpush2.bf16.msra.mxu0 0
    %6198 = vmatprep.mubr.bf16.mxu0 0
    %6199 = vmatmul.mubr.bf16.gmra.mxu0 %v5538
    %v6200 = vpop.f32.mrf.mxu0
    %v6201 = vadd.f32 %v4687, %v6200
    %v6202 = vpop.f32.mrf.mxu0
    %v6203 = vpop.f32.mrf.mxu0
    %v6204 = vpop.f32.mrf.mxu0
    %6205 = vdwg.mxu0
    %v6206 = vpack.c.bf16 %v6121, %v6121
    %v6207 = vpack.c.bf16 %v6161, %v6161
    %v6209 = vsel %vm997, %v6206, 0
    %v6212 = vsel %vm997, %v6207, 0
    %6214 = vmatprep.subr.bf16.mxu0 0
    %6215 = vmatpush1.bf16.xpose.msra.mxu0 0
    %6216 = vmatprep.subr.bf16.mxu0 0
    %6217 = vmatpush1.bf16.xpose.msra.mxu0 0
    %6218 = vmatprep.subr.bf16.mxu0 0
    %6219 = vmatpush1.bf16.xpose.msra.mxu0 0
    %6220 = vmatprep.subr.bf16.mxu0 0
    %6221 = vmatpush1.bf16.xpose.msra.mxu0 0
    %6222 = vmatprep.subr.bf16.mxu0 0
    %6223 = vmatpush1.bf16.xpose.msra.mxu0 0
    %6224 = vmatprep.subr.bf16.mxu0 0
    %6225 = vmatpush1.bf16.xpose.msra.mxu0 0
    %6226 = vmatprep.subr.bf16.mxu0 0
    %6227 = vmatpush1.bf16.xpose.msra.mxu0 0
    %6228 = vmatprep.subr.bf16.mxu0 0
    %6229 = vmatpush1.bf16.xpose.msra.mxu0 %v6212
    %6230 = vmatprep.subr.bf16.mxu0 0
    %6231 = vmatpush2.bf16.xpose.msra.mxu0 0
    %6232 = vmatprep.subr.bf16.mxu0 0
    %6233 = vmatpush2.bf16.xpose.msra.mxu0 0
    %6234 = vmatprep.subr.bf16.mxu0 0
    %6235 = vmatpush2.bf16.xpose.msra.mxu0 0
    %6236 = vmatprep.subr.bf16.mxu0 0
    %6237 = vmatpush2.bf16.xpose.msra.mxu0 0
    %6238 = vmatprep.subr.bf16.mxu0 0
    %6239 = vmatpush2.bf16.xpose.msra.mxu0 0
    %6240 = vmatprep.subr.bf16.mxu0 0
    %6241 = vmatpush2.bf16.xpose.msra.mxu0 0
    %6242 = vmatprep.subr.bf16.mxu0 0
    %6243 = vmatpush2.bf16.xpose.msra.mxu0 0
    %6244 = vmatprep.subr.bf16.mxu0 0
    %6245 = vmatpush2.bf16.xpose.msra.mxu0 0
    %6246 = vmatprep.mubr.bf16.mxu0 0
    %6247 = vmatmul.mubr.bf16.gmra.mxu0 %v6209
    %v6248 = vpop.f32.mrf.mxu0
    %v6249 = vadd.f32 0.0, %v6248
    %v6250 = vpop.f32.mrf.mxu0
    %v6251 = vpop.f32.mrf.mxu0
    %v6252 = vpop.f32.mrf.mxu0
    %6253 = vdwg.mxu0
    %v6254 = vmul.f32 %v6249, 0.35355338
    %v6255 = vadd.f32 %v6254, %v546
    %v6256 = vsel %vm997, %v6255, -inf
    %6257 = vmax.xlane.f32.xlu0 %v6256
    %v6258 = vpop.xlane.xlu0 %6257
    %v6259 = vsub.f32 %v6255, %v6258
    %v6260 = vmul.f32 %v6259, 1.442695
    %v6261 = vpow.pop %v6260
    %v6262 = vsel %vm997, %v6261, 0.0
    %6263 = vadd.xlane.f32.xlu0 %v6262
    %v6264 = vpop.xlane.xlu0 %6263
    %v6265 = vrcp.pop %v6264
    %v6266 = vmul.f32 %v6261, %v6265
    %v6267 = vpack.c.bf16 %v6266, %v6266
    %v6268 = vpack.c.bf16 %v6201, %v6201
    %v6270 = vsel %vm997, %v6267, 0
    %v6273 = vsel %vm665, %v6268, 0
    %6275 = vmatprep.subr.bf16.mxu0 0
    %6276 = vmatpush1.bf16.msra.mxu0 0
    %6277 = vmatprep.subr.bf16.mxu0 0
    %6278 = vmatpush1.bf16.msra.mxu0 0
    %6279 = vmatprep.subr.bf16.mxu0 0
    %6280 = vmatpush1.bf16.msra.mxu0 0
    %6281 = vmatprep.subr.bf16.mxu0 0
    %6282 = vmatpush1.bf16.msra.mxu0 0
    %6283 = vmatprep.subr.bf16.mxu0 0
    %6284 = vmatpush1.bf16.msra.mxu0 0
    %6285 = vmatprep.subr.bf16.mxu0 0
    %6286 = vmatpush1.bf16.msra.mxu0 0
    %6287 = vmatprep.subr.bf16.mxu0 0
    %6288 = vmatpush1.bf16.msra.mxu0 0
    %6289 = vmatprep.subr.bf16.mxu0 0
    %6290 = vmatpush1.bf16.msra.mxu0 %v6273
    %6291 = vmatprep.subr.bf16.mxu0 0
    %6292 = vmatpush2.bf16.msra.mxu0 0
    %6293 = vmatprep.subr.bf16.mxu0 0
    %6294 = vmatpush2.bf16.msra.mxu0 0
    %6295 = vmatprep.subr.bf16.mxu0 0
    %6296 = vmatpush2.bf16.msra.mxu0 0
    %6297 = vmatprep.subr.bf16.mxu0 0
    %6298 = vmatpush2.bf16.msra.mxu0 0
    %6299 = vmatprep.subr.bf16.mxu0 0
    %6300 = vmatpush2.bf16.msra.mxu0 0
    %6301 = vmatprep.subr.bf16.mxu0 0
    %6302 = vmatpush2.bf16.msra.mxu0 0
    %6303 = vmatprep.subr.bf16.mxu0 0
    %6304 = vmatpush2.bf16.msra.mxu0 0
    %6305 = vmatprep.subr.bf16.mxu0 0
    %6306 = vmatpush2.bf16.msra.mxu0 0
    %6307 = vmatprep.mubr.bf16.mxu0 0
    %6308 = vmatmul.mubr.bf16.gmra.mxu0 %v6270
    %v6309 = vpop.f32.mrf.mxu0
    %v6310 = vadd.f32 0.0, %v6309
    %v6311 = vpop.f32.mrf.mxu0
    %v6312 = vpop.f32.mrf.mxu0
    %v6313 = vpop.f32.mrf.mxu0
    %6314 = vdwg.mxu0
    %v6315 = vpack.c.bf16 %v6310, %v6310
    %v6317 = vsel %vm997, %v6315, 0
    %6319 = vmatprep.subr.bf16.mxu0 0
    %6320 = vmatpush1.bf16.msra.mxu0 0
    %6321 = vmatprep.subr.bf16.mxu0 0
    %6322 = vmatpush1.bf16.msra.mxu0 0
    %6323 = vmatprep.subr.bf16.mxu0 0
    %6324 = vmatpush1.bf16.msra.mxu0 0
    %6325 = vmatprep.subr.bf16.mxu0 0
    %6326 = vmatpush1.bf16.msra.mxu0 0
    %6327 = vmatprep.subr.bf16.mxu0 0
    %6328 = vmatpush1.bf16.msra.mxu0 0
    %6329 = vmatprep.subr.bf16.mxu0 0
    %6330 = vmatpush1.bf16.msra.mxu0 0
    %6331 = vmatprep.subr.bf16.mxu0 0
    %6332 = vmatpush1.bf16.msra.mxu0 0
    %6333 = vmatprep.subr.bf16.mxu0 0
    %6334 = vmatpush1.bf16.msra.mxu0 %v4867
    %6335 = vmatprep.subr.bf16.mxu0 0
    %6336 = vmatpush2.bf16.msra.mxu0 0
    %6337 = vmatprep.subr.bf16.mxu0 0
    %6338 = vmatpush2.bf16.msra.mxu0 0
    %6339 = vmatprep.subr.bf16.mxu0 0
    %6340 = vmatpush2.bf16.msra.mxu0 0
    %6341 = vmatprep.subr.bf16.mxu0 0
    %6342 = vmatpush2.bf16.msra.mxu0 0
    %6343 = vmatprep.subr.bf16.mxu0 0
    %6344 = vmatpush2.bf16.msra.mxu0 0
    %6345 = vmatprep.subr.bf16.mxu0 0
    %6346 = vmatpush2.bf16.msra.mxu0 0
    %6347 = vmatprep.subr.bf16.mxu0 0
    %6348 = vmatpush2.bf16.msra.mxu0 0
    %6349 = vmatprep.subr.bf16.mxu0 0
    %6350 = vmatpush2.bf16.msra.mxu0 0
    %6351 = vmatprep.mubr.bf16.mxu0 0
    %6352 = vmatmul.mubr.bf16.gmra.mxu0 %v6317
    %v6353 = vpop.f32.mrf.mxu0
    %v6354 = vadd.f32 0.0, %v6353
    %v6355 = vpop.f32.mrf.mxu0
    %v6356 = vpop.f32.mrf.mxu0
    %v6357 = vpop.f32.mrf.mxu0
    %6358 = vdwg.mxu0
    %v6359 = vadd.f32 %v6081, %v6354
    %6360 = vmatprep.subr.bf16.mxu0 0
    %6361 = vmatpush1.bf16.msra.mxu0 0
    %6362 = vmatprep.subr.bf16.mxu0 0
    %6363 = vmatpush1.bf16.msra.mxu0 0
    %6364 = vmatprep.subr.bf16.mxu0 0
    %6365 = vmatpush1.bf16.msra.mxu0 0
    %6366 = vmatprep.subr.bf16.mxu0 0
    %6367 = vmatpush1.bf16.msra.mxu0 0
    %6368 = vmatprep.subr.bf16.mxu0 0
    %6369 = vmatpush1.bf16.msra.mxu0 0
    %6370 = vmatprep.subr.bf16.mxu0 0
    %6371 = vmatpush1.bf16.msra.mxu0 0
    %6372 = vmatprep.subr.bf16.mxu0 0
    %6373 = vmatpush1.bf16.msra.mxu0 %v4925
    %6374 = vmatprep.subr.bf16.mxu0 0
    %6375 = vmatpush1.bf16.msra.mxu0 %v4924
    %6376 = vmatprep.subr.bf16.mxu0 0
    %6377 = vmatpush2.bf16.msra.mxu0 0
    %6378 = vmatprep.subr.bf16.mxu0 0
    %6379 = vmatpush2.bf16.msra.mxu0 0
    %6380 = vmatprep.subr.bf16.mxu0 0
    %6381 = vmatpush2.bf16.msra.mxu0 0
    %6382 = vmatprep.subr.bf16.mxu0 0
    %6383 = vmatpush2.bf16.msra.mxu0 0
    %6384 = vmatprep.subr.bf16.mxu0 0
    %6385 = vmatpush2.bf16.msra.mxu0 0
    %6386 = vmatprep.subr.bf16.mxu0 0
    %6387 = vmatpush2.bf16.msra.mxu0 0
    %6388 = vmatprep.subr.bf16.mxu0 0
    %6389 = vmatpush2.bf16.msra.mxu0 0
    %6390 = vmatprep.subr.bf16.mxu0 0
    %6391 = vmatpush2.bf16.msra.mxu0 0
    %6392 = vmatprep.mubr.bf16.mxu0 0
    %6393 = vmatmul.mubr.bf16.gmra.mxu0 %v5538
    %v6394 = vpop.f32.mrf.mxu0
    %v6395 = vadd.f32 %v4915, %v6394
    %v6396 = vpop.f32.mrf.mxu0
    %v6397 = vpop.f32.mrf.mxu0
    %v6398 = vpop.f32.mrf.mxu0
    %6399 = vdwg.mxu0
    %6400 = vmatprep.subr.bf16.mxu0 0
    %6401 = vmatpush1.bf16.msra.mxu0 0
    %6402 = vmatprep.subr.bf16.mxu0 0
    %6403 = vmatpush1.bf16.msra.mxu0 0
    %6404 = vmatprep.subr.bf16.mxu0 0
    %6405 = vmatpush1.bf16.msra.mxu0 0
    %6406 = vmatprep.subr.bf16.mxu0 0
    %6407 = vmatpush1.bf16.msra.mxu0 0
    %6408 = vmatprep.subr.bf16.mxu0 0
    %6409 = vmatpush1.bf16.msra.mxu0 0
    %6410 = vmatprep.subr.bf16.mxu0 0
    %6411 = vmatpush1.bf16.msra.mxu0 0
    %6412 = vmatprep.subr.bf16.mxu0 0
    %6413 = vmatpush1.bf16.msra.mxu0 %v4982
    %6414 = vmatprep.subr.bf16.mxu0 0
    %6415 = vmatpush1.bf16.msra.mxu0 %v4981
    %6416 = vmatprep.subr.bf16.mxu0 0
    %6417 = vmatpush2.bf16.msra.mxu0 0
    %6418 = vmatprep.subr.bf16.mxu0 0
    %6419 = vmatpush2.bf16.msra.mxu0 0
    %6420 = vmatprep.subr.bf16.mxu0 0
    %6421 = vmatpush2.bf16.msra.mxu0 0
    %6422 = vmatprep.subr.bf16.mxu0 0
    %6423 = vmatpush2.bf16.msra.mxu0 0
    %6424 = vmatprep.subr.bf16.mxu0 0
    %6425 = vmatpush2.bf16.msra.mxu0 0
    %6426 = vmatprep.subr.bf16.mxu0 0
    %6427 = vmatpush2.bf16.msra.mxu0 0
    %6428 = vmatprep.subr.bf16.mxu0 0
    %6429 = vmatpush2.bf16.msra.mxu0 0
    %6430 = vmatprep.subr.bf16.mxu0 0
    %6431 = vmatpush2.bf16.msra.mxu0 0
    %6432 = vmatprep.mubr.bf16.mxu0 0
    %6433 = vmatmul.mubr.bf16.gmra.mxu0 %v5538
    %v6434 = vpop.f32.mrf.mxu0
    %v6435 = vadd.f32 %v4972, %v6434
    %v6436 = vpop.f32.mrf.mxu0
    %v6437 = vpop.f32.mrf.mxu0
    %v6438 = vpop.f32.mrf.mxu0
    %6439 = vdwg.mxu0
    %6440 = vmatprep.subr.bf16.mxu0 0
    %6441 = vmatpush1.bf16.msra.mxu0 0
    %6442 = vmatprep.subr.bf16.mxu0 0
    %6443 = vmatpush1.bf16.msra.mxu0 0
    %6444 = vmatprep.subr.bf16.mxu0 0
    %6445 = vmatpush1.bf16.msra.mxu0 0
    %6446 = vmatprep.subr.bf16.mxu0 0
    %6447 = vmatpush1.bf16.msra.mxu0 0
    %6448 = vmatprep.subr.bf16.mxu0 0
    %6449 = vmatpush1.bf16.msra.mxu0 0
    %6450 = vmatprep.subr.bf16.mxu0 0
    %6451 = vmatpush1.bf16.msra.mxu0 0
    %6452 = vmatprep.subr.bf16.mxu0 0
    %6453 = vmatpush1.bf16.msra.mxu0 %v5039
    %6454 = vmatprep.subr.bf16.mxu0 0
    %6455 = vmatpush1.bf16.msra.mxu0 %v5038
    %6456 = vmatprep.subr.bf16.mxu0 0
    %6457 = vmatpush2.bf16.msra.mxu0 0
    %6458 = vmatprep.subr.bf16.mxu0 0
    %6459 = vmatpush2.bf16.msra.mxu0 0
    %6460 = vmatprep.subr.bf16.mxu0 0
    %6461 = vmatpush2.bf16.msra.mxu0 0
    %6462 = vmatprep.subr.bf16.mxu0 0
    %6463 = vmatpush2.bf16.msra.mxu0 0
    %6464 = vmatprep.subr.bf16.mxu0 0
    %6465 = vmatpush2.bf16.msra.mxu0 0
    %6466 = vmatprep.subr.bf16.mxu0 0
    %6467 = vmatpush2.bf16.msra.mxu0 0
    %6468 = vmatprep.subr.bf16.mxu0 0
    %6469 = vmatpush2.bf16.msra.mxu0 0
    %6470 = vmatprep.subr.bf16.mxu0 0
    %6471 = vmatpush2.bf16.msra.mxu0 0
    %6472 = vmatprep.mubr.bf16.mxu0 0
    %6473 = vmatmul.mubr.bf16.gmra.mxu0 %v5538
    %v6474 = vpop.f32.mrf.mxu0
    %v6475 = vadd.f32 %v5029, %v6474
    %v6476 = vpop.f32.mrf.mxu0
    %v6477 = vpop.f32.mrf.mxu0
    %v6478 = vpop.f32.mrf.mxu0
    %6479 = vdwg.mxu0
    %v6480 = vpack.c.bf16 %v6395, %v6395
    %v6481 = vpack.c.bf16 %v6435, %v6435
    %v6483 = vsel %vm997, %v6480, 0
    %v6486 = vsel %vm997, %v6481, 0
    %6488 = vmatprep.subr.bf16.mxu0 0
    %6489 = vmatpush1.bf16.xpose.msra.mxu0 0
    %6490 = vmatprep.subr.bf16.mxu0 0
    %6491 = vmatpush1.bf16.xpose.msra.mxu0 0
    %6492 = vmatprep.subr.bf16.mxu0 0
    %6493 = vmatpush1.bf16.xpose.msra.mxu0 0
    %6494 = vmatprep.subr.bf16.mxu0 0
    %6495 = vmatpush1.bf16.xpose.msra.mxu0 0
    %6496 = vmatprep.subr.bf16.mxu0 0
    %6497 = vmatpush1.bf16.xpose.msra.mxu0 0
    %6498 = vmatprep.subr.bf16.mxu0 0
    %6499 = vmatpush1.bf16.xpose.msra.mxu0 0
    %6500 = vmatprep.subr.bf16.mxu0 0
    %6501 = vmatpush1.bf16.xpose.msra.mxu0 0
    %6502 = vmatprep.subr.bf16.mxu0 0
    %6503 = vmatpush1.bf16.xpose.msra.mxu0 %v6486
    %6504 = vmatprep.subr.bf16.mxu0 0
    %6505 = vmatpush2.bf16.xpose.msra.mxu0 0
    %6506 = vmatprep.subr.bf16.mxu0 0
    %6507 = vmatpush2.bf16.xpose.msra.mxu0 0
    %6508 = vmatprep.subr.bf16.mxu0 0
    %6509 = vmatpush2.bf16.xpose.msra.mxu0 0
    %6510 = vmatprep.subr.bf16.mxu0 0
    %6511 = vmatpush2.bf16.xpose.msra.mxu0 0
    %6512 = vmatprep.subr.bf16.mxu0 0
    %6513 = vmatpush2.bf16.xpose.msra.mxu0 0
    %6514 = vmatprep.subr.bf16.mxu0 0
    %6515 = vmatpush2.bf16.xpose.msra.mxu0 0
    %6516 = vmatprep.subr.bf16.mxu0 0
    %6517 = vmatpush2.bf16.xpose.msra.mxu0 0
    %6518 = vmatprep.subr.bf16.mxu0 0
    %6519 = vmatpush2.bf16.xpose.msra.mxu0 0
    %6520 = vmatprep.mubr.bf16.mxu0 0
    %6521 = vmatmul.mubr.bf16.gmra.mxu0 %v6483
    %v6522 = vpop.f32.mrf.mxu0
    %v6523 = vadd.f32 0.0, %v6522
    %v6524 = vpop.f32.mrf.mxu0
    %v6525 = vpop.f32.mrf.mxu0
    %v6526 = vpop.f32.mrf.mxu0
    %6527 = vdwg.mxu0
    %v6528 = vmul.f32 %v6523, 0.35355338
    %v6529 = vadd.f32 %v6528, %v546
    %v6530 = vsel %vm997, %v6529, -inf
    %6531 = vmax.xlane.f32.xlu0 %v6530
    %v6532 = vpop.xlane.xlu0 %6531
    %v6533 = vsub.f32 %v6529, %v6532
    %v6534 = vmul.f32 %v6533, 1.442695
    %v6535 = vpow.pop %v6534
    %v6536 = vsel %vm997, %v6535, 0.0
    %6537 = vadd.xlane.f32.xlu0 %v6536
    %v6538 = vpop.xlane.xlu0 %6537
    %v6539 = vrcp.pop %v6538
    %v6540 = vmul.f32 %v6535, %v6539
    %v6541 = vpack.c.bf16 %v6540, %v6540
    %v6542 = vpack.c.bf16 %v6475, %v6475
    %v6544 = vsel %vm997, %v6541, 0
    %v6547 = vsel %vm665, %v6542, 0
    %6549 = vmatprep.subr.bf16.mxu0 0
    %6550 = vmatpush1.bf16.msra.mxu0 0
    %6551 = vmatprep.subr.bf16.mxu0 0
    %6552 = vmatpush1.bf16.msra.mxu0 0
    %6553 = vmatprep.subr.bf16.mxu0 0
    %6554 = vmatpush1.bf16.msra.mxu0 0
    %6555 = vmatprep.subr.bf16.mxu0 0
    %6556 = vmatpush1.bf16.msra.mxu0 0
    %6557 = vmatprep.subr.bf16.mxu0 0
    %6558 = vmatpush1.bf16.msra.mxu0 0
    %6559 = vmatprep.subr.bf16.mxu0 0
    %6560 = vmatpush1.bf16.msra.mxu0 0
    %6561 = vmatprep.subr.bf16.mxu0 0
    %6562 = vmatpush1.bf16.msra.mxu0 0
    %6563 = vmatprep.subr.bf16.mxu0 0
    %6564 = vmatpush1.bf16.msra.mxu0 %v6547
    %6565 = vmatprep.subr.bf16.mxu0 0
    %6566 = vmatpush2.bf16.msra.mxu0 0
    %6567 = vmatprep.subr.bf16.mxu0 0
    %6568 = vmatpush2.bf16.msra.mxu0 0
    %6569 = vmatprep.subr.bf16.mxu0 0
    %6570 = vmatpush2.bf16.msra.mxu0 0
    %6571 = vmatprep.subr.bf16.mxu0 0
    %6572 = vmatpush2.bf16.msra.mxu0 0
    %6573 = vmatprep.subr.bf16.mxu0 0
    %6574 = vmatpush2.bf16.msra.mxu0 0
    %6575 = vmatprep.subr.bf16.mxu0 0
    %6576 = vmatpush2.bf16.msra.mxu0 0
    %6577 = vmatprep.subr.bf16.mxu0 0
    %6578 = vmatpush2.bf16.msra.mxu0 0
    %6579 = vmatprep.subr.bf16.mxu0 0
    %6580 = vmatpush2.bf16.msra.mxu0 0
    %6581 = vmatprep.mubr.bf16.mxu0 0
    %6582 = vmatmul.mubr.bf16.gmra.mxu0 %v6544
    %v6583 = vpop.f32.mrf.mxu0
    %v6584 = vadd.f32 0.0, %v6583
    %v6585 = vpop.f32.mrf.mxu0
    %v6586 = vpop.f32.mrf.mxu0
    %v6587 = vpop.f32.mrf.mxu0
    %6588 = vdwg.mxu0
    %v6589 = vpack.c.bf16 %v6584, %v6584
    %v6591 = vsel %vm997, %v6589, 0
    %6593 = vmatprep.subr.bf16.mxu0 0
    %6594 = vmatpush1.bf16.msra.mxu0 0
    %6595 = vmatprep.subr.bf16.mxu0 0
    %6596 = vmatpush1.bf16.msra.mxu0 0
    %6597 = vmatprep.subr.bf16.mxu0 0
    %6598 = vmatpush1.bf16.msra.mxu0 0
    %6599 = vmatprep.subr.bf16.mxu0 0
    %6600 = vmatpush1.bf16.msra.mxu0 0
    %6601 = vmatprep.subr.bf16.mxu0 0
    %6602 = vmatpush1.bf16.msra.mxu0 0
    %6603 = vmatprep.subr.bf16.mxu0 0
    %6604 = vmatpush1.bf16.msra.mxu0 0
    %6605 = vmatprep.subr.bf16.mxu0 0
    %6606 = vmatpush1.bf16.msra.mxu0 0
    %6607 = vmatprep.subr.bf16.mxu0 0
    %6608 = vmatpush1.bf16.msra.mxu0 %v5209
    %6609 = vmatprep.subr.bf16.mxu0 0
    %6610 = vmatpush2.bf16.msra.mxu0 0
    %6611 = vmatprep.subr.bf16.mxu0 0
    %6612 = vmatpush2.bf16.msra.mxu0 0
    %6613 = vmatprep.subr.bf16.mxu0 0
    %6614 = vmatpush2.bf16.msra.mxu0 0
    %6615 = vmatprep.subr.bf16.mxu0 0
    %6616 = vmatpush2.bf16.msra.mxu0 0
    %6617 = vmatprep.subr.bf16.mxu0 0
    %6618 = vmatpush2.bf16.msra.mxu0 0
    %6619 = vmatprep.subr.bf16.mxu0 0
    %6620 = vmatpush2.bf16.msra.mxu0 0
    %6621 = vmatprep.subr.bf16.mxu0 0
    %6622 = vmatpush2.bf16.msra.mxu0 0
    %6623 = vmatprep.subr.bf16.mxu0 0
    %6624 = vmatpush2.bf16.msra.mxu0 0
    %6625 = vmatprep.mubr.bf16.mxu0 0
    %6626 = vmatmul.mubr.bf16.gmra.mxu0 %v6591
    %v6627 = vpop.f32.mrf.mxu0
    %v6628 = vadd.f32 0.0, %v6627
    %v6629 = vpop.f32.mrf.mxu0
    %v6630 = vpop.f32.mrf.mxu0
    %v6631 = vpop.f32.mrf.mxu0
    %6632 = vdwg.mxu0
    %v6633 = vadd.f32 %v6359, %v6628
    %v6634 = vadd.f32 %v2319, %v6633
    %v6635 = vadd.f32 %v6634, %v5260
    %v6636 = vsel %vm798, %v6635, 0.0
    %6637 = vadd.xlane.f32.xlu0 %v6636
    %v6638 = vpop.xlane.xlu0 %6637
    %v6639 = vmul.f32 %v6638, %v802
    %v6640 = vsub.f32 %v6635, %v6639
    %v6641 = vmul.f32 %v6640, %v6640
    %v6642 = vsel %vm798, %v6641, 0.0
    %6643 = vadd.xlane.f32.xlu0 %v6642
    %v6644 = vpop.xlane.xlu0 %6643
    %v6645 = vmul.f32 %v6644, %v802
    %v6646 = vadd.f32 %v6645, 1e-05
    %v6647 = vrsqrt.pop %v6646
    %v6648 = vmul.f32 %v6640, %v6647
    %v6649 = vlaneseq
    %v6650 = vshrl.u32 %v6649, 7
    %v6651 = vsub.s32 4, %v6650
    %v6652 = vrot.slane %v411, %v6651
    %v6653 = vmul.f32 %v6648, %v6652
    %v6654 = vlaneseq
    %v6655 = vshrl.u32 %v6654, 7
    %v6656 = vsub.s32 4, %v6655
    %v6657 = vrot.slane %v410, %v6656
    %v6658 = vadd.f32 %v6653, %v6657
    %v6659 = vpack.c.bf16 %v6658, %v6658
    %v6661 = vsel %vm798, %v6659, 0
    %6663 = vmatprep.subr.bf16.mxu0 0
    %6664 = vmatpush1.bf16.msra.mxu0 0
    %6665 = vmatprep.subr.bf16.mxu0 0
    %6666 = vmatpush1.bf16.msra.mxu0 0
    %6667 = vmatprep.subr.bf16.mxu0 0
    %6668 = vmatpush1.bf16.msra.mxu0 0
    %6669 = vmatprep.subr.bf16.mxu0 0
    %6670 = vmatpush1.bf16.msra.mxu0 0
    %6671 = vmatprep.subr.bf16.mxu0 0
    %6672 = vmatpush1.bf16.msra.mxu0 0
    %6673 = vmatprep.subr.bf16.mxu0 0
    %6674 = vmatpush1.bf16.msra.mxu0 0
    %6675 = vmatprep.subr.bf16.mxu0 0
    %6676 = vmatpush1.bf16.msra.mxu0 %v5318
    %6677 = vmatprep.subr.bf16.mxu0 0
    %6678 = vmatpush1.bf16.msra.mxu0 %v5317
    %6679 = vmatprep.subr.bf16.mxu0 0
    %6680 = vmatpush2.bf16.msra.mxu0 0
    %6681 = vmatprep.subr.bf16.mxu0 0
    %6682 = vmatpush2.bf16.msra.mxu0 0
    %6683 = vmatprep.subr.bf16.mxu0 0
    %6684 = vmatpush2.bf16.msra.mxu0 0
    %6685 = vmatprep.subr.bf16.mxu0 0
    %6686 = vmatpush2.bf16.msra.mxu0 0
    %6687 = vmatprep.subr.bf16.mxu0 0
    %6688 = vmatpush2.bf16.msra.mxu0 0
    %6689 = vmatprep.subr.bf16.mxu0 0
    %6690 = vmatpush2.bf16.msra.mxu0 0
    %6691 = vmatprep.subr.bf16.mxu0 0
    %6692 = vmatpush2.bf16.msra.mxu0 0
    %6693 = vmatprep.subr.bf16.mxu0 0
    %6694 = vmatpush2.bf16.msra.mxu0 0
    %6695 = vmatprep.mubr.bf16.mxu0 0
    %6696 = vmatmul.mubr.bf16.gmra.mxu0 %v6661
    %v6697 = vpop.f32.mrf.mxu0
    %v6698 = vadd.f32 %v5307, %v6697
    %v6699 = vpop.f32.mrf.mxu0
    %v6700 = vpop.f32.mrf.mxu0
    %v6701 = vpop.f32.mrf.mxu0
    %6702 = vdwg.mxu0
    %v6703 = vmul.f32 %v6698, 0.5
    %v6704 = vmul.f32 %v6698, 0.70710677
    %v6705 = verf.f32.pop %v6704
    %v6706 = vadd.f32 %v6705, 1.0
    %v6707 = vmul.f32 %v6703, %v6706
    %v6708 = vpack.c.bf16 %v6707, %v6707
    %6709 = vmatprep.subr.bf16.mxu0 0
    %6710 = vmatpush1.bf16.msra.mxu0 %v5421
    %6711 = vmatprep.subr.bf16.mxu0 0
    %6712 = vmatpush1.bf16.msra.mxu0 %v5420
    %6713 = vmatprep.subr.bf16.mxu0 0
    %6714 = vmatpush1.bf16.msra.mxu0 %v5419
    %6715 = vmatprep.subr.bf16.mxu0 0
    %6716 = vmatpush1.bf16.msra.mxu0 %v5418
    %6717 = vmatprep.subr.bf16.mxu0 0
    %6718 = vmatpush1.bf16.msra.mxu0 %v5417
    %6719 = vmatprep.subr.bf16.mxu0 0
    %6720 = vmatpush1.bf16.msra.mxu0 %v5416
    %6721 = vmatprep.subr.bf16.mxu0 0
    %6722 = vmatpush1.bf16.msra.mxu0 %v5415
    %6723 = vmatprep.subr.bf16.mxu0 0
    %6724 = vmatpush1.bf16.msra.mxu0 %v5414
    %6725 = vmatprep.subr.bf16.mxu0 0
    %6726 = vmatpush2.bf16.msra.mxu0 0
    %6727 = vmatprep.subr.bf16.mxu0 0
    %6728 = vmatpush2.bf16.msra.mxu0 0
    %6729 = vmatprep.subr.bf16.mxu0 0
    %6730 = vmatpush2.bf16.msra.mxu0 0
    %6731 = vmatprep.subr.bf16.mxu0 0
    %6732 = vmatpush2.bf16.msra.mxu0 0
    %6733 = vmatprep.subr.bf16.mxu0 0
    %6734 = vmatpush2.bf16.msra.mxu0 0
    %6735 = vmatprep.subr.bf16.mxu0 0
    %6736 = vmatpush2.bf16.msra.mxu0 0
    %6737 = vmatprep.subr.bf16.mxu0 0
    %6738 = vmatpush2.bf16.msra.mxu0 0
    %6739 = vmatprep.subr.bf16.mxu0 0
    %6740 = vmatpush2.bf16.msra.mxu0 0
    %6741 = vmatprep.mubr.bf16.mxu0 0
    %6742 = vmatmul.mubr.bf16.gmra.mxu0 %v6708
    %v6743 = vpop.f32.mrf.mxu0
    %v6744 = vadd.f32 %v5380, %v6743
    %v6745 = vpop.f32.mrf.mxu0
    %v6746 = vpop.f32.mrf.mxu0
    %v6747 = vpop.f32.mrf.mxu0
    %6748 = vdwg.mxu0
    %v6749 = vadd.f32 %v6635, %v6744
    %v6750 = vsel %vm798, %v6749, 0.0
    %6751 = vadd.xlane.f32.xlu0 %v6750
    %v6752 = vpop.xlane.xlu0 %6751
    %v6753 = vmul.f32 %v6752, %v802
    %v6754 = vsub.f32 %v6749, %v6753
    %v6755 = vmul.f32 %v6754, %v6754
    %v6756 = vsel %vm798, %v6755, 0.0
    %6757 = vadd.xlane.f32.xlu0 %v6756
    %v6758 = vpop.xlane.xlu0 %6757
    %v6759 = vmul.f32 %v6758, %v802
    %v6760 = vadd.f32 %v6759, 1e-05
    %v6761 = vrsqrt.pop %v6760
    %v6762 = vmul.f32 %v6754, %v6761
    %v6763 = vlaneseq
    %v6764 = vshrl.u32 %v6763, 7
    %v6765 = vsub.s32 1, %v6764
    %v6766 = vrot.slane %v545, %v6765
    %v6767 = vmul.f32 %v6762, %v6766
    %v6768 = vlaneseq
    %v6769 = vshrl.u32 %v6768, 7
    %v6770 = vsub.s32 1, %v6769
    %v6771 = vrot.slane %v544, %v6770
    %v6772 = vadd.f32 %v6767, %v6771
    %6773 = vst.msk [vmem:[#allocation14] sm:$0xff] %vm798, %v6772
    %v6774 = vsel %vm798, %v3838, 0.0
    %6775 = vadd.xlane.f32.xlu0 %v6774
    %v6776 = vpop.xlane.xlu0 %6775
    %v6777 = vmul.f32 %v6776, %v802
    %v6778 = vsub.f32 %v3838, %v6777
    %v6779 = vmul.f32 %v6778, %v6778
    %v6780 = vsel %vm798, %v6779, 0.0
    %6781 = vadd.xlane.f32.xlu0 %v6780
    %v6782 = vpop.xlane.xlu0 %6781
    %v6783 = vmul.f32 %v6782, %v802
    %v6784 = vadd.f32 %v6783, 1e-05
    %v6785 = vrsqrt.pop %v6784
    %v6786 = vmul.f32 %v6778, %v6785
    %v6787 = vlaneseq
    %v6788 = vshrl.u32 %v6787, 7
    %v6789 = vsub.s32 2, %v6788
    %v6790 = vrot.slane %v411, %v6789
    %v6791 = vmul.f32 %v6786, %v6790
    %v6792 = vlaneseq
    %v6793 = vshrl.u32 %v6792, 7
    %v6794 = vsub.s32 2, %v6793
    %v6795 = vrot.slane %v410, %v6794
    %v6796 = vadd.f32 %v6791, %v6795
    %v6797 = vpack.c.bf16 %v6796, %v6796
    %v6799 = vsel %vm798, %v6797, 0
    %6801 = vmatprep.subr.bf16.mxu0 0
    %6802 = vmatpush1.bf16.msra.mxu0 0
    %6803 = vmatprep.subr.bf16.mxu0 0
    %6804 = vmatpush1.bf16.msra.mxu0 0
    %6805 = vmatprep.subr.bf16.mxu0 0
    %6806 = vmatpush1.bf16.msra.mxu0 0
    %6807 = vmatprep.subr.bf16.mxu0 0
    %6808 = vmatpush1.bf16.msra.mxu0 0
    %6809 = vmatprep.subr.bf16.mxu0 0
    %6810 = vmatpush1.bf16.msra.mxu0 0
    %6811 = vmatprep.subr.bf16.mxu0 0
    %6812 = vmatpush1.bf16.msra.mxu0 0
    %6813 = vmatprep.subr.bf16.mxu0 0
    %6814 = vmatpush1.bf16.msra.mxu0 %v3899
    %6815 = vmatprep.subr.bf16.mxu0 0
    %6816 = vmatpush1.bf16.msra.mxu0 %v3898
    %6817 = vmatprep.subr.bf16.mxu0 0
    %6818 = vmatpush2.bf16.msra.mxu0 0
    %6819 = vmatprep.subr.bf16.mxu0 0
    %6820 = vmatpush2.bf16.msra.mxu0 0
    %6821 = vmatprep.subr.bf16.mxu0 0
    %6822 = vmatpush2.bf16.msra.mxu0 0
    %6823 = vmatprep.subr.bf16.mxu0 0
    %6824 = vmatpush2.bf16.msra.mxu0 0
    %6825 = vmatprep.subr.bf16.mxu0 0
    %6826 = vmatpush2.bf16.msra.mxu0 0
    %6827 = vmatprep.subr.bf16.mxu0 0
    %6828 = vmatpush2.bf16.msra.mxu0 0
    %6829 = vmatprep.subr.bf16.mxu0 0
    %6830 = vmatpush2.bf16.msra.mxu0 0
    %6831 = vmatprep.subr.bf16.mxu0 0
    %6832 = vmatpush2.bf16.msra.mxu0 0
    %6833 = vmatprep.mubr.bf16.mxu0 0
    %6834 = vmatmul.mubr.bf16.gmra.mxu0 %v6799
    %v6835 = vpop.f32.mrf.mxu0
    %v6836 = vadd.f32 %v3889, %v6835
    %v6837 = vpop.f32.mrf.mxu0
    %v6838 = vpop.f32.mrf.mxu0
    %v6839 = vpop.f32.mrf.mxu0
    %6840 = vdwg.mxu0
    %6841 = vmatprep.subr.bf16.mxu0 0
    %6842 = vmatpush1.bf16.msra.mxu0 0
    %6843 = vmatprep.subr.bf16.mxu0 0
    %6844 = vmatpush1.bf16.msra.mxu0 0
    %6845 = vmatprep.subr.bf16.mxu0 0
    %6846 = vmatpush1.bf16.msra.mxu0 0
    %6847 = vmatprep.subr.bf16.mxu0 0
    %6848 = vmatpush1.bf16.msra.mxu0 0
    %6849 = vmatprep.subr.bf16.mxu0 0
    %6850 = vmatpush1.bf16.msra.mxu0 0
    %6851 = vmatprep.subr.bf16.mxu0 0
    %6852 = vmatpush1.bf16.msra.mxu0 0
    %6853 = vmatprep.subr.bf16.mxu0 0
    %6854 = vmatpush1.bf16.msra.mxu0 %v3959
    %6855 = vmatprep.subr.bf16.mxu0 0
    %6856 = vmatpush1.bf16.msra.mxu0 %v3958
    %6857 = vmatprep.subr.bf16.mxu0 0
    %6858 = vmatpush2.bf16.msra.mxu0 0
    %6859 = vmatprep.subr.bf16.mxu0 0
    %6860 = vmatpush2.bf16.msra.mxu0 0
    %6861 = vmatprep.subr.bf16.mxu0 0
    %6862 = vmatpush2.bf16.msra.mxu0 0
    %6863 = vmatprep.subr.bf16.mxu0 0
    %6864 = vmatpush2.bf16.msra.mxu0 0
    %6865 = vmatprep.subr.bf16.mxu0 0
    %6866 = vmatpush2.bf16.msra.mxu0 0
    %6867 = vmatprep.subr.bf16.mxu0 0
    %6868 = vmatpush2.bf16.msra.mxu0 0
    %6869 = vmatprep.subr.bf16.mxu0 0
    %6870 = vmatpush2.bf16.msra.mxu0 0
    %6871 = vmatprep.subr.bf16.mxu0 0
    %6872 = vmatpush2.bf16.msra.mxu0 0
    %6873 = vmatprep.mubr.bf16.mxu0 0
    %6874 = vmatmul.mubr.bf16.gmra.mxu0 %v6799
    %v6875 = vpop.f32.mrf.mxu0
    %v6876 = vadd.f32 %v3949, %v6875
    %v6877 = vpop.f32.mrf.mxu0
    %v6878 = vpop.f32.mrf.mxu0
    %v6879 = vpop.f32.mrf.mxu0
    %6880 = vdwg.mxu0
    %6881 = vmatprep.subr.bf16.mxu0 0
    %6882 = vmatpush1.bf16.msra.mxu0 0
    %6883 = vmatprep.subr.bf16.mxu0 0
    %6884 = vmatpush1.bf16.msra.mxu0 0
    %6885 = vmatprep.subr.bf16.mxu0 0
    %6886 = vmatpush1.bf16.msra.mxu0 0
    %6887 = vmatprep.subr.bf16.mxu0 0
    %6888 = vmatpush1.bf16.msra.mxu0 0
    %6889 = vmatprep.subr.bf16.mxu0 0
    %6890 = vmatpush1.bf16.msra.mxu0 0
    %6891 = vmatprep.subr.bf16.mxu0 0
    %6892 = vmatpush1.bf16.msra.mxu0 0
    %6893 = vmatprep.subr.bf16.mxu0 0
    %6894 = vmatpush1.bf16.msra.mxu0 %v4016
    %6895 = vmatprep.subr.bf16.mxu0 0
    %6896 = vmatpush1.bf16.msra.mxu0 %v4015
    %6897 = vmatprep.subr.bf16.mxu0 0
    %6898 = vmatpush2.bf16.msra.mxu0 0
    %6899 = vmatprep.subr.bf16.mxu0 0
    %6900 = vmatpush2.bf16.msra.mxu0 0
    %6901 = vmatprep.subr.bf16.mxu0 0
    %6902 = vmatpush2.bf16.msra.mxu0 0
    %6903 = vmatprep.subr.bf16.mxu0 0
    %6904 = vmatpush2.bf16.msra.mxu0 0
    %6905 = vmatprep.subr.bf16.mxu0 0
    %6906 = vmatpush2.bf16.msra.mxu0 0
    %6907 = vmatprep.subr.bf16.mxu0 0
    %6908 = vmatpush2.bf16.msra.mxu0 0
    %6909 = vmatprep.subr.bf16.mxu0 0
    %6910 = vmatpush2.bf16.msra.mxu0 0
    %6911 = vmatprep.subr.bf16.mxu0 0
    %6912 = vmatpush2.bf16.msra.mxu0 0
    %6913 = vmatprep.mubr.bf16.mxu0 0
    %6914 = vmatmul.mubr.bf16.gmra.mxu0 %v6799
    %v6915 = vpop.f32.mrf.mxu0
    %v6916 = vadd.f32 %v4006, %v6915
    %v6917 = vpop.f32.mrf.mxu0
    %v6918 = vpop.f32.mrf.mxu0
    %v6919 = vpop.f32.mrf.mxu0
    %6920 = vdwg.mxu0
    %v6921 = vpack.c.bf16 %v6836, %v6836
    %v6922 = vpack.c.bf16 %v6876, %v6876
    %v6924 = vsel %vm997, %v6921, 0
    %v6927 = vsel %vm997, %v6922, 0
    %6929 = vmatprep.subr.bf16.mxu0 0
    %6930 = vmatpush1.bf16.xpose.msra.mxu0 0
    %6931 = vmatprep.subr.bf16.mxu0 0
    %6932 = vmatpush1.bf16.xpose.msra.mxu0 0
    %6933 = vmatprep.subr.bf16.mxu0 0
    %6934 = vmatpush1.bf16.xpose.msra.mxu0 0
    %6935 = vmatprep.subr.bf16.mxu0 0
    %6936 = vmatpush1.bf16.xpose.msra.mxu0 0
    %6937 = vmatprep.subr.bf16.mxu0 0
    %6938 = vmatpush1.bf16.xpose.msra.mxu0 0
    %6939 = vmatprep.subr.bf16.mxu0 0
    %6940 = vmatpush1.bf16.xpose.msra.mxu0 0
    %6941 = vmatprep.subr.bf16.mxu0 0
    %6942 = vmatpush1.bf16.xpose.msra.mxu0 0
    %6943 = vmatprep.subr.bf16.mxu0 0
    %6944 = vmatpush1.bf16.xpose.msra.mxu0 %v6927
    %6945 = vmatprep.subr.bf16.mxu0 0
    %6946 = vmatpush2.bf16.xpose.msra.mxu0 0
    %6947 = vmatprep.subr.bf16.mxu0 0
    %6948 = vmatpush2.bf16.xpose.msra.mxu0 0
    %6949 = vmatprep.subr.bf16.mxu0 0
    %6950 = vmatpush2.bf16.xpose.msra.mxu0 0
    %6951 = vmatprep.subr.bf16.mxu0 0
    %6952 = vmatpush2.bf16.xpose.msra.mxu0 0
    %6953 = vmatprep.subr.bf16.mxu0 0
    %6954 = vmatpush2.bf16.xpose.msra.mxu0 0
    %6955 = vmatprep.subr.bf16.mxu0 0
    %6956 = vmatpush2.bf16.xpose.msra.mxu0 0
    %6957 = vmatprep.subr.bf16.mxu0 0
    %6958 = vmatpush2.bf16.xpose.msra.mxu0 0
    %6959 = vmatprep.subr.bf16.mxu0 0
    %6960 = vmatpush2.bf16.xpose.msra.mxu0 0
    %6961 = vmatprep.mubr.bf16.mxu0 0
    %6962 = vmatmul.mubr.bf16.gmra.mxu0 %v6924
    %v6963 = vpop.f32.mrf.mxu0
    %v6964 = vadd.f32 0.0, %v6963
    %v6965 = vpop.f32.mrf.mxu0
    %v6966 = vpop.f32.mrf.mxu0
    %v6967 = vpop.f32.mrf.mxu0
    %6968 = vdwg.mxu0
    %v6969 = vmul.f32 %v6964, 0.35355338
    %v6970 = vadd.f32 %v6969, %v549
    %v6971 = vsel %vm997, %v6970, -inf
    %6972 = vmax.xlane.f32.xlu0 %v6971
    %v6973 = vpop.xlane.xlu0 %6972
    %v6974 = vsub.f32 %v6970, %v6973
    %v6975 = vmul.f32 %v6974, 1.442695
    %v6976 = vpow.pop %v6975
    %v6977 = vsel %vm997, %v6976, 0.0
    %6978 = vadd.xlane.f32.xlu0 %v6977
    %v6979 = vpop.xlane.xlu0 %6978
    %v6980 = vrcp.pop %v6979
    %v6981 = vmul.f32 %v6976, %v6980
    %v6982 = vpack.c.bf16 %v6981, %v6981
    %v6983 = vpack.c.bf16 %v6916, %v6916
    %v6985 = vsel %vm997, %v6982, 0
    %v6988 = vsel %vm665, %v6983, 0
    %6990 = vmatprep.subr.bf16.mxu0 0
    %6991 = vmatpush1.bf16.msra.mxu0 0
    %6992 = vmatprep.subr.bf16.mxu0 0
    %6993 = vmatpush1.bf16.msra.mxu0 0
    %6994 = vmatprep.subr.bf16.mxu0 0
    %6995 = vmatpush1.bf16.msra.mxu0 0
    %6996 = vmatprep.subr.bf16.mxu0 0
    %6997 = vmatpush1.bf16.msra.mxu0 0
    %6998 = vmatprep.subr.bf16.mxu0 0
    %6999 = vmatpush1.bf16.msra.mxu0 0
    %7000 = vmatprep.subr.bf16.mxu0 0
    %7001 = vmatpush1.bf16.msra.mxu0 0
    %7002 = vmatprep.subr.bf16.mxu0 0
    %7003 = vmatpush1.bf16.msra.mxu0 0
    %7004 = vmatprep.subr.bf16.mxu0 0
    %7005 = vmatpush1.bf16.msra.mxu0 %v6988
    %7006 = vmatprep.subr.bf16.mxu0 0
    %7007 = vmatpush2.bf16.msra.mxu0 0
    %7008 = vmatprep.subr.bf16.mxu0 0
    %7009 = vmatpush2.bf16.msra.mxu0 0
    %7010 = vmatprep.subr.bf16.mxu0 0
    %7011 = vmatpush2.bf16.msra.mxu0 0
    %7012 = vmatprep.subr.bf16.mxu0 0
    %7013 = vmatpush2.bf16.msra.mxu0 0
    %7014 = vmatprep.subr.bf16.mxu0 0
    %7015 = vmatpush2.bf16.msra.mxu0 0
    %7016 = vmatprep.subr.bf16.mxu0 0
    %7017 = vmatpush2.bf16.msra.mxu0 0
    %7018 = vmatprep.subr.bf16.mxu0 0
    %7019 = vmatpush2.bf16.msra.mxu0 0
    %7020 = vmatprep.subr.bf16.mxu0 0
    %7021 = vmatpush2.bf16.msra.mxu0 0
    %7022 = vmatprep.mubr.bf16.mxu0 0
    %7023 = vmatmul.mubr.bf16.gmra.mxu0 %v6985
    %v7024 = vpop.f32.mrf.mxu0
    %v7025 = vadd.f32 0.0, %v7024
    %v7026 = vpop.f32.mrf.mxu0
    %v7027 = vpop.f32.mrf.mxu0
    %v7028 = vpop.f32.mrf.mxu0
    %7029 = vdwg.mxu0
    %v7030 = vpack.c.bf16 %v7025, %v7025
    %7031 = vmatprep.subr.bf16.mxu0 0
    %7032 = vmatpush1.bf16.msra.mxu0 0
    %7033 = vmatprep.subr.bf16.mxu0 0
    %7034 = vmatpush1.bf16.msra.mxu0 0
    %7035 = vmatprep.subr.bf16.mxu0 0
    %7036 = vmatpush1.bf16.msra.mxu0 0
    %7037 = vmatprep.subr.bf16.mxu0 0
    %7038 = vmatpush1.bf16.msra.mxu0 0
    %7039 = vmatprep.subr.bf16.mxu0 0
    %7040 = vmatpush1.bf16.msra.mxu0 0
    %7041 = vmatprep.subr.bf16.mxu0 0
    %7042 = vmatpush1.bf16.msra.mxu0 0
    %7043 = vmatprep.subr.bf16.mxu0 0
    %7044 = vmatpush1.bf16.msra.mxu0 %v4196
    %7045 = vmatprep.subr.bf16.mxu0 0
    %7046 = vmatpush1.bf16.msra.mxu0 %v4195
    %7047 = vmatprep.subr.bf16.mxu0 0
    %7048 = vmatpush2.bf16.msra.mxu0 0
    %7049 = vmatprep.subr.bf16.mxu0 0
    %7050 = vmatpush2.bf16.msra.mxu0 0
    %7051 = vmatprep.subr.bf16.mxu0 0
    %7052 = vmatpush2.bf16.msra.mxu0 0
    %7053 = vmatprep.subr.bf16.mxu0 0
    %7054 = vmatpush2.bf16.msra.mxu0 0
    %7055 = vmatprep.subr.bf16.mxu0 0
    %7056 = vmatpush2.bf16.msra.mxu0 0
    %7057 = vmatprep.subr.bf16.mxu0 0
    %7058 = vmatpush2.bf16.msra.mxu0 0
    %7059 = vmatprep.subr.bf16.mxu0 0
    %7060 = vmatpush2.bf16.msra.mxu0 0
    %7061 = vmatprep.subr.bf16.mxu0 0
    %7062 = vmatpush2.bf16.msra.mxu0 0
    %7063 = vmatprep.mubr.bf16.mxu0 0
    %7064 = vmatmul.mubr.bf16.gmra.mxu0 %v6799
    %v7065 = vpop.f32.mrf.mxu0
    %v7066 = vadd.f32 %v4186, %v7065
    %v7067 = vpop.f32.mrf.mxu0
    %v7068 = vpop.f32.mrf.mxu0
    %v7069 = vpop.f32.mrf.mxu0
    %7070 = vdwg.mxu0
    %7071 = vmatprep.subr.bf16.mxu0 0
    %7072 = vmatpush1.bf16.msra.mxu0 0
    %7073 = vmatprep.subr.bf16.mxu0 0
    %7074 = vmatpush1.bf16.msra.mxu0 0
    %7075 = vmatprep.subr.bf16.mxu0 0
    %7076 = vmatpush1.bf16.msra.mxu0 0
    %7077 = vmatprep.subr.bf16.mxu0 0
    %7078 = vmatpush1.bf16.msra.mxu0 0
    %7079 = vmatprep.subr.bf16.mxu0 0
    %7080 = vmatpush1.bf16.msra.mxu0 0
    %7081 = vmatprep.subr.bf16.mxu0 0
    %7082 = vmatpush1.bf16.msra.mxu0 0
    %7083 = vmatprep.subr.bf16.mxu0 0
    %7084 = vmatpush1.bf16.msra.mxu0 %v4253
    %7085 = vmatprep.subr.bf16.mxu0 0
    %7086 = vmatpush1.bf16.msra.mxu0 %v4252
    %7087 = vmatprep.subr.bf16.mxu0 0
    %7088 = vmatpush2.bf16.msra.mxu0 0
    %7089 = vmatprep.subr.bf16.mxu0 0
    %7090 = vmatpush2.bf16.msra.mxu0 0
    %7091 = vmatprep.subr.bf16.mxu0 0
    %7092 = vmatpush2.bf16.msra.mxu0 0
    %7093 = vmatprep.subr.bf16.mxu0 0
    %7094 = vmatpush2.bf16.msra.mxu0 0
    %7095 = vmatprep.subr.bf16.mxu0 0
    %7096 = vmatpush2.bf16.msra.mxu0 0
    %7097 = vmatprep.subr.bf16.mxu0 0
    %7098 = vmatpush2.bf16.msra.mxu0 0
    %7099 = vmatprep.subr.bf16.mxu0 0
    %7100 = vmatpush2.bf16.msra.mxu0 0
    %7101 = vmatprep.subr.bf16.mxu0 0
    %7102 = vmatpush2.bf16.msra.mxu0 0
    %7103 = vmatprep.mubr.bf16.mxu0 0
    %7104 = vmatmul.mubr.bf16.gmra.mxu0 %v6799
    %v7105 = vpop.f32.mrf.mxu0
    %v7106 = vadd.f32 %v4243, %v7105
    %v7107 = vpop.f32.mrf.mxu0
    %v7108 = vpop.f32.mrf.mxu0
    %v7109 = vpop.f32.mrf.mxu0
    %7110 = vdwg.mxu0
    %7111 = vmatprep.subr.bf16.mxu0 0
    %7112 = vmatpush1.bf16.msra.mxu0 0
    %7113 = vmatprep.subr.bf16.mxu0 0
    %7114 = vmatpush1.bf16.msra.mxu0 0
    %7115 = vmatprep.subr.bf16.mxu0 0
    %7116 = vmatpush1.bf16.msra.mxu0 0
    %7117 = vmatprep.subr.bf16.mxu0 0
    %7118 = vmatpush1.bf16.msra.mxu0 0
    %7119 = vmatprep.subr.bf16.mxu0 0
    %7120 = vmatpush1.bf16.msra.mxu0 0
    %7121 = vmatprep.subr.bf16.mxu0 0
    %7122 = vmatpush1.bf16.msra.mxu0 0
    %7123 = vmatprep.subr.bf16.mxu0 0
    %7124 = vmatpush1.bf16.msra.mxu0 %v4310
    %7125 = vmatprep.subr.bf16.mxu0 0
    %7126 = vmatpush1.bf16.msra.mxu0 %v4309
    %7127 = vmatprep.subr.bf16.mxu0 0
    %7128 = vmatpush2.bf16.msra.mxu0 0
    %7129 = vmatprep.subr.bf16.mxu0 0
    %7130 = vmatpush2.bf16.msra.mxu0 0
    %7131 = vmatprep.subr.bf16.mxu0 0
    %7132 = vmatpush2.bf16.msra.mxu0 0
    %7133 = vmatprep.subr.bf16.mxu0 0
    %7134 = vmatpush2.bf16.msra.mxu0 0
    %7135 = vmatprep.subr.bf16.mxu0 0
    %7136 = vmatpush2.bf16.msra.mxu0 0
    %7137 = vmatprep.subr.bf16.mxu0 0
    %7138 = vmatpush2.bf16.msra.mxu0 0
    %7139 = vmatprep.subr.bf16.mxu0 0
    %7140 = vmatpush2.bf16.msra.mxu0 0
    %7141 = vmatprep.subr.bf16.mxu0 0
    %7142 = vmatpush2.bf16.msra.mxu0 0
    %7143 = vmatprep.mubr.bf16.mxu0 0
    %7144 = vmatmul.mubr.bf16.gmra.mxu0 %v6799
    %v7145 = vpop.f32.mrf.mxu0
    %v7146 = vadd.f32 %v4300, %v7145
    %v7147 = vpop.f32.mrf.mxu0
    %v7148 = vpop.f32.mrf.mxu0
    %v7149 = vpop.f32.mrf.mxu0
    %7150 = vdwg.mxu0
    %v7151 = vpack.c.bf16 %v7066, %v7066
    %v7152 = vpack.c.bf16 %v7106, %v7106
    %v7154 = vsel %vm997, %v7151, 0
    %v7157 = vsel %vm997, %v7152, 0
    %7159 = vmatprep.subr.bf16.mxu0 0
    %7160 = vmatpush1.bf16.xpose.msra.mxu0 0
    %7161 = vmatprep.subr.bf16.mxu0 0
    %7162 = vmatpush1.bf16.xpose.msra.mxu0 0
    %7163 = vmatprep.subr.bf16.mxu0 0
    %7164 = vmatpush1.bf16.xpose.msra.mxu0 0
    %7165 = vmatprep.subr.bf16.mxu0 0
    %7166 = vmatpush1.bf16.xpose.msra.mxu0 0
    %7167 = vmatprep.subr.bf16.mxu0 0
    %7168 = vmatpush1.bf16.xpose.msra.mxu0 0
    %7169 = vmatprep.subr.bf16.mxu0 0
    %7170 = vmatpush1.bf16.xpose.msra.mxu0 0
    %7171 = vmatprep.subr.bf16.mxu0 0
    %7172 = vmatpush1.bf16.xpose.msra.mxu0 0
    %7173 = vmatprep.subr.bf16.mxu0 0
    %7174 = vmatpush1.bf16.xpose.msra.mxu0 %v7157
    %7175 = vmatprep.subr.bf16.mxu0 0
    %7176 = vmatpush2.bf16.xpose.msra.mxu0 0
    %7177 = vmatprep.subr.bf16.mxu0 0
    %7178 = vmatpush2.bf16.xpose.msra.mxu0 0
    %7179 = vmatprep.subr.bf16.mxu0 0
    %7180 = vmatpush2.bf16.xpose.msra.mxu0 0
    %7181 = vmatprep.subr.bf16.mxu0 0
    %7182 = vmatpush2.bf16.xpose.msra.mxu0 0
    %7183 = vmatprep.subr.bf16.mxu0 0
    %7184 = vmatpush2.bf16.xpose.msra.mxu0 0
    %7185 = vmatprep.subr.bf16.mxu0 0
    %7186 = vmatpush2.bf16.xpose.msra.mxu0 0
    %7187 = vmatprep.subr.bf16.mxu0 0
    %7188 = vmatpush2.bf16.xpose.msra.mxu0 0
    %7189 = vmatprep.subr.bf16.mxu0 0
    %7190 = vmatpush2.bf16.xpose.msra.mxu0 0
    %7191 = vmatprep.mubr.bf16.mxu0 0
    %7192 = vmatmul.mubr.bf16.gmra.mxu0 %v7154
    %v7193 = vpop.f32.mrf.mxu0
    %v7194 = vadd.f32 0.0, %v7193
    %v7195 = vpop.f32.mrf.mxu0
    %v7196 = vpop.f32.mrf.mxu0
    %v7197 = vpop.f32.mrf.mxu0
    %7198 = vdwg.mxu0
    %v7199 = vmul.f32 %v7194, 0.35355338
    %v7200 = vadd.f32 %v7199, %v549
    %v7201 = vsel %vm997, %v7200, -inf
    %7202 = vmax.xlane.f32.xlu0 %v7201
    %v7203 = vpop.xlane.xlu0 %7202
    %v7204 = vsub.f32 %v7200, %v7203
    %v7205 = vmul.f32 %v7204, 1.442695
    %v7206 = vpow.pop %v7205
    %v7207 = vsel %vm997, %v7206, 0.0
    %7208 = vadd.xlane.f32.xlu0 %v7207
    %v7209 = vpop.xlane.xlu0 %7208
    %v7210 = vrcp.pop %v7209
    %v7211 = vmul.f32 %v7206, %v7210
    %v7212 = vpack.c.bf16 %v7211, %v7211
    %v7213 = vpack.c.bf16 %v7146, %v7146
    %v7215 = vsel %vm997, %v7212, 0
    %v7218 = vsel %vm665, %v7213, 0
    %7220 = vmatprep.subr.bf16.mxu0 0
    %7221 = vmatpush1.bf16.msra.mxu0 0
    %7222 = vmatprep.subr.bf16.mxu0 0
    %7223 = vmatpush1.bf16.msra.mxu0 0
    %7224 = vmatprep.subr.bf16.mxu0 0
    %7225 = vmatpush1.bf16.msra.mxu0 0
    %7226 = vmatprep.subr.bf16.mxu0 0
    %7227 = vmatpush1.bf16.msra.mxu0 0
    %7228 = vmatprep.subr.bf16.mxu0 0
    %7229 = vmatpush1.bf16.msra.mxu0 0
    %7230 = vmatprep.subr.bf16.mxu0 0
    %7231 = vmatpush1.bf16.msra.mxu0 0
    %7232 = vmatprep.subr.bf16.mxu0 0
    %7233 = vmatpush1.bf16.msra.mxu0 0
    %7234 = vmatprep.subr.bf16.mxu0 0
    %7235 = vmatpush1.bf16.msra.mxu0 %v7218
    %7236 = vmatprep.subr.bf16.mxu0 0
    %7237 = vmatpush2.bf16.msra.mxu0 0
    %7238 = vmatprep.subr.bf16.mxu0 0
    %7239 = vmatpush2.bf16.msra.mxu0 0
    %7240 = vmatprep.subr.bf16.mxu0 0
    %7241 = vmatpush2.bf16.msra.mxu0 0
    %7242 = vmatprep.subr.bf16.mxu0 0
    %7243 = vmatpush2.bf16.msra.mxu0 0
    %7244 = vmatprep.subr.bf16.mxu0 0
    %7245 = vmatpush2.bf16.msra.mxu0 0
    %7246 = vmatprep.subr.bf16.mxu0 0
    %7247 = vmatpush2.bf16.msra.mxu0 0
    %7248 = vmatprep.subr.bf16.mxu0 0
    %7249 = vmatpush2.bf16.msra.mxu0 0
    %7250 = vmatprep.subr.bf16.mxu0 0
    %7251 = vmatpush2.bf16.msra.mxu0 0
    %7252 = vmatprep.mubr.bf16.mxu0 0
    %7253 = vmatmul.mubr.bf16.gmra.mxu0 %v7215
    %v7254 = vpop.f32.mrf.mxu0
    %v7255 = vadd.f32 0.0, %v7254
    %v7256 = vpop.f32.mrf.mxu0
    %v7257 = vpop.f32.mrf.mxu0
    %v7258 = vpop.f32.mrf.mxu0
    %7259 = vdwg.mxu0
    %v7260 = vpack.c.bf16 %v7255, %v7255
    %v7262 = vsel %vm997, %v7260, 0
    %7264 = vmatprep.subr.bf16.mxu0 0
    %7265 = vmatpush1.bf16.msra.mxu0 0
    %7266 = vmatprep.subr.bf16.mxu0 0
    %7267 = vmatpush1.bf16.msra.mxu0 0
    %7268 = vmatprep.subr.bf16.mxu0 0
    %7269 = vmatpush1.bf16.msra.mxu0 0
    %7270 = vmatprep.subr.bf16.mxu0 0
    %7271 = vmatpush1.bf16.msra.mxu0 0
    %7272 = vmatprep.subr.bf16.mxu0 0
    %7273 = vmatpush1.bf16.msra.mxu0 0
    %7274 = vmatprep.subr.bf16.mxu0 0
    %7275 = vmatpush1.bf16.msra.mxu0 0
    %7276 = vmatprep.subr.bf16.mxu0 0
    %7277 = vmatpush1.bf16.msra.mxu0 0
    %7278 = vmatprep.subr.bf16.mxu0 0
    %7279 = vmatpush1.bf16.msra.mxu0 %v4480
    %7280 = vmatprep.subr.bf16.mxu0 0
    %7281 = vmatpush2.bf16.msra.mxu0 0
    %7282 = vmatprep.subr.bf16.mxu0 0
    %7283 = vmatpush2.bf16.msra.mxu0 0
    %7284 = vmatprep.subr.bf16.mxu0 0
    %7285 = vmatpush2.bf16.msra.mxu0 0
    %7286 = vmatprep.subr.bf16.mxu0 0
    %7287 = vmatpush2.bf16.msra.mxu0 0
    %7288 = vmatprep.subr.bf16.mxu0 0
    %7289 = vmatpush2.bf16.msra.mxu0 0
    %7290 = vmatprep.subr.bf16.mxu0 0
    %7291 = vmatpush2.bf16.msra.mxu0 0
    %7292 = vmatprep.subr.bf16.mxu0 0
    %7293 = vmatpush2.bf16.msra.mxu0 0
    %7294 = vmatprep.subr.bf16.mxu0 0
    %7295 = vmatpush2.bf16.msra.mxu0 0
    %7296 = vmatprep.mubr.bf16.mxu0 0
    %7297 = vmatmul.mubr.bf16.gmra.mxu0 %v7262
    %v7298 = vpop.f32.mrf.mxu0
    %v7299 = vadd.f32 0.0, %v7298
    %v7300 = vpop.f32.mrf.mxu0
    %v7301 = vpop.f32.mrf.mxu0
    %v7302 = vpop.f32.mrf.mxu0
    %7303 = vdwg.mxu0
    %v7305 = vsel %vm997, %v7030, 0
    %7307 = vmatprep.subr.bf16.mxu0 0
    %7308 = vmatpush1.bf16.msra.mxu0 0
    %7309 = vmatprep.subr.bf16.mxu0 0
    %7310 = vmatpush1.bf16.msra.mxu0 0
    %7311 = vmatprep.subr.bf16.mxu0 0
    %7312 = vmatpush1.bf16.msra.mxu0 0
    %7313 = vmatprep.subr.bf16.mxu0 0
    %7314 = vmatpush1.bf16.msra.mxu0 0
    %7315 = vmatprep.subr.bf16.mxu0 0
    %7316 = vmatpush1.bf16.msra.mxu0 0
    %7317 = vmatprep.subr.bf16.mxu0 0
    %7318 = vmatpush1.bf16.msra.mxu0 0
    %7319 = vmatprep.subr.bf16.mxu0 0
    %7320 = vmatpush1.bf16.msra.mxu0 0
    %7321 = vmatprep.subr.bf16.mxu0 0
    %7322 = vmatpush1.bf16.msra.mxu0 %v4527
    %7323 = vmatprep.subr.bf16.mxu0 0
    %7324 = vmatpush2.bf16.msra.mxu0 0
    %7325 = vmatprep.subr.bf16.mxu0 0
    %7326 = vmatpush2.bf16.msra.mxu0 0
    %7327 = vmatprep.subr.bf16.mxu0 0
    %7328 = vmatpush2.bf16.msra.mxu0 0
    %7329 = vmatprep.subr.bf16.mxu0 0
    %7330 = vmatpush2.bf16.msra.mxu0 0
    %7331 = vmatprep.subr.bf16.mxu0 0
    %7332 = vmatpush2.bf16.msra.mxu0 0
    %7333 = vmatprep.subr.bf16.mxu0 0
    %7334 = vmatpush2.bf16.msra.mxu0 0
    %7335 = vmatprep.subr.bf16.mxu0 0
    %7336 = vmatpush2.bf16.msra.mxu0 0
    %7337 = vmatprep.subr.bf16.mxu0 0
    %7338 = vmatpush2.bf16.msra.mxu0 0
    %7339 = vmatprep.mubr.bf16.mxu0 0
    %7340 = vmatmul.mubr.bf16.gmra.mxu0 %v7305
    %v7341 = vpop.f32.mrf.mxu0
    %v7342 = vadd.f32 %v7299, %v7341
    %v7343 = vpop.f32.mrf.mxu0
    %v7344 = vpop.f32.mrf.mxu0
    %v7345 = vpop.f32.mrf.mxu0
    %7346 = vdwg.mxu0
    %7347 = vmatprep.subr.bf16.mxu0 0
    %7348 = vmatpush1.bf16.msra.mxu0 0
    %7349 = vmatprep.subr.bf16.mxu0 0
    %7350 = vmatpush1.bf16.msra.mxu0 0
    %7351 = vmatprep.subr.bf16.mxu0 0
    %7352 = vmatpush1.bf16.msra.mxu0 0
    %7353 = vmatprep.subr.bf16.mxu0 0
    %7354 = vmatpush1.bf16.msra.mxu0 0
    %7355 = vmatprep.subr.bf16.mxu0 0
    %7356 = vmatpush1.bf16.msra.mxu0 0
    %7357 = vmatprep.subr.bf16.mxu0 0
    %7358 = vmatpush1.bf16.msra.mxu0 0
    %7359 = vmatprep.subr.bf16.mxu0 0
    %7360 = vmatpush1.bf16.msra.mxu0 %v4583
    %7361 = vmatprep.subr.bf16.mxu0 0
    %7362 = vmatpush1.bf16.msra.mxu0 %v4582
    %7363 = vmatprep.subr.bf16.mxu0 0
    %7364 = vmatpush2.bf16.msra.mxu0 0
    %7365 = vmatprep.subr.bf16.mxu0 0
    %7366 = vmatpush2.bf16.msra.mxu0 0
    %7367 = vmatprep.subr.bf16.mxu0 0
    %7368 = vmatpush2.bf16.msra.mxu0 0
    %7369 = vmatprep.subr.bf16.mxu0 0
    %7370 = vmatpush2.bf16.msra.mxu0 0
    %7371 = vmatprep.subr.bf16.mxu0 0
    %7372 = vmatpush2.bf16.msra.mxu0 0
    %7373 = vmatprep.subr.bf16.mxu0 0
    %7374 = vmatpush2.bf16.msra.mxu0 0
    %7375 = vmatprep.subr.bf16.mxu0 0
    %7376 = vmatpush2.bf16.msra.mxu0 0
    %7377 = vmatprep.subr.bf16.mxu0 0
    %7378 = vmatpush2.bf16.msra.mxu0 0
    %7379 = vmatprep.mubr.bf16.mxu0 0
    %7380 = vmatmul.mubr.bf16.gmra.mxu0 %v6799
    %v7381 = vpop.f32.mrf.mxu0
    %v7382 = vadd.f32 %v4573, %v7381
    %v7383 = vpop.f32.mrf.mxu0
    %v7384 = vpop.f32.mrf.mxu0
    %v7385 = vpop.f32.mrf.mxu0
    %7386 = vdwg.mxu0
    %7387 = vmatprep.subr.bf16.mxu0 0
    %7388 = vmatpush1.bf16.msra.mxu0 0
    %7389 = vmatprep.subr.bf16.mxu0 0
    %7390 = vmatpush1.bf16.msra.mxu0 0
    %7391 = vmatprep.subr.bf16.mxu0 0
    %7392 = vmatpush1.bf16.msra.mxu0 0
    %7393 = vmatprep.subr.bf16.mxu0 0
    %7394 = vmatpush1.bf16.msra.mxu0 0
    %7395 = vmatprep.subr.bf16.mxu0 0
    %7396 = vmatpush1.bf16.msra.mxu0 0
    %7397 = vmatprep.subr.bf16.mxu0 0
    %7398 = vmatpush1.bf16.msra.mxu0 0
    %7399 = vmatprep.subr.bf16.mxu0 0
    %7400 = vmatpush1.bf16.msra.mxu0 %v4640
    %7401 = vmatprep.subr.bf16.mxu0 0
    %7402 = vmatpush1.bf16.msra.mxu0 %v4639
    %7403 = vmatprep.subr.bf16.mxu0 0
    %7404 = vmatpush2.bf16.msra.mxu0 0
    %7405 = vmatprep.subr.bf16.mxu0 0
    %7406 = vmatpush2.bf16.msra.mxu0 0
    %7407 = vmatprep.subr.bf16.mxu0 0
    %7408 = vmatpush2.bf16.msra.mxu0 0
    %7409 = vmatprep.subr.bf16.mxu0 0
    %7410 = vmatpush2.bf16.msra.mxu0 0
    %7411 = vmatprep.subr.bf16.mxu0 0
    %7412 = vmatpush2.bf16.msra.mxu0 0
    %7413 = vmatprep.subr.bf16.mxu0 0
    %7414 = vmatpush2.bf16.msra.mxu0 0
    %7415 = vmatprep.subr.bf16.mxu0 0
    %7416 = vmatpush2.bf16.msra.mxu0 0
    %7417 = vmatprep.subr.bf16.mxu0 0
    %7418 = vmatpush2.bf16.msra.mxu0 0
    %7419 = vmatprep.mubr.bf16.mxu0 0
    %7420 = vmatmul.mubr.bf16.gmra.mxu0 %v6799
    %v7421 = vpop.f32.mrf.mxu0
    %v7422 = vadd.f32 %v4630, %v7421
    %v7423 = vpop.f32.mrf.mxu0
    %v7424 = vpop.f32.mrf.mxu0
    %v7425 = vpop.f32.mrf.mxu0
    %7426 = vdwg.mxu0
    %7427 = vmatprep.subr.bf16.mxu0 0
    %7428 = vmatpush1.bf16.msra.mxu0 0
    %7429 = vmatprep.subr.bf16.mxu0 0
    %7430 = vmatpush1.bf16.msra.mxu0 0
    %7431 = vmatprep.subr.bf16.mxu0 0
    %7432 = vmatpush1.bf16.msra.mxu0 0
    %7433 = vmatprep.subr.bf16.mxu0 0
    %7434 = vmatpush1.bf16.msra.mxu0 0
    %7435 = vmatprep.subr.bf16.mxu0 0
    %7436 = vmatpush1.bf16.msra.mxu0 0
    %7437 = vmatprep.subr.bf16.mxu0 0
    %7438 = vmatpush1.bf16.msra.mxu0 0
    %7439 = vmatprep.subr.bf16.mxu0 0
    %7440 = vmatpush1.bf16.msra.mxu0 %v4697
    %7441 = vmatprep.subr.bf16.mxu0 0
    %7442 = vmatpush1.bf16.msra.mxu0 %v4696
    %7443 = vmatprep.subr.bf16.mxu0 0
    %7444 = vmatpush2.bf16.msra.mxu0 0
    %7445 = vmatprep.subr.bf16.mxu0 0
    %7446 = vmatpush2.bf16.msra.mxu0 0
    %7447 = vmatprep.subr.bf16.mxu0 0
    %7448 = vmatpush2.bf16.msra.mxu0 0
    %7449 = vmatprep.subr.bf16.mxu0 0
    %7450 = vmatpush2.bf16.msra.mxu0 0
    %7451 = vmatprep.subr.bf16.mxu0 0
    %7452 = vmatpush2.bf16.msra.mxu0 0
    %7453 = vmatprep.subr.bf16.mxu0 0
    %7454 = vmatpush2.bf16.msra.mxu0 0
    %7455 = vmatprep.subr.bf16.mxu0 0
    %7456 = vmatpush2.bf16.msra.mxu0 0
    %7457 = vmatprep.subr.bf16.mxu0 0
    %7458 = vmatpush2.bf16.msra.mxu0 0
    %7459 = vmatprep.mubr.bf16.mxu0 0
    %7460 = vmatmul.mubr.bf16.gmra.mxu0 %v6799
    %v7461 = vpop.f32.mrf.mxu0
    %v7462 = vadd.f32 %v4687, %v7461
    %v7463 = vpop.f32.mrf.mxu0
    %v7464 = vpop.f32.mrf.mxu0
    %v7465 = vpop.f32.mrf.mxu0
    %7466 = vdwg.mxu0
    %v7467 = vpack.c.bf16 %v7382, %v7382
    %v7468 = vpack.c.bf16 %v7422, %v7422
    %v7470 = vsel %vm997, %v7467, 0
    %v7473 = vsel %vm997, %v7468, 0
    %7475 = vmatprep.subr.bf16.mxu0 0
    %7476 = vmatpush1.bf16.xpose.msra.mxu0 0
    %7477 = vmatprep.subr.bf16.mxu0 0
    %7478 = vmatpush1.bf16.xpose.msra.mxu0 0
    %7479 = vmatprep.subr.bf16.mxu0 0
    %7480 = vmatpush1.bf16.xpose.msra.mxu0 0
    %7481 = vmatprep.subr.bf16.mxu0 0
    %7482 = vmatpush1.bf16.xpose.msra.mxu0 0
    %7483 = vmatprep.subr.bf16.mxu0 0
    %7484 = vmatpush1.bf16.xpose.msra.mxu0 0
    %7485 = vmatprep.subr.bf16.mxu0 0
    %7486 = vmatpush1.bf16.xpose.msra.mxu0 0
    %7487 = vmatprep.subr.bf16.mxu0 0
    %7488 = vmatpush1.bf16.xpose.msra.mxu0 0
    %7489 = vmatprep.subr.bf16.mxu0 0
    %7490 = vmatpush1.bf16.xpose.msra.mxu0 %v7473
    %7491 = vmatprep.subr.bf16.mxu0 0
    %7492 = vmatpush2.bf16.xpose.msra.mxu0 0
    %7493 = vmatprep.subr.bf16.mxu0 0
    %7494 = vmatpush2.bf16.xpose.msra.mxu0 0
    %7495 = vmatprep.subr.bf16.mxu0 0
    %7496 = vmatpush2.bf16.xpose.msra.mxu0 0
    %7497 = vmatprep.subr.bf16.mxu0 0
    %7498 = vmatpush2.bf16.xpose.msra.mxu0 0
    %7499 = vmatprep.subr.bf16.mxu0 0
    %7500 = vmatpush2.bf16.xpose.msra.mxu0 0
    %7501 = vmatprep.subr.bf16.mxu0 0
    %7502 = vmatpush2.bf16.xpose.msra.mxu0 0
    %7503 = vmatprep.subr.bf16.mxu0 0
    %7504 = vmatpush2.bf16.xpose.msra.mxu0 0
    %7505 = vmatprep.subr.bf16.mxu0 0
    %7506 = vmatpush2.bf16.xpose.msra.mxu0 0
    %7507 = vmatprep.mubr.bf16.mxu0 0
    %7508 = vmatmul.mubr.bf16.gmra.mxu0 %v7470
    %v7509 = vpop.f32.mrf.mxu0
    %v7510 = vadd.f32 0.0, %v7509
    %v7511 = vpop.f32.mrf.mxu0
    %v7512 = vpop.f32.mrf.mxu0
    %v7513 = vpop.f32.mrf.mxu0
    %7514 = vdwg.mxu0
    %v7515 = vmul.f32 %v7510, 0.35355338
    %v7516 = vadd.f32 %v7515, %v549
    %v7517 = vsel %vm997, %v7516, -inf
    %7518 = vmax.xlane.f32.xlu0 %v7517
    %v7519 = vpop.xlane.xlu0 %7518
    %v7520 = vsub.f32 %v7516, %v7519
    %v7521 = vmul.f32 %v7520, 1.442695
    %v7522 = vpow.pop %v7521
    %v7523 = vsel %vm997, %v7522, 0.0
    %7524 = vadd.xlane.f32.xlu0 %v7523
    %v7525 = vpop.xlane.xlu0 %7524
    %v7526 = vrcp.pop %v7525
    %v7527 = vmul.f32 %v7522, %v7526
    %v7528 = vpack.c.bf16 %v7527, %v7527
    %v7529 = vpack.c.bf16 %v7462, %v7462
    %v7531 = vsel %vm997, %v7528, 0
    %v7534 = vsel %vm665, %v7529, 0
    %7536 = vmatprep.subr.bf16.mxu0 0
    %7537 = vmatpush1.bf16.msra.mxu0 0
    %7538 = vmatprep.subr.bf16.mxu0 0
    %7539 = vmatpush1.bf16.msra.mxu0 0
    %7540 = vmatprep.subr.bf16.mxu0 0
    %7541 = vmatpush1.bf16.msra.mxu0 0
    %7542 = vmatprep.subr.bf16.mxu0 0
    %7543 = vmatpush1.bf16.msra.mxu0 0
    %7544 = vmatprep.subr.bf16.mxu0 0
    %7545 = vmatpush1.bf16.msra.mxu0 0
    %7546 = vmatprep.subr.bf16.mxu0 0
    %7547 = vmatpush1.bf16.msra.mxu0 0
    %7548 = vmatprep.subr.bf16.mxu0 0
    %7549 = vmatpush1.bf16.msra.mxu0 0
    %7550 = vmatprep.subr.bf16.mxu0 0
    %7551 = vmatpush1.bf16.msra.mxu0 %v7534
    %7552 = vmatprep.subr.bf16.mxu0 0
    %7553 = vmatpush2.bf16.msra.mxu0 0
    %7554 = vmatprep.subr.bf16.mxu0 0
    %7555 = vmatpush2.bf16.msra.mxu0 0
    %7556 = vmatprep.subr.bf16.mxu0 0
    %7557 = vmatpush2.bf16.msra.mxu0 0
    %7558 = vmatprep.subr.bf16.mxu0 0
    %7559 = vmatpush2.bf16.msra.mxu0 0
    %7560 = vmatprep.subr.bf16.mxu0 0
    %7561 = vmatpush2.bf16.msra.mxu0 0
    %7562 = vmatprep.subr.bf16.mxu0 0
    %7563 = vmatpush2.bf16.msra.mxu0 0
    %7564 = vmatprep.subr.bf16.mxu0 0
    %7565 = vmatpush2.bf16.msra.mxu0 0
    %7566 = vmatprep.subr.bf16.mxu0 0
    %7567 = vmatpush2.bf16.msra.mxu0 0
    %7568 = vmatprep.mubr.bf16.mxu0 0
    %7569 = vmatmul.mubr.bf16.gmra.mxu0 %v7531
    %v7570 = vpop.f32.mrf.mxu0
    %v7571 = vadd.f32 0.0, %v7570
    %v7572 = vpop.f32.mrf.mxu0
    %v7573 = vpop.f32.mrf.mxu0
    %v7574 = vpop.f32.mrf.mxu0
    %7575 = vdwg.mxu0
    %v7576 = vpack.c.bf16 %v7571, %v7571
    %v7578 = vsel %vm997, %v7576, 0
    %7580 = vmatprep.subr.bf16.mxu0 0
    %7581 = vmatpush1.bf16.msra.mxu0 0
    %7582 = vmatprep.subr.bf16.mxu0 0
    %7583 = vmatpush1.bf16.msra.mxu0 0
    %7584 = vmatprep.subr.bf16.mxu0 0
    %7585 = vmatpush1.bf16.msra.mxu0 0
    %7586 = vmatprep.subr.bf16.mxu0 0
    %7587 = vmatpush1.bf16.msra.mxu0 0
    %7588 = vmatprep.subr.bf16.mxu0 0
    %7589 = vmatpush1.bf16.msra.mxu0 0
    %7590 = vmatprep.subr.bf16.mxu0 0
    %7591 = vmatpush1.bf16.msra.mxu0 0
    %7592 = vmatprep.subr.bf16.mxu0 0
    %7593 = vmatpush1.bf16.msra.mxu0 0
    %7594 = vmatprep.subr.bf16.mxu0 0
    %7595 = vmatpush1.bf16.msra.mxu0 %v4867
    %7596 = vmatprep.subr.bf16.mxu0 0
    %7597 = vmatpush2.bf16.msra.mxu0 0
    %7598 = vmatprep.subr.bf16.mxu0 0
    %7599 = vmatpush2.bf16.msra.mxu0 0
    %7600 = vmatprep.subr.bf16.mxu0 0
    %7601 = vmatpush2.bf16.msra.mxu0 0
    %7602 = vmatprep.subr.bf16.mxu0 0
    %7603 = vmatpush2.bf16.msra.mxu0 0
    %7604 = vmatprep.subr.bf16.mxu0 0
    %7605 = vmatpush2.bf16.msra.mxu0 0
    %7606 = vmatprep.subr.bf16.mxu0 0
    %7607 = vmatpush2.bf16.msra.mxu0 0
    %7608 = vmatprep.subr.bf16.mxu0 0
    %7609 = vmatpush2.bf16.msra.mxu0 0
    %7610 = vmatprep.subr.bf16.mxu0 0
    %7611 = vmatpush2.bf16.msra.mxu0 0
    %7612 = vmatprep.mubr.bf16.mxu0 0
    %7613 = vmatmul.mubr.bf16.gmra.mxu0 %v7578
    %v7614 = vpop.f32.mrf.mxu0
    %v7615 = vadd.f32 0.0, %v7614
    %v7616 = vpop.f32.mrf.mxu0
    %v7617 = vpop.f32.mrf.mxu0
    %v7618 = vpop.f32.mrf.mxu0
    %7619 = vdwg.mxu0
    %v7620 = vadd.f32 %v7342, %v7615
    %7621 = vmatprep.subr.bf16.mxu0 0
    %7622 = vmatpush1.bf16.msra.mxu0 0
    %7623 = vmatprep.subr.bf16.mxu0 0
    %7624 = vmatpush1.bf16.msra.mxu0 0
    %7625 = vmatprep.subr.bf16.mxu0 0
    %7626 = vmatpush1.bf16.msra.mxu0 0
    %7627 = vmatprep.subr.bf16.mxu0 0
    %7628 = vmatpush1.bf16.msra.mxu0 0
    %7629 = vmatprep.subr.bf16.mxu0 0
    %7630 = vmatpush1.bf16.msra.mxu0 0
    %7631 = vmatprep.subr.bf16.mxu0 0
    %7632 = vmatpush1.bf16.msra.mxu0 0
    %7633 = vmatprep.subr.bf16.mxu0 0
    %7634 = vmatpush1.bf16.msra.mxu0 %v4925
    %7635 = vmatprep.subr.bf16.mxu0 0
    %7636 = vmatpush1.bf16.msra.mxu0 %v4924
    %7637 = vmatprep.subr.bf16.mxu0 0
    %7638 = vmatpush2.bf16.msra.mxu0 0
    %7639 = vmatprep.subr.bf16.mxu0 0
    %7640 = vmatpush2.bf16.msra.mxu0 0
    %7641 = vmatprep.subr.bf16.mxu0 0
    %7642 = vmatpush2.bf16.msra.mxu0 0
    %7643 = vmatprep.subr.bf16.mxu0 0
    %7644 = vmatpush2.bf16.msra.mxu0 0
    %7645 = vmatprep.subr.bf16.mxu0 0
    %7646 = vmatpush2.bf16.msra.mxu0 0
    %7647 = vmatprep.subr.bf16.mxu0 0
    %7648 = vmatpush2.bf16.msra.mxu0 0
    %7649 = vmatprep.subr.bf16.mxu0 0
    %7650 = vmatpush2.bf16.msra.mxu0 0
    %7651 = vmatprep.subr.bf16.mxu0 0
    %7652 = vmatpush2.bf16.msra.mxu0 0
    %7653 = vmatprep.mubr.bf16.mxu0 0
    %7654 = vmatmul.mubr.bf16.gmra.mxu0 %v6799
    %v7655 = vpop.f32.mrf.mxu0
    %v7656 = vadd.f32 %v4915, %v7655
    %v7657 = vpop.f32.mrf.mxu0
    %v7658 = vpop.f32.mrf.mxu0
    %v7659 = vpop.f32.mrf.mxu0
    %7660 = vdwg.mxu0
    %7661 = vmatprep.subr.bf16.mxu0 0
    %7662 = vmatpush1.bf16.msra.mxu0 0
    %7663 = vmatprep.subr.bf16.mxu0 0
    %7664 = vmatpush1.bf16.msra.mxu0 0
    %7665 = vmatprep.subr.bf16.mxu0 0
    %7666 = vmatpush1.bf16.msra.mxu0 0
    %7667 = vmatprep.subr.bf16.mxu0 0
    %7668 = vmatpush1.bf16.msra.mxu0 0
    %7669 = vmatprep.subr.bf16.mxu0 0
    %7670 = vmatpush1.bf16.msra.mxu0 0
    %7671 = vmatprep.subr.bf16.mxu0 0
    %7672 = vmatpush1.bf16.msra.mxu0 0
    %7673 = vmatprep.subr.bf16.mxu0 0
    %7674 = vmatpush1.bf16.msra.mxu0 %v4982
    %7675 = vmatprep.subr.bf16.mxu0 0
    %7676 = vmatpush1.bf16.msra.mxu0 %v4981
    %7677 = vmatprep.subr.bf16.mxu0 0
    %7678 = vmatpush2.bf16.msra.mxu0 0
    %7679 = vmatprep.subr.bf16.mxu0 0
    %7680 = vmatpush2.bf16.msra.mxu0 0
    %7681 = vmatprep.subr.bf16.mxu0 0
    %7682 = vmatpush2.bf16.msra.mxu0 0
    %7683 = vmatprep.subr.bf16.mxu0 0
    %7684 = vmatpush2.bf16.msra.mxu0 0
    %7685 = vmatprep.subr.bf16.mxu0 0
    %7686 = vmatpush2.bf16.msra.mxu0 0
    %7687 = vmatprep.subr.bf16.mxu0 0
    %7688 = vmatpush2.bf16.msra.mxu0 0
    %7689 = vmatprep.subr.bf16.mxu0 0
    %7690 = vmatpush2.bf16.msra.mxu0 0
    %7691 = vmatprep.subr.bf16.mxu0 0
    %7692 = vmatpush2.bf16.msra.mxu0 0
    %7693 = vmatprep.mubr.bf16.mxu0 0
    %7694 = vmatmul.mubr.bf16.gmra.mxu0 %v6799
    %v7695 = vpop.f32.mrf.mxu0
    %v7696 = vadd.f32 %v4972, %v7695
    %v7697 = vpop.f32.mrf.mxu0
    %v7698 = vpop.f32.mrf.mxu0
    %v7699 = vpop.f32.mrf.mxu0
    %7700 = vdwg.mxu0
    %7701 = vmatprep.subr.bf16.mxu0 0
    %7702 = vmatpush1.bf16.msra.mxu0 0
    %7703 = vmatprep.subr.bf16.mxu0 0
    %7704 = vmatpush1.bf16.msra.mxu0 0
    %7705 = vmatprep.subr.bf16.mxu0 0
    %7706 = vmatpush1.bf16.msra.mxu0 0
    %7707 = vmatprep.subr.bf16.mxu0 0
    %7708 = vmatpush1.bf16.msra.mxu0 0
    %7709 = vmatprep.subr.bf16.mxu0 0
    %7710 = vmatpush1.bf16.msra.mxu0 0
    %7711 = vmatprep.subr.bf16.mxu0 0
    %7712 = vmatpush1.bf16.msra.mxu0 0
    %7713 = vmatprep.subr.bf16.mxu0 0
    %7714 = vmatpush1.bf16.msra.mxu0 %v5039
    %7715 = vmatprep.subr.bf16.mxu0 0
    %7716 = vmatpush1.bf16.msra.mxu0 %v5038
    %7717 = vmatprep.subr.bf16.mxu0 0
    %7718 = vmatpush2.bf16.msra.mxu0 0
    %7719 = vmatprep.subr.bf16.mxu0 0
    %7720 = vmatpush2.bf16.msra.mxu0 0
    %7721 = vmatprep.subr.bf16.mxu0 0
    %7722 = vmatpush2.bf16.msra.mxu0 0
    %7723 = vmatprep.subr.bf16.mxu0 0
    %7724 = vmatpush2.bf16.msra.mxu0 0
    %7725 = vmatprep.subr.bf16.mxu0 0
    %7726 = vmatpush2.bf16.msra.mxu0 0
    %7727 = vmatprep.subr.bf16.mxu0 0
    %7728 = vmatpush2.bf16.msra.mxu0 0
    %7729 = vmatprep.subr.bf16.mxu0 0
    %7730 = vmatpush2.bf16.msra.mxu0 0
    %7731 = vmatprep.subr.bf16.mxu0 0
    %7732 = vmatpush2.bf16.msra.mxu0 0
    %7733 = vmatprep.mubr.bf16.mxu0 0
    %7734 = vmatmul.mubr.bf16.gmra.mxu0 %v6799
    %v7735 = vpop.f32.mrf.mxu0
    %v7736 = vadd.f32 %v5029, %v7735
    %v7737 = vpop.f32.mrf.mxu0
    %v7738 = vpop.f32.mrf.mxu0
    %v7739 = vpop.f32.mrf.mxu0
    %7740 = vdwg.mxu0
    %v7741 = vpack.c.bf16 %v7656, %v7656
    %v7742 = vpack.c.bf16 %v7696, %v7696
    %v7744 = vsel %vm997, %v7741, 0
    %v7747 = vsel %vm997, %v7742, 0
    %7749 = vmatprep.subr.bf16.mxu0 0
    %7750 = vmatpush1.bf16.xpose.msra.mxu0 0
    %7751 = vmatprep.subr.bf16.mxu0 0
    %7752 = vmatpush1.bf16.xpose.msra.mxu0 0
    %7753 = vmatprep.subr.bf16.mxu0 0
    %7754 = vmatpush1.bf16.xpose.msra.mxu0 0
    %7755 = vmatprep.subr.bf16.mxu0 0
    %7756 = vmatpush1.bf16.xpose.msra.mxu0 0
    %7757 = vmatprep.subr.bf16.mxu0 0
    %7758 = vmatpush1.bf16.xpose.msra.mxu0 0
    %7759 = vmatprep.subr.bf16.mxu0 0
    %7760 = vmatpush1.bf16.xpose.msra.mxu0 0
    %7761 = vmatprep.subr.bf16.mxu0 0
    %7762 = vmatpush1.bf16.xpose.msra.mxu0 0
    %7763 = vmatprep.subr.bf16.mxu0 0
    %7764 = vmatpush1.bf16.xpose.msra.mxu0 %v7747
    %7765 = vmatprep.subr.bf16.mxu0 0
    %7766 = vmatpush2.bf16.xpose.msra.mxu0 0
    %7767 = vmatprep.subr.bf16.mxu0 0
    %7768 = vmatpush2.bf16.xpose.msra.mxu0 0
    %7769 = vmatprep.subr.bf16.mxu0 0
    %7770 = vmatpush2.bf16.xpose.msra.mxu0 0
    %7771 = vmatprep.subr.bf16.mxu0 0
    %7772 = vmatpush2.bf16.xpose.msra.mxu0 0
    %7773 = vmatprep.subr.bf16.mxu0 0
    %7774 = vmatpush2.bf16.xpose.msra.mxu0 0
    %7775 = vmatprep.subr.bf16.mxu0 0
    %7776 = vmatpush2.bf16.xpose.msra.mxu0 0
    %7777 = vmatprep.subr.bf16.mxu0 0
    %7778 = vmatpush2.bf16.xpose.msra.mxu0 0
    %7779 = vmatprep.subr.bf16.mxu0 0
    %7780 = vmatpush2.bf16.xpose.msra.mxu0 0
    %7781 = vmatprep.mubr.bf16.mxu0 0
    %7782 = vmatmul.mubr.bf16.gmra.mxu0 %v7744
    %v7783 = vpop.f32.mrf.mxu0
    %v7784 = vadd.f32 0.0, %v7783
    %v7785 = vpop.f32.mrf.mxu0
    %v7786 = vpop.f32.mrf.mxu0
    %v7787 = vpop.f32.mrf.mxu0
    %7788 = vdwg.mxu0
    %v7789 = vmul.f32 %v7784, 0.35355338
    %v7790 = vadd.f32 %v7789, %v549
    %v7791 = vsel %vm997, %v7790, -inf
    %7792 = vmax.xlane.f32.xlu0 %v7791
    %v7793 = vpop.xlane.xlu0 %7792
    %v7794 = vsub.f32 %v7790, %v7793
    %v7795 = vmul.f32 %v7794, 1.442695
    %v7796 = vpow.pop %v7795
    %v7797 = vsel %vm997, %v7796, 0.0
    %7798 = vadd.xlane.f32.xlu0 %v7797
    %v7799 = vpop.xlane.xlu0 %7798
    %v7800 = vrcp.pop %v7799
    %v7801 = vmul.f32 %v7796, %v7800
    %v7802 = vpack.c.bf16 %v7801, %v7801
    %v7803 = vpack.c.bf16 %v7736, %v7736
    %v7805 = vsel %vm997, %v7802, 0
    %v7808 = vsel %vm665, %v7803, 0
    %7810 = vmatprep.subr.bf16.mxu0 0
    %7811 = vmatpush1.bf16.msra.mxu0 0
    %7812 = vmatprep.subr.bf16.mxu0 0
    %7813 = vmatpush1.bf16.msra.mxu0 0
    %7814 = vmatprep.subr.bf16.mxu0 0
    %7815 = vmatpush1.bf16.msra.mxu0 0
    %7816 = vmatprep.subr.bf16.mxu0 0
    %7817 = vmatpush1.bf16.msra.mxu0 0
    %7818 = vmatprep.subr.bf16.mxu0 0
    %7819 = vmatpush1.bf16.msra.mxu0 0
    %7820 = vmatprep.subr.bf16.mxu0 0
    %7821 = vmatpush1.bf16.msra.mxu0 0
    %7822 = vmatprep.subr.bf16.mxu0 0
    %7823 = vmatpush1.bf16.msra.mxu0 0
    %7824 = vmatprep.subr.bf16.mxu0 0
    %7825 = vmatpush1.bf16.msra.mxu0 %v7808
    %7826 = vmatprep.subr.bf16.mxu0 0
    %7827 = vmatpush2.bf16.msra.mxu0 0
    %7828 = vmatprep.subr.bf16.mxu0 0
    %7829 = vmatpush2.bf16.msra.mxu0 0
    %7830 = vmatprep.subr.bf16.mxu0 0
    %7831 = vmatpush2.bf16.msra.mxu0 0
    %7832 = vmatprep.subr.bf16.mxu0 0
    %7833 = vmatpush2.bf16.msra.mxu0 0
    %7834 = vmatprep.subr.bf16.mxu0 0
    %7835 = vmatpush2.bf16.msra.mxu0 0
    %7836 = vmatprep.subr.bf16.mxu0 0
    %7837 = vmatpush2.bf16.msra.mxu0 0
    %7838 = vmatprep.subr.bf16.mxu0 0
    %7839 = vmatpush2.bf16.msra.mxu0 0
    %7840 = vmatprep.subr.bf16.mxu0 0
    %7841 = vmatpush2.bf16.msra.mxu0 0
    %7842 = vmatprep.mubr.bf16.mxu0 0
    %7843 = vmatmul.mubr.bf16.gmra.mxu0 %v7805
    %v7844 = vpop.f32.mrf.mxu0
    %v7845 = vadd.f32 0.0, %v7844
    %v7846 = vpop.f32.mrf.mxu0
    %v7847 = vpop.f32.mrf.mxu0
    %v7848 = vpop.f32.mrf.mxu0
    %7849 = vdwg.mxu0
    %v7850 = vpack.c.bf16 %v7845, %v7845
    %v7852 = vsel %vm997, %v7850, 0
    %7854 = vmatprep.subr.bf16.mxu0 0
    %7855 = vmatpush1.bf16.msra.mxu0 0
    %7856 = vmatprep.subr.bf16.mxu0 0
    %7857 = vmatpush1.bf16.msra.mxu0 0
    %7858 = vmatprep.subr.bf16.mxu0 0
    %7859 = vmatpush1.bf16.msra.mxu0 0
    %7860 = vmatprep.subr.bf16.mxu0 0
    %7861 = vmatpush1.bf16.msra.mxu0 0
    %7862 = vmatprep.subr.bf16.mxu0 0
    %7863 = vmatpush1.bf16.msra.mxu0 0
    %7864 = vmatprep.subr.bf16.mxu0 0
    %7865 = vmatpush1.bf16.msra.mxu0 0
    %7866 = vmatprep.subr.bf16.mxu0 0
    %7867 = vmatpush1.bf16.msra.mxu0 0
    %7868 = vmatprep.subr.bf16.mxu0 0
    %7869 = vmatpush1.bf16.msra.mxu0 %v5209
    %7870 = vmatprep.subr.bf16.mxu0 0
    %7871 = vmatpush2.bf16.msra.mxu0 0
    %7872 = vmatprep.subr.bf16.mxu0 0
    %7873 = vmatpush2.bf16.msra.mxu0 0
    %7874 = vmatprep.subr.bf16.mxu0 0
    %7875 = vmatpush2.bf16.msra.mxu0 0
    %7876 = vmatprep.subr.bf16.mxu0 0
    %7877 = vmatpush2.bf16.msra.mxu0 0
    %7878 = vmatprep.subr.bf16.mxu0 0
    %7879 = vmatpush2.bf16.msra.mxu0 0
    %7880 = vmatprep.subr.bf16.mxu0 0
    %7881 = vmatpush2.bf16.msra.mxu0 0
    %7882 = vmatprep.subr.bf16.mxu0 0
    %7883 = vmatpush2.bf16.msra.mxu0 0
    %7884 = vmatprep.subr.bf16.mxu0 0
    %7885 = vmatpush2.bf16.msra.mxu0 0
    %7886 = vmatprep.mubr.bf16.mxu0 0
    %7887 = vmatmul.mubr.bf16.gmra.mxu0 %v7852
    %v7888 = vpop.f32.mrf.mxu0
    %v7889 = vadd.f32 0.0, %v7888
    %v7890 = vpop.f32.mrf.mxu0
    %v7891 = vpop.f32.mrf.mxu0
    %v7892 = vpop.f32.mrf.mxu0
    %7893 = vdwg.mxu0
    %v7894 = vadd.f32 %v7620, %v7889
    %v7895 = vadd.f32 %v3838, %v7894
    %v7896 = vadd.f32 %v7895, %v5260
    %v7897 = vsel %vm798, %v7896, 0.0
    %7898 = vadd.xlane.f32.xlu0 %v7897
    %v7899 = vpop.xlane.xlu0 %7898
    %v7900 = vmul.f32 %v7899, %v802
    %v7901 = vsub.f32 %v7896, %v7900
    %v7902 = vmul.f32 %v7901, %v7901
    %v7903 = vsel %vm798, %v7902, 0.0
    %7904 = vadd.xlane.f32.xlu0 %v7903
    %v7905 = vpop.xlane.xlu0 %7904
    %v7906 = vmul.f32 %v7905, %v802
    %v7907 = vadd.f32 %v7906, 1e-05
    %v7908 = vrsqrt.pop %v7907
    %v7909 = vmul.f32 %v7901, %v7908
    %v7910 = vlaneseq
    %v7911 = vshrl.u32 %v7910, 7
    %v7912 = vsub.s32 5, %v7911
    %v7913 = vrot.slane %v411, %v7912
    %v7914 = vmul.f32 %v7909, %v7913
    %v7915 = vlaneseq
    %v7916 = vshrl.u32 %v7915, 7
    %v7917 = vsub.s32 5, %v7916
    %v7918 = vrot.slane %v410, %v7917
    %v7919 = vadd.f32 %v7914, %v7918
    %v7920 = vpack.c.bf16 %v7919, %v7919
    %v7922 = vsel %vm798, %v7920, 0
    %7924 = vmatprep.subr.bf16.mxu0 0
    %7925 = vmatpush1.bf16.msra.mxu0 0
    %7926 = vmatprep.subr.bf16.mxu0 0
    %7927 = vmatpush1.bf16.msra.mxu0 0
    %7928 = vmatprep.subr.bf16.mxu0 0
    %7929 = vmatpush1.bf16.msra.mxu0 0
    %7930 = vmatprep.subr.bf16.mxu0 0
    %7931 = vmatpush1.bf16.msra.mxu0 0
    %7932 = vmatprep.subr.bf16.mxu0 0
    %7933 = vmatpush1.bf16.msra.mxu0 0
    %7934 = vmatprep.subr.bf16.mxu0 0
    %7935 = vmatpush1.bf16.msra.mxu0 0
    %7936 = vmatprep.subr.bf16.mxu0 0
    %7937 = vmatpush1.bf16.msra.mxu0 %v5318
    %7938 = vmatprep.subr.bf16.mxu0 0
    %7939 = vmatpush1.bf16.msra.mxu0 %v5317
    %7940 = vmatprep.subr.bf16.mxu0 0
    %7941 = vmatpush2.bf16.msra.mxu0 0
    %7942 = vmatprep.subr.bf16.mxu0 0
    %7943 = vmatpush2.bf16.msra.mxu0 0
    %7944 = vmatprep.subr.bf16.mxu0 0
    %7945 = vmatpush2.bf16.msra.mxu0 0
    %7946 = vmatprep.subr.bf16.mxu0 0
    %7947 = vmatpush2.bf16.msra.mxu0 0
    %7948 = vmatprep.subr.bf16.mxu0 0
    %7949 = vmatpush2.bf16.msra.mxu0 0
    %7950 = vmatprep.subr.bf16.mxu0 0
    %7951 = vmatpush2.bf16.msra.mxu0 0
    %7952 = vmatprep.subr.bf16.mxu0 0
    %7953 = vmatpush2.bf16.msra.mxu0 0
    %7954 = vmatprep.subr.bf16.mxu0 0
    %7955 = vmatpush2.bf16.msra.mxu0 0
    %7956 = vmatprep.mubr.bf16.mxu0 0
    %7957 = vmatmul.mubr.bf16.gmra.mxu0 %v7922
    %v7958 = vpop.f32.mrf.mxu0
    %v7959 = vadd.f32 %v5307, %v7958
    %v7960 = vpop.f32.mrf.mxu0
    %v7961 = vpop.f32.mrf.mxu0
    %v7962 = vpop.f32.mrf.mxu0
    %7963 = vdwg.mxu0
    %v7964 = vmul.f32 %v7959, 0.5
    %v7965 = vmul.f32 %v7959, 0.70710677
    %v7966 = verf.f32.pop %v7965
    %v7967 = vadd.f32 %v7966, 1.0
    %v7968 = vmul.f32 %v7964, %v7967
    %v7969 = vpack.c.bf16 %v7968, %v7968
    %7970 = vmatprep.subr.bf16.mxu0 0
    %7971 = vmatpush1.bf16.msra.mxu0 %v5421
    %7972 = vmatprep.subr.bf16.mxu0 0
    %7973 = vmatpush1.bf16.msra.mxu0 %v5420
    %7974 = vmatprep.subr.bf16.mxu0 0
    %7975 = vmatpush1.bf16.msra.mxu0 %v5419
    %7976 = vmatprep.subr.bf16.mxu0 0
    %7977 = vmatpush1.bf16.msra.mxu0 %v5418
    %7978 = vmatprep.subr.bf16.mxu0 0
    %7979 = vmatpush1.bf16.msra.mxu0 %v5417
    %7980 = vmatprep.subr.bf16.mxu0 0
    %7981 = vmatpush1.bf16.msra.mxu0 %v5416
    %7982 = vmatprep.subr.bf16.mxu0 0
    %7983 = vmatpush1.bf16.msra.mxu0 %v5415
    %7984 = vmatprep.subr.bf16.mxu0 0
    %7985 = vmatpush1.bf16.msra.mxu0 %v5414
    %7986 = vmatprep.subr.bf16.mxu0 0
    %7987 = vmatpush2.bf16.msra.mxu0 0
    %7988 = vmatprep.subr.bf16.mxu0 0
    %7989 = vmatpush2.bf16.msra.mxu0 0
    %7990 = vmatprep.subr.bf16.mxu0 0
    %7991 = vmatpush2.bf16.msra.mxu0 0
    %7992 = vmatprep.subr.bf16.mxu0 0
    %7993 = vmatpush2.bf16.msra.mxu0 0
    %7994 = vmatprep.subr.bf16.mxu0 0
    %7995 = vmatpush2.bf16.msra.mxu0 0
    %7996 = vmatprep.subr.bf16.mxu0 0
    %7997 = vmatpush2.bf16.msra.mxu0 0
    %7998 = vmatprep.subr.bf16.mxu0 0
    %7999 = vmatpush2.bf16.msra.mxu0 0
    %8000 = vmatprep.subr.bf16.mxu0 0
    %8001 = vmatpush2.bf16.msra.mxu0 0
    %8002 = vmatprep.mubr.bf16.mxu0 0
    %8003 = vmatmul.mubr.bf16.gmra.mxu0 %v7969
    %v8004 = vpop.f32.mrf.mxu0
    %v8005 = vadd.f32 %v5380, %v8004
    %v8006 = vpop.f32.mrf.mxu0
    %v8007 = vpop.f32.mrf.mxu0
    %v8008 = vpop.f32.mrf.mxu0
    %8009 = vdwg.mxu0
    %v8010 = vadd.f32 %v7896, %v8005
    %v8011 = vsel %vm798, %v8010, 0.0
    %8012 = vadd.xlane.f32.xlu0 %v8011
    %v8013 = vpop.xlane.xlu0 %8012
    %v8014 = vmul.f32 %v8013, %v802
    %v8015 = vsub.f32 %v8010, %v8014
    %v8016 = vmul.f32 %v8015, %v8015
    %v8017 = vsel %vm798, %v8016, 0.0
    %8018 = vadd.xlane.f32.xlu0 %v8017
    %v8019 = vpop.xlane.xlu0 %8018
    %v8020 = vmul.f32 %v8019, %v802
    %v8021 = vadd.f32 %v8020, 1e-05
    %v8022 = vrsqrt.pop %v8021
    %v8023 = vmul.f32 %v8015, %v8022
    %v8024 = vlaneseq
    %v8025 = vshrl.u32 %v8024, 7
    %v8026 = vsub.s32 2, %v8025
    %v8027 = vrot.slane %v545, %v8026
    %v8028 = vmul.f32 %v8023, %v8027
    %v8029 = vlaneseq
    %v8030 = vshrl.u32 %v8029, 7
    %v8031 = vsub.s32 2, %v8030
    %v8032 = vrot.slane %v544, %v8031
    %v8033 = vadd.f32 %v8028, %v8032
    %8034 = vst.msk [vmem:[#allocation16] sm:$0xff] %vm798, %v8033
    // Predicated region
    $region246: #{tpu_custom_call.1} parent=1 // pred_check
      _
    $region247: #{tpu_custom_call.1} parent=1 // pred_check_branch
      %8036 = sbr.rel (0) target = $region249
    $region248: #{tpu_custom_call.1} parent=1 // pred_region
      %s8038 = ssub.s32 256, 256
      %8039 = vsyncadd [#allocation4], %s8038
      %s8040 = sshll.u32 [#allocation13], 4
      %s8041 = int_to_ptr.vmem [resolvable:$true] %s8040
      %8046 = dma.vmem_to_hbm [thread:$0]  %s8041, 256, %s111, [#allocation4], 128, 128, 8
    $region249: #{tpu_custom_call.1} parent=1 // pred_fallthru
      _
    // Predicated region
    $region250: #{tpu_custom_call.1} parent=1 // pred_check
      _
    $region251: #{tpu_custom_call.1} parent=1 // pred_check_branch
      %8048 = sbr.rel (0) target = $region253
    $region252: #{tpu_custom_call.1} parent=1 // pred_region
      %s8050 = ssub.s32 128, 128
      %8051 = vsyncadd [#allocation15], %s8050
      %s8053 = sshll.u32 [#allocation14], 4
      %s8054 = int_to_ptr.vmem [resolvable:$true] %s8053
      %8056 = dma.vmem_to_hbm [thread:$0]  %s8054, 128, %s113, [#allocation15]
    $region253: #{tpu_custom_call.1} parent=1 // pred_fallthru
      _
    // Predicated region
    $region254: #{tpu_custom_call.1} parent=1 // pred_check
      _
    $region255: #{tpu_custom_call.1} parent=1 // pred_check_branch
      %8058 = sbr.rel (0) target = $region257
    $region256: #{tpu_custom_call.1} parent=1 // pred_region
      %s8060 = ssub.s32 128, 128
      %8061 = vsyncadd [#allocation15], %s8060
      %s8063 = sshll.u32 [#allocation16], 4
      %s8064 = int_to_ptr.vmem [resolvable:$true] %s8063
      %8066 = dma.vmem_to_hbm [thread:$0]  %s8064, 128, %s115, [#allocation15]
    $region257: #{tpu_custom_call.1} parent=1 // pred_fallthru
      _
    // Predicated region
    $region258: #{tpu_custom_call.1} parent=1 // pred_check
      _
    $region259: #{tpu_custom_call.1} parent=1 // pred_check_branch
      %8068 = sbr.rel (0) target = $region261
    $region260: #{tpu_custom_call.1} parent=1 // pred_region
      %8069 = dma.done [#allocation4], 256
    $region261: #{tpu_custom_call.1} parent=1 // pred_fallthru
      _
    // Predicated region
    $region262: #{tpu_custom_call.1} parent=1 // pred_check
      _
    $region263: #{tpu_custom_call.1} parent=1 // pred_check_branch
      %8071 = sbr.rel (0) target = $region265
    $region264: #{tpu_custom_call.1} parent=1 // pred_region
      %8072 = dma.done [#allocation15], 128
    $region265: #{tpu_custom_call.1} parent=1 // pred_fallthru
      _
    // Predicated region
    $region266: #{tpu_custom_call.1} parent=1 // pred_check
      _
    $region267: #{tpu_custom_call.1} parent=1 // pred_check_branch
      %8074 = sbr.rel (0) target = $region269
    $region268: #{tpu_custom_call.1} parent=1 // pred_region
      %8075 = dma.done [#allocation15], 128
    $region269: #{tpu_custom_call.1} parent=1 // pred_fallthru
      _
    %8076 = vsyncpa [#allocation3], 1
    %8077 = vsyncpa [#allocation6], 1
    %8078 = vsyncpa [#allocation9], 1
    %8079 = vsyncpa [#allocation12], 1
    %8080 = vsyncpa [#allocation4], 1
    %8081 = vsyncpa [#allocation15], 1

</llo_original>
